<compile_context>
chip_gen: v5e
topology: v5e:2x2
jax: 0.10.0
libtpu: 0.0.40
codegen_flags: <defaults>
</compile_context>

<pallas_src>
import math
from functools import partial

import jax
import jax.numpy as jnp
from jax import lax
from jax.experimental import pallas as pl
from jax.experimental.pallas import tpu as pltpu


def pos_embedding(h, w, ff):
    """Fourier-feature positional embedding, matching LambdaLayer.pos_embedding."""
    ch = jnp.linspace(-1.0, 1.0, h)
    cw = jnp.linspace(-1.0, 1.0, w)
    gh, gw = jnp.meshgrid(ch, cw, indexing="ij")        # torch.meshgrid default = 'ij'
    rel_pos = jnp.stack([gh, gw], axis=-1).reshape(h * w, 2)            # (M, 2)
    pos_proj = rel_pos @ ff * (2.0 * math.pi)                           # (M, K/2)
    return jnp.concatenate([jnp.sin(pos_proj), jnp.cos(pos_proj)], 1)   # (M, K)


def _lambda_kernel(*refs, K, U, N, V, M, Bb, has_shift):
    if has_shift:
        x_ref, w_ref, shift_ref, et_ref, o_ref = refs
    else:
        x_ref, w_ref, et_ref, o_ref = refs
        shift_ref = None

    x = x_ref[...]                                   # (Bb, C, M)   bf16
    w = w_ref[...]                                   # (C_out, C)   bf16 (BN scale folded)
    c_out, c_in = w.shape

    # 1x1 conv == channel matmul; the batch block is a dot_general batch dim so
    # a single batched MXU contraction (bf16 operands, f32 accumulate) covers
    # the whole grid step.
    w_b = jnp.broadcast_to(w[None], (Bb, c_out, c_in))
    qkv = jnp.einsum("boc,bcm->bom", w_b, x,
                     preferred_element_type=jnp.float32)               # (Bb, C_out, M) f32
    if has_shift:
        qkv = qkv + shift_ref[...][None]             # eval-mode BN shift (rarely nonzero)

    KN, KU = K * N, K * U
    q = qkv[:, :KN, :]                               # (Bb, N*K, M) head-major rows
    k = qkv[:, KN:KN + KU, :]                        # (Bb, U*K, M) u-major rows
    v = qkv[:, KN + KU:, :]                          # (Bb, U*V, M) u-major rows

    # Softmax over the spatial (key) axis.  Exact division (the approximate EUP
    # reciprocal in the previous version biased the output past tolerance).
    k = k - jnp.max(k, axis=-1, keepdims=True)
    k = jnp.exp(k)
    k = k / jnp.sum(k, axis=-1, keepdims=True)

    # Position lambda folds exactly into the content lambda (shared v, m sums):
    #   lam[b,k,v] = sum_{u,m} (softmax(k)[b,u,k,m] + e[m,k]) * v[b,u,v,m]
    e = et_ref[...]                                  # (K, M) f32
    if U > 1:
        e = jnp.tile(e, (U, 1))                      # (U*K, M)
    kk = k + e[None]                                 # (Bb, U*K, M)

    hp = lax.Precision.HIGHEST
    if U == 1:
        lam = jnp.einsum("bkm,bvm->bkv", kk, v,
                         preferred_element_type=jnp.float32,
                         precision=hp)                               # (Bb, K, V)
    else:
        # U is tiny and static; per-u blocks are sublane-aligned row slices.
        lam = jnp.zeros((Bb, K, V), jnp.float32)
        for u in range(U):
            lam = lam + jnp.einsum(
                "bkm,bvm->bkv",
                kk[:, u * K:(u + 1) * K, :], v[:, u * V:(u + 1) * V, :],
                preferred_element_type=jnp.float32, precision=hp)

    # Apply lambda to the queries: one batched dot per head.  Head blocks are
    # 8-sublane-aligned row slices of q (no lane shuffles); every store is a
    # dense (Bb, V, M) f32 tile (lane-dense, no vst.msk).
    for n in range(N):
        q_n = q[:, n * K:(n + 1) * K, :]             # (Bb, K, M)
        out_n = jnp.einsum("bkv,bkm->bvm", lam, q_n,
                           preferred_element_type=jnp.float32, precision=hp)
        o_ref[:, n, :, :] = out_n.astype(o_ref.dtype)


def _pick_block_b(B, M):
    # Per-step working set grows with Bb; target ~2K spatial columns per step
    # (qkv intermediate ~ C_out*Bb*M*4 bytes stays far below every generation's
    # scoped-VMEM default) while keeping grid length >= 2 so a two-TensorCore
    # part (v7x) can still split the batch axis.
    target = max(1, 2048 // M)
    best = 1
    for d in range(1, B + 1):
        if B % d == 0 and d <= target and B // d >= 2:
            best = d
    return best


def lambda_layer_forward(x, w_qkv, ff, bn_scale, bn_shift=None, *,
                         dim_k=16, dim_u=1, heads=4, block_b=None):
    B, C, H, W = x.shape
    M = H * W
    K, U, N = dim_k, dim_u, heads
    V = C // N
    C_out = K * N + K * U + V * U
    assert w_qkv.shape == (C_out, C)

    Bb = _pick_block_b(B, M) if block_b is None else block_b
    assert B % Bb == 0
    G = B // Bb

    # Channel permutation (wrapper-side layout only): q '(k n)' -> '(n k)'
    # (head-major rows), k already '(u k)', v '(v u)' -> '(u v)'.
    perm_q = [kk * N + n for n in range(N) for kk in range(K)]
    perm_k = [K * N + u * K + kk for u in range(U) for kk in range(K)]
    perm_v = [K * N + K * U + vv * U + u for u in range(U) for vv in range(V)]
    perm = jnp.array(perm_q + perm_k + perm_v, dtype=jnp.int32)

    # Eval-mode BatchNorm scale folded into the conv weight (exact, in f32)
    # before the bf16 cast: removes the per-step VPU multiply and two input
    # blocks / DMAs.
    # TODO(synk): training-mode batch statistics for norm_q / norm_v are not reproduced.
    w_folded = bn_scale[:, None].astype(jnp.float32) * w_qkv.astype(jnp.float32)
    w_p = w_folded[perm].astype(jnp.bfloat16)

    x_flat = x.reshape(B, C, M).astype(jnp.bfloat16)          # layout only
    e_t = pos_embedding(H, W, ff).astype(jnp.float32).T       # (K, M)

    has_shift = bn_shift is not None
    inputs = [x_flat, w_p]
    in_specs = [
        pl.BlockSpec((Bb, C, M), lambda g: (g, 0, 0)),        # batch-folded x block
        pl.BlockSpec((C_out, C), lambda g: (0, 0)),           # conv weight (BN folded)
    ]
    if has_shift:
        shift_p = bn_shift[perm].reshape(C_out, 1).astype(jnp.float32)
        inputs.append(shift_p)
        in_specs.append(pl.BlockSpec((C_out, 1), lambda g: (0, 0)))
    inputs.append(e_t)
    in_specs.append(pl.BlockSpec((K, M), lambda g: (0, 0)))

    kernel = partial(_lambda_kernel, K=K, U=U, N=N, V=V, M=M, Bb=Bb,
                     has_shift=has_shift)
    out_k = pl.pallas_call(
        kernel,
        out_shape=jax.ShapeDtypeStruct((B, N, V, M), jnp.float32),
        grid_spec=pltpu.PrefetchScalarGridSpec(
            num_scalar_prefetch=0,
            grid=(G,),
            in_specs=in_specs,
            out_specs=pl.BlockSpec((Bb, N, V, M), lambda g: (g, 0, 0, 0)),
        ),
        compiler_params=pltpu.CompilerParams(
            # On v7x one can switch to pltpu.CORE_PARALLEL to shard the
            # (even-length) batch-block axis across the two TensorCores.
            dimension_semantics=("parallel",),
            vmem_limit_bytes=32 * 1024 * 1024,   # explicit, well above the ~1 MiB/step footprint
        ),
    )(*inputs)

    # Pure layout plumbing outside the kernel: (B, N, V, M) -> (B, N*V, H, W).
    return out_k.reshape(B, N * V, H, W)


def reference_forward(x, w_qkv, ff, bn_scale, bn_shift=None, *,
                      dim_k=16, dim_u=1, heads=4):
    """Pure-JAX mirror of the PyTorch forward (verification).

    The 1x1 conv uses the same BN-folded bf16 weight / f32 accumulation as the
    kernel, and the lambda einsums use Precision.HIGHEST, so the comparison
    isolates kernel layout/fusion correctness from the precision policy.
    """
    B, C, H, W = x.shape
    M = H * W
    K, U, N = dim_k, dim_u, heads
    V = C // N
    w_f = (bn_scale[:, None].astype(jnp.float32) * w_qkv.astype(jnp.float32)
           ).astype(jnp.bfloat16)
    qkv = jnp.einsum("oc,bchw->bohw", w_f, x.astype(jnp.bfloat16),
                     preferred_element_type=jnp.float32)
    if bn_shift is not None:
        qkv = qkv + bn_shift.reshape(1, -1, 1, 1)
    q, k, v = jnp.split(qkv, [K * N, K * N + K * U], axis=1)
    q = q.reshape(B, K, N, M).transpose(0, 2, 1, 3)      # b n k m
    v = v.reshape(B, V, U, M).transpose(0, 2, 1, 3)      # b u v m
    k = jax.nn.softmax(k.reshape(B, U, K, M), axis=-1)   # b u k m
    e = pos_embedding(H, W, ff)                          # (M, K)
    hp = lax.Precision.HIGHEST
    content_lambda = jnp.einsum("bukm,buvm->bkv", k, v, precision=hp)
    position_lambda = jnp.einsum("mk,buvm->bkv", e, v, precision=hp)
    content_output = jnp.einsum("bnkm,bkv->bnvm", q, content_lambda, precision=hp)
    position_output = jnp.einsum("bnkm,bkv->bnvm", q, position_lambda, precision=hp)
    return (content_output + position_output).reshape(B, N * V, H, W)


if __name__ == "__main__":
    key = jax.random.PRNGKey(0)
    B, dim, H, W = 8, 32, 16, 16        # M = 256 (lane-dense); Bb=4 -> grid of 2 steps
    dim_k, dim_u, heads = 16, 1, 4
    dim_v = dim // heads
    C_out = dim_k * heads + dim_k * dim_u + dim_v * dim_u

    k1, k2, k3 = jax.random.split(key, 3)
    x = jax.random.normal(k1, (B, dim, H, W), jnp.float32)
    w_qkv = jax.random.normal(k2, (C_out, dim), jnp.float32) / math.sqrt(dim)
    ff = jax.random.normal(k3, (2, dim_k // 2), jnp.float32) * 10.0   # ff_sigma = 10

    # BatchNorm2d in inference mode with default params (gamma=1, beta=0,
    # running_mean=0, running_var=1) -> per-channel scale 1/sqrt(1+eps), shift 0.
    eps = 1e-5
    bn = 1.0 / math.sqrt(1.0 + eps)
    bn_scale = jnp.concatenate([
        jnp.full((dim_k * heads,), bn, jnp.float32),   # q channels -> norm_q
        jnp.ones((dim_k * dim_u,), jnp.float32),       # k channels -> softmax only
        jnp.full((dim_v * dim_u,), bn, jnp.float32),   # v channels -> norm_v
    ])

    out = lambda_layer_forward(x, w_qkv, ff, bn_scale, bn_shift=None,
                               dim_k=dim_k, dim_u=dim_u, heads=heads)
    out = jax.block_until_ready(out)

    ref = reference_forward(x, w_qkv, ff, bn_scale, bn_shift=None,
                            dim_k=dim_k, dim_u=dim_u, heads=heads)
    assert out.shape == (B, heads * dim_v, H, W)
    max_err = float(jnp.max(jnp.abs(out - ref)))
    assert jnp.allclose(out, ref, atol=3e-3, rtol=3e-3), f"max_err={max_err}"
    print("KERNEL_OK")
</pallas_src>

<mosaic_0001>
module attributes {stable_mosaic.version = 11 : i64} {
  func.func @_lambda_kernel(%arg0: i32, %arg1: memref<4x32x256xbf16, #tpu.memory_space<vmem>>, %arg2: memref<88x32xbf16, #tpu.memory_space<vmem>>, %arg3: memref<16x256xf32, #tpu.memory_space<vmem>>, %arg4: memref<4x4x8x256xf32, #tpu.memory_space<vmem>>) attributes {dimension_semantics = [#tpu.dimension_semantics<parallel>], iteration_bounds = array<i64: 2>, scalar_prefetch = 0 : i64, scratch_operands = 0 : i64, tpu.core_type = #tpu.core_type<tc>, window_params = [{transform_indices = @transform_0, window_bounds = array<i64: 4, 32, 256>}, {pipeline_mode = #tpu.pipeline_mode<synchronous>, transform_indices = @transform_1, window_bounds = array<i64: 88, 32>}, {pipeline_mode = #tpu.pipeline_mode<synchronous>, transform_indices = @transform_2, window_bounds = array<i64: 16, 256>}, {transform_indices = @transform_3, window_bounds = array<i64: 4, 4, 8, 256>}]} {
    %c0 = arith.constant 0 : index
    %c0_0 = arith.constant 0 : index
    %c0_1 = arith.constant 0 : index
    %0 = vector.load %arg1[%c0, %c0_0, %c0_1] : memref<4x32x256xbf16, #tpu.memory_space<vmem>>, vector<4x32x256xbf16>
    %c0_2 = arith.constant 0 : index
    %c0_3 = arith.constant 0 : index
    %1 = vector.load %arg2[%c0_2, %c0_3] : memref<88x32xbf16, #tpu.memory_space<vmem>>, vector<88x32xbf16>
    %2 = vector.shape_cast %1 : vector<88x32xbf16> to vector<1x88x32xbf16>
    %3 = vector.shape_cast %2 : vector<1x88x32xbf16> to vector<1x88x32xbf16>
    %4 = vector.broadcast %3 : vector<1x88x32xbf16> to vector<4x88x32xbf16>
    "tpu.trace_start"() <{level = 10 : i32, message = "boc,bcm->bom"}> : () -> ()
    %cst = arith.constant dense<0.000000e+00> : vector<4x88x256xf32>
    %5 = tpu.matmul %4, %0, %cst {dimension_numbers = #tpu.dot_dimension_numbers<[2], [1], [1], [2], [0, 0, 0, 1, 1, 2], [0], [0]>} : vector<4x88x32xbf16>, vector<4x32x256xbf16>, vector<4x88x256xf32> -> vector<4x88x256xf32>
    "tpu.trace_stop"() : () -> ()
    %6 = vector.extract_strided_slice %5 {offsets = [0, 0, 0], sizes = [4, 64, 256], strides = [1, 1, 1]} : vector<4x88x256xf32> to vector<4x64x256xf32>
    %7 = vector.extract_strided_slice %5 {offsets = [0, 64, 0], sizes = [4, 16, 256], strides = [1, 1, 1]} : vector<4x88x256xf32> to vector<4x16x256xf32>
    %8 = vector.extract_strided_slice %5 {offsets = [0, 80, 0], sizes = [4, 8, 256], strides = [1, 1, 1]} : vector<4x88x256xf32> to vector<4x8x256xf32>
    %cst_4 = arith.constant dense<0xFF800000> : vector<4x16xf32>
    %9 = vector.multi_reduction <maximumf>, %7, %cst_4 [2] : vector<4x16x256xf32> to vector<4x16xf32>
    %10 = vector.shape_cast %9 : vector<4x16xf32> to vector<4x16x1xf32>
    %11 = vector.broadcast %10 : vector<4x16x1xf32> to vector<4x16x256xf32>
    %12 = arith.subf %7, %11 : vector<4x16x256xf32>
    %13 = math.exp %12 : vector<4x16x256xf32>
    %cst_5 = arith.constant dense<0.000000e+00> : vector<4x16xf32>
    %14 = vector.multi_reduction <add>, %13, %cst_5 [2] : vector<4x16x256xf32> to vector<4x16xf32>
    %15 = vector.shape_cast %14 : vector<4x16xf32> to vector<4x16x1xf32>
    %16 = vector.broadcast %15 : vector<4x16x1xf32> to vector<4x16x256xf32>
    %17 = arith.divf %13, %16 : vector<4x16x256xf32>
    %c0_6 = arith.constant 0 : index
    %c0_7 = arith.constant 0 : index
    %18 = vector.load %arg3[%c0_6, %c0_7] : memref<16x256xf32, #tpu.memory_space<vmem>>, vector<16x256xf32>
    %19 = vector.shape_cast %18 : vector<16x256xf32> to vector<1x16x256xf32>
    %20 = vector.broadcast %19 : vector<1x16x256xf32> to vector<4x16x256xf32>
    %21 = arith.addf %17, %20 : vector<4x16x256xf32>
    "tpu.trace_start"() <{level = 10 : i32, message = "bkm,bvm->bkv"}> : () -> ()
    %cst_8 = arith.constant dense<0.000000e+00> : vector<4x16x8xf32>
    %22 = tpu.matmul %21, %8, %cst_8 {dimension_numbers = #tpu.dot_dimension_numbers<[2], [2], [1], [1], [0, 0, 0, 1, 1, 1], [0], [0]>, precision = #tpu.contract_precision<fp32>} : vector<4x16x256xf32>, vector<4x8x256xf32>, vector<4x16x8xf32> -> vector<4x16x8xf32>
    "tpu.trace_stop"() : () -> ()
    %23 = vector.extract_strided_slice %6 {offsets = [0, 0, 0], sizes = [4, 16, 256], strides = [1, 1, 1]} : vector<4x64x256xf32> to vector<4x16x256xf32>
    "tpu.trace_start"() <{level = 10 : i32, message = "bkv,bkm->bvm"}> : () -> ()
    %cst_9 = arith.constant dense<0.000000e+00> : vector<4x8x256xf32>
    %24 = tpu.matmul %22, %23, %cst_9 {dimension_numbers = #tpu.dot_dimension_numbers<[1], [1], [2], [2], [0, 0, 0, 2, 1, 2], [0], [0]>, precision = #tpu.contract_precision<fp32>} : vector<4x16x8xf32>, vector<4x16x256xf32>, vector<4x8x256xf32> -> vector<4x8x256xf32>
    "tpu.trace_stop"() : () -> ()
    %c0_10 = arith.constant 0 : index
    %c0_11 = arith.constant 0 : index
    %c0_12 = arith.constant 0 : index
    %c0_13 = arith.constant 0 : index
    %25 = vector.load %arg4[%c0_10, %c0_11, %c0_12, %c0_13] : memref<4x4x8x256xf32, #tpu.memory_space<vmem>>, vector<4x1x8x256xf32>
    %26 = vector.shape_cast %25 : vector<4x1x8x256xf32> to vector<4x8x256xf32>
    %27 = vector.shape_cast %24 : vector<4x8x256xf32> to vector<4x1x8x256xf32>
    tpu.vector_store %arg4[%c0_10, %c0_11, %c0_12, %c0_13], %27 {strides = array<i32>} : memref<4x4x8x256xf32, #tpu.memory_space<vmem>>, vector<4x1x8x256xf32>,
    %28 = vector.extract_strided_slice %6 {offsets = [0, 16, 0], sizes = [4, 16, 256], strides = [1, 1, 1]} : vector<4x64x256xf32> to vector<4x16x256xf32>
    "tpu.trace_start"() <{level = 10 : i32, message = "bkv,bkm->bvm"}> : () -> ()
    %cst_14 = arith.constant dense<0.000000e+00> : vector<4x8x256xf32>
    %29 = tpu.matmul %22, %28, %cst_14 {dimension_numbers = #tpu.dot_dimension_numbers<[1], [1], [2], [2], [0, 0, 0, 2, 1, 2], [0], [0]>, precision = #tpu.contract_precision<fp32>} : vector<4x16x8xf32>, vector<4x16x256xf32>, vector<4x8x256xf32> -> vector<4x8x256xf32>
    "tpu.trace_stop"() : () -> ()
    %c0_15 = arith.constant 0 : index
    %c1 = arith.constant 1 : index
    %c0_16 = arith.constant 0 : index
    %c0_17 = arith.constant 0 : index
    %30 = vector.load %arg4[%c0_15, %c1, %c0_16, %c0_17] : memref<4x4x8x256xf32, #tpu.memory_space<vmem>>, vector<4x1x8x256xf32>
    %31 = vector.shape_cast %30 : vector<4x1x8x256xf32> to vector<4x8x256xf32>
    %32 = vector.shape_cast %29 : vector<4x8x256xf32> to vector<4x1x8x256xf32>
    tpu.vector_store %arg4[%c0_15, %c1, %c0_16, %c0_17], %32 {strides = array<i32>} : memref<4x4x8x256xf32, #tpu.memory_space<vmem>>, vector<4x1x8x256xf32>,
    %33 = vector.extract_strided_slice %6 {offsets = [0, 32, 0], sizes = [4, 16, 256], strides = [1, 1, 1]} : vector<4x64x256xf32> to vector<4x16x256xf32>
    "tpu.trace_start"() <{level = 10 : i32, message = "bkv,bkm->bvm"}> : () -> ()
    %cst_18 = arith.constant dense<0.000000e+00> : vector<4x8x256xf32>
    %34 = tpu.matmul %22, %33, %cst_18 {dimension_numbers = #tpu.dot_dimension_numbers<[1], [1], [2], [2], [0, 0, 0, 2, 1, 2], [0], [0]>, precision = #tpu.contract_precision<fp32>} : vector<4x16x8xf32>, vector<4x16x256xf32>, vector<4x8x256xf32> -> vector<4x8x256xf32>
    "tpu.trace_stop"() : () -> ()
    %c0_19 = arith.constant 0 : index
    %c2 = arith.constant 2 : index
    %c0_20 = arith.constant 0 : index
    %c0_21 = arith.constant 0 : index
    %35 = vector.load %arg4[%c0_19, %c2, %c0_20, %c0_21] : memref<4x4x8x256xf32, #tpu.memory_space<vmem>>, vector<4x1x8x256xf32>
    %36 = vector.shape_cast %35 : vector<4x1x8x256xf32> to vector<4x8x256xf32>
    %37 = vector.shape_cast %34 : vector<4x8x256xf32> to vector<4x1x8x256xf32>
    tpu.vector_store %arg4[%c0_19, %c2, %c0_20, %c0_21], %37 {strides = array<i32>} : memref<4x4x8x256xf32, #tpu.memory_space<vmem>>, vector<4x1x8x256xf32>,
    %38 = vector.extract_strided_slice %6 {offsets = [0, 48, 0], sizes = [4, 16, 256], strides = [1, 1, 1]} : vector<4x64x256xf32> to vector<4x16x256xf32>
    "tpu.trace_start"() <{level = 10 : i32, message = "bkv,bkm->bvm"}> : () -> ()
    %cst_22 = arith.constant dense<0.000000e+00> : vector<4x8x256xf32>
    %39 = tpu.matmul %22, %38, %cst_22 {dimension_numbers = #tpu.dot_dimension_numbers<[1], [1], [2], [2], [0, 0, 0, 2, 1, 2], [0], [0]>, precision = #tpu.contract_precision<fp32>} : vector<4x16x8xf32>, vector<4x16x256xf32>, vector<4x8x256xf32> -> vector<4x8x256xf32>
    "tpu.trace_stop"() : () -> ()
    %c0_23 = arith.constant 0 : index
    %c3 = arith.constant 3 : index
    %c0_24 = arith.constant 0 : index
    %c0_25 = arith.constant 0 : index
    %40 = vector.load %arg4[%c0_23, %c3, %c0_24, %c0_25] : memref<4x4x8x256xf32, #tpu.memory_space<vmem>>, vector<4x1x8x256xf32>
    %41 = vector.shape_cast %40 : vector<4x1x8x256xf32> to vector<4x8x256xf32>
    %42 = vector.shape_cast %39 : vector<4x8x256xf32> to vector<4x1x8x256xf32>
    tpu.vector_store %arg4[%c0_23, %c3, %c0_24, %c0_25], %42 {strides = array<i32>} : memref<4x4x8x256xf32, #tpu.memory_space<vmem>>, vector<4x1x8x256xf32>,
    return
  }
  func.func @transform_0(%arg0: i32) -> (i32, i32, i32) {
    %c0_i32 = arith.constant 0 : i32
    %c0_i32_0 = arith.constant 0 : i32
    %c0_i32_1 = arith.constant 0 : i32
    return %arg0, %c0_i32, %c0_i32_0 : i32, i32, i32
  }
  func.func @transform_1(%arg0: i32) -> (i32, i32) {
    %c0_i32 = arith.constant 0 : i32
    %c0_i32_0 = arith.constant 0 : i32
    %c0_i32_1 = arith.constant 0 : i32
    return %c0_i32, %c0_i32_0 : i32, i32
  }
  func.func @transform_2(%arg0: i32) -> (i32, i32) {
    %c0_i32 = arith.constant 0 : i32
    %c0_i32_0 = arith.constant 0 : i32
    %c0_i32_1 = arith.constant 0 : i32
    return %c0_i32, %c0_i32_0 : i32, i32
  }
  func.func @transform_3(%arg0: i32) -> (i32, i32, i32, i32) {
    %c0_i32 = arith.constant 0 : i32
    %c0_i32_0 = arith.constant 0 : i32
    %c0_i32_1 = arith.constant 0 : i32
    %c0_i32_2 = arith.constant 0 : i32
    return %arg0, %c0_i32, %c0_i32_0, %c0_i32_1 : i32, i32, i32, i32
  }
}

</mosaic_0001>

<llo_original>
// kernel: tpu_custom_call.1
$region0: #{tpu_custom_call.1}
  #allocation0 [shape = 'u32[]', space=smem, size = 0x4, offset = 0x4, fixed_abs, tag = 'smem constant byte address 0x4 - core index']
  #allocation1 [shape = 'u32[72,128]{1,0:T(1,128)}', space=vmem, size = 0x9000, scoped, tag = 'internal scratch']
  %s0 = inlined_call_operand.hbm [shape: bf16[8,32,256], index: 0, kind: input, shape index: {}]
  %s1 = inlined_call_operand.vmem [shape: bf16[88,32], index: 1, kind: input, shape index: {}]
  %s2 = inlined_call_operand.vmem [shape: f32[16,256], index: 2, kind: input, shape index: {}]
  %s3 = inlined_call_operand.hbm [shape: f32[8,4,8,256], index: 3, kind: output, shape index: {}]
  %s4 = sld [smem:[#allocation0]]
  $region49: #{tpu_custom_call.1} parent=0
    _
  %s6 = ssub.s32 1, %s4
  %s7 = scalar_select 0, %s6, %s4
  $region1: #{tpu_custom_call.1} parent=0
    #allocation2 [shape = 'u8[131072]{0}', space=vmem, size = 0x20000, scoped, tag = 'input window, operand 0']
    #allocation3 [shape = 's32[2]{0}', space=sflag, size = 0x8, scoped, tag = 'scoped memory for tpu_custom_call.1']
    #allocation4 [shape = 's32[2]{0}', space=sflag, size = 0x8, scoped, tag = 'scoped memory for tpu_custom_call.1']
    #allocation5 [shape = 'u8[262144]{0}', space=vmem, size = 0x40000, scoped, tag = 'output window, operand 0']
    %8 = vsyncpa [#allocation3], 0
    %s9 = scalar_lea.sflag [#allocation3], 1
    %10 = vsyncpa %s9, 0
    %11 = vsyncpa [#allocation4], 0
    %s12 = scalar_lea.sflag [#allocation4], 1
    %13 = vsyncpa %s12, 0
    loop: start=0, step=1, limit=4
    $region2: #{tpu_custom_call.1} parent=1 // loop_pre_header
      _
    $region3: #{tpu_custom_call.1} parent=1 // loop_header
      %s15 = sphi 0, %s19
      %p16 = scmp.ge.s32.totalorder %s15, 4
      %s25 = sphi 0, %s27
      %s28 = sphi 0, %s25
      %s29 = sphi 0, %s28
      %s45 = sphi 0, %s29
      %s49 = sphi 0, %s49
      %s51 = sphi 0, %s49
      %s52 = sphi 0, %s51
      %s66 = sphi 0, %s52
      %s70 = sphi 0, %s70
      %s72 = sphi 0, %s70
      %s73 = sphi 0, %s72
      %s87 = sphi 0, %s73
      %s93 = sphi 0, %s95
      %s96 = sphi 0, %s93
      %s97 = sphi 0, %s96
      %s113 = sphi 0, %s97
    $region4: #{tpu_custom_call.1} parent=1 // loop_header_branch
      %18 = sbr.rel (%p16) target = $region8
    $region5: #{tpu_custom_call.1} parent=1 // loop_body
      %s20 = ssub.s32 %s15, 1
      %s21 = ssub.s32 %s15, 2
      %s22 = sadd.s32 %s15, 1
      %s23 = ssub.s32 %s15, %s22
      %p24 = scmp.eq.s32.totalorder %s23, 0
      %s26 = sadd.s32 %s25, 1
      %s27 = scalar_select %p24, %s25, %s26
      %p30 = pneg %p24
      %p31 = scmp.eq.s32.totalorder %s15, 1
      %p32 = por %p30, %p31
      %p33 = scmp.ne.s32.totalorder %s25, %s28
      %p34 = scmp.eq.s32.totalorder %s15, 0
      %p35 = por %p33, %p34
      %p36 = scmp.ne.s32.totalorder %s25, %s28
      %p37 = scmp.eq.s32.totalorder %s20, 1
      %p38 = por %p36, %p37
      %p39 = scmp.ne.s32.totalorder %s28, %s29
      %p40 = scmp.eq.s32.totalorder %s20, 0
      %p41 = por %p39, %p40
      %p42 = scmp.ne.s32.totalorder %s28, %s29
      %p43 = scmp.eq.s32.totalorder %s21, 1
      %p44 = por %p42, %p43
      %p46 = scmp.ne.s32.totalorder %s29, %s45
      %p47 = scmp.eq.s32.totalorder %s21, 0
      %p48 = por %p46, %p47
      %s50 = sadd.s32 %s49, 1
      %p53 = scmp.eq.s32.totalorder %s15, 1
      %p54 = scmp.ne.s32.totalorder %s49, %s51
      %p55 = scmp.eq.s32.totalorder %s15, 0
      %p56 = por %p54, %p55
      %p57 = scmp.ne.s32.totalorder %s49, %s51
      %p58 = scmp.eq.s32.totalorder %s20, 1
      %p59 = por %p57, %p58
      %p60 = scmp.ne.s32.totalorder %s51, %s52
      %p61 = scmp.eq.s32.totalorder %s20, 0
      %p62 = por %p60, %p61
      %p63 = scmp.ne.s32.totalorder %s51, %s52
      %p64 = scmp.eq.s32.totalorder %s21, 1
      %p65 = por %p63, %p64
      %p67 = scmp.ne.s32.totalorder %s52, %s66
      %p68 = scmp.eq.s32.totalorder %s21, 0
      %p69 = por %p67, %p68
      %s71 = sadd.s32 %s70, 1
      %p74 = scmp.eq.s32.totalorder %s15, 1
      %p75 = scmp.ne.s32.totalorder %s70, %s72
      %p76 = scmp.eq.s32.totalorder %s15, 0
      %p77 = por %p75, %p76
      %p78 = scmp.ne.s32.totalorder %s70, %s72
      %p79 = scmp.eq.s32.totalorder %s20, 1
      %p80 = por %p78, %p79
      %p81 = scmp.ne.s32.totalorder %s72, %s73
      %p82 = scmp.eq.s32.totalorder %s20, 0
      %p83 = por %p81, %p82
      %p84 = scmp.ne.s32.totalorder %s72, %s73
      %p85 = scmp.eq.s32.totalorder %s21, 1
      %p86 = por %p84, %p85
      %p88 = scmp.ne.s32.totalorder %s73, %s87
      %p89 = scmp.eq.s32.totalorder %s21, 0
      %p90 = por %p88, %p89
      %s91 = ssub.s32 %s15, %s22
      %p92 = scmp.eq.s32.totalorder %s91, 0
      %s94 = sadd.s32 %s93, 1
      %s95 = scalar_select %p92, %s93, %s94
      %p98 = pneg %p92
      %p99 = scmp.eq.s32.totalorder %s15, 1
      %p100 = por %p98, %p99
      %p101 = scmp.ne.s32.totalorder %s93, %s96
      %p102 = scmp.eq.s32.totalorder %s15, 0
      %p103 = por %p101, %p102
      %p104 = scmp.ne.s32.totalorder %s93, %s96
      %p105 = scmp.eq.s32.totalorder %s20, 1
      %p106 = por %p104, %p105
      %p107 = scmp.ne.s32.totalorder %s96, %s97
      %p108 = scmp.eq.s32.totalorder %s20, 0
      %p109 = por %p107, %p108
      %p110 = scmp.ne.s32.totalorder %s96, %s97
      %p111 = scmp.eq.s32.totalorder %s21, 1
      %p112 = por %p110, %p111
      %p114 = scmp.ne.s32.totalorder %s97, %s113
      %p115 = scmp.eq.s32.totalorder %s21, 0
      %p116 = por %p114, %p115
      %p117 = scmp.le.s32.totalorder 1, %s15
      %p118 = scmp.lt.s32.totalorder %s15, 3
      %p119 = pnand %p117, %p118
      %p120 = pneg %p119
      // Predicated region
      $region9: #{tpu_custom_call.1} parent=5 // pred_check
        _
      $region10: #{tpu_custom_call.1} parent=5 // pred_check_branch
        %122 = sbr.rel (%p119) target = $region12
      $region11: #{tpu_custom_call.1} parent=5 // pred_region
        %s123 = ssub.s32 %s15, 1
        // Predicated region
        $region13: #{tpu_custom_call.1} parent=11 // pred_check
          %p124 = pneg %p62
        $region14: #{tpu_custom_call.1} parent=11 // pred_check_branch
          %126 = sbr.rel (%p124) target = $region16
        $region15: #{tpu_custom_call.1} parent=11 // pred_region
          _
        $region16: #{tpu_custom_call.1} parent=11 // pred_fallthru
          _
        // Predicated region
        $region17: #{tpu_custom_call.1} parent=11 // pred_check
          %p127 = pneg %p83
        $region18: #{tpu_custom_call.1} parent=11 // pred_check_branch
          %129 = sbr.rel (%p127) target = $region20
        $region19: #{tpu_custom_call.1} parent=11 // pred_region
          _
        $region20: #{tpu_custom_call.1} parent=11 // pred_fallthru
          _
      $region12: #{tpu_custom_call.1} parent=5 // pred_fallthru
        _
      %p130 = scmp.lt.s32.totalorder %s15, 2
      // Predicated region
      $region21: #{tpu_custom_call.1} parent=5 // pred_check
        %p131 = pneg %p130
      $region22: #{tpu_custom_call.1} parent=5 // pred_check_branch
        %133 = sbr.rel (%p131) target = $region24
      $region23: #{tpu_custom_call.1} parent=5 // pred_region
        // Predicated region
        $region25: #{tpu_custom_call.1} parent=23 // pred_check
          %p134 = pneg %p35
        $region26: #{tpu_custom_call.1} parent=23 // pred_check_branch
          %136 = sbr.rel (%p134) target = $region28
        $region27: #{tpu_custom_call.1} parent=23 // pred_region
          %s137 = sand.u32 %s25, 1
          %s138 = scalar_lea.sflag [#allocation3], %s137
          %s139 = sand.u32 %s25, 1
          %s140 = smul.addr %s139, 128
          %s141 = scalar_lea.vmem [#allocation2], %s140
          %s142 = smul.u32 4, %s15
          %144 = vsyncadd %s138, 0
          %s145 = smul.addr %s142, 8
          %s146 = smul.addr %s145, 4
          %s147 = scalar_lea.hbm %s0, %s146
          %s148 = sshll.u32 %s147, 4
          %s149 = int_to_ptr.hbm [resolvable:$true] %s148
          %s150 = sshll.u32 %s141, 4
          %s151 = int_to_ptr.vmem [resolvable:$true] %s150
          %156 = dma.hbm_to_vmem [thread:$0]  %s149, 2048, %s151, %s138, 128, 128, 8
        $region28: #{tpu_custom_call.1} parent=23 // pred_fallthru
          _
      $region24: #{tpu_custom_call.1} parent=5 // pred_fallthru
        _
      %p157 = scmp.le.s32.totalorder 1, %s15
      %p158 = scmp.lt.s32.totalorder %s15, 3
      %p159 = pnand %p157, %p158
      %p160 = pneg %p159
      // Predicated region
      $region29: #{tpu_custom_call.1} parent=5 // pred_check
        _
      $region30: #{tpu_custom_call.1} parent=5 // pred_check_branch
        %162 = sbr.rel (%p159) target = $region32
      $region31: #{tpu_custom_call.1} parent=5 // pred_region
        %s163 = ssub.s32 %s15, 1
        %s164 = sand.u32 %s28, 1
        %s165 = scalar_lea.sflag [#allocation3], %s164
        %s166 = sand.u32 %s28, 1
        %s167 = smul.addr %s166, 128
        %s168 = scalar_lea.vmem [#allocation2], %s167
        // Predicated region
        $region33: #{tpu_custom_call.1} parent=31 // pred_check
          %p169 = pneg %p41
        $region34: #{tpu_custom_call.1} parent=31 // pred_check_branch
          %171 = sbr.rel (%p169) target = $region36
        $region35: #{tpu_custom_call.1} parent=31 // pred_region
          %173 = dma.done %s165, 2048
        $region36: #{tpu_custom_call.1} parent=31 // pred_fallthru
          _
        %s174 = sand.u32 %s28, 1
        %s175 = scalar_lea.sflag [#allocation3], %s174
        %s176 = sand.u32 %s28, 1
        %s177 = smul.addr %s176, 128
        %s178 = scalar_lea.vmem [#allocation2], %s177
        %p179 = pneg %p41
        %p180 = pneg %p38
        %p181 = pneg %p62
        %p182 = pneg %p59
        %p183 = pneg %p83
        %p184 = pneg %p80
        %p185 = pneg %p109
        %p186 = pneg %p106
        %s187 = sand.u32 %s96, 1
        %s188 = scalar_lea.sflag [#allocation4], %s187
        %s189 = sand.u32 %s96, 1
        %s190 = smul.addr %s189, 256
        %s191 = scalar_lea.vmem [#allocation5], %s190
        %s192 = smul.u32 4, %s20
        %s193 = smul.u32 4, %s20
        %v195 = vld [vmem:[%s168] sm:$0xff]
        %v196 = vld [vmem:[%s168 + $0x8] sm:$0xff]
        %v197 = vld [vmem:[%s168 + $0x10] sm:$0xff]
        %v198 = vld [vmem:[%s168 + $0x18] sm:$0xff]
        %v199 = vld [vmem:[%s168 + $0x20] sm:$0xff]
        %v200 = vld [vmem:[%s168 + $0x28] sm:$0xff]
        %v201 = vld [vmem:[%s168 + $0x30] sm:$0xff]
        %v202 = vld [vmem:[%s168 + $0x38] sm:$0xff]
        %v203 = vld [vmem:[%s168 + $0x40] sm:$0xff]
        %v204 = vld [vmem:[%s168 + $0x48] sm:$0xff]
        %v205 = vld [vmem:[%s168 + $0x50] sm:$0xff]
        %v206 = vld [vmem:[%s168 + $0x58] sm:$0xff]
        %v207 = vld [vmem:[%s168 + $0x60] sm:$0xff]
        %v208 = vld [vmem:[%s168 + $0x68] sm:$0xff]
        %v209 = vld [vmem:[%s168 + $0x70] sm:$0xff]
        %v210 = vld [vmem:[%s168 + $0x78] sm:$0xff]
        %v211 = vld [vmem:[%s1] sm:$0xf]
        %v212 = vld [vmem:[%s1 + $0x4] sm:$0xf]
        %v213 = vld [vmem:[%s1 + $0x8] sm:$0xf]
        %v214 = vld [vmem:[%s1 + $0xc] sm:$0xf]
        %v215 = vld [vmem:[%s1 + $0x10] sm:$0xf]
        %v216 = vld [vmem:[%s1 + $0x14] sm:$0xf]
        %v217 = vld [vmem:[%s1 + $0x18] sm:$0xf]
        %v218 = vld [vmem:[%s1 + $0x1c] sm:$0xf]
        %v219 = vld [vmem:[%s1 + $0x20] sm:$0xf]
        %v220 = vld [vmem:[%s1 + $0x24] sm:$0xf]
        %v221 = vld [vmem:[%s1 + $0x28] sm:$0xf]
        %v233 = vunpack.c.l.b16 %v211
        %v234 = vunpack.c.l.b16 %v212
        %v235 = vunpack.c.l.b16 %v213
        %v236 = vunpack.c.l.b16 %v214
        %v237 = vunpack.c.l.b16 %v215
        %v238 = vunpack.c.l.b16 %v216
        %v239 = vunpack.c.l.b16 %v217
        %v240 = vunpack.c.l.b16 %v218
        %v241 = vunpack.c.l.b16 %v219
        %v242 = vunpack.c.l.b16 %v220
        %v243 = vunpack.c.l.b16 %v221
        %v244 = vpack.c.b16 %v234, %v233
        %v245 = vpack.c.b16 %v236, %v235
        %v246 = vpack.c.b16 %v238, %v237
        %v247 = vpack.c.b16 %v240, %v239
        %v248 = vpack.c.b16 %v242, %v241
        %v249 = vpack.c.b16 %v243, %v243
        %v254 = vunpack.c.l.b16 %v195
        %v255 = vunpack.c.h.b16 %v195
        %v256 = vunpack.c.l.b16 %v196
        %v257 = vunpack.c.h.b16 %v196
        %v258 = vunpack.c.l.b16 %v197
        %v259 = vunpack.c.h.b16 %v197
        %v260 = vunpack.c.l.b16 %v198
        %v261 = vunpack.c.h.b16 %v198
        %v262 = vpack.c.b16 %v256, %v254
        %v263 = vpack.c.b16 %v257, %v255
        %v264 = vpack.c.b16 %v260, %v258
        %v265 = vpack.c.b16 %v261, %v259
        %vm270 = vcmask 261120
        %v272 = vsel %vm270, %v244, 0
        %v275 = vsel %vm270, %v245, 0
        %v278 = vsel %vm270, %v246, 0
        %v281 = vsel %vm270, %v247, 0
        %v284 = vsel %vm270, %v248, 0
        %v287 = vsel %vm270, %v249, 0
        %289 = vmatpush.bf16.msra.mxu0 0
        %290 = vmatpush.bf16.msra.mxu0 0
        %291 = vmatpush.bf16.msra.mxu0 0
        %292 = vmatpush.bf16.msra.mxu0 0
        %293 = vmatpush.bf16.msra.mxu0 0
        %294 = vmatpush.bf16.msra.mxu0 0
        %295 = vmatpush.bf16.msra.mxu0 %v264
        %296 = vmatpush.bf16.msra.mxu0 %v262
        %297 = vmatmul.bf16.gmra.mxu0 %v272
        %v298 = vpop.f32.mrf.mxu0
        %v299 = vadd.f32 0.0, %v298
        %v300 = vpop.f32.mrf.mxu0
        %v301 = vadd.f32 0.0, %v300
        %302 = vmatmul.bf16.gmra.mxu0 %v275
        %v303 = vpop.f32.mrf.mxu0
        %v304 = vadd.f32 0.0, %v303
        %v305 = vpop.f32.mrf.mxu0
        %v306 = vadd.f32 0.0, %v305
        %307 = vmatmul.bf16.gmra.mxu0 %v278
        %v308 = vpop.f32.mrf.mxu0
        %v309 = vadd.f32 0.0, %v308
        %v310 = vpop.f32.mrf.mxu0
        %v311 = vadd.f32 0.0, %v310
        %312 = vmatmul.bf16.gmra.mxu0 %v281
        %v313 = vpop.f32.mrf.mxu0
        %v314 = vadd.f32 0.0, %v313
        %v315 = vpop.f32.mrf.mxu0
        %v316 = vadd.f32 0.0, %v315
        %317 = vmatmul.bf16.gmra.mxu0 %v284
        %v318 = vpop.f32.mrf.mxu0
        %v319 = vadd.f32 0.0, %v318
        %v320 = vpop.f32.mrf.mxu0
        %v321 = vadd.f32 0.0, %v320
        %322 = vmatmul.bf16.gmra.mxu0 %v287
        %v323 = vpop.f32.mrf.mxu0
        %v324 = vadd.f32 0.0, %v323
        %v325 = vpop.f32.mrf.mxu0
        %326 = vdwg.mxu0
        %327 = vmatpush.bf16.msra.mxu0 0
        %328 = vmatpush.bf16.msra.mxu0 0
        %329 = vmatpush.bf16.msra.mxu0 0
        %330 = vmatpush.bf16.msra.mxu0 0
        %331 = vmatpush.bf16.msra.mxu0 0
        %332 = vmatpush.bf16.msra.mxu0 0
        %333 = vmatpush.bf16.msra.mxu0 %v265
        %334 = vmatpush.bf16.msra.mxu0 %v263
        %335 = vmatmul.bf16.gmra.mxu0 %v272
        %v336 = vpop.f32.mrf.mxu0
        %v337 = vadd.f32 0.0, %v336
        %v338 = vpop.f32.mrf.mxu0
        %v339 = vadd.f32 0.0, %v338
        %340 = vmatmul.bf16.gmra.mxu0 %v275
        %v341 = vpop.f32.mrf.mxu0
        %v342 = vadd.f32 0.0, %v341
        %v343 = vpop.f32.mrf.mxu0
        %v344 = vadd.f32 0.0, %v343
        %345 = vmatmul.bf16.gmra.mxu0 %v278
        %v346 = vpop.f32.mrf.mxu0
        %v347 = vadd.f32 0.0, %v346
        %v348 = vpop.f32.mrf.mxu0
        %v349 = vadd.f32 0.0, %v348
        %350 = vmatmul.bf16.gmra.mxu0 %v281
        %v351 = vpop.f32.mrf.mxu0
        %v352 = vadd.f32 0.0, %v351
        %v353 = vpop.f32.mrf.mxu0
        %v354 = vadd.f32 0.0, %v353
        %355 = vmatmul.bf16.gmra.mxu0 %v284
        %v356 = vpop.f32.mrf.mxu0
        %v357 = vadd.f32 0.0, %v356
        %v358 = vpop.f32.mrf.mxu0
        %v359 = vadd.f32 0.0, %v358
        %360 = vmatmul.bf16.gmra.mxu0 %v287
        %v361 = vpop.f32.mrf.mxu0
        %v362 = vadd.f32 0.0, %v361
        %v363 = vpop.f32.mrf.mxu0
        %364 = vdwg.mxu0
        %v369 = vunpack.c.l.b16 %v199
        %v370 = vunpack.c.h.b16 %v199
        %v371 = vunpack.c.l.b16 %v200
        %v372 = vunpack.c.h.b16 %v200
        %v373 = vunpack.c.l.b16 %v201
        %v374 = vunpack.c.h.b16 %v201
        %v375 = vunpack.c.l.b16 %v202
        %v376 = vunpack.c.h.b16 %v202
        %v377 = vpack.c.b16 %v371, %v369
        %v378 = vpack.c.b16 %v372, %v370
        %v379 = vpack.c.b16 %v375, %v373
        %v380 = vpack.c.b16 %v376, %v374
        %385 = vmatpush.bf16.msra.mxu0 0
        %386 = vmatpush.bf16.msra.mxu0 0
        %387 = vmatpush.bf16.msra.mxu0 0
        %388 = vmatpush.bf16.msra.mxu0 0
        %389 = vmatpush.bf16.msra.mxu0 0
        %390 = vmatpush.bf16.msra.mxu0 0
        %391 = vmatpush.bf16.msra.mxu0 %v379
        %392 = vmatpush.bf16.msra.mxu0 %v377
        %393 = vmatmul.bf16.gmra.mxu0 %v272
        %v394 = vpop.f32.mrf.mxu0
        %v395 = vadd.f32 0.0, %v394
        %v396 = vpop.f32.mrf.mxu0
        %v397 = vadd.f32 0.0, %v396
        %398 = vmatmul.bf16.gmra.mxu0 %v275
        %v399 = vpop.f32.mrf.mxu0
        %v400 = vadd.f32 0.0, %v399
        %v401 = vpop.f32.mrf.mxu0
        %v402 = vadd.f32 0.0, %v401
        %403 = vmatmul.bf16.gmra.mxu0 %v278
        %v404 = vpop.f32.mrf.mxu0
        %v405 = vadd.f32 0.0, %v404
        %v406 = vpop.f32.mrf.mxu0
        %v407 = vadd.f32 0.0, %v406
        %408 = vmatmul.bf16.gmra.mxu0 %v281
        %v409 = vpop.f32.mrf.mxu0
        %v410 = vadd.f32 0.0, %v409
        %v411 = vpop.f32.mrf.mxu0
        %v412 = vadd.f32 0.0, %v411
        %413 = vmatmul.bf16.gmra.mxu0 %v284
        %v414 = vpop.f32.mrf.mxu0
        %v415 = vadd.f32 0.0, %v414
        %v416 = vpop.f32.mrf.mxu0
        %v417 = vadd.f32 0.0, %v416
        %418 = vmatmul.bf16.gmra.mxu0 %v287
        %v419 = vpop.f32.mrf.mxu0
        %v420 = vadd.f32 0.0, %v419
        %v421 = vpop.f32.mrf.mxu0
        %422 = vdwg.mxu0
        %423 = vmatpush.bf16.msra.mxu0 0
        %424 = vmatpush.bf16.msra.mxu0 0
        %425 = vmatpush.bf16.msra.mxu0 0
        %426 = vmatpush.bf16.msra.mxu0 0
        %427 = vmatpush.bf16.msra.mxu0 0
        %428 = vmatpush.bf16.msra.mxu0 0
        %429 = vmatpush.bf16.msra.mxu0 %v380
        %430 = vmatpush.bf16.msra.mxu0 %v378
        %431 = vmatmul.bf16.gmra.mxu0 %v272
        %v432 = vpop.f32.mrf.mxu0
        %v433 = vadd.f32 0.0, %v432
        %v434 = vpop.f32.mrf.mxu0
        %v435 = vadd.f32 0.0, %v434
        %436 = vmatmul.bf16.gmra.mxu0 %v275
        %v437 = vpop.f32.mrf.mxu0
        %v438 = vadd.f32 0.0, %v437
        %v439 = vpop.f32.mrf.mxu0
        %v440 = vadd.f32 0.0, %v439
        %441 = vmatmul.bf16.gmra.mxu0 %v278
        %v442 = vpop.f32.mrf.mxu0
        %v443 = vadd.f32 0.0, %v442
        %v444 = vpop.f32.mrf.mxu0
        %v445 = vadd.f32 0.0, %v444
        %446 = vmatmul.bf16.gmra.mxu0 %v281
        %v447 = vpop.f32.mrf.mxu0
        %v448 = vadd.f32 0.0, %v447
        %v449 = vpop.f32.mrf.mxu0
        %v450 = vadd.f32 0.0, %v449
        %451 = vmatmul.bf16.gmra.mxu0 %v284
        %v452 = vpop.f32.mrf.mxu0
        %v453 = vadd.f32 0.0, %v452
        %v454 = vpop.f32.mrf.mxu0
        %v455 = vadd.f32 0.0, %v454
        %456 = vmatmul.bf16.gmra.mxu0 %v287
        %v457 = vpop.f32.mrf.mxu0
        %v458 = vadd.f32 0.0, %v457
        %v459 = vpop.f32.mrf.mxu0
        %460 = vdwg.mxu0
        %v465 = vunpack.c.l.b16 %v203
        %v466 = vunpack.c.h.b16 %v203
        %v467 = vunpack.c.l.b16 %v204
        %v468 = vunpack.c.h.b16 %v204
        %v469 = vunpack.c.l.b16 %v205
        %v470 = vunpack.c.h.b16 %v205
        %v471 = vunpack.c.l.b16 %v206
        %v472 = vunpack.c.h.b16 %v206
        %v473 = vpack.c.b16 %v467, %v465
        %v474 = vpack.c.b16 %v468, %v466
        %v475 = vpack.c.b16 %v471, %v469
        %v476 = vpack.c.b16 %v472, %v470
        %481 = vmatpush.bf16.msra.mxu0 0
        %482 = vmatpush.bf16.msra.mxu0 0
        %483 = vmatpush.bf16.msra.mxu0 0
        %484 = vmatpush.bf16.msra.mxu0 0
        %485 = vmatpush.bf16.msra.mxu0 0
        %486 = vmatpush.bf16.msra.mxu0 0
        %487 = vmatpush.bf16.msra.mxu0 %v475
        %488 = vmatpush.bf16.msra.mxu0 %v473
        %489 = vmatmul.bf16.gmra.mxu0 %v272
        %v490 = vpop.f32.mrf.mxu0
        %v491 = vadd.f32 0.0, %v490
        %v492 = vpop.f32.mrf.mxu0
        %v493 = vadd.f32 0.0, %v492
        %494 = vmatmul.bf16.gmra.mxu0 %v275
        %v495 = vpop.f32.mrf.mxu0
        %v496 = vadd.f32 0.0, %v495
        %v497 = vpop.f32.mrf.mxu0
        %v498 = vadd.f32 0.0, %v497
        %499 = vmatmul.bf16.gmra.mxu0 %v278
        %v500 = vpop.f32.mrf.mxu0
        %v501 = vadd.f32 0.0, %v500
        %v502 = vpop.f32.mrf.mxu0
        %v503 = vadd.f32 0.0, %v502
        %504 = vmatmul.bf16.gmra.mxu0 %v281
        %v505 = vpop.f32.mrf.mxu0
        %v506 = vadd.f32 0.0, %v505
        %v507 = vpop.f32.mrf.mxu0
        %v508 = vadd.f32 0.0, %v507
        %509 = vmatmul.bf16.gmra.mxu0 %v284
        %v510 = vpop.f32.mrf.mxu0
        %v511 = vadd.f32 0.0, %v510
        %v512 = vpop.f32.mrf.mxu0
        %v513 = vadd.f32 0.0, %v512
        %514 = vmatmul.bf16.gmra.mxu0 %v287
        %v515 = vpop.f32.mrf.mxu0
        %v516 = vadd.f32 0.0, %v515
        %v517 = vpop.f32.mrf.mxu0
        %518 = vdwg.mxu0
        %519 = vmatpush.bf16.msra.mxu0 0
        %520 = vmatpush.bf16.msra.mxu0 0
        %521 = vmatpush.bf16.msra.mxu0 0
        %522 = vmatpush.bf16.msra.mxu0 0
        %523 = vmatpush.bf16.msra.mxu0 0
        %524 = vmatpush.bf16.msra.mxu0 0
        %525 = vmatpush.bf16.msra.mxu0 %v476
        %526 = vmatpush.bf16.msra.mxu0 %v474
        %527 = vmatmul.bf16.gmra.mxu0 %v272
        %v528 = vpop.f32.mrf.mxu0
        %v529 = vadd.f32 0.0, %v528
        %v530 = vpop.f32.mrf.mxu0
        %v531 = vadd.f32 0.0, %v530
        %532 = vmatmul.bf16.gmra.mxu0 %v275
        %v533 = vpop.f32.mrf.mxu0
        %v534 = vadd.f32 0.0, %v533
        %v535 = vpop.f32.mrf.mxu0
        %v536 = vadd.f32 0.0, %v535
        %537 = vmatmul.bf16.gmra.mxu0 %v278
        %v538 = vpop.f32.mrf.mxu0
        %v539 = vadd.f32 0.0, %v538
        %v540 = vpop.f32.mrf.mxu0
        %v541 = vadd.f32 0.0, %v540
        %542 = vmatmul.bf16.gmra.mxu0 %v281
        %v543 = vpop.f32.mrf.mxu0
        %v544 = vadd.f32 0.0, %v543
        %v545 = vpop.f32.mrf.mxu0
        %v546 = vadd.f32 0.0, %v545
        %547 = vmatmul.bf16.gmra.mxu0 %v284
        %v548 = vpop.f32.mrf.mxu0
        %v549 = vadd.f32 0.0, %v548
        %v550 = vpop.f32.mrf.mxu0
        %v551 = vadd.f32 0.0, %v550
        %552 = vmatmul.bf16.gmra.mxu0 %v287
        %v553 = vpop.f32.mrf.mxu0
        %v554 = vadd.f32 0.0, %v553
        %v555 = vpop.f32.mrf.mxu0
        %556 = vdwg.mxu0
        %v561 = vunpack.c.l.b16 %v207
        %v562 = vunpack.c.h.b16 %v207
        %v563 = vunpack.c.l.b16 %v208
        %v564 = vunpack.c.h.b16 %v208
        %v565 = vunpack.c.l.b16 %v209
        %v566 = vunpack.c.h.b16 %v209
        %v567 = vunpack.c.l.b16 %v210
        %v568 = vunpack.c.h.b16 %v210
        %v569 = vpack.c.b16 %v563, %v561
        %v570 = vpack.c.b16 %v564, %v562
        %v571 = vpack.c.b16 %v567, %v565
        %v572 = vpack.c.b16 %v568, %v566
        %577 = vmatpush.bf16.msra.mxu0 0
        %578 = vmatpush.bf16.msra.mxu0 0
        %579 = vmatpush.bf16.msra.mxu0 0
        %580 = vmatpush.bf16.msra.mxu0 0
        %581 = vmatpush.bf16.msra.mxu0 0
        %582 = vmatpush.bf16.msra.mxu0 0
        %583 = vmatpush.bf16.msra.mxu0 %v571
        %584 = vmatpush.bf16.msra.mxu0 %v569
        %585 = vmatmul.bf16.gmra.mxu0 %v272
        %v586 = vpop.f32.mrf.mxu0
        %v587 = vadd.f32 0.0, %v586
        %v588 = vpop.f32.mrf.mxu0
        %v589 = vadd.f32 0.0, %v588
        %590 = vmatmul.bf16.gmra.mxu0 %v275
        %v591 = vpop.f32.mrf.mxu0
        %v592 = vadd.f32 0.0, %v591
        %v593 = vpop.f32.mrf.mxu0
        %v594 = vadd.f32 0.0, %v593
        %595 = vmatmul.bf16.gmra.mxu0 %v278
        %v596 = vpop.f32.mrf.mxu0
        %v597 = vadd.f32 0.0, %v596
        %v598 = vpop.f32.mrf.mxu0
        %v599 = vadd.f32 0.0, %v598
        %600 = vmatmul.bf16.gmra.mxu0 %v281
        %v601 = vpop.f32.mrf.mxu0
        %v602 = vadd.f32 0.0, %v601
        %v603 = vpop.f32.mrf.mxu0
        %v604 = vadd.f32 0.0, %v603
        %605 = vmatmul.bf16.gmra.mxu0 %v284
        %v606 = vpop.f32.mrf.mxu0
        %v607 = vadd.f32 0.0, %v606
        %v608 = vpop.f32.mrf.mxu0
        %v609 = vadd.f32 0.0, %v608
        %610 = vmatmul.bf16.gmra.mxu0 %v287
        %v611 = vpop.f32.mrf.mxu0
        %v612 = vadd.f32 0.0, %v611
        %v613 = vpop.f32.mrf.mxu0
        %614 = vdwg.mxu0
        %615 = vmatpush.bf16.msra.mxu0 0
        %616 = vmatpush.bf16.msra.mxu0 0
        %617 = vmatpush.bf16.msra.mxu0 0
        %618 = vmatpush.bf16.msra.mxu0 0
        %619 = vmatpush.bf16.msra.mxu0 0
        %620 = vmatpush.bf16.msra.mxu0 0
        %621 = vmatpush.bf16.msra.mxu0 %v572
        %622 = vmatpush.bf16.msra.mxu0 %v570
        %623 = vmatmul.bf16.gmra.mxu0 %v272
        %v624 = vpop.f32.mrf.mxu0
        %v625 = vadd.f32 0.0, %v624
        %v626 = vpop.f32.mrf.mxu0
        %v627 = vadd.f32 0.0, %v626
        %628 = vmatmul.bf16.gmra.mxu0 %v275
        %v629 = vpop.f32.mrf.mxu0
        %v630 = vadd.f32 0.0, %v629
        %v631 = vpop.f32.mrf.mxu0
        %v632 = vadd.f32 0.0, %v631
        %633 = vmatmul.bf16.gmra.mxu0 %v278
        %v634 = vpop.f32.mrf.mxu0
        %v635 = vadd.f32 0.0, %v634
        %v636 = vpop.f32.mrf.mxu0
        %v637 = vadd.f32 0.0, %v636
        %638 = vmatmul.bf16.gmra.mxu0 %v281
        %v639 = vpop.f32.mrf.mxu0
        %v640 = vadd.f32 0.0, %v639
        %v641 = vpop.f32.mrf.mxu0
        %v642 = vadd.f32 0.0, %v641
        %643 = vmatmul.bf16.gmra.mxu0 %v284
        %v644 = vpop.f32.mrf.mxu0
        %v645 = vadd.f32 0.0, %v644
        %v646 = vpop.f32.mrf.mxu0
        %v647 = vadd.f32 0.0, %v646
        %648 = vmatmul.bf16.gmra.mxu0 %v287
        %v649 = vpop.f32.mrf.mxu0
        %v650 = vadd.f32 0.0, %v649
        %v651 = vpop.f32.mrf.mxu0
        %652 = vdwg.mxu0
        %v653 = vmax.f32 %v319, %v357
        %654 = vmax.xlane.f32.xlu0 %v653
        %v655 = vpop.xlane.xlu0 %654
        %v656 = vmax.f32 %v321, %v359
        %657 = vmax.xlane.f32.xlu0 %v656
        %v658 = vpop.xlane.xlu0 %657
        %v659 = vmax.f32 %v415, %v453
        %660 = vmax.xlane.f32.xlu0 %v659
        %v661 = vpop.xlane.xlu0 %660
        %v662 = vmax.f32 %v417, %v455
        %663 = vmax.xlane.f32.xlu0 %v662
        %v664 = vpop.xlane.xlu0 %663
        %v665 = vmax.f32 %v511, %v549
        %666 = vmax.xlane.f32.xlu0 %v665
        %v667 = vpop.xlane.xlu0 %666
        %v668 = vmax.f32 %v513, %v551
        %669 = vmax.xlane.f32.xlu0 %v668
        %v670 = vpop.xlane.xlu0 %669
        %v671 = vmax.f32 %v607, %v645
        %672 = vmax.xlane.f32.xlu0 %v671
        %v673 = vpop.xlane.xlu0 %672
        %v674 = vmax.f32 %v609, %v647
        %675 = vmax.xlane.f32.xlu0 %v674
        %v676 = vpop.xlane.xlu0 %675
        %v677 = vsub.f32 %v319, %v655
        %v678 = vsub.f32 %v357, %v655
        %v679 = vsub.f32 %v321, %v658
        %v680 = vsub.f32 %v359, %v658
        %v681 = vsub.f32 %v415, %v661
        %v682 = vsub.f32 %v453, %v661
        %v683 = vsub.f32 %v417, %v664
        %v684 = vsub.f32 %v455, %v664
        %v685 = vsub.f32 %v511, %v667
        %v686 = vsub.f32 %v549, %v667
        %v687 = vsub.f32 %v513, %v670
        %v688 = vsub.f32 %v551, %v670
        %v689 = vsub.f32 %v607, %v673
        %v690 = vsub.f32 %v645, %v673
        %v691 = vsub.f32 %v609, %v676
        %v692 = vsub.f32 %v647, %v676
        %v693 = vmul.f32 %v677, 1.442695
        %v694 = vpow.pop %v693
        %v695 = vmul.f32 %v678, 1.442695
        %v696 = vpow.pop %v695
        %v697 = vmul.f32 %v679, 1.442695
        %v698 = vpow.pop %v697
        %v699 = vmul.f32 %v680, 1.442695
        %v700 = vpow.pop %v699
        %v701 = vmul.f32 %v681, 1.442695
        %v702 = vpow.pop %v701
        %v703 = vmul.f32 %v682, 1.442695
        %v704 = vpow.pop %v703
        %v705 = vmul.f32 %v683, 1.442695
        %v706 = vpow.pop %v705
        %v707 = vmul.f32 %v684, 1.442695
        %v708 = vpow.pop %v707
        %v709 = vmul.f32 %v685, 1.442695
        %v710 = vpow.pop %v709
        %v711 = vmul.f32 %v686, 1.442695
        %v712 = vpow.pop %v711
        %v713 = vmul.f32 %v687, 1.442695
        %v714 = vpow.pop %v713
        %v715 = vmul.f32 %v688, 1.442695
        %v716 = vpow.pop %v715
        %v717 = vmul.f32 %v689, 1.442695
        %v718 = vpow.pop %v717
        %v719 = vmul.f32 %v690, 1.442695
        %v720 = vpow.pop %v719
        %v721 = vmul.f32 %v691, 1.442695
        %v722 = vpow.pop %v721
        %v723 = vmul.f32 %v692, 1.442695
        %v724 = vpow.pop %v723
        %v725 = vadd.f32 %v694, %v696
        %726 = vadd.xlane.f32.xlu0 %v725
        %v727 = vpop.xlane.xlu0 %726
        %v728 = vadd.f32 %v698, %v700
        %729 = vadd.xlane.f32.xlu0 %v728
        %v730 = vpop.xlane.xlu0 %729
        %v731 = vadd.f32 %v702, %v704
        %732 = vadd.xlane.f32.xlu0 %v731
        %v733 = vpop.xlane.xlu0 %732
        %v734 = vadd.f32 %v706, %v708
        %735 = vadd.xlane.f32.xlu0 %v734
        %v736 = vpop.xlane.xlu0 %735
        %v737 = vadd.f32 %v710, %v712
        %738 = vadd.xlane.f32.xlu0 %v737
        %v739 = vpop.xlane.xlu0 %738
        %v740 = vadd.f32 %v714, %v716
        %741 = vadd.xlane.f32.xlu0 %v740
        %v742 = vpop.xlane.xlu0 %741
        %v743 = vadd.f32 %v718, %v720
        %744 = vadd.xlane.f32.xlu0 %v743
        %v745 = vpop.xlane.xlu0 %744
        %v746 = vadd.f32 %v722, %v724
        %747 = vadd.xlane.f32.xlu0 %v746
        %v748 = vpop.xlane.xlu0 %747
        %v749 = vrcp.pop %v727
        %v750 = vmul.f32 %v727, %v749
        %v751 = vsub.f32 1.0, %v750
        %v752 = vmul.f32 %v749, %v751
        %v753 = vadd.f32 %v749, %v752
        %vm754 = vweird.f32 %v727
        %vm755 = vweird.f32 %v749
        %vm756 = vmor %vm754, %vm755
        %v757 = vsel %vm756, %v749, %v753
        %v758 = vand.u32 2147483647, %v727
        %vm759 = vcmp.eq.f32.partialorder %v758, 8.507059e+37
        %v760 = vand.u32 %v727, 2147483648
        %v761 = vor.u32 1.1754944e-38, %v760
        %v762 = vsel %vm759, %v761, %v757
        %v763 = vmul.f32 %v694, %v762
        %v764 = vmul.f32 %v696, %v762
        %v765 = vrcp.pop %v730
        %v766 = vmul.f32 %v730, %v765
        %v767 = vsub.f32 1.0, %v766
        %v768 = vmul.f32 %v765, %v767
        %v769 = vadd.f32 %v765, %v768
        %vm770 = vweird.f32 %v730
        %vm771 = vweird.f32 %v765
        %vm772 = vmor %vm770, %vm771
        %v773 = vsel %vm772, %v765, %v769
        %v774 = vand.u32 2147483647, %v730
        %vm775 = vcmp.eq.f32.partialorder %v774, 8.507059e+37
        %v776 = vand.u32 %v730, 2147483648
        %v777 = vor.u32 1.1754944e-38, %v776
        %v778 = vsel %vm775, %v777, %v773
        %v779 = vmul.f32 %v698, %v778
        %v780 = vmul.f32 %v700, %v778
        %v781 = vrcp.pop %v733
        %v782 = vmul.f32 %v733, %v781
        %v783 = vsub.f32 1.0, %v782
        %v784 = vmul.f32 %v781, %v783
        %v785 = vadd.f32 %v781, %v784
        %vm786 = vweird.f32 %v733
        %vm787 = vweird.f32 %v781
        %vm788 = vmor %vm786, %vm787
        %v789 = vsel %vm788, %v781, %v785
        %v790 = vand.u32 2147483647, %v733
        %vm791 = vcmp.eq.f32.partialorder %v790, 8.507059e+37
        %v792 = vand.u32 %v733, 2147483648
        %v793 = vor.u32 1.1754944e-38, %v792
        %v794 = vsel %vm791, %v793, %v789
        %v795 = vmul.f32 %v702, %v794
        %v796 = vmul.f32 %v704, %v794
        %v797 = vrcp.pop %v736
        %v798 = vmul.f32 %v736, %v797
        %v799 = vsub.f32 1.0, %v798
        %v800 = vmul.f32 %v797, %v799
        %v801 = vadd.f32 %v797, %v800
        %vm802 = vweird.f32 %v736
        %vm803 = vweird.f32 %v797
        %vm804 = vmor %vm802, %vm803
        %v805 = vsel %vm804, %v797, %v801
        %v806 = vand.u32 2147483647, %v736
        %vm807 = vcmp.eq.f32.partialorder %v806, 8.507059e+37
        %v808 = vand.u32 %v736, 2147483648
        %v809 = vor.u32 1.1754944e-38, %v808
        %v810 = vsel %vm807, %v809, %v805
        %v811 = vmul.f32 %v706, %v810
        %v812 = vmul.f32 %v708, %v810
        %v813 = vrcp.pop %v739
        %v814 = vmul.f32 %v739, %v813
        %v815 = vsub.f32 1.0, %v814
        %v816 = vmul.f32 %v813, %v815
        %v817 = vadd.f32 %v813, %v816
        %vm818 = vweird.f32 %v739
        %vm819 = vweird.f32 %v813
        %vm820 = vmor %vm818, %vm819
        %v821 = vsel %vm820, %v813, %v817
        %v822 = vand.u32 2147483647, %v739
        %vm823 = vcmp.eq.f32.partialorder %v822, 8.507059e+37
        %v824 = vand.u32 %v739, 2147483648
        %v825 = vor.u32 1.1754944e-38, %v824
        %v826 = vsel %vm823, %v825, %v821
        %v827 = vmul.f32 %v710, %v826
        %v828 = vmul.f32 %v712, %v826
        %v829 = vrcp.pop %v742
        %v830 = vmul.f32 %v742, %v829
        %v831 = vsub.f32 1.0, %v830
        %v832 = vmul.f32 %v829, %v831
        %v833 = vadd.f32 %v829, %v832
        %vm834 = vweird.f32 %v742
        %vm835 = vweird.f32 %v829
        %vm836 = vmor %vm834, %vm835
        %v837 = vsel %vm836, %v829, %v833
        %v838 = vand.u32 2147483647, %v742
        %vm839 = vcmp.eq.f32.partialorder %v838, 8.507059e+37
        %v840 = vand.u32 %v742, 2147483648
        %v841 = vor.u32 1.1754944e-38, %v840
        %v842 = vsel %vm839, %v841, %v837
        %v843 = vmul.f32 %v714, %v842
        %v844 = vmul.f32 %v716, %v842
        %v845 = vrcp.pop %v745
        %v846 = vmul.f32 %v745, %v845
        %v847 = vsub.f32 1.0, %v846
        %v848 = vmul.f32 %v845, %v847
        %v849 = vadd.f32 %v845, %v848
        %vm850 = vweird.f32 %v745
        %vm851 = vweird.f32 %v845
        %vm852 = vmor %vm850, %vm851
        %v853 = vsel %vm852, %v845, %v849
        %v854 = vand.u32 2147483647, %v745
        %vm855 = vcmp.eq.f32.partialorder %v854, 8.507059e+37
        %v856 = vand.u32 %v745, 2147483648
        %v857 = vor.u32 1.1754944e-38, %v856
        %v858 = vsel %vm855, %v857, %v853
        %v859 = vmul.f32 %v718, %v858
        %v860 = vmul.f32 %v720, %v858
        %v861 = vrcp.pop %v748
        %v862 = vmul.f32 %v748, %v861
        %v863 = vsub.f32 1.0, %v862
        %v864 = vmul.f32 %v861, %v863
        %v865 = vadd.f32 %v861, %v864
        %vm866 = vweird.f32 %v748
        %vm867 = vweird.f32 %v861
        %vm868 = vmor %vm866, %vm867
        %v869 = vsel %vm868, %v861, %v865
        %v870 = vand.u32 2147483647, %v748
        %vm871 = vcmp.eq.f32.partialorder %v870, 8.507059e+37
        %v872 = vand.u32 %v748, 2147483648
        %v873 = vor.u32 1.1754944e-38, %v872
        %v874 = vsel %vm871, %v873, %v869
        %v875 = vmul.f32 %v722, %v874
        %v876 = vmul.f32 %v724, %v874
        %v877 = vld [vmem:[%s2] sm:$0xff]
        %v878 = vld [vmem:[%s2 + $0x8] sm:$0xff]
        %v879 = vld [vmem:[%s2 + $0x10] sm:$0xff]
        %v880 = vld [vmem:[%s2 + $0x18] sm:$0xff]
        %v881 = vadd.f32 %v763, %v877
        %v882 = vadd.f32 %v764, %v878
        %v883 = vadd.f32 %v779, %v879
        %v884 = vadd.f32 %v780, %v880
        %v885 = vadd.f32 %v795, %v877
        %v886 = vadd.f32 %v796, %v878
        %v887 = vadd.f32 %v811, %v879
        %v888 = vadd.f32 %v812, %v880
        %v889 = vadd.f32 %v827, %v877
        %v890 = vadd.f32 %v828, %v878
        %v891 = vadd.f32 %v843, %v879
        %v892 = vadd.f32 %v844, %v880
        %v893 = vadd.f32 %v859, %v877
        %v894 = vadd.f32 %v860, %v878
        %v895 = vadd.f32 %v875, %v879
        %v896 = vadd.f32 %v876, %v880
        %897 = vmatpush.xpose.msra.mxu0 0.0
        %898 = vmatpush.xpose.msra.mxu0 0.0
        %899 = vmatpush.xpose.msra.mxu0 0.0
        %900 = vmatpush.xpose.msra.mxu0 0.0
        %901 = vmatpush.xpose.msra.mxu0 0.0
        %902 = vmatpush.xpose.msra.mxu0 0.0
        %903 = vmatpush.xpose.msra.mxu0 0.0
        %904 = vmatpush.xpose.msra.mxu0 0.0
        %905 = vmatpush.xpose.msra.mxu0 0.0
        %906 = vmatpush.xpose.msra.mxu0 0.0
        %907 = vmatpush.xpose.msra.mxu0 0.0
        %908 = vmatpush.xpose.msra.mxu0 0.0
        %909 = vmatpush.xpose.msra.mxu0 0.0
        %910 = vmatpush.xpose.msra.mxu0 0.0
        %911 = vmatpush.xpose.msra.mxu0 0.0
        %v912 = vand.u32 %v324, 4294901760
        %913 = vmatpush.xpose.msra.mxu0 %v912
        %v914 = vand.u32 %v881, 4294901760
        %v915 = vsub.f32 %v881, %v914
        %v916 = vand.u32 %v915, 4294901760
        %v917 = vsub.f32 %v915, %v916
        %v918 = vand.u32 %v917, 4294901760
        %919 = vmatmul.f32.gmra.mxu0 %v918
        %v920 = vpop.f32.mrf.mxu0
        %v921 = vadd.f32 0.0, %v920
        %v922 = vand.u32 %v883, 4294901760
        %v923 = vsub.f32 %v883, %v922
        %v924 = vand.u32 %v923, 4294901760
        %v925 = vsub.f32 %v923, %v924
        %v926 = vand.u32 %v925, 4294901760
        %927 = vmatmul.f32.gmra.mxu0 %v926
        %v928 = vpop.f32.mrf.mxu0
        %v929 = vadd.f32 0.0, %v928
        %930 = vdwg.mxu0
        %931 = vmatpush.xpose.msra.mxu0 0.0
        %932 = vmatpush.xpose.msra.mxu0 0.0
        %933 = vmatpush.xpose.msra.mxu0 0.0
        %934 = vmatpush.xpose.msra.mxu0 0.0
        %935 = vmatpush.xpose.msra.mxu0 0.0
        %936 = vmatpush.xpose.msra.mxu0 0.0
        %937 = vmatpush.xpose.msra.mxu0 0.0
        %938 = vmatpush.xpose.msra.mxu0 0.0
        %939 = vmatpush.xpose.msra.mxu0 0.0
        %940 = vmatpush.xpose.msra.mxu0 0.0
        %941 = vmatpush.xpose.msra.mxu0 0.0
        %942 = vmatpush.xpose.msra.mxu0 0.0
        %943 = vmatpush.xpose.msra.mxu0 0.0
        %944 = vmatpush.xpose.msra.mxu0 0.0
        %945 = vmatpush.xpose.msra.mxu0 0.0
        %v946 = vand.u32 %v324, 4294901760
        %v947 = vsub.f32 %v324, %v946
        %v948 = vand.u32 %v947, 4294901760
        %v949 = vsub.f32 %v947, %v948
        %v950 = vand.u32 %v949, 4294901760
        %951 = vmatpush.xpose.msra.mxu0 %v950
        %v952 = vand.u32 %v881, 4294901760
        %953 = vmatmul.f32.gmra.mxu0 %v952
        %v954 = vpop.f32.mrf.mxu0
        %v955 = vadd.f32 %v921, %v954
        %v956 = vand.u32 %v883, 4294901760
        %957 = vmatmul.f32.gmra.mxu0 %v956
        %v958 = vpop.f32.mrf.mxu0
        %v959 = vadd.f32 %v929, %v958
        %960 = vdwg.mxu0
        %961 = vmatpush.xpose.msra.mxu0 0.0
        %962 = vmatpush.xpose.msra.mxu0 0.0
        %963 = vmatpush.xpose.msra.mxu0 0.0
        %964 = vmatpush.xpose.msra.mxu0 0.0
        %965 = vmatpush.xpose.msra.mxu0 0.0
        %966 = vmatpush.xpose.msra.mxu0 0.0
        %967 = vmatpush.xpose.msra.mxu0 0.0
        %968 = vmatpush.xpose.msra.mxu0 0.0
        %969 = vmatpush.xpose.msra.mxu0 0.0
        %970 = vmatpush.xpose.msra.mxu0 0.0
        %971 = vmatpush.xpose.msra.mxu0 0.0
        %972 = vmatpush.xpose.msra.mxu0 0.0
        %973 = vmatpush.xpose.msra.mxu0 0.0
        %974 = vmatpush.xpose.msra.mxu0 0.0
        %975 = vmatpush.xpose.msra.mxu0 0.0
        %v976 = vand.u32 %v324, 4294901760
        %v977 = vsub.f32 %v324, %v976
        %978 = vmatpush.xpose.msra.mxu0 %v977
        %v979 = vand.u32 %v881, 4294901760
        %v980 = vsub.f32 %v881, %v979
        %981 = vmatmul.f32.gmra.mxu0 %v980
        %v982 = vpop.f32.mrf.mxu0
        %v983 = vadd.f32 %v955, %v982
        %v984 = vand.u32 %v883, 4294901760
        %v985 = vsub.f32 %v883, %v984
        %986 = vmatmul.f32.gmra.mxu0 %v985
        %v987 = vpop.f32.mrf.mxu0
        %v988 = vadd.f32 %v959, %v987
        %989 = vdwg.mxu0
        %990 = vmatpush.xpose.msra.mxu0 0.0
        %991 = vmatpush.xpose.msra.mxu0 0.0
        %992 = vmatpush.xpose.msra.mxu0 0.0
        %993 = vmatpush.xpose.msra.mxu0 0.0
        %994 = vmatpush.xpose.msra.mxu0 0.0
        %995 = vmatpush.xpose.msra.mxu0 0.0
        %996 = vmatpush.xpose.msra.mxu0 0.0
        %997 = vmatpush.xpose.msra.mxu0 0.0
        %998 = vmatpush.xpose.msra.mxu0 0.0
        %999 = vmatpush.xpose.msra.mxu0 0.0
        %1000 = vmatpush.xpose.msra.mxu0 0.0
        %1001 = vmatpush.xpose.msra.mxu0 0.0
        %1002 = vmatpush.xpose.msra.mxu0 0.0
        %1003 = vmatpush.xpose.msra.mxu0 0.0
        %1004 = vmatpush.xpose.msra.mxu0 0.0
        %v1005 = vand.u32 %v324, 4294901760
        %1006 = vmatpush.xpose.msra.mxu0 %v1005
        %v1007 = vand.u32 %v881, 4294901760
        %v1008 = vsub.f32 %v881, %v1007
        %v1009 = vand.u32 %v1008, 4294901760
        %1010 = vmatmul.f32.gmra.mxu0 %v1009
        %v1011 = vpop.f32.mrf.mxu0
        %v1012 = vadd.f32 %v983, %v1011
        %v1013 = vand.u32 %v883, 4294901760
        %v1014 = vsub.f32 %v883, %v1013
        %v1015 = vand.u32 %v1014, 4294901760
        %1016 = vmatmul.f32.gmra.mxu0 %v1015
        %v1017 = vpop.f32.mrf.mxu0
        %v1018 = vadd.f32 %v988, %v1017
        %1019 = vdwg.mxu0
        %1020 = vmatpush.xpose.msra.mxu0 0.0
        %1021 = vmatpush.xpose.msra.mxu0 0.0
        %1022 = vmatpush.xpose.msra.mxu0 0.0
        %1023 = vmatpush.xpose.msra.mxu0 0.0
        %1024 = vmatpush.xpose.msra.mxu0 0.0
        %1025 = vmatpush.xpose.msra.mxu0 0.0
        %1026 = vmatpush.xpose.msra.mxu0 0.0
        %1027 = vmatpush.xpose.msra.mxu0 0.0
        %1028 = vmatpush.xpose.msra.mxu0 0.0
        %1029 = vmatpush.xpose.msra.mxu0 0.0
        %1030 = vmatpush.xpose.msra.mxu0 0.0
        %1031 = vmatpush.xpose.msra.mxu0 0.0
        %1032 = vmatpush.xpose.msra.mxu0 0.0
        %1033 = vmatpush.xpose.msra.mxu0 0.0
        %1034 = vmatpush.xpose.msra.mxu0 0.0
        %v1035 = vand.u32 %v324, 4294901760
        %v1036 = vsub.f32 %v324, %v1035
        %v1037 = vand.u32 %v1036, 4294901760
        %1038 = vmatpush.xpose.msra.mxu0 %v1037
        %v1039 = vand.u32 %v881, 4294901760
        %1040 = vmatmul.f32.gmra.mxu0 %v1039
        %v1041 = vpop.f32.mrf.mxu0
        %v1042 = vadd.f32 %v1012, %v1041
        %v1043 = vand.u32 %v883, 4294901760
        %1044 = vmatmul.f32.gmra.mxu0 %v1043
        %v1045 = vpop.f32.mrf.mxu0
        %v1046 = vadd.f32 %v1018, %v1045
        %1047 = vdwg.mxu0
        %1048 = vmatpush.xpose.msra.mxu0 0.0
        %1049 = vmatpush.xpose.msra.mxu0 0.0
        %1050 = vmatpush.xpose.msra.mxu0 0.0
        %1051 = vmatpush.xpose.msra.mxu0 0.0
        %1052 = vmatpush.xpose.msra.mxu0 0.0
        %1053 = vmatpush.xpose.msra.mxu0 0.0
        %1054 = vmatpush.xpose.msra.mxu0 0.0
        %1055 = vmatpush.xpose.msra.mxu0 0.0
        %1056 = vmatpush.xpose.msra.mxu0 0.0
        %1057 = vmatpush.xpose.msra.mxu0 0.0
        %1058 = vmatpush.xpose.msra.mxu0 0.0
        %1059 = vmatpush.xpose.msra.mxu0 0.0
        %1060 = vmatpush.xpose.msra.mxu0 0.0
        %1061 = vmatpush.xpose.msra.mxu0 0.0
        %1062 = vmatpush.xpose.msra.mxu0 0.0
        %v1063 = vand.u32 %v324, 4294901760
        %1064 = vmatpush.xpose.msra.mxu0 %v1063
        %v1065 = vand.u32 %v881, 4294901760
        %1066 = vmatmul.f32.gmra.mxu0 %v1065
        %v1067 = vpop.f32.mrf.mxu0
        %v1068 = vadd.f32 %v1042, %v1067
        %v1069 = vand.u32 %v883, 4294901760
        %1070 = vmatmul.f32.gmra.mxu0 %v1069
        %v1071 = vpop.f32.mrf.mxu0
        %v1072 = vadd.f32 %v1046, %v1071
        %1073 = vdwg.mxu0
        %1074 = vmatpush.xpose.msra.mxu0 0.0
        %1075 = vmatpush.xpose.msra.mxu0 0.0
        %1076 = vmatpush.xpose.msra.mxu0 0.0
        %1077 = vmatpush.xpose.msra.mxu0 0.0
        %1078 = vmatpush.xpose.msra.mxu0 0.0
        %1079 = vmatpush.xpose.msra.mxu0 0.0
        %1080 = vmatpush.xpose.msra.mxu0 0.0
        %1081 = vmatpush.xpose.msra.mxu0 0.0
        %1082 = vmatpush.xpose.msra.mxu0 0.0
        %1083 = vmatpush.xpose.msra.mxu0 0.0
        %1084 = vmatpush.xpose.msra.mxu0 0.0
        %1085 = vmatpush.xpose.msra.mxu0 0.0
        %1086 = vmatpush.xpose.msra.mxu0 0.0
        %1087 = vmatpush.xpose.msra.mxu0 0.0
        %1088 = vmatpush.xpose.msra.mxu0 0.0
        %v1089 = vand.u32 %v362, 4294901760
        %1090 = vmatpush.xpose.msra.mxu0 %v1089
        %v1091 = vand.u32 %v882, 4294901760
        %v1092 = vsub.f32 %v882, %v1091
        %v1093 = vand.u32 %v1092, 4294901760
        %v1094 = vsub.f32 %v1092, %v1093
        %v1095 = vand.u32 %v1094, 4294901760
        %1096 = vmatmul.f32.gmra.mxu0 %v1095
        %v1097 = vpop.f32.mrf.mxu0
        %v1098 = vadd.f32 %v1068, %v1097
        %v1099 = vand.u32 %v884, 4294901760
        %v1100 = vsub.f32 %v884, %v1099
        %v1101 = vand.u32 %v1100, 4294901760
        %v1102 = vsub.f32 %v1100, %v1101
        %v1103 = vand.u32 %v1102, 4294901760
        %1104 = vmatmul.f32.gmra.mxu0 %v1103
        %v1105 = vpop.f32.mrf.mxu0
        %v1106 = vadd.f32 %v1072, %v1105
        %1107 = vdwg.mxu0
        %1108 = vmatpush.xpose.msra.mxu0 0.0
        %1109 = vmatpush.xpose.msra.mxu0 0.0
        %1110 = vmatpush.xpose.msra.mxu0 0.0
        %1111 = vmatpush.xpose.msra.mxu0 0.0
        %1112 = vmatpush.xpose.msra.mxu0 0.0
        %1113 = vmatpush.xpose.msra.mxu0 0.0
        %1114 = vmatpush.xpose.msra.mxu0 0.0
        %1115 = vmatpush.xpose.msra.mxu0 0.0
        %1116 = vmatpush.xpose.msra.mxu0 0.0
        %1117 = vmatpush.xpose.msra.mxu0 0.0
        %1118 = vmatpush.xpose.msra.mxu0 0.0
        %1119 = vmatpush.xpose.msra.mxu0 0.0
        %1120 = vmatpush.xpose.msra.mxu0 0.0
        %1121 = vmatpush.xpose.msra.mxu0 0.0
        %1122 = vmatpush.xpose.msra.mxu0 0.0
        %v1123 = vand.u32 %v362, 4294901760
        %v1124 = vsub.f32 %v362, %v1123
        %v1125 = vand.u32 %v1124, 4294901760
        %v1126 = vsub.f32 %v1124, %v1125
        %v1127 = vand.u32 %v1126, 4294901760
        %1128 = vmatpush.xpose.msra.mxu0 %v1127
        %v1129 = vand.u32 %v882, 4294901760
        %1130 = vmatmul.f32.gmra.mxu0 %v1129
        %v1131 = vpop.f32.mrf.mxu0
        %v1132 = vadd.f32 %v1098, %v1131
        %v1133 = vand.u32 %v884, 4294901760
        %1134 = vmatmul.f32.gmra.mxu0 %v1133
        %v1135 = vpop.f32.mrf.mxu0
        %v1136 = vadd.f32 %v1106, %v1135
        %1137 = vdwg.mxu0
        %1138 = vmatpush.xpose.msra.mxu0 0.0
        %1139 = vmatpush.xpose.msra.mxu0 0.0
        %1140 = vmatpush.xpose.msra.mxu0 0.0
        %1141 = vmatpush.xpose.msra.mxu0 0.0
        %1142 = vmatpush.xpose.msra.mxu0 0.0
        %1143 = vmatpush.xpose.msra.mxu0 0.0
        %1144 = vmatpush.xpose.msra.mxu0 0.0
        %1145 = vmatpush.xpose.msra.mxu0 0.0
        %1146 = vmatpush.xpose.msra.mxu0 0.0
        %1147 = vmatpush.xpose.msra.mxu0 0.0
        %1148 = vmatpush.xpose.msra.mxu0 0.0
        %1149 = vmatpush.xpose.msra.mxu0 0.0
        %1150 = vmatpush.xpose.msra.mxu0 0.0
        %1151 = vmatpush.xpose.msra.mxu0 0.0
        %1152 = vmatpush.xpose.msra.mxu0 0.0
        %v1153 = vand.u32 %v362, 4294901760
        %v1154 = vsub.f32 %v362, %v1153
        %1155 = vmatpush.xpose.msra.mxu0 %v1154
        %v1156 = vand.u32 %v882, 4294901760
        %v1157 = vsub.f32 %v882, %v1156
        %1158 = vmatmul.f32.gmra.mxu0 %v1157
        %v1159 = vpop.f32.mrf.mxu0
        %v1160 = vadd.f32 %v1132, %v1159
        %v1161 = vand.u32 %v884, 4294901760
        %v1162 = vsub.f32 %v884, %v1161
        %1163 = vmatmul.f32.gmra.mxu0 %v1162
        %v1164 = vpop.f32.mrf.mxu0
        %v1165 = vadd.f32 %v1136, %v1164
        %1166 = vdwg.mxu0
        %1167 = vmatpush.xpose.msra.mxu0 0.0
        %1168 = vmatpush.xpose.msra.mxu0 0.0
        %1169 = vmatpush.xpose.msra.mxu0 0.0
        %1170 = vmatpush.xpose.msra.mxu0 0.0
        %1171 = vmatpush.xpose.msra.mxu0 0.0
        %1172 = vmatpush.xpose.msra.mxu0 0.0
        %1173 = vmatpush.xpose.msra.mxu0 0.0
        %1174 = vmatpush.xpose.msra.mxu0 0.0
        %1175 = vmatpush.xpose.msra.mxu0 0.0
        %1176 = vmatpush.xpose.msra.mxu0 0.0
        %1177 = vmatpush.xpose.msra.mxu0 0.0
        %1178 = vmatpush.xpose.msra.mxu0 0.0
        %1179 = vmatpush.xpose.msra.mxu0 0.0
        %1180 = vmatpush.xpose.msra.mxu0 0.0
        %1181 = vmatpush.xpose.msra.mxu0 0.0
        %v1182 = vand.u32 %v362, 4294901760
        %1183 = vmatpush.xpose.msra.mxu0 %v1182
        %v1184 = vand.u32 %v882, 4294901760
        %v1185 = vsub.f32 %v882, %v1184
        %v1186 = vand.u32 %v1185, 4294901760
        %1187 = vmatmul.f32.gmra.mxu0 %v1186
        %v1188 = vpop.f32.mrf.mxu0
        %v1189 = vadd.f32 %v1160, %v1188
        %v1190 = vand.u32 %v884, 4294901760
        %v1191 = vsub.f32 %v884, %v1190
        %v1192 = vand.u32 %v1191, 4294901760
        %1193 = vmatmul.f32.gmra.mxu0 %v1192
        %v1194 = vpop.f32.mrf.mxu0
        %v1195 = vadd.f32 %v1165, %v1194
        %1196 = vdwg.mxu0
        %1197 = vmatpush.xpose.msra.mxu0 0.0
        %1198 = vmatpush.xpose.msra.mxu0 0.0
        %1199 = vmatpush.xpose.msra.mxu0 0.0
        %1200 = vmatpush.xpose.msra.mxu0 0.0
        %1201 = vmatpush.xpose.msra.mxu0 0.0
        %1202 = vmatpush.xpose.msra.mxu0 0.0
        %1203 = vmatpush.xpose.msra.mxu0 0.0
        %1204 = vmatpush.xpose.msra.mxu0 0.0
        %1205 = vmatpush.xpose.msra.mxu0 0.0
        %1206 = vmatpush.xpose.msra.mxu0 0.0
        %1207 = vmatpush.xpose.msra.mxu0 0.0
        %1208 = vmatpush.xpose.msra.mxu0 0.0
        %1209 = vmatpush.xpose.msra.mxu0 0.0
        %1210 = vmatpush.xpose.msra.mxu0 0.0
        %1211 = vmatpush.xpose.msra.mxu0 0.0
        %v1212 = vand.u32 %v362, 4294901760
        %v1213 = vsub.f32 %v362, %v1212
        %v1214 = vand.u32 %v1213, 4294901760
        %1215 = vmatpush.xpose.msra.mxu0 %v1214
        %v1216 = vand.u32 %v882, 4294901760
        %1217 = vmatmul.f32.gmra.mxu0 %v1216
        %v1218 = vpop.f32.mrf.mxu0
        %v1219 = vadd.f32 %v1189, %v1218
        %v1220 = vand.u32 %v884, 4294901760
        %1221 = vmatmul.f32.gmra.mxu0 %v1220
        %v1222 = vpop.f32.mrf.mxu0
        %v1223 = vadd.f32 %v1195, %v1222
        %1224 = vdwg.mxu0
        %1225 = vmatpush.xpose.msra.mxu0 0.0
        %1226 = vmatpush.xpose.msra.mxu0 0.0
        %1227 = vmatpush.xpose.msra.mxu0 0.0
        %1228 = vmatpush.xpose.msra.mxu0 0.0
        %1229 = vmatpush.xpose.msra.mxu0 0.0
        %1230 = vmatpush.xpose.msra.mxu0 0.0
        %1231 = vmatpush.xpose.msra.mxu0 0.0
        %1232 = vmatpush.xpose.msra.mxu0 0.0
        %1233 = vmatpush.xpose.msra.mxu0 0.0
        %1234 = vmatpush.xpose.msra.mxu0 0.0
        %1235 = vmatpush.xpose.msra.mxu0 0.0
        %1236 = vmatpush.xpose.msra.mxu0 0.0
        %1237 = vmatpush.xpose.msra.mxu0 0.0
        %1238 = vmatpush.xpose.msra.mxu0 0.0
        %1239 = vmatpush.xpose.msra.mxu0 0.0
        %v1240 = vand.u32 %v362, 4294901760
        %1241 = vmatpush.xpose.msra.mxu0 %v1240
        %v1242 = vand.u32 %v882, 4294901760
        %1243 = vmatmul.f32.gmra.mxu0 %v1242
        %v1244 = vpop.f32.mrf.mxu0
        %v1245 = vadd.f32 %v1219, %v1244
        %v1246 = vand.u32 %v884, 4294901760
        %1247 = vmatmul.f32.gmra.mxu0 %v1246
        %v1248 = vpop.f32.mrf.mxu0
        %v1249 = vadd.f32 %v1223, %v1248
        %1250 = vdwg.mxu0
        %1251 = vmatpush.xpose.msra.mxu0 0.0
        %1252 = vmatpush.xpose.msra.mxu0 0.0
        %1253 = vmatpush.xpose.msra.mxu0 0.0
        %1254 = vmatpush.xpose.msra.mxu0 0.0
        %1255 = vmatpush.xpose.msra.mxu0 0.0
        %1256 = vmatpush.xpose.msra.mxu0 0.0
        %1257 = vmatpush.xpose.msra.mxu0 0.0
        %1258 = vmatpush.xpose.msra.mxu0 0.0
        %1259 = vmatpush.xpose.msra.mxu0 0.0
        %1260 = vmatpush.xpose.msra.mxu0 0.0
        %1261 = vmatpush.xpose.msra.mxu0 0.0
        %1262 = vmatpush.xpose.msra.mxu0 0.0
        %1263 = vmatpush.xpose.msra.mxu0 0.0
        %1264 = vmatpush.xpose.msra.mxu0 0.0
        %1265 = vmatpush.xpose.msra.mxu0 0.0
        %v1266 = vand.u32 %v420, 4294901760
        %1267 = vmatpush.xpose.msra.mxu0 %v1266
        %v1268 = vand.u32 %v885, 4294901760
        %v1269 = vsub.f32 %v885, %v1268
        %v1270 = vand.u32 %v1269, 4294901760
        %v1271 = vsub.f32 %v1269, %v1270
        %v1272 = vand.u32 %v1271, 4294901760
        %1273 = vmatmul.f32.gmra.mxu0 %v1272
        %v1274 = vpop.f32.mrf.mxu0
        %v1275 = vadd.f32 0.0, %v1274
        %v1276 = vand.u32 %v887, 4294901760
        %v1277 = vsub.f32 %v887, %v1276
        %v1278 = vand.u32 %v1277, 4294901760
        %v1279 = vsub.f32 %v1277, %v1278
        %v1280 = vand.u32 %v1279, 4294901760
        %1281 = vmatmul.f32.gmra.mxu0 %v1280
        %v1282 = vpop.f32.mrf.mxu0
        %v1283 = vadd.f32 0.0, %v1282
        %1284 = vdwg.mxu0
        %1285 = vmatpush.xpose.msra.mxu0 0.0
        %1286 = vmatpush.xpose.msra.mxu0 0.0
        %1287 = vmatpush.xpose.msra.mxu0 0.0
        %1288 = vmatpush.xpose.msra.mxu0 0.0
        %1289 = vmatpush.xpose.msra.mxu0 0.0
        %1290 = vmatpush.xpose.msra.mxu0 0.0
        %1291 = vmatpush.xpose.msra.mxu0 0.0
        %1292 = vmatpush.xpose.msra.mxu0 0.0
        %1293 = vmatpush.xpose.msra.mxu0 0.0
        %1294 = vmatpush.xpose.msra.mxu0 0.0
        %1295 = vmatpush.xpose.msra.mxu0 0.0
        %1296 = vmatpush.xpose.msra.mxu0 0.0
        %1297 = vmatpush.xpose.msra.mxu0 0.0
        %1298 = vmatpush.xpose.msra.mxu0 0.0
        %1299 = vmatpush.xpose.msra.mxu0 0.0
        %v1300 = vand.u32 %v420, 4294901760
        %v1301 = vsub.f32 %v420, %v1300
        %v1302 = vand.u32 %v1301, 4294901760
        %v1303 = vsub.f32 %v1301, %v1302
        %v1304 = vand.u32 %v1303, 4294901760
        %1305 = vmatpush.xpose.msra.mxu0 %v1304
        %v1306 = vand.u32 %v885, 4294901760
        %1307 = vmatmul.f32.gmra.mxu0 %v1306
        %v1308 = vpop.f32.mrf.mxu0
        %v1309 = vadd.f32 %v1275, %v1308
        %v1310 = vand.u32 %v887, 4294901760
        %1311 = vmatmul.f32.gmra.mxu0 %v1310
        %v1312 = vpop.f32.mrf.mxu0
        %v1313 = vadd.f32 %v1283, %v1312
        %1314 = vdwg.mxu0
        %1315 = vmatpush.xpose.msra.mxu0 0.0
        %1316 = vmatpush.xpose.msra.mxu0 0.0
        %1317 = vmatpush.xpose.msra.mxu0 0.0
        %1318 = vmatpush.xpose.msra.mxu0 0.0
        %1319 = vmatpush.xpose.msra.mxu0 0.0
        %1320 = vmatpush.xpose.msra.mxu0 0.0
        %1321 = vmatpush.xpose.msra.mxu0 0.0
        %1322 = vmatpush.xpose.msra.mxu0 0.0
        %1323 = vmatpush.xpose.msra.mxu0 0.0
        %1324 = vmatpush.xpose.msra.mxu0 0.0
        %1325 = vmatpush.xpose.msra.mxu0 0.0
        %1326 = vmatpush.xpose.msra.mxu0 0.0
        %1327 = vmatpush.xpose.msra.mxu0 0.0
        %1328 = vmatpush.xpose.msra.mxu0 0.0
        %1329 = vmatpush.xpose.msra.mxu0 0.0
        %v1330 = vand.u32 %v420, 4294901760
        %v1331 = vsub.f32 %v420, %v1330
        %1332 = vmatpush.xpose.msra.mxu0 %v1331
        %v1333 = vand.u32 %v885, 4294901760
        %v1334 = vsub.f32 %v885, %v1333
        %1335 = vmatmul.f32.gmra.mxu0 %v1334
        %v1336 = vpop.f32.mrf.mxu0
        %v1337 = vadd.f32 %v1309, %v1336
        %v1338 = vand.u32 %v887, 4294901760
        %v1339 = vsub.f32 %v887, %v1338
        %1340 = vmatmul.f32.gmra.mxu0 %v1339
        %v1341 = vpop.f32.mrf.mxu0
        %v1342 = vadd.f32 %v1313, %v1341
        %1343 = vdwg.mxu0
        %1344 = vmatpush.xpose.msra.mxu0 0.0
        %1345 = vmatpush.xpose.msra.mxu0 0.0
        %1346 = vmatpush.xpose.msra.mxu0 0.0
        %1347 = vmatpush.xpose.msra.mxu0 0.0
        %1348 = vmatpush.xpose.msra.mxu0 0.0
        %1349 = vmatpush.xpose.msra.mxu0 0.0
        %1350 = vmatpush.xpose.msra.mxu0 0.0
        %1351 = vmatpush.xpose.msra.mxu0 0.0
        %1352 = vmatpush.xpose.msra.mxu0 0.0
        %1353 = vmatpush.xpose.msra.mxu0 0.0
        %1354 = vmatpush.xpose.msra.mxu0 0.0
        %1355 = vmatpush.xpose.msra.mxu0 0.0
        %1356 = vmatpush.xpose.msra.mxu0 0.0
        %1357 = vmatpush.xpose.msra.mxu0 0.0
        %1358 = vmatpush.xpose.msra.mxu0 0.0
        %v1359 = vand.u32 %v420, 4294901760
        %1360 = vmatpush.xpose.msra.mxu0 %v1359
        %v1361 = vand.u32 %v885, 4294901760
        %v1362 = vsub.f32 %v885, %v1361
        %v1363 = vand.u32 %v1362, 4294901760
        %1364 = vmatmul.f32.gmra.mxu0 %v1363
        %v1365 = vpop.f32.mrf.mxu0
        %v1366 = vadd.f32 %v1337, %v1365
        %v1367 = vand.u32 %v887, 4294901760
        %v1368 = vsub.f32 %v887, %v1367
        %v1369 = vand.u32 %v1368, 4294901760
        %1370 = vmatmul.f32.gmra.mxu0 %v1369
        %v1371 = vpop.f32.mrf.mxu0
        %v1372 = vadd.f32 %v1342, %v1371
        %1373 = vdwg.mxu0
        %1374 = vmatpush.xpose.msra.mxu0 0.0
        %1375 = vmatpush.xpose.msra.mxu0 0.0
        %1376 = vmatpush.xpose.msra.mxu0 0.0
        %1377 = vmatpush.xpose.msra.mxu0 0.0
        %1378 = vmatpush.xpose.msra.mxu0 0.0
        %1379 = vmatpush.xpose.msra.mxu0 0.0
        %1380 = vmatpush.xpose.msra.mxu0 0.0
        %1381 = vmatpush.xpose.msra.mxu0 0.0
        %1382 = vmatpush.xpose.msra.mxu0 0.0
        %1383 = vmatpush.xpose.msra.mxu0 0.0
        %1384 = vmatpush.xpose.msra.mxu0 0.0
        %1385 = vmatpush.xpose.msra.mxu0 0.0
        %1386 = vmatpush.xpose.msra.mxu0 0.0
        %1387 = vmatpush.xpose.msra.mxu0 0.0
        %1388 = vmatpush.xpose.msra.mxu0 0.0
        %v1389 = vand.u32 %v420, 4294901760
        %v1390 = vsub.f32 %v420, %v1389
        %v1391 = vand.u32 %v1390, 4294901760
        %1392 = vmatpush.xpose.msra.mxu0 %v1391
        %v1393 = vand.u32 %v885, 4294901760
        %1394 = vmatmul.f32.gmra.mxu0 %v1393
        %v1395 = vpop.f32.mrf.mxu0
        %v1396 = vadd.f32 %v1366, %v1395
        %v1397 = vand.u32 %v887, 4294901760
        %1398 = vmatmul.f32.gmra.mxu0 %v1397
        %v1399 = vpop.f32.mrf.mxu0
        %v1400 = vadd.f32 %v1372, %v1399
        %1401 = vdwg.mxu0
        %1402 = vmatpush.xpose.msra.mxu0 0.0
        %1403 = vmatpush.xpose.msra.mxu0 0.0
        %1404 = vmatpush.xpose.msra.mxu0 0.0
        %1405 = vmatpush.xpose.msra.mxu0 0.0
        %1406 = vmatpush.xpose.msra.mxu0 0.0
        %1407 = vmatpush.xpose.msra.mxu0 0.0
        %1408 = vmatpush.xpose.msra.mxu0 0.0
        %1409 = vmatpush.xpose.msra.mxu0 0.0
        %1410 = vmatpush.xpose.msra.mxu0 0.0
        %1411 = vmatpush.xpose.msra.mxu0 0.0
        %1412 = vmatpush.xpose.msra.mxu0 0.0
        %1413 = vmatpush.xpose.msra.mxu0 0.0
        %1414 = vmatpush.xpose.msra.mxu0 0.0
        %1415 = vmatpush.xpose.msra.mxu0 0.0
        %1416 = vmatpush.xpose.msra.mxu0 0.0
        %v1417 = vand.u32 %v420, 4294901760
        %1418 = vmatpush.xpose.msra.mxu0 %v1417
        %v1419 = vand.u32 %v885, 4294901760
        %1420 = vmatmul.f32.gmra.mxu0 %v1419
        %v1421 = vpop.f32.mrf.mxu0
        %v1422 = vadd.f32 %v1396, %v1421
        %v1423 = vand.u32 %v887, 4294901760
        %1424 = vmatmul.f32.gmra.mxu0 %v1423
        %v1425 = vpop.f32.mrf.mxu0
        %v1426 = vadd.f32 %v1400, %v1425
        %1427 = vdwg.mxu0
        %1428 = vmatpush.xpose.msra.mxu0 0.0
        %1429 = vmatpush.xpose.msra.mxu0 0.0
        %1430 = vmatpush.xpose.msra.mxu0 0.0
        %1431 = vmatpush.xpose.msra.mxu0 0.0
        %1432 = vmatpush.xpose.msra.mxu0 0.0
        %1433 = vmatpush.xpose.msra.mxu0 0.0
        %1434 = vmatpush.xpose.msra.mxu0 0.0
        %1435 = vmatpush.xpose.msra.mxu0 0.0
        %1436 = vmatpush.xpose.msra.mxu0 0.0
        %1437 = vmatpush.xpose.msra.mxu0 0.0
        %1438 = vmatpush.xpose.msra.mxu0 0.0
        %1439 = vmatpush.xpose.msra.mxu0 0.0
        %1440 = vmatpush.xpose.msra.mxu0 0.0
        %1441 = vmatpush.xpose.msra.mxu0 0.0
        %1442 = vmatpush.xpose.msra.mxu0 0.0
        %v1443 = vand.u32 %v458, 4294901760
        %1444 = vmatpush.xpose.msra.mxu0 %v1443
        %v1445 = vand.u32 %v886, 4294901760
        %v1446 = vsub.f32 %v886, %v1445
        %v1447 = vand.u32 %v1446, 4294901760
        %v1448 = vsub.f32 %v1446, %v1447
        %v1449 = vand.u32 %v1448, 4294901760
        %1450 = vmatmul.f32.gmra.mxu0 %v1449
        %v1451 = vpop.f32.mrf.mxu0
        %v1452 = vadd.f32 %v1422, %v1451
        %v1453 = vand.u32 %v888, 4294901760
        %v1454 = vsub.f32 %v888, %v1453
        %v1455 = vand.u32 %v1454, 4294901760
        %v1456 = vsub.f32 %v1454, %v1455
        %v1457 = vand.u32 %v1456, 4294901760
        %1458 = vmatmul.f32.gmra.mxu0 %v1457
        %v1459 = vpop.f32.mrf.mxu0
        %v1460 = vadd.f32 %v1426, %v1459
        %1461 = vdwg.mxu0
        %1462 = vmatpush.xpose.msra.mxu0 0.0
        %1463 = vmatpush.xpose.msra.mxu0 0.0
        %1464 = vmatpush.xpose.msra.mxu0 0.0
        %1465 = vmatpush.xpose.msra.mxu0 0.0
        %1466 = vmatpush.xpose.msra.mxu0 0.0
        %1467 = vmatpush.xpose.msra.mxu0 0.0
        %1468 = vmatpush.xpose.msra.mxu0 0.0
        %1469 = vmatpush.xpose.msra.mxu0 0.0
        %1470 = vmatpush.xpose.msra.mxu0 0.0
        %1471 = vmatpush.xpose.msra.mxu0 0.0
        %1472 = vmatpush.xpose.msra.mxu0 0.0
        %1473 = vmatpush.xpose.msra.mxu0 0.0
        %1474 = vmatpush.xpose.msra.mxu0 0.0
        %1475 = vmatpush.xpose.msra.mxu0 0.0
        %1476 = vmatpush.xpose.msra.mxu0 0.0
        %v1477 = vand.u32 %v458, 4294901760
        %v1478 = vsub.f32 %v458, %v1477
        %v1479 = vand.u32 %v1478, 4294901760
        %v1480 = vsub.f32 %v1478, %v1479
        %v1481 = vand.u32 %v1480, 4294901760
        %1482 = vmatpush.xpose.msra.mxu0 %v1481
        %v1483 = vand.u32 %v886, 4294901760
        %1484 = vmatmul.f32.gmra.mxu0 %v1483
        %v1485 = vpop.f32.mrf.mxu0
        %v1486 = vadd.f32 %v1452, %v1485
        %v1487 = vand.u32 %v888, 4294901760
        %1488 = vmatmul.f32.gmra.mxu0 %v1487
        %v1489 = vpop.f32.mrf.mxu0
        %v1490 = vadd.f32 %v1460, %v1489
        %1491 = vdwg.mxu0
        %1492 = vmatpush.xpose.msra.mxu0 0.0
        %1493 = vmatpush.xpose.msra.mxu0 0.0
        %1494 = vmatpush.xpose.msra.mxu0 0.0
        %1495 = vmatpush.xpose.msra.mxu0 0.0
        %1496 = vmatpush.xpose.msra.mxu0 0.0
        %1497 = vmatpush.xpose.msra.mxu0 0.0
        %1498 = vmatpush.xpose.msra.mxu0 0.0
        %1499 = vmatpush.xpose.msra.mxu0 0.0
        %1500 = vmatpush.xpose.msra.mxu0 0.0
        %1501 = vmatpush.xpose.msra.mxu0 0.0
        %1502 = vmatpush.xpose.msra.mxu0 0.0
        %1503 = vmatpush.xpose.msra.mxu0 0.0
        %1504 = vmatpush.xpose.msra.mxu0 0.0
        %1505 = vmatpush.xpose.msra.mxu0 0.0
        %1506 = vmatpush.xpose.msra.mxu0 0.0
        %v1507 = vand.u32 %v458, 4294901760
        %v1508 = vsub.f32 %v458, %v1507
        %1509 = vmatpush.xpose.msra.mxu0 %v1508
        %v1510 = vand.u32 %v886, 4294901760
        %v1511 = vsub.f32 %v886, %v1510
        %1512 = vmatmul.f32.gmra.mxu0 %v1511
        %v1513 = vpop.f32.mrf.mxu0
        %v1514 = vadd.f32 %v1486, %v1513
        %v1515 = vand.u32 %v888, 4294901760
        %v1516 = vsub.f32 %v888, %v1515
        %1517 = vmatmul.f32.gmra.mxu0 %v1516
        %v1518 = vpop.f32.mrf.mxu0
        %v1519 = vadd.f32 %v1490, %v1518
        %1520 = vdwg.mxu0
        %1521 = vmatpush.xpose.msra.mxu0 0.0
        %1522 = vmatpush.xpose.msra.mxu0 0.0
        %1523 = vmatpush.xpose.msra.mxu0 0.0
        %1524 = vmatpush.xpose.msra.mxu0 0.0
        %1525 = vmatpush.xpose.msra.mxu0 0.0
        %1526 = vmatpush.xpose.msra.mxu0 0.0
        %1527 = vmatpush.xpose.msra.mxu0 0.0
        %1528 = vmatpush.xpose.msra.mxu0 0.0
        %1529 = vmatpush.xpose.msra.mxu0 0.0
        %1530 = vmatpush.xpose.msra.mxu0 0.0
        %1531 = vmatpush.xpose.msra.mxu0 0.0
        %1532 = vmatpush.xpose.msra.mxu0 0.0
        %1533 = vmatpush.xpose.msra.mxu0 0.0
        %1534 = vmatpush.xpose.msra.mxu0 0.0
        %1535 = vmatpush.xpose.msra.mxu0 0.0
        %v1536 = vand.u32 %v458, 4294901760
        %1537 = vmatpush.xpose.msra.mxu0 %v1536
        %v1538 = vand.u32 %v886, 4294901760
        %v1539 = vsub.f32 %v886, %v1538
        %v1540 = vand.u32 %v1539, 4294901760
        %1541 = vmatmul.f32.gmra.mxu0 %v1540
        %v1542 = vpop.f32.mrf.mxu0
        %v1543 = vadd.f32 %v1514, %v1542
        %v1544 = vand.u32 %v888, 4294901760
        %v1545 = vsub.f32 %v888, %v1544
        %v1546 = vand.u32 %v1545, 4294901760
        %1547 = vmatmul.f32.gmra.mxu0 %v1546
        %v1548 = vpop.f32.mrf.mxu0
        %v1549 = vadd.f32 %v1519, %v1548
        %1550 = vdwg.mxu0
        %1551 = vmatpush.xpose.msra.mxu0 0.0
        %1552 = vmatpush.xpose.msra.mxu0 0.0
        %1553 = vmatpush.xpose.msra.mxu0 0.0
        %1554 = vmatpush.xpose.msra.mxu0 0.0
        %1555 = vmatpush.xpose.msra.mxu0 0.0
        %1556 = vmatpush.xpose.msra.mxu0 0.0
        %1557 = vmatpush.xpose.msra.mxu0 0.0
        %1558 = vmatpush.xpose.msra.mxu0 0.0
        %1559 = vmatpush.xpose.msra.mxu0 0.0
        %1560 = vmatpush.xpose.msra.mxu0 0.0
        %1561 = vmatpush.xpose.msra.mxu0 0.0
        %1562 = vmatpush.xpose.msra.mxu0 0.0
        %1563 = vmatpush.xpose.msra.mxu0 0.0
        %1564 = vmatpush.xpose.msra.mxu0 0.0
        %1565 = vmatpush.xpose.msra.mxu0 0.0
        %v1566 = vand.u32 %v458, 4294901760
        %v1567 = vsub.f32 %v458, %v1566
        %v1568 = vand.u32 %v1567, 4294901760
        %1569 = vmatpush.xpose.msra.mxu0 %v1568
        %v1570 = vand.u32 %v886, 4294901760
        %1571 = vmatmul.f32.gmra.mxu0 %v1570
        %v1572 = vpop.f32.mrf.mxu0
        %v1573 = vadd.f32 %v1543, %v1572
        %v1574 = vand.u32 %v888, 4294901760
        %1575 = vmatmul.f32.gmra.mxu0 %v1574
        %v1576 = vpop.f32.mrf.mxu0
        %v1577 = vadd.f32 %v1549, %v1576
        %1578 = vdwg.mxu0
        %1579 = vmatpush.xpose.msra.mxu0 0.0
        %1580 = vmatpush.xpose.msra.mxu0 0.0
        %1581 = vmatpush.xpose.msra.mxu0 0.0
        %1582 = vmatpush.xpose.msra.mxu0 0.0
        %1583 = vmatpush.xpose.msra.mxu0 0.0
        %1584 = vmatpush.xpose.msra.mxu0 0.0
        %1585 = vmatpush.xpose.msra.mxu0 0.0
        %1586 = vmatpush.xpose.msra.mxu0 0.0
        %1587 = vmatpush.xpose.msra.mxu0 0.0
        %1588 = vmatpush.xpose.msra.mxu0 0.0
        %1589 = vmatpush.xpose.msra.mxu0 0.0
        %1590 = vmatpush.xpose.msra.mxu0 0.0
        %1591 = vmatpush.xpose.msra.mxu0 0.0
        %1592 = vmatpush.xpose.msra.mxu0 0.0
        %1593 = vmatpush.xpose.msra.mxu0 0.0
        %v1594 = vand.u32 %v458, 4294901760
        %1595 = vmatpush.xpose.msra.mxu0 %v1594
        %v1596 = vand.u32 %v886, 4294901760
        %1597 = vmatmul.f32.gmra.mxu0 %v1596
        %v1598 = vpop.f32.mrf.mxu0
        %v1599 = vadd.f32 %v1573, %v1598
        %v1600 = vand.u32 %v888, 4294901760
        %1601 = vmatmul.f32.gmra.mxu0 %v1600
        %v1602 = vpop.f32.mrf.mxu0
        %v1603 = vadd.f32 %v1577, %v1602
        %1604 = vdwg.mxu0
        %1605 = vmatpush.xpose.msra.mxu0 0.0
        %1606 = vmatpush.xpose.msra.mxu0 0.0
        %1607 = vmatpush.xpose.msra.mxu0 0.0
        %1608 = vmatpush.xpose.msra.mxu0 0.0
        %1609 = vmatpush.xpose.msra.mxu0 0.0
        %1610 = vmatpush.xpose.msra.mxu0 0.0
        %1611 = vmatpush.xpose.msra.mxu0 0.0
        %1612 = vmatpush.xpose.msra.mxu0 0.0
        %1613 = vmatpush.xpose.msra.mxu0 0.0
        %1614 = vmatpush.xpose.msra.mxu0 0.0
        %1615 = vmatpush.xpose.msra.mxu0 0.0
        %1616 = vmatpush.xpose.msra.mxu0 0.0
        %1617 = vmatpush.xpose.msra.mxu0 0.0
        %1618 = vmatpush.xpose.msra.mxu0 0.0
        %1619 = vmatpush.xpose.msra.mxu0 0.0
        %v1620 = vand.u32 %v516, 4294901760
        %1621 = vmatpush.xpose.msra.mxu0 %v1620
        %v1622 = vand.u32 %v889, 4294901760
        %v1623 = vsub.f32 %v889, %v1622
        %v1624 = vand.u32 %v1623, 4294901760
        %v1625 = vsub.f32 %v1623, %v1624
        %v1626 = vand.u32 %v1625, 4294901760
        %1627 = vmatmul.f32.gmra.mxu0 %v1626
        %v1628 = vpop.f32.mrf.mxu0
        %v1629 = vadd.f32 0.0, %v1628
        %v1630 = vand.u32 %v891, 4294901760
        %v1631 = vsub.f32 %v891, %v1630
        %v1632 = vand.u32 %v1631, 4294901760
        %v1633 = vsub.f32 %v1631, %v1632
        %v1634 = vand.u32 %v1633, 4294901760
        %1635 = vmatmul.f32.gmra.mxu0 %v1634
        %v1636 = vpop.f32.mrf.mxu0
        %v1637 = vadd.f32 0.0, %v1636
        %1638 = vdwg.mxu0
        %1639 = vmatpush.xpose.msra.mxu0 0.0
        %1640 = vmatpush.xpose.msra.mxu0 0.0
        %1641 = vmatpush.xpose.msra.mxu0 0.0
        %1642 = vmatpush.xpose.msra.mxu0 0.0
        %1643 = vmatpush.xpose.msra.mxu0 0.0
        %1644 = vmatpush.xpose.msra.mxu0 0.0
        %1645 = vmatpush.xpose.msra.mxu0 0.0
        %1646 = vmatpush.xpose.msra.mxu0 0.0
        %1647 = vmatpush.xpose.msra.mxu0 0.0
        %1648 = vmatpush.xpose.msra.mxu0 0.0
        %1649 = vmatpush.xpose.msra.mxu0 0.0
        %1650 = vmatpush.xpose.msra.mxu0 0.0
        %1651 = vmatpush.xpose.msra.mxu0 0.0
        %1652 = vmatpush.xpose.msra.mxu0 0.0
        %1653 = vmatpush.xpose.msra.mxu0 0.0
        %v1654 = vand.u32 %v516, 4294901760
        %v1655 = vsub.f32 %v516, %v1654
        %v1656 = vand.u32 %v1655, 4294901760
        %v1657 = vsub.f32 %v1655, %v1656
        %v1658 = vand.u32 %v1657, 4294901760
        %1659 = vmatpush.xpose.msra.mxu0 %v1658
        %v1660 = vand.u32 %v889, 4294901760
        %1661 = vmatmul.f32.gmra.mxu0 %v1660
        %v1662 = vpop.f32.mrf.mxu0
        %v1663 = vadd.f32 %v1629, %v1662
        %v1664 = vand.u32 %v891, 4294901760
        %1665 = vmatmul.f32.gmra.mxu0 %v1664
        %v1666 = vpop.f32.mrf.mxu0
        %v1667 = vadd.f32 %v1637, %v1666
        %1668 = vdwg.mxu0
        %1669 = vmatpush.xpose.msra.mxu0 0.0
        %1670 = vmatpush.xpose.msra.mxu0 0.0
        %1671 = vmatpush.xpose.msra.mxu0 0.0
        %1672 = vmatpush.xpose.msra.mxu0 0.0
        %1673 = vmatpush.xpose.msra.mxu0 0.0
        %1674 = vmatpush.xpose.msra.mxu0 0.0
        %1675 = vmatpush.xpose.msra.mxu0 0.0
        %1676 = vmatpush.xpose.msra.mxu0 0.0
        %1677 = vmatpush.xpose.msra.mxu0 0.0
        %1678 = vmatpush.xpose.msra.mxu0 0.0
        %1679 = vmatpush.xpose.msra.mxu0 0.0
        %1680 = vmatpush.xpose.msra.mxu0 0.0
        %1681 = vmatpush.xpose.msra.mxu0 0.0
        %1682 = vmatpush.xpose.msra.mxu0 0.0
        %1683 = vmatpush.xpose.msra.mxu0 0.0
        %v1684 = vand.u32 %v516, 4294901760
        %v1685 = vsub.f32 %v516, %v1684
        %1686 = vmatpush.xpose.msra.mxu0 %v1685
        %v1687 = vand.u32 %v889, 4294901760
        %v1688 = vsub.f32 %v889, %v1687
        %1689 = vmatmul.f32.gmra.mxu0 %v1688
        %v1690 = vpop.f32.mrf.mxu0
        %v1691 = vadd.f32 %v1663, %v1690
        %v1692 = vand.u32 %v891, 4294901760
        %v1693 = vsub.f32 %v891, %v1692
        %1694 = vmatmul.f32.gmra.mxu0 %v1693
        %v1695 = vpop.f32.mrf.mxu0
        %v1696 = vadd.f32 %v1667, %v1695
        %1697 = vdwg.mxu0
        %1698 = vmatpush.xpose.msra.mxu0 0.0
        %1699 = vmatpush.xpose.msra.mxu0 0.0
        %1700 = vmatpush.xpose.msra.mxu0 0.0
        %1701 = vmatpush.xpose.msra.mxu0 0.0
        %1702 = vmatpush.xpose.msra.mxu0 0.0
        %1703 = vmatpush.xpose.msra.mxu0 0.0
        %1704 = vmatpush.xpose.msra.mxu0 0.0
        %1705 = vmatpush.xpose.msra.mxu0 0.0
        %1706 = vmatpush.xpose.msra.mxu0 0.0
        %1707 = vmatpush.xpose.msra.mxu0 0.0
        %1708 = vmatpush.xpose.msra.mxu0 0.0
        %1709 = vmatpush.xpose.msra.mxu0 0.0
        %1710 = vmatpush.xpose.msra.mxu0 0.0
        %1711 = vmatpush.xpose.msra.mxu0 0.0
        %1712 = vmatpush.xpose.msra.mxu0 0.0
        %v1713 = vand.u32 %v516, 4294901760
        %1714 = vmatpush.xpose.msra.mxu0 %v1713
        %v1715 = vand.u32 %v889, 4294901760
        %v1716 = vsub.f32 %v889, %v1715
        %v1717 = vand.u32 %v1716, 4294901760
        %1718 = vmatmul.f32.gmra.mxu0 %v1717
        %v1719 = vpop.f32.mrf.mxu0
        %v1720 = vadd.f32 %v1691, %v1719
        %v1721 = vand.u32 %v891, 4294901760
        %v1722 = vsub.f32 %v891, %v1721
        %v1723 = vand.u32 %v1722, 4294901760
        %1724 = vmatmul.f32.gmra.mxu0 %v1723
        %v1725 = vpop.f32.mrf.mxu0
        %v1726 = vadd.f32 %v1696, %v1725
        %1727 = vdwg.mxu0
        %1728 = vmatpush.xpose.msra.mxu0 0.0
        %1729 = vmatpush.xpose.msra.mxu0 0.0
        %1730 = vmatpush.xpose.msra.mxu0 0.0
        %1731 = vmatpush.xpose.msra.mxu0 0.0
        %1732 = vmatpush.xpose.msra.mxu0 0.0
        %1733 = vmatpush.xpose.msra.mxu0 0.0
        %1734 = vmatpush.xpose.msra.mxu0 0.0
        %1735 = vmatpush.xpose.msra.mxu0 0.0
        %1736 = vmatpush.xpose.msra.mxu0 0.0
        %1737 = vmatpush.xpose.msra.mxu0 0.0
        %1738 = vmatpush.xpose.msra.mxu0 0.0
        %1739 = vmatpush.xpose.msra.mxu0 0.0
        %1740 = vmatpush.xpose.msra.mxu0 0.0
        %1741 = vmatpush.xpose.msra.mxu0 0.0
        %1742 = vmatpush.xpose.msra.mxu0 0.0
        %v1743 = vand.u32 %v516, 4294901760
        %v1744 = vsub.f32 %v516, %v1743
        %v1745 = vand.u32 %v1744, 4294901760
        %1746 = vmatpush.xpose.msra.mxu0 %v1745
        %v1747 = vand.u32 %v889, 4294901760
        %1748 = vmatmul.f32.gmra.mxu0 %v1747
        %v1749 = vpop.f32.mrf.mxu0
        %v1750 = vadd.f32 %v1720, %v1749
        %v1751 = vand.u32 %v891, 4294901760
        %1752 = vmatmul.f32.gmra.mxu0 %v1751
        %v1753 = vpop.f32.mrf.mxu0
        %v1754 = vadd.f32 %v1726, %v1753
        %1755 = vdwg.mxu0
        %1756 = vmatpush.xpose.msra.mxu0 0.0
        %1757 = vmatpush.xpose.msra.mxu0 0.0
        %1758 = vmatpush.xpose.msra.mxu0 0.0
        %1759 = vmatpush.xpose.msra.mxu0 0.0
        %1760 = vmatpush.xpose.msra.mxu0 0.0
        %1761 = vmatpush.xpose.msra.mxu0 0.0
        %1762 = vmatpush.xpose.msra.mxu0 0.0
        %1763 = vmatpush.xpose.msra.mxu0 0.0
        %1764 = vmatpush.xpose.msra.mxu0 0.0
        %1765 = vmatpush.xpose.msra.mxu0 0.0
        %1766 = vmatpush.xpose.msra.mxu0 0.0
        %1767 = vmatpush.xpose.msra.mxu0 0.0
        %1768 = vmatpush.xpose.msra.mxu0 0.0
        %1769 = vmatpush.xpose.msra.mxu0 0.0
        %1770 = vmatpush.xpose.msra.mxu0 0.0
        %v1771 = vand.u32 %v516, 4294901760
        %1772 = vmatpush.xpose.msra.mxu0 %v1771
        %v1773 = vand.u32 %v889, 4294901760
        %1774 = vmatmul.f32.gmra.mxu0 %v1773
        %v1775 = vpop.f32.mrf.mxu0
        %v1776 = vadd.f32 %v1750, %v1775
        %v1777 = vand.u32 %v891, 4294901760
        %1778 = vmatmul.f32.gmra.mxu0 %v1777
        %v1779 = vpop.f32.mrf.mxu0
        %v1780 = vadd.f32 %v1754, %v1779
        %1781 = vdwg.mxu0
        %1782 = vmatpush.xpose.msra.mxu0 0.0
        %1783 = vmatpush.xpose.msra.mxu0 0.0
        %1784 = vmatpush.xpose.msra.mxu0 0.0
        %1785 = vmatpush.xpose.msra.mxu0 0.0
        %1786 = vmatpush.xpose.msra.mxu0 0.0
        %1787 = vmatpush.xpose.msra.mxu0 0.0
        %1788 = vmatpush.xpose.msra.mxu0 0.0
        %1789 = vmatpush.xpose.msra.mxu0 0.0
        %1790 = vmatpush.xpose.msra.mxu0 0.0
        %1791 = vmatpush.xpose.msra.mxu0 0.0
        %1792 = vmatpush.xpose.msra.mxu0 0.0
        %1793 = vmatpush.xpose.msra.mxu0 0.0
        %1794 = vmatpush.xpose.msra.mxu0 0.0
        %1795 = vmatpush.xpose.msra.mxu0 0.0
        %1796 = vmatpush.xpose.msra.mxu0 0.0
        %v1797 = vand.u32 %v554, 4294901760
        %1798 = vmatpush.xpose.msra.mxu0 %v1797
        %v1799 = vand.u32 %v890, 4294901760
        %v1800 = vsub.f32 %v890, %v1799
        %v1801 = vand.u32 %v1800, 4294901760
        %v1802 = vsub.f32 %v1800, %v1801
        %v1803 = vand.u32 %v1802, 4294901760
        %1804 = vmatmul.f32.gmra.mxu0 %v1803
        %v1805 = vpop.f32.mrf.mxu0
        %v1806 = vadd.f32 %v1776, %v1805
        %v1807 = vand.u32 %v892, 4294901760
        %v1808 = vsub.f32 %v892, %v1807
        %v1809 = vand.u32 %v1808, 4294901760
        %v1810 = vsub.f32 %v1808, %v1809
        %v1811 = vand.u32 %v1810, 4294901760
        %1812 = vmatmul.f32.gmra.mxu0 %v1811
        %v1813 = vpop.f32.mrf.mxu0
        %v1814 = vadd.f32 %v1780, %v1813
        %1815 = vdwg.mxu0
        %1816 = vmatpush.xpose.msra.mxu0 0.0
        %1817 = vmatpush.xpose.msra.mxu0 0.0
        %1818 = vmatpush.xpose.msra.mxu0 0.0
        %1819 = vmatpush.xpose.msra.mxu0 0.0
        %1820 = vmatpush.xpose.msra.mxu0 0.0
        %1821 = vmatpush.xpose.msra.mxu0 0.0
        %1822 = vmatpush.xpose.msra.mxu0 0.0
        %1823 = vmatpush.xpose.msra.mxu0 0.0
        %1824 = vmatpush.xpose.msra.mxu0 0.0
        %1825 = vmatpush.xpose.msra.mxu0 0.0
        %1826 = vmatpush.xpose.msra.mxu0 0.0
        %1827 = vmatpush.xpose.msra.mxu0 0.0
        %1828 = vmatpush.xpose.msra.mxu0 0.0
        %1829 = vmatpush.xpose.msra.mxu0 0.0
        %1830 = vmatpush.xpose.msra.mxu0 0.0
        %v1831 = vand.u32 %v554, 4294901760
        %v1832 = vsub.f32 %v554, %v1831
        %v1833 = vand.u32 %v1832, 4294901760
        %v1834 = vsub.f32 %v1832, %v1833
        %v1835 = vand.u32 %v1834, 4294901760
        %1836 = vmatpush.xpose.msra.mxu0 %v1835
        %v1837 = vand.u32 %v890, 4294901760
        %1838 = vmatmul.f32.gmra.mxu0 %v1837
        %v1839 = vpop.f32.mrf.mxu0
        %v1840 = vadd.f32 %v1806, %v1839
        %v1841 = vand.u32 %v892, 4294901760
        %1842 = vmatmul.f32.gmra.mxu0 %v1841
        %v1843 = vpop.f32.mrf.mxu0
        %v1844 = vadd.f32 %v1814, %v1843
        %1845 = vdwg.mxu0
        %1846 = vmatpush.xpose.msra.mxu0 0.0
        %1847 = vmatpush.xpose.msra.mxu0 0.0
        %1848 = vmatpush.xpose.msra.mxu0 0.0
        %1849 = vmatpush.xpose.msra.mxu0 0.0
        %1850 = vmatpush.xpose.msra.mxu0 0.0
        %1851 = vmatpush.xpose.msra.mxu0 0.0
        %1852 = vmatpush.xpose.msra.mxu0 0.0
        %1853 = vmatpush.xpose.msra.mxu0 0.0
        %1854 = vmatpush.xpose.msra.mxu0 0.0
        %1855 = vmatpush.xpose.msra.mxu0 0.0
        %1856 = vmatpush.xpose.msra.mxu0 0.0
        %1857 = vmatpush.xpose.msra.mxu0 0.0
        %1858 = vmatpush.xpose.msra.mxu0 0.0
        %1859 = vmatpush.xpose.msra.mxu0 0.0
        %1860 = vmatpush.xpose.msra.mxu0 0.0
        %v1861 = vand.u32 %v554, 4294901760
        %v1862 = vsub.f32 %v554, %v1861
        %1863 = vmatpush.xpose.msra.mxu0 %v1862
        %v1864 = vand.u32 %v890, 4294901760
        %v1865 = vsub.f32 %v890, %v1864
        %1866 = vmatmul.f32.gmra.mxu0 %v1865
        %v1867 = vpop.f32.mrf.mxu0
        %v1868 = vadd.f32 %v1840, %v1867
        %v1869 = vand.u32 %v892, 4294901760
        %v1870 = vsub.f32 %v892, %v1869
        %1871 = vmatmul.f32.gmra.mxu0 %v1870
        %v1872 = vpop.f32.mrf.mxu0
        %v1873 = vadd.f32 %v1844, %v1872
        %1874 = vdwg.mxu0
        %1875 = vmatpush.xpose.msra.mxu0 0.0
        %1876 = vmatpush.xpose.msra.mxu0 0.0
        %1877 = vmatpush.xpose.msra.mxu0 0.0
        %1878 = vmatpush.xpose.msra.mxu0 0.0
        %1879 = vmatpush.xpose.msra.mxu0 0.0
        %1880 = vmatpush.xpose.msra.mxu0 0.0
        %1881 = vmatpush.xpose.msra.mxu0 0.0
        %1882 = vmatpush.xpose.msra.mxu0 0.0
        %1883 = vmatpush.xpose.msra.mxu0 0.0
        %1884 = vmatpush.xpose.msra.mxu0 0.0
        %1885 = vmatpush.xpose.msra.mxu0 0.0
        %1886 = vmatpush.xpose.msra.mxu0 0.0
        %1887 = vmatpush.xpose.msra.mxu0 0.0
        %1888 = vmatpush.xpose.msra.mxu0 0.0
        %1889 = vmatpush.xpose.msra.mxu0 0.0
        %v1890 = vand.u32 %v554, 4294901760
        %1891 = vmatpush.xpose.msra.mxu0 %v1890
        %v1892 = vand.u32 %v890, 4294901760
        %v1893 = vsub.f32 %v890, %v1892
        %v1894 = vand.u32 %v1893, 4294901760
        %1895 = vmatmul.f32.gmra.mxu0 %v1894
        %v1896 = vpop.f32.mrf.mxu0
        %v1897 = vadd.f32 %v1868, %v1896
        %v1898 = vand.u32 %v892, 4294901760
        %v1899 = vsub.f32 %v892, %v1898
        %v1900 = vand.u32 %v1899, 4294901760
        %1901 = vmatmul.f32.gmra.mxu0 %v1900
        %v1902 = vpop.f32.mrf.mxu0
        %v1903 = vadd.f32 %v1873, %v1902
        %1904 = vdwg.mxu0
        %1905 = vmatpush.xpose.msra.mxu0 0.0
        %1906 = vmatpush.xpose.msra.mxu0 0.0
        %1907 = vmatpush.xpose.msra.mxu0 0.0
        %1908 = vmatpush.xpose.msra.mxu0 0.0
        %1909 = vmatpush.xpose.msra.mxu0 0.0
        %1910 = vmatpush.xpose.msra.mxu0 0.0
        %1911 = vmatpush.xpose.msra.mxu0 0.0
        %1912 = vmatpush.xpose.msra.mxu0 0.0
        %1913 = vmatpush.xpose.msra.mxu0 0.0
        %1914 = vmatpush.xpose.msra.mxu0 0.0
        %1915 = vmatpush.xpose.msra.mxu0 0.0
        %1916 = vmatpush.xpose.msra.mxu0 0.0
        %1917 = vmatpush.xpose.msra.mxu0 0.0
        %1918 = vmatpush.xpose.msra.mxu0 0.0
        %1919 = vmatpush.xpose.msra.mxu0 0.0
        %v1920 = vand.u32 %v554, 4294901760
        %v1921 = vsub.f32 %v554, %v1920
        %v1922 = vand.u32 %v1921, 4294901760
        %1923 = vmatpush.xpose.msra.mxu0 %v1922
        %v1924 = vand.u32 %v890, 4294901760
        %1925 = vmatmul.f32.gmra.mxu0 %v1924
        %v1926 = vpop.f32.mrf.mxu0
        %v1927 = vadd.f32 %v1897, %v1926
        %v1928 = vand.u32 %v892, 4294901760
        %1929 = vmatmul.f32.gmra.mxu0 %v1928
        %v1930 = vpop.f32.mrf.mxu0
        %v1931 = vadd.f32 %v1903, %v1930
        %1932 = vdwg.mxu0
        %1933 = vmatpush.xpose.msra.mxu0 0.0
        %1934 = vmatpush.xpose.msra.mxu0 0.0
        %1935 = vmatpush.xpose.msra.mxu0 0.0
        %1936 = vmatpush.xpose.msra.mxu0 0.0
        %1937 = vmatpush.xpose.msra.mxu0 0.0
        %1938 = vmatpush.xpose.msra.mxu0 0.0
        %1939 = vmatpush.xpose.msra.mxu0 0.0
        %1940 = vmatpush.xpose.msra.mxu0 0.0
        %1941 = vmatpush.xpose.msra.mxu0 0.0
        %1942 = vmatpush.xpose.msra.mxu0 0.0
        %1943 = vmatpush.xpose.msra.mxu0 0.0
        %1944 = vmatpush.xpose.msra.mxu0 0.0
        %1945 = vmatpush.xpose.msra.mxu0 0.0
        %1946 = vmatpush.xpose.msra.mxu0 0.0
        %1947 = vmatpush.xpose.msra.mxu0 0.0
        %v1948 = vand.u32 %v554, 4294901760
        %1949 = vmatpush.xpose.msra.mxu0 %v1948
        %v1950 = vand.u32 %v890, 4294901760
        %1951 = vmatmul.f32.gmra.mxu0 %v1950
        %v1952 = vpop.f32.mrf.mxu0
        %v1953 = vadd.f32 %v1927, %v1952
        %v1954 = vand.u32 %v892, 4294901760
        %1955 = vmatmul.f32.gmra.mxu0 %v1954
        %v1956 = vpop.f32.mrf.mxu0
        %v1957 = vadd.f32 %v1931, %v1956
        %1958 = vdwg.mxu0
        %1959 = vmatpush.xpose.msra.mxu0 0.0
        %1960 = vmatpush.xpose.msra.mxu0 0.0
        %1961 = vmatpush.xpose.msra.mxu0 0.0
        %1962 = vmatpush.xpose.msra.mxu0 0.0
        %1963 = vmatpush.xpose.msra.mxu0 0.0
        %1964 = vmatpush.xpose.msra.mxu0 0.0
        %1965 = vmatpush.xpose.msra.mxu0 0.0
        %1966 = vmatpush.xpose.msra.mxu0 0.0
        %1967 = vmatpush.xpose.msra.mxu0 0.0
        %1968 = vmatpush.xpose.msra.mxu0 0.0
        %1969 = vmatpush.xpose.msra.mxu0 0.0
        %1970 = vmatpush.xpose.msra.mxu0 0.0
        %1971 = vmatpush.xpose.msra.mxu0 0.0
        %1972 = vmatpush.xpose.msra.mxu0 0.0
        %1973 = vmatpush.xpose.msra.mxu0 0.0
        %v1974 = vand.u32 %v612, 4294901760
        %1975 = vmatpush.xpose.msra.mxu0 %v1974
        %v1976 = vand.u32 %v893, 4294901760
        %v1977 = vsub.f32 %v893, %v1976
        %v1978 = vand.u32 %v1977, 4294901760
        %v1979 = vsub.f32 %v1977, %v1978
        %v1980 = vand.u32 %v1979, 4294901760
        %1981 = vmatmul.f32.gmra.mxu0 %v1980
        %v1982 = vpop.f32.mrf.mxu0
        %v1983 = vadd.f32 0.0, %v1982
        %v1984 = vand.u32 %v895, 4294901760
        %v1985 = vsub.f32 %v895, %v1984
        %v1986 = vand.u32 %v1985, 4294901760
        %v1987 = vsub.f32 %v1985, %v1986
        %v1988 = vand.u32 %v1987, 4294901760
        %1989 = vmatmul.f32.gmra.mxu0 %v1988
        %v1990 = vpop.f32.mrf.mxu0
        %v1991 = vadd.f32 0.0, %v1990
        %1992 = vdwg.mxu0
        %1993 = vmatpush.xpose.msra.mxu0 0.0
        %1994 = vmatpush.xpose.msra.mxu0 0.0
        %1995 = vmatpush.xpose.msra.mxu0 0.0
        %1996 = vmatpush.xpose.msra.mxu0 0.0
        %1997 = vmatpush.xpose.msra.mxu0 0.0
        %1998 = vmatpush.xpose.msra.mxu0 0.0
        %1999 = vmatpush.xpose.msra.mxu0 0.0
        %2000 = vmatpush.xpose.msra.mxu0 0.0
        %2001 = vmatpush.xpose.msra.mxu0 0.0
        %2002 = vmatpush.xpose.msra.mxu0 0.0
        %2003 = vmatpush.xpose.msra.mxu0 0.0
        %2004 = vmatpush.xpose.msra.mxu0 0.0
        %2005 = vmatpush.xpose.msra.mxu0 0.0
        %2006 = vmatpush.xpose.msra.mxu0 0.0
        %2007 = vmatpush.xpose.msra.mxu0 0.0
        %v2008 = vand.u32 %v612, 4294901760
        %v2009 = vsub.f32 %v612, %v2008
        %v2010 = vand.u32 %v2009, 4294901760
        %v2011 = vsub.f32 %v2009, %v2010
        %v2012 = vand.u32 %v2011, 4294901760
        %2013 = vmatpush.xpose.msra.mxu0 %v2012
        %v2014 = vand.u32 %v893, 4294901760
        %2015 = vmatmul.f32.gmra.mxu0 %v2014
        %v2016 = vpop.f32.mrf.mxu0
        %v2017 = vadd.f32 %v1983, %v2016
        %v2018 = vand.u32 %v895, 4294901760
        %2019 = vmatmul.f32.gmra.mxu0 %v2018
        %v2020 = vpop.f32.mrf.mxu0
        %v2021 = vadd.f32 %v1991, %v2020
        %2022 = vdwg.mxu0
        %2023 = vmatpush.xpose.msra.mxu0 0.0
        %2024 = vmatpush.xpose.msra.mxu0 0.0
        %2025 = vmatpush.xpose.msra.mxu0 0.0
        %2026 = vmatpush.xpose.msra.mxu0 0.0
        %2027 = vmatpush.xpose.msra.mxu0 0.0
        %2028 = vmatpush.xpose.msra.mxu0 0.0
        %2029 = vmatpush.xpose.msra.mxu0 0.0
        %2030 = vmatpush.xpose.msra.mxu0 0.0
        %2031 = vmatpush.xpose.msra.mxu0 0.0
        %2032 = vmatpush.xpose.msra.mxu0 0.0
        %2033 = vmatpush.xpose.msra.mxu0 0.0
        %2034 = vmatpush.xpose.msra.mxu0 0.0
        %2035 = vmatpush.xpose.msra.mxu0 0.0
        %2036 = vmatpush.xpose.msra.mxu0 0.0
        %2037 = vmatpush.xpose.msra.mxu0 0.0
        %v2038 = vand.u32 %v612, 4294901760
        %v2039 = vsub.f32 %v612, %v2038
        %2040 = vmatpush.xpose.msra.mxu0 %v2039
        %v2041 = vand.u32 %v893, 4294901760
        %v2042 = vsub.f32 %v893, %v2041
        %2043 = vmatmul.f32.gmra.mxu0 %v2042
        %v2044 = vpop.f32.mrf.mxu0
        %v2045 = vadd.f32 %v2017, %v2044
        %v2046 = vand.u32 %v895, 4294901760
        %v2047 = vsub.f32 %v895, %v2046
        %2048 = vmatmul.f32.gmra.mxu0 %v2047
        %v2049 = vpop.f32.mrf.mxu0
        %v2050 = vadd.f32 %v2021, %v2049
        %2051 = vdwg.mxu0
        %2052 = vmatpush.xpose.msra.mxu0 0.0
        %2053 = vmatpush.xpose.msra.mxu0 0.0
        %2054 = vmatpush.xpose.msra.mxu0 0.0
        %2055 = vmatpush.xpose.msra.mxu0 0.0
        %2056 = vmatpush.xpose.msra.mxu0 0.0
        %2057 = vmatpush.xpose.msra.mxu0 0.0
        %2058 = vmatpush.xpose.msra.mxu0 0.0
        %2059 = vmatpush.xpose.msra.mxu0 0.0
        %2060 = vmatpush.xpose.msra.mxu0 0.0
        %2061 = vmatpush.xpose.msra.mxu0 0.0
        %2062 = vmatpush.xpose.msra.mxu0 0.0
        %2063 = vmatpush.xpose.msra.mxu0 0.0
        %2064 = vmatpush.xpose.msra.mxu0 0.0
        %2065 = vmatpush.xpose.msra.mxu0 0.0
        %2066 = vmatpush.xpose.msra.mxu0 0.0
        %v2067 = vand.u32 %v612, 4294901760
        %2068 = vmatpush.xpose.msra.mxu0 %v2067
        %v2069 = vand.u32 %v893, 4294901760
        %v2070 = vsub.f32 %v893, %v2069
        %v2071 = vand.u32 %v2070, 4294901760
        %2072 = vmatmul.f32.gmra.mxu0 %v2071
        %v2073 = vpop.f32.mrf.mxu0
        %v2074 = vadd.f32 %v2045, %v2073
        %v2075 = vand.u32 %v895, 4294901760
        %v2076 = vsub.f32 %v895, %v2075
        %v2077 = vand.u32 %v2076, 4294901760
        %2078 = vmatmul.f32.gmra.mxu0 %v2077
        %v2079 = vpop.f32.mrf.mxu0
        %v2080 = vadd.f32 %v2050, %v2079
        %2081 = vdwg.mxu0
        %2082 = vmatpush.xpose.msra.mxu0 0.0
        %2083 = vmatpush.xpose.msra.mxu0 0.0
        %2084 = vmatpush.xpose.msra.mxu0 0.0
        %2085 = vmatpush.xpose.msra.mxu0 0.0
        %2086 = vmatpush.xpose.msra.mxu0 0.0
        %2087 = vmatpush.xpose.msra.mxu0 0.0
        %2088 = vmatpush.xpose.msra.mxu0 0.0
        %2089 = vmatpush.xpose.msra.mxu0 0.0
        %2090 = vmatpush.xpose.msra.mxu0 0.0
        %2091 = vmatpush.xpose.msra.mxu0 0.0
        %2092 = vmatpush.xpose.msra.mxu0 0.0
        %2093 = vmatpush.xpose.msra.mxu0 0.0
        %2094 = vmatpush.xpose.msra.mxu0 0.0
        %2095 = vmatpush.xpose.msra.mxu0 0.0
        %2096 = vmatpush.xpose.msra.mxu0 0.0
        %v2097 = vand.u32 %v612, 4294901760
        %v2098 = vsub.f32 %v612, %v2097
        %v2099 = vand.u32 %v2098, 4294901760
        %2100 = vmatpush.xpose.msra.mxu0 %v2099
        %v2101 = vand.u32 %v893, 4294901760
        %2102 = vmatmul.f32.gmra.mxu0 %v2101
        %v2103 = vpop.f32.mrf.mxu0
        %v2104 = vadd.f32 %v2074, %v2103
        %v2105 = vand.u32 %v895, 4294901760
        %2106 = vmatmul.f32.gmra.mxu0 %v2105
        %v2107 = vpop.f32.mrf.mxu0
        %v2108 = vadd.f32 %v2080, %v2107
        %2109 = vdwg.mxu0
        %2110 = vmatpush.xpose.msra.mxu0 0.0
        %2111 = vmatpush.xpose.msra.mxu0 0.0
        %2112 = vmatpush.xpose.msra.mxu0 0.0
        %2113 = vmatpush.xpose.msra.mxu0 0.0
        %2114 = vmatpush.xpose.msra.mxu0 0.0
        %2115 = vmatpush.xpose.msra.mxu0 0.0
        %2116 = vmatpush.xpose.msra.mxu0 0.0
        %2117 = vmatpush.xpose.msra.mxu0 0.0
        %2118 = vmatpush.xpose.msra.mxu0 0.0
        %2119 = vmatpush.xpose.msra.mxu0 0.0
        %2120 = vmatpush.xpose.msra.mxu0 0.0
        %2121 = vmatpush.xpose.msra.mxu0 0.0
        %2122 = vmatpush.xpose.msra.mxu0 0.0
        %2123 = vmatpush.xpose.msra.mxu0 0.0
        %2124 = vmatpush.xpose.msra.mxu0 0.0
        %v2125 = vand.u32 %v612, 4294901760
        %2126 = vmatpush.xpose.msra.mxu0 %v2125
        %v2127 = vand.u32 %v893, 4294901760
        %2128 = vmatmul.f32.gmra.mxu0 %v2127
        %v2129 = vpop.f32.mrf.mxu0
        %v2130 = vadd.f32 %v2104, %v2129
        %v2131 = vand.u32 %v895, 4294901760
        %2132 = vmatmul.f32.gmra.mxu0 %v2131
        %v2133 = vpop.f32.mrf.mxu0
        %v2134 = vadd.f32 %v2108, %v2133
        %2135 = vdwg.mxu0
        %2136 = vmatpush.xpose.msra.mxu0 0.0
        %2137 = vmatpush.xpose.msra.mxu0 0.0
        %2138 = vmatpush.xpose.msra.mxu0 0.0
        %2139 = vmatpush.xpose.msra.mxu0 0.0
        %2140 = vmatpush.xpose.msra.mxu0 0.0
        %2141 = vmatpush.xpose.msra.mxu0 0.0
        %2142 = vmatpush.xpose.msra.mxu0 0.0
        %2143 = vmatpush.xpose.msra.mxu0 0.0
        %2144 = vmatpush.xpose.msra.mxu0 0.0
        %2145 = vmatpush.xpose.msra.mxu0 0.0
        %2146 = vmatpush.xpose.msra.mxu0 0.0
        %2147 = vmatpush.xpose.msra.mxu0 0.0
        %2148 = vmatpush.xpose.msra.mxu0 0.0
        %2149 = vmatpush.xpose.msra.mxu0 0.0
        %2150 = vmatpush.xpose.msra.mxu0 0.0
        %v2151 = vand.u32 %v650, 4294901760
        %2152 = vmatpush.xpose.msra.mxu0 %v2151
        %v2153 = vand.u32 %v894, 4294901760
        %v2154 = vsub.f32 %v894, %v2153
        %v2155 = vand.u32 %v2154, 4294901760
        %v2156 = vsub.f32 %v2154, %v2155
        %v2157 = vand.u32 %v2156, 4294901760
        %2158 = vmatmul.f32.gmra.mxu0 %v2157
        %v2159 = vpop.f32.mrf.mxu0
        %v2160 = vadd.f32 %v2130, %v2159
        %v2161 = vand.u32 %v896, 4294901760
        %v2162 = vsub.f32 %v896, %v2161
        %v2163 = vand.u32 %v2162, 4294901760
        %v2164 = vsub.f32 %v2162, %v2163
        %v2165 = vand.u32 %v2164, 4294901760
        %2166 = vmatmul.f32.gmra.mxu0 %v2165
        %v2167 = vpop.f32.mrf.mxu0
        %v2168 = vadd.f32 %v2134, %v2167
        %2169 = vdwg.mxu0
        %2170 = vmatpush.xpose.msra.mxu0 0.0
        %2171 = vmatpush.xpose.msra.mxu0 0.0
        %2172 = vmatpush.xpose.msra.mxu0 0.0
        %2173 = vmatpush.xpose.msra.mxu0 0.0
        %2174 = vmatpush.xpose.msra.mxu0 0.0
        %2175 = vmatpush.xpose.msra.mxu0 0.0
        %2176 = vmatpush.xpose.msra.mxu0 0.0
        %2177 = vmatpush.xpose.msra.mxu0 0.0
        %2178 = vmatpush.xpose.msra.mxu0 0.0
        %2179 = vmatpush.xpose.msra.mxu0 0.0
        %2180 = vmatpush.xpose.msra.mxu0 0.0
        %2181 = vmatpush.xpose.msra.mxu0 0.0
        %2182 = vmatpush.xpose.msra.mxu0 0.0
        %2183 = vmatpush.xpose.msra.mxu0 0.0
        %2184 = vmatpush.xpose.msra.mxu0 0.0
        %v2185 = vand.u32 %v650, 4294901760
        %v2186 = vsub.f32 %v650, %v2185
        %v2187 = vand.u32 %v2186, 4294901760
        %v2188 = vsub.f32 %v2186, %v2187
        %v2189 = vand.u32 %v2188, 4294901760
        %2190 = vmatpush.xpose.msra.mxu0 %v2189
        %v2191 = vand.u32 %v894, 4294901760
        %2192 = vmatmul.f32.gmra.mxu0 %v2191
        %v2193 = vpop.f32.mrf.mxu0
        %v2194 = vadd.f32 %v2160, %v2193
        %v2195 = vand.u32 %v896, 4294901760
        %2196 = vmatmul.f32.gmra.mxu0 %v2195
        %v2197 = vpop.f32.mrf.mxu0
        %v2198 = vadd.f32 %v2168, %v2197
        %2199 = vdwg.mxu0
        %2200 = vmatpush.xpose.msra.mxu0 0.0
        %2201 = vmatpush.xpose.msra.mxu0 0.0
        %2202 = vmatpush.xpose.msra.mxu0 0.0
        %2203 = vmatpush.xpose.msra.mxu0 0.0
        %2204 = vmatpush.xpose.msra.mxu0 0.0
        %2205 = vmatpush.xpose.msra.mxu0 0.0
        %2206 = vmatpush.xpose.msra.mxu0 0.0
        %2207 = vmatpush.xpose.msra.mxu0 0.0
        %2208 = vmatpush.xpose.msra.mxu0 0.0
        %2209 = vmatpush.xpose.msra.mxu0 0.0
        %2210 = vmatpush.xpose.msra.mxu0 0.0
        %2211 = vmatpush.xpose.msra.mxu0 0.0
        %2212 = vmatpush.xpose.msra.mxu0 0.0
        %2213 = vmatpush.xpose.msra.mxu0 0.0
        %2214 = vmatpush.xpose.msra.mxu0 0.0
        %v2215 = vand.u32 %v650, 4294901760
        %v2216 = vsub.f32 %v650, %v2215
        %2217 = vmatpush.xpose.msra.mxu0 %v2216
        %v2218 = vand.u32 %v894, 4294901760
        %v2219 = vsub.f32 %v894, %v2218
        %2220 = vmatmul.f32.gmra.mxu0 %v2219
        %v2221 = vpop.f32.mrf.mxu0
        %v2222 = vadd.f32 %v2194, %v2221
        %v2223 = vand.u32 %v896, 4294901760
        %v2224 = vsub.f32 %v896, %v2223
        %2225 = vmatmul.f32.gmra.mxu0 %v2224
        %v2226 = vpop.f32.mrf.mxu0
        %v2227 = vadd.f32 %v2198, %v2226
        %2228 = vdwg.mxu0
        %2229 = vmatpush.xpose.msra.mxu0 0.0
        %2230 = vmatpush.xpose.msra.mxu0 0.0
        %2231 = vmatpush.xpose.msra.mxu0 0.0
        %2232 = vmatpush.xpose.msra.mxu0 0.0
        %2233 = vmatpush.xpose.msra.mxu0 0.0
        %2234 = vmatpush.xpose.msra.mxu0 0.0
        %2235 = vmatpush.xpose.msra.mxu0 0.0
        %2236 = vmatpush.xpose.msra.mxu0 0.0
        %2237 = vmatpush.xpose.msra.mxu0 0.0
        %2238 = vmatpush.xpose.msra.mxu0 0.0
        %2239 = vmatpush.xpose.msra.mxu0 0.0
        %2240 = vmatpush.xpose.msra.mxu0 0.0
        %2241 = vmatpush.xpose.msra.mxu0 0.0
        %2242 = vmatpush.xpose.msra.mxu0 0.0
        %2243 = vmatpush.xpose.msra.mxu0 0.0
        %v2244 = vand.u32 %v650, 4294901760
        %2245 = vmatpush.xpose.msra.mxu0 %v2244
        %v2246 = vand.u32 %v894, 4294901760
        %v2247 = vsub.f32 %v894, %v2246
        %v2248 = vand.u32 %v2247, 4294901760
        %2249 = vmatmul.f32.gmra.mxu0 %v2248
        %v2250 = vpop.f32.mrf.mxu0
        %v2251 = vadd.f32 %v2222, %v2250
        %v2252 = vand.u32 %v896, 4294901760
        %v2253 = vsub.f32 %v896, %v2252
        %v2254 = vand.u32 %v2253, 4294901760
        %2255 = vmatmul.f32.gmra.mxu0 %v2254
        %v2256 = vpop.f32.mrf.mxu0
        %v2257 = vadd.f32 %v2227, %v2256
        %2258 = vdwg.mxu0
        %2259 = vmatpush.xpose.msra.mxu0 0.0
        %2260 = vmatpush.xpose.msra.mxu0 0.0
        %2261 = vmatpush.xpose.msra.mxu0 0.0
        %2262 = vmatpush.xpose.msra.mxu0 0.0
        %2263 = vmatpush.xpose.msra.mxu0 0.0
        %2264 = vmatpush.xpose.msra.mxu0 0.0
        %2265 = vmatpush.xpose.msra.mxu0 0.0
        %2266 = vmatpush.xpose.msra.mxu0 0.0
        %2267 = vmatpush.xpose.msra.mxu0 0.0
        %2268 = vmatpush.xpose.msra.mxu0 0.0
        %2269 = vmatpush.xpose.msra.mxu0 0.0
        %2270 = vmatpush.xpose.msra.mxu0 0.0
        %2271 = vmatpush.xpose.msra.mxu0 0.0
        %2272 = vmatpush.xpose.msra.mxu0 0.0
        %2273 = vmatpush.xpose.msra.mxu0 0.0
        %v2274 = vand.u32 %v650, 4294901760
        %v2275 = vsub.f32 %v650, %v2274
        %v2276 = vand.u32 %v2275, 4294901760
        %2277 = vmatpush.xpose.msra.mxu0 %v2276
        %v2278 = vand.u32 %v894, 4294901760
        %2279 = vmatmul.f32.gmra.mxu0 %v2278
        %v2280 = vpop.f32.mrf.mxu0
        %v2281 = vadd.f32 %v2251, %v2280
        %v2282 = vand.u32 %v896, 4294901760
        %2283 = vmatmul.f32.gmra.mxu0 %v2282
        %v2284 = vpop.f32.mrf.mxu0
        %v2285 = vadd.f32 %v2257, %v2284
        %2286 = vdwg.mxu0
        %2287 = vmatpush.xpose.msra.mxu0 0.0
        %2288 = vmatpush.xpose.msra.mxu0 0.0
        %2289 = vmatpush.xpose.msra.mxu0 0.0
        %2290 = vmatpush.xpose.msra.mxu0 0.0
        %2291 = vmatpush.xpose.msra.mxu0 0.0
        %2292 = vmatpush.xpose.msra.mxu0 0.0
        %2293 = vmatpush.xpose.msra.mxu0 0.0
        %2294 = vmatpush.xpose.msra.mxu0 0.0
        %2295 = vmatpush.xpose.msra.mxu0 0.0
        %2296 = vmatpush.xpose.msra.mxu0 0.0
        %2297 = vmatpush.xpose.msra.mxu0 0.0
        %2298 = vmatpush.xpose.msra.mxu0 0.0
        %2299 = vmatpush.xpose.msra.mxu0 0.0
        %2300 = vmatpush.xpose.msra.mxu0 0.0
        %2301 = vmatpush.xpose.msra.mxu0 0.0
        %v2302 = vand.u32 %v650, 4294901760
        %2303 = vmatpush.xpose.msra.mxu0 %v2302
        %v2304 = vand.u32 %v894, 4294901760
        %2305 = vmatmul.f32.gmra.mxu0 %v2304
        %v2306 = vpop.f32.mrf.mxu0
        %v2307 = vadd.f32 %v2281, %v2306
        %v2308 = vand.u32 %v896, 4294901760
        %2309 = vmatmul.f32.gmra.mxu0 %v2308
        %v2310 = vpop.f32.mrf.mxu0
        %v2311 = vadd.f32 %v2285, %v2310
        %2312 = vdwg.mxu0
        %2313 = vxpose.xlu0.b32.start [1/16] %v1245, 128
        %2314 = vxpose.xlu0.b32.cont [2/16] %v1249, 128
        %2315 = vxpose.xlu0.b32.cont [3/16] 0.0, 128
        %2316 = vxpose.xlu0.b32.cont [4/16] 0.0, 128
        %2317 = vxpose.xlu0.b32.cont [5/16] 0.0, 128
        %2318 = vxpose.xlu0.b32.cont [6/16] 0.0, 128
        %2319 = vxpose.xlu0.b32.cont [7/16] 0.0, 128
        %2320 = vxpose.xlu0.b32.cont [8/16] 0.0, 128
        %2321 = vxpose.xlu0.b32.cont [9/16] 0.0, 128
        %2322 = vxpose.xlu0.b32.cont [10/16] 0.0, 128
        %2323 = vxpose.xlu0.b32.cont [11/16] 0.0, 128
        %2324 = vxpose.xlu0.b32.cont [12/16] 0.0, 128
        %2325 = vxpose.xlu0.b32.cont [13/16] 0.0, 128
        %2326 = vxpose.xlu0.b32.cont [14/16] 0.0, 128
        %2327 = vxpose.xlu0.b32.cont [15/16] 0.0, 128
        %2328 = vxpose.xlu0.b32.end [16/16] 0.0, 128
        %v2329 = vpop.trf.xlu0
        %v2330 = vpop.trf.xlu0
        %v2331 = vpop.trf.xlu0
        %v2332 = vpop.trf.xlu0
        %v2333 = vpop.trf.xlu0
        %v2334 = vpop.trf.xlu0
        %v2335 = vpop.trf.xlu0
        %v2336 = vpop.trf.xlu0
        %v2337 = vpop.trf.xlu0
        %v2338 = vpop.trf.xlu0
        %v2339 = vpop.trf.xlu0
        %v2340 = vpop.trf.xlu0
        %v2341 = vpop.trf.xlu0
        %v2342 = vpop.trf.xlu0
        %v2343 = vpop.trf.xlu0
        %v2344 = vpop.trf.xlu0
        %vm2345 = vcmask 130048
        %v2347 = vsel %vm2345, %v2329, 0
        %2349 = vmatpush.msra.mxu0 0.0
        %2350 = vmatpush.msra.mxu0 0.0
        %2351 = vmatpush.msra.mxu0 0.0
        %2352 = vmatpush.msra.mxu0 0.0
        %2353 = vmatpush.msra.mxu0 0.0
        %2354 = vmatpush.msra.mxu0 0.0
        %2355 = vmatpush.msra.mxu0 0.0
        %2356 = vmatpush.msra.mxu0 0.0
        %2357 = vmatpush.msra.mxu0 0.0
        %2358 = vmatpush.msra.mxu0 0.0
        %2359 = vmatpush.msra.mxu0 0.0
        %2360 = vmatpush.msra.mxu0 0.0
        %2361 = vmatpush.msra.mxu0 0.0
        %2362 = vmatpush.msra.mxu0 0.0
        %v2363 = vand.u32 %v301, 4294901760
        %2364 = vmatpush.msra.mxu0 %v2363
        %v2365 = vand.u32 %v299, 4294901760
        %2366 = vmatpush.msra.mxu0 %v2365
        %v2367 = vand.u32 %v2347, 4294901760
        %v2368 = vsub.f32 %v2347, %v2367
        %v2369 = vand.u32 %v2368, 4294901760
        %v2370 = vsub.f32 %v2368, %v2369
        %v2371 = vand.u32 %v2370, 4294901760
        %2372 = vmatmul.f32.gmra.mxu0 %v2371
        %v2373 = vpop.f32.mrf.mxu0
        %v2374 = vadd.f32 0.0, %v2373
        %2375 = vdwg.mxu0
        %2376 = vmatpush.msra.mxu0 0.0
        %2377 = vmatpush.msra.mxu0 0.0
        %2378 = vmatpush.msra.mxu0 0.0
        %2379 = vmatpush.msra.mxu0 0.0
        %2380 = vmatpush.msra.mxu0 0.0
        %2381 = vmatpush.msra.mxu0 0.0
        %2382 = vmatpush.msra.mxu0 0.0
        %2383 = vmatpush.msra.mxu0 0.0
        %2384 = vmatpush.msra.mxu0 0.0
        %2385 = vmatpush.msra.mxu0 0.0
        %2386 = vmatpush.msra.mxu0 0.0
        %2387 = vmatpush.msra.mxu0 0.0
        %2388 = vmatpush.msra.mxu0 0.0
        %2389 = vmatpush.msra.mxu0 0.0
        %v2390 = vand.u32 %v301, 4294901760
        %v2391 = vsub.f32 %v301, %v2390
        %v2392 = vand.u32 %v2391, 4294901760
        %v2393 = vsub.f32 %v2391, %v2392
        %v2394 = vand.u32 %v2393, 4294901760
        %2395 = vmatpush.msra.mxu0 %v2394
        %v2396 = vand.u32 %v299, 4294901760
        %v2397 = vsub.f32 %v299, %v2396
        %v2398 = vand.u32 %v2397, 4294901760
        %v2399 = vsub.f32 %v2397, %v2398
        %v2400 = vand.u32 %v2399, 4294901760
        %2401 = vmatpush.msra.mxu0 %v2400
        %v2402 = vand.u32 %v2347, 4294901760
        %2403 = vmatmul.f32.gmra.mxu0 %v2402
        %v2404 = vpop.f32.mrf.mxu0
        %v2405 = vadd.f32 %v2374, %v2404
        %2406 = vdwg.mxu0
        %2407 = vmatpush.msra.mxu0 0.0
        %2408 = vmatpush.msra.mxu0 0.0
        %2409 = vmatpush.msra.mxu0 0.0
        %2410 = vmatpush.msra.mxu0 0.0
        %2411 = vmatpush.msra.mxu0 0.0
        %2412 = vmatpush.msra.mxu0 0.0
        %2413 = vmatpush.msra.mxu0 0.0
        %2414 = vmatpush.msra.mxu0 0.0
        %2415 = vmatpush.msra.mxu0 0.0
        %2416 = vmatpush.msra.mxu0 0.0
        %2417 = vmatpush.msra.mxu0 0.0
        %2418 = vmatpush.msra.mxu0 0.0
        %2419 = vmatpush.msra.mxu0 0.0
        %2420 = vmatpush.msra.mxu0 0.0
        %v2421 = vand.u32 %v301, 4294901760
        %v2422 = vsub.f32 %v301, %v2421
        %2423 = vmatpush.msra.mxu0 %v2422
        %v2424 = vand.u32 %v299, 4294901760
        %v2425 = vsub.f32 %v299, %v2424
        %2426 = vmatpush.msra.mxu0 %v2425
        %v2427 = vand.u32 %v2347, 4294901760
        %v2428 = vsub.f32 %v2347, %v2427
        %2429 = vmatmul.f32.gmra.mxu0 %v2428
        %v2430 = vpop.f32.mrf.mxu0
        %v2431 = vadd.f32 %v2405, %v2430
        %2432 = vdwg.mxu0
        %2433 = vmatpush.msra.mxu0 0.0
        %2434 = vmatpush.msra.mxu0 0.0
        %2435 = vmatpush.msra.mxu0 0.0
        %2436 = vmatpush.msra.mxu0 0.0
        %2437 = vmatpush.msra.mxu0 0.0
        %2438 = vmatpush.msra.mxu0 0.0
        %2439 = vmatpush.msra.mxu0 0.0
        %2440 = vmatpush.msra.mxu0 0.0
        %2441 = vmatpush.msra.mxu0 0.0
        %2442 = vmatpush.msra.mxu0 0.0
        %2443 = vmatpush.msra.mxu0 0.0
        %2444 = vmatpush.msra.mxu0 0.0
        %2445 = vmatpush.msra.mxu0 0.0
        %2446 = vmatpush.msra.mxu0 0.0
        %v2447 = vand.u32 %v301, 4294901760
        %2448 = vmatpush.msra.mxu0 %v2447
        %v2449 = vand.u32 %v299, 4294901760
        %2450 = vmatpush.msra.mxu0 %v2449
        %v2451 = vand.u32 %v2347, 4294901760
        %v2452 = vsub.f32 %v2347, %v2451
        %v2453 = vand.u32 %v2452, 4294901760
        %2454 = vmatmul.f32.gmra.mxu0 %v2453
        %v2455 = vpop.f32.mrf.mxu0
        %v2456 = vadd.f32 %v2431, %v2455
        %2457 = vdwg.mxu0
        %2458 = vmatpush.msra.mxu0 0.0
        %2459 = vmatpush.msra.mxu0 0.0
        %2460 = vmatpush.msra.mxu0 0.0
        %2461 = vmatpush.msra.mxu0 0.0
        %2462 = vmatpush.msra.mxu0 0.0
        %2463 = vmatpush.msra.mxu0 0.0
        %2464 = vmatpush.msra.mxu0 0.0
        %2465 = vmatpush.msra.mxu0 0.0
        %2466 = vmatpush.msra.mxu0 0.0
        %2467 = vmatpush.msra.mxu0 0.0
        %2468 = vmatpush.msra.mxu0 0.0
        %2469 = vmatpush.msra.mxu0 0.0
        %2470 = vmatpush.msra.mxu0 0.0
        %2471 = vmatpush.msra.mxu0 0.0
        %v2472 = vand.u32 %v301, 4294901760
        %v2473 = vsub.f32 %v301, %v2472
        %v2474 = vand.u32 %v2473, 4294901760
        %2475 = vmatpush.msra.mxu0 %v2474
        %v2476 = vand.u32 %v299, 4294901760
        %v2477 = vsub.f32 %v299, %v2476
        %v2478 = vand.u32 %v2477, 4294901760
        %2479 = vmatpush.msra.mxu0 %v2478
        %v2480 = vand.u32 %v2347, 4294901760
        %2481 = vmatmul.f32.gmra.mxu0 %v2480
        %v2482 = vpop.f32.mrf.mxu0
        %v2483 = vadd.f32 %v2456, %v2482
        %2484 = vdwg.mxu0
        %2485 = vmatpush.msra.mxu0 0.0
        %2486 = vmatpush.msra.mxu0 0.0
        %2487 = vmatpush.msra.mxu0 0.0
        %2488 = vmatpush.msra.mxu0 0.0
        %2489 = vmatpush.msra.mxu0 0.0
        %2490 = vmatpush.msra.mxu0 0.0
        %2491 = vmatpush.msra.mxu0 0.0
        %2492 = vmatpush.msra.mxu0 0.0
        %2493 = vmatpush.msra.mxu0 0.0
        %2494 = vmatpush.msra.mxu0 0.0
        %2495 = vmatpush.msra.mxu0 0.0
        %2496 = vmatpush.msra.mxu0 0.0
        %2497 = vmatpush.msra.mxu0 0.0
        %2498 = vmatpush.msra.mxu0 0.0
        %v2499 = vand.u32 %v301, 4294901760
        %2500 = vmatpush.msra.mxu0 %v2499
        %v2501 = vand.u32 %v299, 4294901760
        %2502 = vmatpush.msra.mxu0 %v2501
        %v2503 = vand.u32 %v2347, 4294901760
        %2504 = vmatmul.f32.gmra.mxu0 %v2503
        %v2505 = vpop.f32.mrf.mxu0
        %v2506 = vadd.f32 %v2483, %v2505
        %2507 = vdwg.mxu0
        %2508 = vmatpush.msra.mxu0 0.0
        %2509 = vmatpush.msra.mxu0 0.0
        %2510 = vmatpush.msra.mxu0 0.0
        %2511 = vmatpush.msra.mxu0 0.0
        %2512 = vmatpush.msra.mxu0 0.0
        %2513 = vmatpush.msra.mxu0 0.0
        %2514 = vmatpush.msra.mxu0 0.0
        %2515 = vmatpush.msra.mxu0 0.0
        %2516 = vmatpush.msra.mxu0 0.0
        %2517 = vmatpush.msra.mxu0 0.0
        %2518 = vmatpush.msra.mxu0 0.0
        %2519 = vmatpush.msra.mxu0 0.0
        %2520 = vmatpush.msra.mxu0 0.0
        %2521 = vmatpush.msra.mxu0 0.0
        %v2522 = vand.u32 %v339, 4294901760
        %2523 = vmatpush.msra.mxu0 %v2522
        %v2524 = vand.u32 %v337, 4294901760
        %2525 = vmatpush.msra.mxu0 %v2524
        %v2526 = vand.u32 %v2347, 4294901760
        %v2527 = vsub.f32 %v2347, %v2526
        %v2528 = vand.u32 %v2527, 4294901760
        %v2529 = vsub.f32 %v2527, %v2528
        %v2530 = vand.u32 %v2529, 4294901760
        %2531 = vmatmul.f32.gmra.mxu0 %v2530
        %v2532 = vpop.f32.mrf.mxu0
        %v2533 = vadd.f32 0.0, %v2532
        %2534 = vdwg.mxu0
        %2535 = vmatpush.msra.mxu0 0.0
        %2536 = vmatpush.msra.mxu0 0.0
        %2537 = vmatpush.msra.mxu0 0.0
        %2538 = vmatpush.msra.mxu0 0.0
        %2539 = vmatpush.msra.mxu0 0.0
        %2540 = vmatpush.msra.mxu0 0.0
        %2541 = vmatpush.msra.mxu0 0.0
        %2542 = vmatpush.msra.mxu0 0.0
        %2543 = vmatpush.msra.mxu0 0.0
        %2544 = vmatpush.msra.mxu0 0.0
        %2545 = vmatpush.msra.mxu0 0.0
        %2546 = vmatpush.msra.mxu0 0.0
        %2547 = vmatpush.msra.mxu0 0.0
        %2548 = vmatpush.msra.mxu0 0.0
        %v2549 = vand.u32 %v339, 4294901760
        %v2550 = vsub.f32 %v339, %v2549
        %v2551 = vand.u32 %v2550, 4294901760
        %v2552 = vsub.f32 %v2550, %v2551
        %v2553 = vand.u32 %v2552, 4294901760
        %2554 = vmatpush.msra.mxu0 %v2553
        %v2555 = vand.u32 %v337, 4294901760
        %v2556 = vsub.f32 %v337, %v2555
        %v2557 = vand.u32 %v2556, 4294901760
        %v2558 = vsub.f32 %v2556, %v2557
        %v2559 = vand.u32 %v2558, 4294901760
        %2560 = vmatpush.msra.mxu0 %v2559
        %v2561 = vand.u32 %v2347, 4294901760
        %2562 = vmatmul.f32.gmra.mxu0 %v2561
        %v2563 = vpop.f32.mrf.mxu0
        %v2564 = vadd.f32 %v2533, %v2563
        %2565 = vdwg.mxu0
        %2566 = vmatpush.msra.mxu0 0.0
        %2567 = vmatpush.msra.mxu0 0.0
        %2568 = vmatpush.msra.mxu0 0.0
        %2569 = vmatpush.msra.mxu0 0.0
        %2570 = vmatpush.msra.mxu0 0.0
        %2571 = vmatpush.msra.mxu0 0.0
        %2572 = vmatpush.msra.mxu0 0.0
        %2573 = vmatpush.msra.mxu0 0.0
        %2574 = vmatpush.msra.mxu0 0.0
        %2575 = vmatpush.msra.mxu0 0.0
        %2576 = vmatpush.msra.mxu0 0.0
        %2577 = vmatpush.msra.mxu0 0.0
        %2578 = vmatpush.msra.mxu0 0.0
        %2579 = vmatpush.msra.mxu0 0.0
        %v2580 = vand.u32 %v339, 4294901760
        %v2581 = vsub.f32 %v339, %v2580
        %2582 = vmatpush.msra.mxu0 %v2581
        %v2583 = vand.u32 %v337, 4294901760
        %v2584 = vsub.f32 %v337, %v2583
        %2585 = vmatpush.msra.mxu0 %v2584
        %v2586 = vand.u32 %v2347, 4294901760
        %v2587 = vsub.f32 %v2347, %v2586
        %2588 = vmatmul.f32.gmra.mxu0 %v2587
        %v2589 = vpop.f32.mrf.mxu0
        %v2590 = vadd.f32 %v2564, %v2589
        %2591 = vdwg.mxu0
        %2592 = vmatpush.msra.mxu0 0.0
        %2593 = vmatpush.msra.mxu0 0.0
        %2594 = vmatpush.msra.mxu0 0.0
        %2595 = vmatpush.msra.mxu0 0.0
        %2596 = vmatpush.msra.mxu0 0.0
        %2597 = vmatpush.msra.mxu0 0.0
        %2598 = vmatpush.msra.mxu0 0.0
        %2599 = vmatpush.msra.mxu0 0.0
        %2600 = vmatpush.msra.mxu0 0.0
        %2601 = vmatpush.msra.mxu0 0.0
        %2602 = vmatpush.msra.mxu0 0.0
        %2603 = vmatpush.msra.mxu0 0.0
        %2604 = vmatpush.msra.mxu0 0.0
        %2605 = vmatpush.msra.mxu0 0.0
        %v2606 = vand.u32 %v339, 4294901760
        %2607 = vmatpush.msra.mxu0 %v2606
        %v2608 = vand.u32 %v337, 4294901760
        %2609 = vmatpush.msra.mxu0 %v2608
        %v2610 = vand.u32 %v2347, 4294901760
        %v2611 = vsub.f32 %v2347, %v2610
        %v2612 = vand.u32 %v2611, 4294901760
        %2613 = vmatmul.f32.gmra.mxu0 %v2612
        %v2614 = vpop.f32.mrf.mxu0
        %v2615 = vadd.f32 %v2590, %v2614
        %2616 = vdwg.mxu0
        %2617 = vmatpush.msra.mxu0 0.0
        %2618 = vmatpush.msra.mxu0 0.0
        %2619 = vmatpush.msra.mxu0 0.0
        %2620 = vmatpush.msra.mxu0 0.0
        %2621 = vmatpush.msra.mxu0 0.0
        %2622 = vmatpush.msra.mxu0 0.0
        %2623 = vmatpush.msra.mxu0 0.0
        %2624 = vmatpush.msra.mxu0 0.0
        %2625 = vmatpush.msra.mxu0 0.0
        %2626 = vmatpush.msra.mxu0 0.0
        %2627 = vmatpush.msra.mxu0 0.0
        %2628 = vmatpush.msra.mxu0 0.0
        %2629 = vmatpush.msra.mxu0 0.0
        %2630 = vmatpush.msra.mxu0 0.0
        %v2631 = vand.u32 %v339, 4294901760
        %v2632 = vsub.f32 %v339, %v2631
        %v2633 = vand.u32 %v2632, 4294901760
        %2634 = vmatpush.msra.mxu0 %v2633
        %v2635 = vand.u32 %v337, 4294901760
        %v2636 = vsub.f32 %v337, %v2635
        %v2637 = vand.u32 %v2636, 4294901760
        %2638 = vmatpush.msra.mxu0 %v2637
        %v2639 = vand.u32 %v2347, 4294901760
        %2640 = vmatmul.f32.gmra.mxu0 %v2639
        %v2641 = vpop.f32.mrf.mxu0
        %v2642 = vadd.f32 %v2615, %v2641
        %2643 = vdwg.mxu0
        %2644 = vmatpush.msra.mxu0 0.0
        %2645 = vmatpush.msra.mxu0 0.0
        %2646 = vmatpush.msra.mxu0 0.0
        %2647 = vmatpush.msra.mxu0 0.0
        %2648 = vmatpush.msra.mxu0 0.0
        %2649 = vmatpush.msra.mxu0 0.0
        %2650 = vmatpush.msra.mxu0 0.0
        %2651 = vmatpush.msra.mxu0 0.0
        %2652 = vmatpush.msra.mxu0 0.0
        %2653 = vmatpush.msra.mxu0 0.0
        %2654 = vmatpush.msra.mxu0 0.0
        %2655 = vmatpush.msra.mxu0 0.0
        %2656 = vmatpush.msra.mxu0 0.0
        %2657 = vmatpush.msra.mxu0 0.0
        %v2658 = vand.u32 %v339, 4294901760
        %2659 = vmatpush.msra.mxu0 %v2658
        %v2660 = vand.u32 %v337, 4294901760
        %2661 = vmatpush.msra.mxu0 %v2660
        %v2662 = vand.u32 %v2347, 4294901760
        %2663 = vmatmul.f32.gmra.mxu0 %v2662
        %v2664 = vpop.f32.mrf.mxu0
        %v2665 = vadd.f32 %v2642, %v2664
        %2666 = vdwg.mxu0
        %2667 = vxpose.xlu0.b32.start [1/16] %v1599, 128
        %2668 = vxpose.xlu0.b32.cont [2/16] %v1603, 128
        %2669 = vxpose.xlu0.b32.cont [3/16] 0.0, 128
        %2670 = vxpose.xlu0.b32.cont [4/16] 0.0, 128
        %2671 = vxpose.xlu0.b32.cont [5/16] 0.0, 128
        %2672 = vxpose.xlu0.b32.cont [6/16] 0.0, 128
        %2673 = vxpose.xlu0.b32.cont [7/16] 0.0, 128
        %2674 = vxpose.xlu0.b32.cont [8/16] 0.0, 128
        %2675 = vxpose.xlu0.b32.cont [9/16] 0.0, 128
        %2676 = vxpose.xlu0.b32.cont [10/16] 0.0, 128
        %2677 = vxpose.xlu0.b32.cont [11/16] 0.0, 128
        %2678 = vxpose.xlu0.b32.cont [12/16] 0.0, 128
        %2679 = vxpose.xlu0.b32.cont [13/16] 0.0, 128
        %2680 = vxpose.xlu0.b32.cont [14/16] 0.0, 128
        %2681 = vxpose.xlu0.b32.cont [15/16] 0.0, 128
        %2682 = vxpose.xlu0.b32.end [16/16] 0.0, 128
        %v2683 = vpop.trf.xlu0
        %v2684 = vpop.trf.xlu0
        %v2685 = vpop.trf.xlu0
        %v2686 = vpop.trf.xlu0
        %v2687 = vpop.trf.xlu0
        %v2688 = vpop.trf.xlu0
        %v2689 = vpop.trf.xlu0
        %v2690 = vpop.trf.xlu0
        %v2691 = vpop.trf.xlu0
        %v2692 = vpop.trf.xlu0
        %v2693 = vpop.trf.xlu0
        %v2694 = vpop.trf.xlu0
        %v2695 = vpop.trf.xlu0
        %v2696 = vpop.trf.xlu0
        %v2697 = vpop.trf.xlu0
        %v2698 = vpop.trf.xlu0
        %v2700 = vsel %vm2345, %v2683, 0
        %2702 = vmatpush.msra.mxu0 0.0
        %2703 = vmatpush.msra.mxu0 0.0
        %2704 = vmatpush.msra.mxu0 0.0
        %2705 = vmatpush.msra.mxu0 0.0
        %2706 = vmatpush.msra.mxu0 0.0
        %2707 = vmatpush.msra.mxu0 0.0
        %2708 = vmatpush.msra.mxu0 0.0
        %2709 = vmatpush.msra.mxu0 0.0
        %2710 = vmatpush.msra.mxu0 0.0
        %2711 = vmatpush.msra.mxu0 0.0
        %2712 = vmatpush.msra.mxu0 0.0
        %2713 = vmatpush.msra.mxu0 0.0
        %2714 = vmatpush.msra.mxu0 0.0
        %2715 = vmatpush.msra.mxu0 0.0
        %v2716 = vand.u32 %v397, 4294901760
        %2717 = vmatpush.msra.mxu0 %v2716
        %v2718 = vand.u32 %v395, 4294901760
        %2719 = vmatpush.msra.mxu0 %v2718
        %v2720 = vand.u32 %v2700, 4294901760
        %v2721 = vsub.f32 %v2700, %v2720
        %v2722 = vand.u32 %v2721, 4294901760
        %v2723 = vsub.f32 %v2721, %v2722
        %v2724 = vand.u32 %v2723, 4294901760
        %2725 = vmatmul.f32.gmra.mxu0 %v2724
        %v2726 = vpop.f32.mrf.mxu0
        %v2727 = vadd.f32 0.0, %v2726
        %2728 = vdwg.mxu0
        %2729 = vmatpush.msra.mxu0 0.0
        %2730 = vmatpush.msra.mxu0 0.0
        %2731 = vmatpush.msra.mxu0 0.0
        %2732 = vmatpush.msra.mxu0 0.0
        %2733 = vmatpush.msra.mxu0 0.0
        %2734 = vmatpush.msra.mxu0 0.0
        %2735 = vmatpush.msra.mxu0 0.0
        %2736 = vmatpush.msra.mxu0 0.0
        %2737 = vmatpush.msra.mxu0 0.0
        %2738 = vmatpush.msra.mxu0 0.0
        %2739 = vmatpush.msra.mxu0 0.0
        %2740 = vmatpush.msra.mxu0 0.0
        %2741 = vmatpush.msra.mxu0 0.0
        %2742 = vmatpush.msra.mxu0 0.0
        %v2743 = vand.u32 %v397, 4294901760
        %v2744 = vsub.f32 %v397, %v2743
        %v2745 = vand.u32 %v2744, 4294901760
        %v2746 = vsub.f32 %v2744, %v2745
        %v2747 = vand.u32 %v2746, 4294901760
        %2748 = vmatpush.msra.mxu0 %v2747
        %v2749 = vand.u32 %v395, 4294901760
        %v2750 = vsub.f32 %v395, %v2749
        %v2751 = vand.u32 %v2750, 4294901760
        %v2752 = vsub.f32 %v2750, %v2751
        %v2753 = vand.u32 %v2752, 4294901760
        %2754 = vmatpush.msra.mxu0 %v2753
        %v2755 = vand.u32 %v2700, 4294901760
        %2756 = vmatmul.f32.gmra.mxu0 %v2755
        %v2757 = vpop.f32.mrf.mxu0
        %v2758 = vadd.f32 %v2727, %v2757
        %2759 = vdwg.mxu0
        %2760 = vmatpush.msra.mxu0 0.0
        %2761 = vmatpush.msra.mxu0 0.0
        %2762 = vmatpush.msra.mxu0 0.0
        %2763 = vmatpush.msra.mxu0 0.0
        %2764 = vmatpush.msra.mxu0 0.0
        %2765 = vmatpush.msra.mxu0 0.0
        %2766 = vmatpush.msra.mxu0 0.0
        %2767 = vmatpush.msra.mxu0 0.0
        %2768 = vmatpush.msra.mxu0 0.0
        %2769 = vmatpush.msra.mxu0 0.0
        %2770 = vmatpush.msra.mxu0 0.0
        %2771 = vmatpush.msra.mxu0 0.0
        %2772 = vmatpush.msra.mxu0 0.0
        %2773 = vmatpush.msra.mxu0 0.0
        %v2774 = vand.u32 %v397, 4294901760
        %v2775 = vsub.f32 %v397, %v2774
        %2776 = vmatpush.msra.mxu0 %v2775
        %v2777 = vand.u32 %v395, 4294901760
        %v2778 = vsub.f32 %v395, %v2777
        %2779 = vmatpush.msra.mxu0 %v2778
        %v2780 = vand.u32 %v2700, 4294901760
        %v2781 = vsub.f32 %v2700, %v2780
        %2782 = vmatmul.f32.gmra.mxu0 %v2781
        %v2783 = vpop.f32.mrf.mxu0
        %v2784 = vadd.f32 %v2758, %v2783
        %2785 = vdwg.mxu0
        %2786 = vmatpush.msra.mxu0 0.0
        %2787 = vmatpush.msra.mxu0 0.0
        %2788 = vmatpush.msra.mxu0 0.0
        %2789 = vmatpush.msra.mxu0 0.0
        %2790 = vmatpush.msra.mxu0 0.0
        %2791 = vmatpush.msra.mxu0 0.0
        %2792 = vmatpush.msra.mxu0 0.0
        %2793 = vmatpush.msra.mxu0 0.0
        %2794 = vmatpush.msra.mxu0 0.0
        %2795 = vmatpush.msra.mxu0 0.0
        %2796 = vmatpush.msra.mxu0 0.0
        %2797 = vmatpush.msra.mxu0 0.0
        %2798 = vmatpush.msra.mxu0 0.0
        %2799 = vmatpush.msra.mxu0 0.0
        %v2800 = vand.u32 %v397, 4294901760
        %2801 = vmatpush.msra.mxu0 %v2800
        %v2802 = vand.u32 %v395, 4294901760
        %2803 = vmatpush.msra.mxu0 %v2802
        %v2804 = vand.u32 %v2700, 4294901760
        %v2805 = vsub.f32 %v2700, %v2804
        %v2806 = vand.u32 %v2805, 4294901760
        %2807 = vmatmul.f32.gmra.mxu0 %v2806
        %v2808 = vpop.f32.mrf.mxu0
        %v2809 = vadd.f32 %v2784, %v2808
        %2810 = vdwg.mxu0
        %2811 = vmatpush.msra.mxu0 0.0
        %2812 = vmatpush.msra.mxu0 0.0
        %2813 = vmatpush.msra.mxu0 0.0
        %2814 = vmatpush.msra.mxu0 0.0
        %2815 = vmatpush.msra.mxu0 0.0
        %2816 = vmatpush.msra.mxu0 0.0
        %2817 = vmatpush.msra.mxu0 0.0
        %2818 = vmatpush.msra.mxu0 0.0
        %2819 = vmatpush.msra.mxu0 0.0
        %2820 = vmatpush.msra.mxu0 0.0
        %2821 = vmatpush.msra.mxu0 0.0
        %2822 = vmatpush.msra.mxu0 0.0
        %2823 = vmatpush.msra.mxu0 0.0
        %2824 = vmatpush.msra.mxu0 0.0
        %v2825 = vand.u32 %v397, 4294901760
        %v2826 = vsub.f32 %v397, %v2825
        %v2827 = vand.u32 %v2826, 4294901760
        %2828 = vmatpush.msra.mxu0 %v2827
        %v2829 = vand.u32 %v395, 4294901760
        %v2830 = vsub.f32 %v395, %v2829
        %v2831 = vand.u32 %v2830, 4294901760
        %2832 = vmatpush.msra.mxu0 %v2831
        %v2833 = vand.u32 %v2700, 4294901760
        %2834 = vmatmul.f32.gmra.mxu0 %v2833
        %v2835 = vpop.f32.mrf.mxu0
        %v2836 = vadd.f32 %v2809, %v2835
        %2837 = vdwg.mxu0
        %2838 = vmatpush.msra.mxu0 0.0
        %2839 = vmatpush.msra.mxu0 0.0
        %2840 = vmatpush.msra.mxu0 0.0
        %2841 = vmatpush.msra.mxu0 0.0
        %2842 = vmatpush.msra.mxu0 0.0
        %2843 = vmatpush.msra.mxu0 0.0
        %2844 = vmatpush.msra.mxu0 0.0
        %2845 = vmatpush.msra.mxu0 0.0
        %2846 = vmatpush.msra.mxu0 0.0
        %2847 = vmatpush.msra.mxu0 0.0
        %2848 = vmatpush.msra.mxu0 0.0
        %2849 = vmatpush.msra.mxu0 0.0
        %2850 = vmatpush.msra.mxu0 0.0
        %2851 = vmatpush.msra.mxu0 0.0
        %v2852 = vand.u32 %v397, 4294901760
        %2853 = vmatpush.msra.mxu0 %v2852
        %v2854 = vand.u32 %v395, 4294901760
        %2855 = vmatpush.msra.mxu0 %v2854
        %v2856 = vand.u32 %v2700, 4294901760
        %2857 = vmatmul.f32.gmra.mxu0 %v2856
        %v2858 = vpop.f32.mrf.mxu0
        %v2859 = vadd.f32 %v2836, %v2858
        %2860 = vdwg.mxu0
        %2861 = vmatpush.msra.mxu0 0.0
        %2862 = vmatpush.msra.mxu0 0.0
        %2863 = vmatpush.msra.mxu0 0.0
        %2864 = vmatpush.msra.mxu0 0.0
        %2865 = vmatpush.msra.mxu0 0.0
        %2866 = vmatpush.msra.mxu0 0.0
        %2867 = vmatpush.msra.mxu0 0.0
        %2868 = vmatpush.msra.mxu0 0.0
        %2869 = vmatpush.msra.mxu0 0.0
        %2870 = vmatpush.msra.mxu0 0.0
        %2871 = vmatpush.msra.mxu0 0.0
        %2872 = vmatpush.msra.mxu0 0.0
        %2873 = vmatpush.msra.mxu0 0.0
        %2874 = vmatpush.msra.mxu0 0.0
        %v2875 = vand.u32 %v435, 4294901760
        %2876 = vmatpush.msra.mxu0 %v2875
        %v2877 = vand.u32 %v433, 4294901760
        %2878 = vmatpush.msra.mxu0 %v2877
        %v2879 = vand.u32 %v2700, 4294901760
        %v2880 = vsub.f32 %v2700, %v2879
        %v2881 = vand.u32 %v2880, 4294901760
        %v2882 = vsub.f32 %v2880, %v2881
        %v2883 = vand.u32 %v2882, 4294901760
        %2884 = vmatmul.f32.gmra.mxu0 %v2883
        %v2885 = vpop.f32.mrf.mxu0
        %v2886 = vadd.f32 0.0, %v2885
        %2887 = vdwg.mxu0
        %2888 = vmatpush.msra.mxu0 0.0
        %2889 = vmatpush.msra.mxu0 0.0
        %2890 = vmatpush.msra.mxu0 0.0
        %2891 = vmatpush.msra.mxu0 0.0
        %2892 = vmatpush.msra.mxu0 0.0
        %2893 = vmatpush.msra.mxu0 0.0
        %2894 = vmatpush.msra.mxu0 0.0
        %2895 = vmatpush.msra.mxu0 0.0
        %2896 = vmatpush.msra.mxu0 0.0
        %2897 = vmatpush.msra.mxu0 0.0
        %2898 = vmatpush.msra.mxu0 0.0
        %2899 = vmatpush.msra.mxu0 0.0
        %2900 = vmatpush.msra.mxu0 0.0
        %2901 = vmatpush.msra.mxu0 0.0
        %v2902 = vand.u32 %v435, 4294901760
        %v2903 = vsub.f32 %v435, %v2902
        %v2904 = vand.u32 %v2903, 4294901760
        %v2905 = vsub.f32 %v2903, %v2904
        %v2906 = vand.u32 %v2905, 4294901760
        %2907 = vmatpush.msra.mxu0 %v2906
        %v2908 = vand.u32 %v433, 4294901760
        %v2909 = vsub.f32 %v433, %v2908
        %v2910 = vand.u32 %v2909, 4294901760
        %v2911 = vsub.f32 %v2909, %v2910
        %v2912 = vand.u32 %v2911, 4294901760
        %2913 = vmatpush.msra.mxu0 %v2912
        %v2914 = vand.u32 %v2700, 4294901760
        %2915 = vmatmul.f32.gmra.mxu0 %v2914
        %v2916 = vpop.f32.mrf.mxu0
        %v2917 = vadd.f32 %v2886, %v2916
        %2918 = vdwg.mxu0
        %2919 = vmatpush.msra.mxu0 0.0
        %2920 = vmatpush.msra.mxu0 0.0
        %2921 = vmatpush.msra.mxu0 0.0
        %2922 = vmatpush.msra.mxu0 0.0
        %2923 = vmatpush.msra.mxu0 0.0
        %2924 = vmatpush.msra.mxu0 0.0
        %2925 = vmatpush.msra.mxu0 0.0
        %2926 = vmatpush.msra.mxu0 0.0
        %2927 = vmatpush.msra.mxu0 0.0
        %2928 = vmatpush.msra.mxu0 0.0
        %2929 = vmatpush.msra.mxu0 0.0
        %2930 = vmatpush.msra.mxu0 0.0
        %2931 = vmatpush.msra.mxu0 0.0
        %2932 = vmatpush.msra.mxu0 0.0
        %v2933 = vand.u32 %v435, 4294901760
        %v2934 = vsub.f32 %v435, %v2933
        %2935 = vmatpush.msra.mxu0 %v2934
        %v2936 = vand.u32 %v433, 4294901760
        %v2937 = vsub.f32 %v433, %v2936
        %2938 = vmatpush.msra.mxu0 %v2937
        %v2939 = vand.u32 %v2700, 4294901760
        %v2940 = vsub.f32 %v2700, %v2939
        %2941 = vmatmul.f32.gmra.mxu0 %v2940
        %v2942 = vpop.f32.mrf.mxu0
        %v2943 = vadd.f32 %v2917, %v2942
        %2944 = vdwg.mxu0
        %2945 = vmatpush.msra.mxu0 0.0
        %2946 = vmatpush.msra.mxu0 0.0
        %2947 = vmatpush.msra.mxu0 0.0
        %2948 = vmatpush.msra.mxu0 0.0
        %2949 = vmatpush.msra.mxu0 0.0
        %2950 = vmatpush.msra.mxu0 0.0
        %2951 = vmatpush.msra.mxu0 0.0
        %2952 = vmatpush.msra.mxu0 0.0
        %2953 = vmatpush.msra.mxu0 0.0
        %2954 = vmatpush.msra.mxu0 0.0
        %2955 = vmatpush.msra.mxu0 0.0
        %2956 = vmatpush.msra.mxu0 0.0
        %2957 = vmatpush.msra.mxu0 0.0
        %2958 = vmatpush.msra.mxu0 0.0
        %v2959 = vand.u32 %v435, 4294901760
        %2960 = vmatpush.msra.mxu0 %v2959
        %v2961 = vand.u32 %v433, 4294901760
        %2962 = vmatpush.msra.mxu0 %v2961
        %v2963 = vand.u32 %v2700, 4294901760
        %v2964 = vsub.f32 %v2700, %v2963
        %v2965 = vand.u32 %v2964, 4294901760
        %2966 = vmatmul.f32.gmra.mxu0 %v2965
        %v2967 = vpop.f32.mrf.mxu0
        %v2968 = vadd.f32 %v2943, %v2967
        %2969 = vdwg.mxu0
        %2970 = vmatpush.msra.mxu0 0.0
        %2971 = vmatpush.msra.mxu0 0.0
        %2972 = vmatpush.msra.mxu0 0.0
        %2973 = vmatpush.msra.mxu0 0.0
        %2974 = vmatpush.msra.mxu0 0.0
        %2975 = vmatpush.msra.mxu0 0.0
        %2976 = vmatpush.msra.mxu0 0.0
        %2977 = vmatpush.msra.mxu0 0.0
        %2978 = vmatpush.msra.mxu0 0.0
        %2979 = vmatpush.msra.mxu0 0.0
        %2980 = vmatpush.msra.mxu0 0.0
        %2981 = vmatpush.msra.mxu0 0.0
        %2982 = vmatpush.msra.mxu0 0.0
        %2983 = vmatpush.msra.mxu0 0.0
        %v2984 = vand.u32 %v435, 4294901760
        %v2985 = vsub.f32 %v435, %v2984
        %v2986 = vand.u32 %v2985, 4294901760
        %2987 = vmatpush.msra.mxu0 %v2986
        %v2988 = vand.u32 %v433, 4294901760
        %v2989 = vsub.f32 %v433, %v2988
        %v2990 = vand.u32 %v2989, 4294901760
        %2991 = vmatpush.msra.mxu0 %v2990
        %v2992 = vand.u32 %v2700, 4294901760
        %2993 = vmatmul.f32.gmra.mxu0 %v2992
        %v2994 = vpop.f32.mrf.mxu0
        %v2995 = vadd.f32 %v2968, %v2994
        %2996 = vdwg.mxu0
        %2997 = vmatpush.msra.mxu0 0.0
        %2998 = vmatpush.msra.mxu0 0.0
        %2999 = vmatpush.msra.mxu0 0.0
        %3000 = vmatpush.msra.mxu0 0.0
        %3001 = vmatpush.msra.mxu0 0.0
        %3002 = vmatpush.msra.mxu0 0.0
        %3003 = vmatpush.msra.mxu0 0.0
        %3004 = vmatpush.msra.mxu0 0.0
        %3005 = vmatpush.msra.mxu0 0.0
        %3006 = vmatpush.msra.mxu0 0.0
        %3007 = vmatpush.msra.mxu0 0.0
        %3008 = vmatpush.msra.mxu0 0.0
        %3009 = vmatpush.msra.mxu0 0.0
        %3010 = vmatpush.msra.mxu0 0.0
        %v3011 = vand.u32 %v435, 4294901760
        %3012 = vmatpush.msra.mxu0 %v3011
        %v3013 = vand.u32 %v433, 4294901760
        %3014 = vmatpush.msra.mxu0 %v3013
        %v3015 = vand.u32 %v2700, 4294901760
        %3016 = vmatmul.f32.gmra.mxu0 %v3015
        %v3017 = vpop.f32.mrf.mxu0
        %v3018 = vadd.f32 %v2995, %v3017
        %3019 = vdwg.mxu0
        %3020 = vxpose.xlu0.b32.start [1/16] %v1953, 128
        %3021 = vxpose.xlu0.b32.cont [2/16] %v1957, 128
        %3022 = vxpose.xlu0.b32.cont [3/16] 0.0, 128
        %3023 = vxpose.xlu0.b32.cont [4/16] 0.0, 128
        %3024 = vxpose.xlu0.b32.cont [5/16] 0.0, 128
        %3025 = vxpose.xlu0.b32.cont [6/16] 0.0, 128
        %3026 = vxpose.xlu0.b32.cont [7/16] 0.0, 128
        %3027 = vxpose.xlu0.b32.cont [8/16] 0.0, 128
        %3028 = vxpose.xlu0.b32.cont [9/16] 0.0, 128
        %3029 = vxpose.xlu0.b32.cont [10/16] 0.0, 128
        %3030 = vxpose.xlu0.b32.cont [11/16] 0.0, 128
        %3031 = vxpose.xlu0.b32.cont [12/16] 0.0, 128
        %3032 = vxpose.xlu0.b32.cont [13/16] 0.0, 128
        %3033 = vxpose.xlu0.b32.cont [14/16] 0.0, 128
        %3034 = vxpose.xlu0.b32.cont [15/16] 0.0, 128
        %3035 = vxpose.xlu0.b32.end [16/16] 0.0, 128
        %v3036 = vpop.trf.xlu0
        %v3037 = vpop.trf.xlu0
        %v3038 = vpop.trf.xlu0
        %v3039 = vpop.trf.xlu0
        %v3040 = vpop.trf.xlu0
        %v3041 = vpop.trf.xlu0
        %v3042 = vpop.trf.xlu0
        %v3043 = vpop.trf.xlu0
        %v3044 = vpop.trf.xlu0
        %v3045 = vpop.trf.xlu0
        %v3046 = vpop.trf.xlu0
        %v3047 = vpop.trf.xlu0
        %v3048 = vpop.trf.xlu0
        %v3049 = vpop.trf.xlu0
        %v3050 = vpop.trf.xlu0
        %v3051 = vpop.trf.xlu0
        %v3053 = vsel %vm2345, %v3036, 0
        %3055 = vmatpush.msra.mxu0 0.0
        %3056 = vmatpush.msra.mxu0 0.0
        %3057 = vmatpush.msra.mxu0 0.0
        %3058 = vmatpush.msra.mxu0 0.0
        %3059 = vmatpush.msra.mxu0 0.0
        %3060 = vmatpush.msra.mxu0 0.0
        %3061 = vmatpush.msra.mxu0 0.0
        %3062 = vmatpush.msra.mxu0 0.0
        %3063 = vmatpush.msra.mxu0 0.0
        %3064 = vmatpush.msra.mxu0 0.0
        %3065 = vmatpush.msra.mxu0 0.0
        %3066 = vmatpush.msra.mxu0 0.0
        %3067 = vmatpush.msra.mxu0 0.0
        %3068 = vmatpush.msra.mxu0 0.0
        %v3069 = vand.u32 %v493, 4294901760
        %3070 = vmatpush.msra.mxu0 %v3069
        %v3071 = vand.u32 %v491, 4294901760
        %3072 = vmatpush.msra.mxu0 %v3071
        %v3073 = vand.u32 %v3053, 4294901760
        %v3074 = vsub.f32 %v3053, %v3073
        %v3075 = vand.u32 %v3074, 4294901760
        %v3076 = vsub.f32 %v3074, %v3075
        %v3077 = vand.u32 %v3076, 4294901760
        %3078 = vmatmul.f32.gmra.mxu0 %v3077
        %v3079 = vpop.f32.mrf.mxu0
        %v3080 = vadd.f32 0.0, %v3079
        %3081 = vdwg.mxu0
        %3082 = vmatpush.msra.mxu0 0.0
        %3083 = vmatpush.msra.mxu0 0.0
        %3084 = vmatpush.msra.mxu0 0.0
        %3085 = vmatpush.msra.mxu0 0.0
        %3086 = vmatpush.msra.mxu0 0.0
        %3087 = vmatpush.msra.mxu0 0.0
        %3088 = vmatpush.msra.mxu0 0.0
        %3089 = vmatpush.msra.mxu0 0.0
        %3090 = vmatpush.msra.mxu0 0.0
        %3091 = vmatpush.msra.mxu0 0.0
        %3092 = vmatpush.msra.mxu0 0.0
        %3093 = vmatpush.msra.mxu0 0.0
        %3094 = vmatpush.msra.mxu0 0.0
        %3095 = vmatpush.msra.mxu0 0.0
        %v3096 = vand.u32 %v493, 4294901760
        %v3097 = vsub.f32 %v493, %v3096
        %v3098 = vand.u32 %v3097, 4294901760
        %v3099 = vsub.f32 %v3097, %v3098
        %v3100 = vand.u32 %v3099, 4294901760
        %3101 = vmatpush.msra.mxu0 %v3100
        %v3102 = vand.u32 %v491, 4294901760
        %v3103 = vsub.f32 %v491, %v3102
        %v3104 = vand.u32 %v3103, 4294901760
        %v3105 = vsub.f32 %v3103, %v3104
        %v3106 = vand.u32 %v3105, 4294901760
        %3107 = vmatpush.msra.mxu0 %v3106
        %v3108 = vand.u32 %v3053, 4294901760
        %3109 = vmatmul.f32.gmra.mxu0 %v3108
        %v3110 = vpop.f32.mrf.mxu0
        %v3111 = vadd.f32 %v3080, %v3110
        %3112 = vdwg.mxu0
        %3113 = vmatpush.msra.mxu0 0.0
        %3114 = vmatpush.msra.mxu0 0.0
        %3115 = vmatpush.msra.mxu0 0.0
        %3116 = vmatpush.msra.mxu0 0.0
        %3117 = vmatpush.msra.mxu0 0.0
        %3118 = vmatpush.msra.mxu0 0.0
        %3119 = vmatpush.msra.mxu0 0.0
        %3120 = vmatpush.msra.mxu0 0.0
        %3121 = vmatpush.msra.mxu0 0.0
        %3122 = vmatpush.msra.mxu0 0.0
        %3123 = vmatpush.msra.mxu0 0.0
        %3124 = vmatpush.msra.mxu0 0.0
        %3125 = vmatpush.msra.mxu0 0.0
        %3126 = vmatpush.msra.mxu0 0.0
        %v3127 = vand.u32 %v493, 4294901760
        %v3128 = vsub.f32 %v493, %v3127
        %3129 = vmatpush.msra.mxu0 %v3128
        %v3130 = vand.u32 %v491, 4294901760
        %v3131 = vsub.f32 %v491, %v3130
        %3132 = vmatpush.msra.mxu0 %v3131
        %v3133 = vand.u32 %v3053, 4294901760
        %v3134 = vsub.f32 %v3053, %v3133
        %3135 = vmatmul.f32.gmra.mxu0 %v3134
        %v3136 = vpop.f32.mrf.mxu0
        %v3137 = vadd.f32 %v3111, %v3136
        %3138 = vdwg.mxu0
        %3139 = vmatpush.msra.mxu0 0.0
        %3140 = vmatpush.msra.mxu0 0.0
        %3141 = vmatpush.msra.mxu0 0.0
        %3142 = vmatpush.msra.mxu0 0.0
        %3143 = vmatpush.msra.mxu0 0.0
        %3144 = vmatpush.msra.mxu0 0.0
        %3145 = vmatpush.msra.mxu0 0.0
        %3146 = vmatpush.msra.mxu0 0.0
        %3147 = vmatpush.msra.mxu0 0.0
        %3148 = vmatpush.msra.mxu0 0.0
        %3149 = vmatpush.msra.mxu0 0.0
        %3150 = vmatpush.msra.mxu0 0.0
        %3151 = vmatpush.msra.mxu0 0.0
        %3152 = vmatpush.msra.mxu0 0.0
        %v3153 = vand.u32 %v493, 4294901760
        %3154 = vmatpush.msra.mxu0 %v3153
        %v3155 = vand.u32 %v491, 4294901760
        %3156 = vmatpush.msra.mxu0 %v3155
        %v3157 = vand.u32 %v3053, 4294901760
        %v3158 = vsub.f32 %v3053, %v3157
        %v3159 = vand.u32 %v3158, 4294901760
        %3160 = vmatmul.f32.gmra.mxu0 %v3159
        %v3161 = vpop.f32.mrf.mxu0
        %v3162 = vadd.f32 %v3137, %v3161
        %3163 = vdwg.mxu0
        %3164 = vmatpush.msra.mxu0 0.0
        %3165 = vmatpush.msra.mxu0 0.0
        %3166 = vmatpush.msra.mxu0 0.0
        %3167 = vmatpush.msra.mxu0 0.0
        %3168 = vmatpush.msra.mxu0 0.0
        %3169 = vmatpush.msra.mxu0 0.0
        %3170 = vmatpush.msra.mxu0 0.0
        %3171 = vmatpush.msra.mxu0 0.0
        %3172 = vmatpush.msra.mxu0 0.0
        %3173 = vmatpush.msra.mxu0 0.0
        %3174 = vmatpush.msra.mxu0 0.0
        %3175 = vmatpush.msra.mxu0 0.0
        %3176 = vmatpush.msra.mxu0 0.0
        %3177 = vmatpush.msra.mxu0 0.0
        %v3178 = vand.u32 %v493, 4294901760
        %v3179 = vsub.f32 %v493, %v3178
        %v3180 = vand.u32 %v3179, 4294901760
        %3181 = vmatpush.msra.mxu0 %v3180
        %v3182 = vand.u32 %v491, 4294901760
        %v3183 = vsub.f32 %v491, %v3182
        %v3184 = vand.u32 %v3183, 4294901760
        %3185 = vmatpush.msra.mxu0 %v3184
        %v3186 = vand.u32 %v3053, 4294901760
        %3187 = vmatmul.f32.gmra.mxu0 %v3186
        %v3188 = vpop.f32.mrf.mxu0
        %v3189 = vadd.f32 %v3162, %v3188
        %3190 = vdwg.mxu0
        %3191 = vmatpush.msra.mxu0 0.0
        %3192 = vmatpush.msra.mxu0 0.0
        %3193 = vmatpush.msra.mxu0 0.0
        %3194 = vmatpush.msra.mxu0 0.0
        %3195 = vmatpush.msra.mxu0 0.0
        %3196 = vmatpush.msra.mxu0 0.0
        %3197 = vmatpush.msra.mxu0 0.0
        %3198 = vmatpush.msra.mxu0 0.0
        %3199 = vmatpush.msra.mxu0 0.0
        %3200 = vmatpush.msra.mxu0 0.0
        %3201 = vmatpush.msra.mxu0 0.0
        %3202 = vmatpush.msra.mxu0 0.0
        %3203 = vmatpush.msra.mxu0 0.0
        %3204 = vmatpush.msra.mxu0 0.0
        %v3205 = vand.u32 %v493, 4294901760
        %3206 = vmatpush.msra.mxu0 %v3205
        %v3207 = vand.u32 %v491, 4294901760
        %3208 = vmatpush.msra.mxu0 %v3207
        %v3209 = vand.u32 %v3053, 4294901760
        %3210 = vmatmul.f32.gmra.mxu0 %v3209
        %v3211 = vpop.f32.mrf.mxu0
        %v3212 = vadd.f32 %v3189, %v3211
        %3213 = vdwg.mxu0
        %3214 = vmatpush.msra.mxu0 0.0
        %3215 = vmatpush.msra.mxu0 0.0
        %3216 = vmatpush.msra.mxu0 0.0
        %3217 = vmatpush.msra.mxu0 0.0
        %3218 = vmatpush.msra.mxu0 0.0
        %3219 = vmatpush.msra.mxu0 0.0
        %3220 = vmatpush.msra.mxu0 0.0
        %3221 = vmatpush.msra.mxu0 0.0
        %3222 = vmatpush.msra.mxu0 0.0
        %3223 = vmatpush.msra.mxu0 0.0
        %3224 = vmatpush.msra.mxu0 0.0
        %3225 = vmatpush.msra.mxu0 0.0
        %3226 = vmatpush.msra.mxu0 0.0
        %3227 = vmatpush.msra.mxu0 0.0
        %v3228 = vand.u32 %v531, 4294901760
        %3229 = vmatpush.msra.mxu0 %v3228
        %v3230 = vand.u32 %v529, 4294901760
        %3231 = vmatpush.msra.mxu0 %v3230
        %v3232 = vand.u32 %v3053, 4294901760
        %v3233 = vsub.f32 %v3053, %v3232
        %v3234 = vand.u32 %v3233, 4294901760
        %v3235 = vsub.f32 %v3233, %v3234
        %v3236 = vand.u32 %v3235, 4294901760
        %3237 = vmatmul.f32.gmra.mxu0 %v3236
        %v3238 = vpop.f32.mrf.mxu0
        %v3239 = vadd.f32 0.0, %v3238
        %3240 = vdwg.mxu0
        %3241 = vmatpush.msra.mxu0 0.0
        %3242 = vmatpush.msra.mxu0 0.0
        %3243 = vmatpush.msra.mxu0 0.0
        %3244 = vmatpush.msra.mxu0 0.0
        %3245 = vmatpush.msra.mxu0 0.0
        %3246 = vmatpush.msra.mxu0 0.0
        %3247 = vmatpush.msra.mxu0 0.0
        %3248 = vmatpush.msra.mxu0 0.0
        %3249 = vmatpush.msra.mxu0 0.0
        %3250 = vmatpush.msra.mxu0 0.0
        %3251 = vmatpush.msra.mxu0 0.0
        %3252 = vmatpush.msra.mxu0 0.0
        %3253 = vmatpush.msra.mxu0 0.0
        %3254 = vmatpush.msra.mxu0 0.0
        %v3255 = vand.u32 %v531, 4294901760
        %v3256 = vsub.f32 %v531, %v3255
        %v3257 = vand.u32 %v3256, 4294901760
        %v3258 = vsub.f32 %v3256, %v3257
        %v3259 = vand.u32 %v3258, 4294901760
        %3260 = vmatpush.msra.mxu0 %v3259
        %v3261 = vand.u32 %v529, 4294901760
        %v3262 = vsub.f32 %v529, %v3261
        %v3263 = vand.u32 %v3262, 4294901760
        %v3264 = vsub.f32 %v3262, %v3263
        %v3265 = vand.u32 %v3264, 4294901760
        %3266 = vmatpush.msra.mxu0 %v3265
        %v3267 = vand.u32 %v3053, 4294901760
        %3268 = vmatmul.f32.gmra.mxu0 %v3267
        %v3269 = vpop.f32.mrf.mxu0
        %v3270 = vadd.f32 %v3239, %v3269
        %3271 = vdwg.mxu0
        %3272 = vmatpush.msra.mxu0 0.0
        %3273 = vmatpush.msra.mxu0 0.0
        %3274 = vmatpush.msra.mxu0 0.0
        %3275 = vmatpush.msra.mxu0 0.0
        %3276 = vmatpush.msra.mxu0 0.0
        %3277 = vmatpush.msra.mxu0 0.0
        %3278 = vmatpush.msra.mxu0 0.0
        %3279 = vmatpush.msra.mxu0 0.0
        %3280 = vmatpush.msra.mxu0 0.0
        %3281 = vmatpush.msra.mxu0 0.0
        %3282 = vmatpush.msra.mxu0 0.0
        %3283 = vmatpush.msra.mxu0 0.0
        %3284 = vmatpush.msra.mxu0 0.0
        %3285 = vmatpush.msra.mxu0 0.0
        %v3286 = vand.u32 %v531, 4294901760
        %v3287 = vsub.f32 %v531, %v3286
        %3288 = vmatpush.msra.mxu0 %v3287
        %v3289 = vand.u32 %v529, 4294901760
        %v3290 = vsub.f32 %v529, %v3289
        %3291 = vmatpush.msra.mxu0 %v3290
        %v3292 = vand.u32 %v3053, 4294901760
        %v3293 = vsub.f32 %v3053, %v3292
        %3294 = vmatmul.f32.gmra.mxu0 %v3293
        %v3295 = vpop.f32.mrf.mxu0
        %v3296 = vadd.f32 %v3270, %v3295
        %3297 = vdwg.mxu0
        %3298 = vmatpush.msra.mxu0 0.0
        %3299 = vmatpush.msra.mxu0 0.0
        %3300 = vmatpush.msra.mxu0 0.0
        %3301 = vmatpush.msra.mxu0 0.0
        %3302 = vmatpush.msra.mxu0 0.0
        %3303 = vmatpush.msra.mxu0 0.0
        %3304 = vmatpush.msra.mxu0 0.0
        %3305 = vmatpush.msra.mxu0 0.0
        %3306 = vmatpush.msra.mxu0 0.0
        %3307 = vmatpush.msra.mxu0 0.0
        %3308 = vmatpush.msra.mxu0 0.0
        %3309 = vmatpush.msra.mxu0 0.0
        %3310 = vmatpush.msra.mxu0 0.0
        %3311 = vmatpush.msra.mxu0 0.0
        %v3312 = vand.u32 %v531, 4294901760
        %3313 = vmatpush.msra.mxu0 %v3312
        %v3314 = vand.u32 %v529, 4294901760
        %3315 = vmatpush.msra.mxu0 %v3314
        %v3316 = vand.u32 %v3053, 4294901760
        %v3317 = vsub.f32 %v3053, %v3316
        %v3318 = vand.u32 %v3317, 4294901760
        %3319 = vmatmul.f32.gmra.mxu0 %v3318
        %v3320 = vpop.f32.mrf.mxu0
        %v3321 = vadd.f32 %v3296, %v3320
        %3322 = vdwg.mxu0
        %3323 = vmatpush.msra.mxu0 0.0
        %3324 = vmatpush.msra.mxu0 0.0
        %3325 = vmatpush.msra.mxu0 0.0
        %3326 = vmatpush.msra.mxu0 0.0
        %3327 = vmatpush.msra.mxu0 0.0
        %3328 = vmatpush.msra.mxu0 0.0
        %3329 = vmatpush.msra.mxu0 0.0
        %3330 = vmatpush.msra.mxu0 0.0
        %3331 = vmatpush.msra.mxu0 0.0
        %3332 = vmatpush.msra.mxu0 0.0
        %3333 = vmatpush.msra.mxu0 0.0
        %3334 = vmatpush.msra.mxu0 0.0
        %3335 = vmatpush.msra.mxu0 0.0
        %3336 = vmatpush.msra.mxu0 0.0
        %v3337 = vand.u32 %v531, 4294901760
        %v3338 = vsub.f32 %v531, %v3337
        %v3339 = vand.u32 %v3338, 4294901760
        %3340 = vmatpush.msra.mxu0 %v3339
        %v3341 = vand.u32 %v529, 4294901760
        %v3342 = vsub.f32 %v529, %v3341
        %v3343 = vand.u32 %v3342, 4294901760
        %3344 = vmatpush.msra.mxu0 %v3343
        %v3345 = vand.u32 %v3053, 4294901760
        %3346 = vmatmul.f32.gmra.mxu0 %v3345
        %v3347 = vpop.f32.mrf.mxu0
        %v3348 = vadd.f32 %v3321, %v3347
        %3349 = vdwg.mxu0
        %3350 = vmatpush.msra.mxu0 0.0
        %3351 = vmatpush.msra.mxu0 0.0
        %3352 = vmatpush.msra.mxu0 0.0
        %3353 = vmatpush.msra.mxu0 0.0
        %3354 = vmatpush.msra.mxu0 0.0
        %3355 = vmatpush.msra.mxu0 0.0
        %3356 = vmatpush.msra.mxu0 0.0
        %3357 = vmatpush.msra.mxu0 0.0
        %3358 = vmatpush.msra.mxu0 0.0
        %3359 = vmatpush.msra.mxu0 0.0
        %3360 = vmatpush.msra.mxu0 0.0
        %3361 = vmatpush.msra.mxu0 0.0
        %3362 = vmatpush.msra.mxu0 0.0
        %3363 = vmatpush.msra.mxu0 0.0
        %v3364 = vand.u32 %v531, 4294901760
        %3365 = vmatpush.msra.mxu0 %v3364
        %v3366 = vand.u32 %v529, 4294901760
        %3367 = vmatpush.msra.mxu0 %v3366
        %v3368 = vand.u32 %v3053, 4294901760
        %3369 = vmatmul.f32.gmra.mxu0 %v3368
        %v3370 = vpop.f32.mrf.mxu0
        %v3371 = vadd.f32 %v3348, %v3370
        %3372 = vdwg.mxu0
        %3373 = vxpose.xlu0.b32.start [1/16] %v2307, 128
        %3374 = vxpose.xlu0.b32.cont [2/16] %v2311, 128
        %3375 = vxpose.xlu0.b32.cont [3/16] 0.0, 128
        %3376 = vxpose.xlu0.b32.cont [4/16] 0.0, 128
        %3377 = vxpose.xlu0.b32.cont [5/16] 0.0, 128
        %3378 = vxpose.xlu0.b32.cont [6/16] 0.0, 128
        %3379 = vxpose.xlu0.b32.cont [7/16] 0.0, 128
        %3380 = vxpose.xlu0.b32.cont [8/16] 0.0, 128
        %3381 = vxpose.xlu0.b32.cont [9/16] 0.0, 128
        %3382 = vxpose.xlu0.b32.cont [10/16] 0.0, 128
        %3383 = vxpose.xlu0.b32.cont [11/16] 0.0, 128
        %3384 = vxpose.xlu0.b32.cont [12/16] 0.0, 128
        %3385 = vxpose.xlu0.b32.cont [13/16] 0.0, 128
        %3386 = vxpose.xlu0.b32.cont [14/16] 0.0, 128
        %3387 = vxpose.xlu0.b32.cont [15/16] 0.0, 128
        %3388 = vxpose.xlu0.b32.end [16/16] 0.0, 128
        %v3389 = vpop.trf.xlu0
        %v3390 = vpop.trf.xlu0
        %v3391 = vpop.trf.xlu0
        %v3392 = vpop.trf.xlu0
        %v3393 = vpop.trf.xlu0
        %v3394 = vpop.trf.xlu0
        %v3395 = vpop.trf.xlu0
        %v3396 = vpop.trf.xlu0
        %v3397 = vpop.trf.xlu0
        %v3398 = vpop.trf.xlu0
        %v3399 = vpop.trf.xlu0
        %v3400 = vpop.trf.xlu0
        %v3401 = vpop.trf.xlu0
        %v3402 = vpop.trf.xlu0
        %v3403 = vpop.trf.xlu0
        %v3404 = vpop.trf.xlu0
        %v3406 = vsel %vm2345, %v3389, 0
        %3408 = vmatpush.msra.mxu0 0.0
        %3409 = vmatpush.msra.mxu0 0.0
        %3410 = vmatpush.msra.mxu0 0.0
        %3411 = vmatpush.msra.mxu0 0.0
        %3412 = vmatpush.msra.mxu0 0.0
        %3413 = vmatpush.msra.mxu0 0.0
        %3414 = vmatpush.msra.mxu0 0.0
        %3415 = vmatpush.msra.mxu0 0.0
        %3416 = vmatpush.msra.mxu0 0.0
        %3417 = vmatpush.msra.mxu0 0.0
        %3418 = vmatpush.msra.mxu0 0.0
        %3419 = vmatpush.msra.mxu0 0.0
        %3420 = vmatpush.msra.mxu0 0.0
        %3421 = vmatpush.msra.mxu0 0.0
        %v3422 = vand.u32 %v589, 4294901760
        %3423 = vmatpush.msra.mxu0 %v3422
        %v3424 = vand.u32 %v587, 4294901760
        %3425 = vmatpush.msra.mxu0 %v3424
        %v3426 = vand.u32 %v3406, 4294901760
        %v3427 = vsub.f32 %v3406, %v3426
        %v3428 = vand.u32 %v3427, 4294901760
        %v3429 = vsub.f32 %v3427, %v3428
        %v3430 = vand.u32 %v3429, 4294901760
        %3431 = vmatmul.f32.gmra.mxu0 %v3430
        %v3432 = vpop.f32.mrf.mxu0
        %v3433 = vadd.f32 0.0, %v3432
        %3434 = vdwg.mxu0
        %3435 = vmatpush.msra.mxu0 0.0
        %3436 = vmatpush.msra.mxu0 0.0
        %3437 = vmatpush.msra.mxu0 0.0
        %3438 = vmatpush.msra.mxu0 0.0
        %3439 = vmatpush.msra.mxu0 0.0
        %3440 = vmatpush.msra.mxu0 0.0
        %3441 = vmatpush.msra.mxu0 0.0
        %3442 = vmatpush.msra.mxu0 0.0
        %3443 = vmatpush.msra.mxu0 0.0
        %3444 = vmatpush.msra.mxu0 0.0
        %3445 = vmatpush.msra.mxu0 0.0
        %3446 = vmatpush.msra.mxu0 0.0
        %3447 = vmatpush.msra.mxu0 0.0
        %3448 = vmatpush.msra.mxu0 0.0
        %v3449 = vand.u32 %v589, 4294901760
        %v3450 = vsub.f32 %v589, %v3449
        %v3451 = vand.u32 %v3450, 4294901760
        %v3452 = vsub.f32 %v3450, %v3451
        %v3453 = vand.u32 %v3452, 4294901760
        %3454 = vmatpush.msra.mxu0 %v3453
        %v3455 = vand.u32 %v587, 4294901760
        %v3456 = vsub.f32 %v587, %v3455
        %v3457 = vand.u32 %v3456, 4294901760
        %v3458 = vsub.f32 %v3456, %v3457
        %v3459 = vand.u32 %v3458, 4294901760
        %3460 = vmatpush.msra.mxu0 %v3459
        %v3461 = vand.u32 %v3406, 4294901760
        %3462 = vmatmul.f32.gmra.mxu0 %v3461
        %v3463 = vpop.f32.mrf.mxu0
        %v3464 = vadd.f32 %v3433, %v3463
        %3465 = vdwg.mxu0
        %3466 = vmatpush.msra.mxu0 0.0
        %3467 = vmatpush.msra.mxu0 0.0
        %3468 = vmatpush.msra.mxu0 0.0
        %3469 = vmatpush.msra.mxu0 0.0
        %3470 = vmatpush.msra.mxu0 0.0
        %3471 = vmatpush.msra.mxu0 0.0
        %3472 = vmatpush.msra.mxu0 0.0
        %3473 = vmatpush.msra.mxu0 0.0
        %3474 = vmatpush.msra.mxu0 0.0
        %3475 = vmatpush.msra.mxu0 0.0
        %3476 = vmatpush.msra.mxu0 0.0
        %3477 = vmatpush.msra.mxu0 0.0
        %3478 = vmatpush.msra.mxu0 0.0
        %3479 = vmatpush.msra.mxu0 0.0
        %v3480 = vand.u32 %v589, 4294901760
        %v3481 = vsub.f32 %v589, %v3480
        %3482 = vmatpush.msra.mxu0 %v3481
        %v3483 = vand.u32 %v587, 4294901760
        %v3484 = vsub.f32 %v587, %v3483
        %3485 = vmatpush.msra.mxu0 %v3484
        %v3486 = vand.u32 %v3406, 4294901760
        %v3487 = vsub.f32 %v3406, %v3486
        %3488 = vmatmul.f32.gmra.mxu0 %v3487
        %v3489 = vpop.f32.mrf.mxu0
        %v3490 = vadd.f32 %v3464, %v3489
        %3491 = vdwg.mxu0
        %3492 = vmatpush.msra.mxu0 0.0
        %3493 = vmatpush.msra.mxu0 0.0
        %3494 = vmatpush.msra.mxu0 0.0
        %3495 = vmatpush.msra.mxu0 0.0
        %3496 = vmatpush.msra.mxu0 0.0
        %3497 = vmatpush.msra.mxu0 0.0
        %3498 = vmatpush.msra.mxu0 0.0
        %3499 = vmatpush.msra.mxu0 0.0
        %3500 = vmatpush.msra.mxu0 0.0
        %3501 = vmatpush.msra.mxu0 0.0
        %3502 = vmatpush.msra.mxu0 0.0
        %3503 = vmatpush.msra.mxu0 0.0
        %3504 = vmatpush.msra.mxu0 0.0
        %3505 = vmatpush.msra.mxu0 0.0
        %v3506 = vand.u32 %v589, 4294901760
        %3507 = vmatpush.msra.mxu0 %v3506
        %v3508 = vand.u32 %v587, 4294901760
        %3509 = vmatpush.msra.mxu0 %v3508
        %v3510 = vand.u32 %v3406, 4294901760
        %v3511 = vsub.f32 %v3406, %v3510
        %v3512 = vand.u32 %v3511, 4294901760
        %3513 = vmatmul.f32.gmra.mxu0 %v3512
        %v3514 = vpop.f32.mrf.mxu0
        %v3515 = vadd.f32 %v3490, %v3514
        %3516 = vdwg.mxu0
        %3517 = vmatpush.msra.mxu0 0.0
        %3518 = vmatpush.msra.mxu0 0.0
        %3519 = vmatpush.msra.mxu0 0.0
        %3520 = vmatpush.msra.mxu0 0.0
        %3521 = vmatpush.msra.mxu0 0.0
        %3522 = vmatpush.msra.mxu0 0.0
        %3523 = vmatpush.msra.mxu0 0.0
        %3524 = vmatpush.msra.mxu0 0.0
        %3525 = vmatpush.msra.mxu0 0.0
        %3526 = vmatpush.msra.mxu0 0.0
        %3527 = vmatpush.msra.mxu0 0.0
        %3528 = vmatpush.msra.mxu0 0.0
        %3529 = vmatpush.msra.mxu0 0.0
        %3530 = vmatpush.msra.mxu0 0.0
        %v3531 = vand.u32 %v589, 4294901760
        %v3532 = vsub.f32 %v589, %v3531
        %v3533 = vand.u32 %v3532, 4294901760
        %3534 = vmatpush.msra.mxu0 %v3533
        %v3535 = vand.u32 %v587, 4294901760
        %v3536 = vsub.f32 %v587, %v3535
        %v3537 = vand.u32 %v3536, 4294901760
        %3538 = vmatpush.msra.mxu0 %v3537
        %v3539 = vand.u32 %v3406, 4294901760
        %3540 = vmatmul.f32.gmra.mxu0 %v3539
        %v3541 = vpop.f32.mrf.mxu0
        %v3542 = vadd.f32 %v3515, %v3541
        %3543 = vdwg.mxu0
        %3544 = vmatpush.msra.mxu0 0.0
        %3545 = vmatpush.msra.mxu0 0.0
        %3546 = vmatpush.msra.mxu0 0.0
        %3547 = vmatpush.msra.mxu0 0.0
        %3548 = vmatpush.msra.mxu0 0.0
        %3549 = vmatpush.msra.mxu0 0.0
        %3550 = vmatpush.msra.mxu0 0.0
        %3551 = vmatpush.msra.mxu0 0.0
        %3552 = vmatpush.msra.mxu0 0.0
        %3553 = vmatpush.msra.mxu0 0.0
        %3554 = vmatpush.msra.mxu0 0.0
        %3555 = vmatpush.msra.mxu0 0.0
        %3556 = vmatpush.msra.mxu0 0.0
        %3557 = vmatpush.msra.mxu0 0.0
        %v3558 = vand.u32 %v589, 4294901760
        %3559 = vmatpush.msra.mxu0 %v3558
        %v3560 = vand.u32 %v587, 4294901760
        %3561 = vmatpush.msra.mxu0 %v3560
        %v3562 = vand.u32 %v3406, 4294901760
        %3563 = vmatmul.f32.gmra.mxu0 %v3562
        %v3564 = vpop.f32.mrf.mxu0
        %v3565 = vadd.f32 %v3542, %v3564
        %3566 = vdwg.mxu0
        %3567 = vmatpush.msra.mxu0 0.0
        %3568 = vmatpush.msra.mxu0 0.0
        %3569 = vmatpush.msra.mxu0 0.0
        %3570 = vmatpush.msra.mxu0 0.0
        %3571 = vmatpush.msra.mxu0 0.0
        %3572 = vmatpush.msra.mxu0 0.0
        %3573 = vmatpush.msra.mxu0 0.0
        %3574 = vmatpush.msra.mxu0 0.0
        %3575 = vmatpush.msra.mxu0 0.0
        %3576 = vmatpush.msra.mxu0 0.0
        %3577 = vmatpush.msra.mxu0 0.0
        %3578 = vmatpush.msra.mxu0 0.0
        %3579 = vmatpush.msra.mxu0 0.0
        %3580 = vmatpush.msra.mxu0 0.0
        %v3581 = vand.u32 %v627, 4294901760
        %3582 = vmatpush.msra.mxu0 %v3581
        %v3583 = vand.u32 %v625, 4294901760
        %3584 = vmatpush.msra.mxu0 %v3583
        %v3585 = vand.u32 %v3406, 4294901760
        %v3586 = vsub.f32 %v3406, %v3585
        %v3587 = vand.u32 %v3586, 4294901760
        %v3588 = vsub.f32 %v3586, %v3587
        %v3589 = vand.u32 %v3588, 4294901760
        %3590 = vmatmul.f32.gmra.mxu0 %v3589
        %v3591 = vpop.f32.mrf.mxu0
        %v3592 = vadd.f32 0.0, %v3591
        %3593 = vdwg.mxu0
        %3594 = vmatpush.msra.mxu0 0.0
        %3595 = vmatpush.msra.mxu0 0.0
        %3596 = vmatpush.msra.mxu0 0.0
        %3597 = vmatpush.msra.mxu0 0.0
        %3598 = vmatpush.msra.mxu0 0.0
        %3599 = vmatpush.msra.mxu0 0.0
        %3600 = vmatpush.msra.mxu0 0.0
        %3601 = vmatpush.msra.mxu0 0.0
        %3602 = vmatpush.msra.mxu0 0.0
        %3603 = vmatpush.msra.mxu0 0.0
        %3604 = vmatpush.msra.mxu0 0.0
        %3605 = vmatpush.msra.mxu0 0.0
        %3606 = vmatpush.msra.mxu0 0.0
        %3607 = vmatpush.msra.mxu0 0.0
        %v3608 = vand.u32 %v627, 4294901760
        %v3609 = vsub.f32 %v627, %v3608
        %v3610 = vand.u32 %v3609, 4294901760
        %v3611 = vsub.f32 %v3609, %v3610
        %v3612 = vand.u32 %v3611, 4294901760
        %3613 = vmatpush.msra.mxu0 %v3612
        %v3614 = vand.u32 %v625, 4294901760
        %v3615 = vsub.f32 %v625, %v3614
        %v3616 = vand.u32 %v3615, 4294901760
        %v3617 = vsub.f32 %v3615, %v3616
        %v3618 = vand.u32 %v3617, 4294901760
        %3619 = vmatpush.msra.mxu0 %v3618
        %v3620 = vand.u32 %v3406, 4294901760
        %3621 = vmatmul.f32.gmra.mxu0 %v3620
        %v3622 = vpop.f32.mrf.mxu0
        %v3623 = vadd.f32 %v3592, %v3622
        %3624 = vdwg.mxu0
        %3625 = vmatpush.msra.mxu0 0.0
        %3626 = vmatpush.msra.mxu0 0.0
        %3627 = vmatpush.msra.mxu0 0.0
        %3628 = vmatpush.msra.mxu0 0.0
        %3629 = vmatpush.msra.mxu0 0.0
        %3630 = vmatpush.msra.mxu0 0.0
        %3631 = vmatpush.msra.mxu0 0.0
        %3632 = vmatpush.msra.mxu0 0.0
        %3633 = vmatpush.msra.mxu0 0.0
        %3634 = vmatpush.msra.mxu0 0.0
        %3635 = vmatpush.msra.mxu0 0.0
        %3636 = vmatpush.msra.mxu0 0.0
        %3637 = vmatpush.msra.mxu0 0.0
        %3638 = vmatpush.msra.mxu0 0.0
        %v3639 = vand.u32 %v627, 4294901760
        %v3640 = vsub.f32 %v627, %v3639
        %3641 = vmatpush.msra.mxu0 %v3640
        %v3642 = vand.u32 %v625, 4294901760
        %v3643 = vsub.f32 %v625, %v3642
        %3644 = vmatpush.msra.mxu0 %v3643
        %v3645 = vand.u32 %v3406, 4294901760
        %v3646 = vsub.f32 %v3406, %v3645
        %3647 = vmatmul.f32.gmra.mxu0 %v3646
        %v3648 = vpop.f32.mrf.mxu0
        %v3649 = vadd.f32 %v3623, %v3648
        %3650 = vdwg.mxu0
        %3651 = vmatpush.msra.mxu0 0.0
        %3652 = vmatpush.msra.mxu0 0.0
        %3653 = vmatpush.msra.mxu0 0.0
        %3654 = vmatpush.msra.mxu0 0.0
        %3655 = vmatpush.msra.mxu0 0.0
        %3656 = vmatpush.msra.mxu0 0.0
        %3657 = vmatpush.msra.mxu0 0.0
        %3658 = vmatpush.msra.mxu0 0.0
        %3659 = vmatpush.msra.mxu0 0.0
        %3660 = vmatpush.msra.mxu0 0.0
        %3661 = vmatpush.msra.mxu0 0.0
        %3662 = vmatpush.msra.mxu0 0.0
        %3663 = vmatpush.msra.mxu0 0.0
        %3664 = vmatpush.msra.mxu0 0.0
        %v3665 = vand.u32 %v627, 4294901760
        %3666 = vmatpush.msra.mxu0 %v3665
        %v3667 = vand.u32 %v625, 4294901760
        %3668 = vmatpush.msra.mxu0 %v3667
        %v3669 = vand.u32 %v3406, 4294901760
        %v3670 = vsub.f32 %v3406, %v3669
        %v3671 = vand.u32 %v3670, 4294901760
        %3672 = vmatmul.f32.gmra.mxu0 %v3671
        %v3673 = vpop.f32.mrf.mxu0
        %v3674 = vadd.f32 %v3649, %v3673
        %3675 = vdwg.mxu0
        %3676 = vmatpush.msra.mxu0 0.0
        %3677 = vmatpush.msra.mxu0 0.0
        %3678 = vmatpush.msra.mxu0 0.0
        %3679 = vmatpush.msra.mxu0 0.0
        %3680 = vmatpush.msra.mxu0 0.0
        %3681 = vmatpush.msra.mxu0 0.0
        %3682 = vmatpush.msra.mxu0 0.0
        %3683 = vmatpush.msra.mxu0 0.0
        %3684 = vmatpush.msra.mxu0 0.0
        %3685 = vmatpush.msra.mxu0 0.0
        %3686 = vmatpush.msra.mxu0 0.0
        %3687 = vmatpush.msra.mxu0 0.0
        %3688 = vmatpush.msra.mxu0 0.0
        %3689 = vmatpush.msra.mxu0 0.0
        %v3690 = vand.u32 %v627, 4294901760
        %v3691 = vsub.f32 %v627, %v3690
        %v3692 = vand.u32 %v3691, 4294901760
        %3693 = vmatpush.msra.mxu0 %v3692
        %v3694 = vand.u32 %v625, 4294901760
        %v3695 = vsub.f32 %v625, %v3694
        %v3696 = vand.u32 %v3695, 4294901760
        %3697 = vmatpush.msra.mxu0 %v3696
        %v3698 = vand.u32 %v3406, 4294901760
        %3699 = vmatmul.f32.gmra.mxu0 %v3698
        %v3700 = vpop.f32.mrf.mxu0
        %v3701 = vadd.f32 %v3674, %v3700
        %3702 = vdwg.mxu0
        %3703 = vmatpush.msra.mxu0 0.0
        %3704 = vmatpush.msra.mxu0 0.0
        %3705 = vmatpush.msra.mxu0 0.0
        %3706 = vmatpush.msra.mxu0 0.0
        %3707 = vmatpush.msra.mxu0 0.0
        %3708 = vmatpush.msra.mxu0 0.0
        %3709 = vmatpush.msra.mxu0 0.0
        %3710 = vmatpush.msra.mxu0 0.0
        %3711 = vmatpush.msra.mxu0 0.0
        %3712 = vmatpush.msra.mxu0 0.0
        %3713 = vmatpush.msra.mxu0 0.0
        %3714 = vmatpush.msra.mxu0 0.0
        %3715 = vmatpush.msra.mxu0 0.0
        %3716 = vmatpush.msra.mxu0 0.0
        %v3717 = vand.u32 %v627, 4294901760
        %3718 = vmatpush.msra.mxu0 %v3717
        %v3719 = vand.u32 %v625, 4294901760
        %3720 = vmatpush.msra.mxu0 %v3719
        %v3721 = vand.u32 %v3406, 4294901760
        %3722 = vmatmul.f32.gmra.mxu0 %v3721
        %v3723 = vpop.f32.mrf.mxu0
        %v3724 = vadd.f32 %v3701, %v3723
        %3725 = vdwg.mxu0
        %3726 = vst [vmem:[%s191] sm:$0xff] %v2506
        %3727 = vst [vmem:[%s191 + $0x8] sm:$0xff] %v2665
        %3728 = vst [vmem:[%s191 + $0x40] sm:$0xff] %v2859
        %3729 = vst [vmem:[%s191 + $0x48] sm:$0xff] %v3018
        %3730 = vst [vmem:[%s191 + $0x80] sm:$0xff] %v3212
        %3731 = vst [vmem:[%s191 + $0x88] sm:$0xff] %v3371
        %3732 = vst [vmem:[%s191 + $0xc0] sm:$0xff] %v3565
        %3733 = vst [vmem:[%s191 + $0xc8] sm:$0xff] %v3724
        %3734 = vmatpush.msra.mxu0 0.0
        %3735 = vmatpush.msra.mxu0 0.0
        %3736 = vmatpush.msra.mxu0 0.0
        %3737 = vmatpush.msra.mxu0 0.0
        %3738 = vmatpush.msra.mxu0 0.0
        %3739 = vmatpush.msra.mxu0 0.0
        %3740 = vmatpush.msra.mxu0 0.0
        %3741 = vmatpush.msra.mxu0 0.0
        %3742 = vmatpush.msra.mxu0 0.0
        %3743 = vmatpush.msra.mxu0 0.0
        %3744 = vmatpush.msra.mxu0 0.0
        %3745 = vmatpush.msra.mxu0 0.0
        %3746 = vmatpush.msra.mxu0 0.0
        %3747 = vmatpush.msra.mxu0 0.0
        %v3748 = vand.u32 %v306, 4294901760
        %3749 = vmatpush.msra.mxu0 %v3748
        %v3750 = vand.u32 %v304, 4294901760
        %3751 = vmatpush.msra.mxu0 %v3750
        %v3752 = vand.u32 %v2347, 4294901760
        %v3753 = vsub.f32 %v2347, %v3752
        %v3754 = vand.u32 %v3753, 4294901760
        %v3755 = vsub.f32 %v3753, %v3754
        %v3756 = vand.u32 %v3755, 4294901760
        %3757 = vmatmul.f32.gmra.mxu0 %v3756
        %v3758 = vpop.f32.mrf.mxu0
        %v3759 = vadd.f32 0.0, %v3758
        %3760 = vdwg.mxu0
        %3761 = vmatpush.msra.mxu0 0.0
        %3762 = vmatpush.msra.mxu0 0.0
        %3763 = vmatpush.msra.mxu0 0.0
        %3764 = vmatpush.msra.mxu0 0.0
        %3765 = vmatpush.msra.mxu0 0.0
        %3766 = vmatpush.msra.mxu0 0.0
        %3767 = vmatpush.msra.mxu0 0.0
        %3768 = vmatpush.msra.mxu0 0.0
        %3769 = vmatpush.msra.mxu0 0.0
        %3770 = vmatpush.msra.mxu0 0.0
        %3771 = vmatpush.msra.mxu0 0.0
        %3772 = vmatpush.msra.mxu0 0.0
        %3773 = vmatpush.msra.mxu0 0.0
        %3774 = vmatpush.msra.mxu0 0.0
        %v3775 = vand.u32 %v306, 4294901760
        %v3776 = vsub.f32 %v306, %v3775
        %v3777 = vand.u32 %v3776, 4294901760
        %v3778 = vsub.f32 %v3776, %v3777
        %v3779 = vand.u32 %v3778, 4294901760
        %3780 = vmatpush.msra.mxu0 %v3779
        %v3781 = vand.u32 %v304, 4294901760
        %v3782 = vsub.f32 %v304, %v3781
        %v3783 = vand.u32 %v3782, 4294901760
        %v3784 = vsub.f32 %v3782, %v3783
        %v3785 = vand.u32 %v3784, 4294901760
        %3786 = vmatpush.msra.mxu0 %v3785
        %v3787 = vand.u32 %v2347, 4294901760
        %3788 = vmatmul.f32.gmra.mxu0 %v3787
        %v3789 = vpop.f32.mrf.mxu0
        %v3790 = vadd.f32 %v3759, %v3789
        %3791 = vdwg.mxu0
        %3792 = vmatpush.msra.mxu0 0.0
        %3793 = vmatpush.msra.mxu0 0.0
        %3794 = vmatpush.msra.mxu0 0.0
        %3795 = vmatpush.msra.mxu0 0.0
        %3796 = vmatpush.msra.mxu0 0.0
        %3797 = vmatpush.msra.mxu0 0.0
        %3798 = vmatpush.msra.mxu0 0.0
        %3799 = vmatpush.msra.mxu0 0.0
        %3800 = vmatpush.msra.mxu0 0.0
        %3801 = vmatpush.msra.mxu0 0.0
        %3802 = vmatpush.msra.mxu0 0.0
        %3803 = vmatpush.msra.mxu0 0.0
        %3804 = vmatpush.msra.mxu0 0.0
        %3805 = vmatpush.msra.mxu0 0.0
        %v3806 = vand.u32 %v306, 4294901760
        %v3807 = vsub.f32 %v306, %v3806
        %3808 = vmatpush.msra.mxu0 %v3807
        %v3809 = vand.u32 %v304, 4294901760
        %v3810 = vsub.f32 %v304, %v3809
        %3811 = vmatpush.msra.mxu0 %v3810
        %v3812 = vand.u32 %v2347, 4294901760
        %v3813 = vsub.f32 %v2347, %v3812
        %3814 = vmatmul.f32.gmra.mxu0 %v3813
        %v3815 = vpop.f32.mrf.mxu0
        %v3816 = vadd.f32 %v3790, %v3815
        %3817 = vdwg.mxu0
        %3818 = vmatpush.msra.mxu0 0.0
        %3819 = vmatpush.msra.mxu0 0.0
        %3820 = vmatpush.msra.mxu0 0.0
        %3821 = vmatpush.msra.mxu0 0.0
        %3822 = vmatpush.msra.mxu0 0.0
        %3823 = vmatpush.msra.mxu0 0.0
        %3824 = vmatpush.msra.mxu0 0.0
        %3825 = vmatpush.msra.mxu0 0.0
        %3826 = vmatpush.msra.mxu0 0.0
        %3827 = vmatpush.msra.mxu0 0.0
        %3828 = vmatpush.msra.mxu0 0.0
        %3829 = vmatpush.msra.mxu0 0.0
        %3830 = vmatpush.msra.mxu0 0.0
        %3831 = vmatpush.msra.mxu0 0.0
        %v3832 = vand.u32 %v306, 4294901760
        %3833 = vmatpush.msra.mxu0 %v3832
        %v3834 = vand.u32 %v304, 4294901760
        %3835 = vmatpush.msra.mxu0 %v3834
        %v3836 = vand.u32 %v2347, 4294901760
        %v3837 = vsub.f32 %v2347, %v3836
        %v3838 = vand.u32 %v3837, 4294901760
        %3839 = vmatmul.f32.gmra.mxu0 %v3838
        %v3840 = vpop.f32.mrf.mxu0
        %v3841 = vadd.f32 %v3816, %v3840
        %3842 = vdwg.mxu0
        %3843 = vmatpush.msra.mxu0 0.0
        %3844 = vmatpush.msra.mxu0 0.0
        %3845 = vmatpush.msra.mxu0 0.0
        %3846 = vmatpush.msra.mxu0 0.0
        %3847 = vmatpush.msra.mxu0 0.0
        %3848 = vmatpush.msra.mxu0 0.0
        %3849 = vmatpush.msra.mxu0 0.0
        %3850 = vmatpush.msra.mxu0 0.0
        %3851 = vmatpush.msra.mxu0 0.0
        %3852 = vmatpush.msra.mxu0 0.0
        %3853 = vmatpush.msra.mxu0 0.0
        %3854 = vmatpush.msra.mxu0 0.0
        %3855 = vmatpush.msra.mxu0 0.0
        %3856 = vmatpush.msra.mxu0 0.0
        %v3857 = vand.u32 %v306, 4294901760
        %v3858 = vsub.f32 %v306, %v3857
        %v3859 = vand.u32 %v3858, 4294901760
        %3860 = vmatpush.msra.mxu0 %v3859
        %v3861 = vand.u32 %v304, 4294901760
        %v3862 = vsub.f32 %v304, %v3861
        %v3863 = vand.u32 %v3862, 4294901760
        %3864 = vmatpush.msra.mxu0 %v3863
        %v3865 = vand.u32 %v2347, 4294901760
        %3866 = vmatmul.f32.gmra.mxu0 %v3865
        %v3867 = vpop.f32.mrf.mxu0
        %v3868 = vadd.f32 %v3841, %v3867
        %3869 = vdwg.mxu0
        %3870 = vmatpush.msra.mxu0 0.0
        %3871 = vmatpush.msra.mxu0 0.0
        %3872 = vmatpush.msra.mxu0 0.0
        %3873 = vmatpush.msra.mxu0 0.0
        %3874 = vmatpush.msra.mxu0 0.0
        %3875 = vmatpush.msra.mxu0 0.0
        %3876 = vmatpush.msra.mxu0 0.0
        %3877 = vmatpush.msra.mxu0 0.0
        %3878 = vmatpush.msra.mxu0 0.0
        %3879 = vmatpush.msra.mxu0 0.0
        %3880 = vmatpush.msra.mxu0 0.0
        %3881 = vmatpush.msra.mxu0 0.0
        %3882 = vmatpush.msra.mxu0 0.0
        %3883 = vmatpush.msra.mxu0 0.0
        %v3884 = vand.u32 %v306, 4294901760
        %3885 = vmatpush.msra.mxu0 %v3884
        %v3886 = vand.u32 %v304, 4294901760
        %3887 = vmatpush.msra.mxu0 %v3886
        %v3888 = vand.u32 %v2347, 4294901760
        %3889 = vmatmul.f32.gmra.mxu0 %v3888
        %v3890 = vpop.f32.mrf.mxu0
        %v3891 = vadd.f32 %v3868, %v3890
        %3892 = vdwg.mxu0
        %3893 = vmatpush.msra.mxu0 0.0
        %3894 = vmatpush.msra.mxu0 0.0
        %3895 = vmatpush.msra.mxu0 0.0
        %3896 = vmatpush.msra.mxu0 0.0
        %3897 = vmatpush.msra.mxu0 0.0
        %3898 = vmatpush.msra.mxu0 0.0
        %3899 = vmatpush.msra.mxu0 0.0
        %3900 = vmatpush.msra.mxu0 0.0
        %3901 = vmatpush.msra.mxu0 0.0
        %3902 = vmatpush.msra.mxu0 0.0
        %3903 = vmatpush.msra.mxu0 0.0
        %3904 = vmatpush.msra.mxu0 0.0
        %3905 = vmatpush.msra.mxu0 0.0
        %3906 = vmatpush.msra.mxu0 0.0
        %v3907 = vand.u32 %v344, 4294901760
        %3908 = vmatpush.msra.mxu0 %v3907
        %v3909 = vand.u32 %v342, 4294901760
        %3910 = vmatpush.msra.mxu0 %v3909
        %v3911 = vand.u32 %v2347, 4294901760
        %v3912 = vsub.f32 %v2347, %v3911
        %v3913 = vand.u32 %v3912, 4294901760
        %v3914 = vsub.f32 %v3912, %v3913
        %v3915 = vand.u32 %v3914, 4294901760
        %3916 = vmatmul.f32.gmra.mxu0 %v3915
        %v3917 = vpop.f32.mrf.mxu0
        %v3918 = vadd.f32 0.0, %v3917
        %3919 = vdwg.mxu0
        %3920 = vmatpush.msra.mxu0 0.0
        %3921 = vmatpush.msra.mxu0 0.0
        %3922 = vmatpush.msra.mxu0 0.0
        %3923 = vmatpush.msra.mxu0 0.0
        %3924 = vmatpush.msra.mxu0 0.0
        %3925 = vmatpush.msra.mxu0 0.0
        %3926 = vmatpush.msra.mxu0 0.0
        %3927 = vmatpush.msra.mxu0 0.0
        %3928 = vmatpush.msra.mxu0 0.0
        %3929 = vmatpush.msra.mxu0 0.0
        %3930 = vmatpush.msra.mxu0 0.0
        %3931 = vmatpush.msra.mxu0 0.0
        %3932 = vmatpush.msra.mxu0 0.0
        %3933 = vmatpush.msra.mxu0 0.0
        %v3934 = vand.u32 %v344, 4294901760
        %v3935 = vsub.f32 %v344, %v3934
        %v3936 = vand.u32 %v3935, 4294901760
        %v3937 = vsub.f32 %v3935, %v3936
        %v3938 = vand.u32 %v3937, 4294901760
        %3939 = vmatpush.msra.mxu0 %v3938
        %v3940 = vand.u32 %v342, 4294901760
        %v3941 = vsub.f32 %v342, %v3940
        %v3942 = vand.u32 %v3941, 4294901760
        %v3943 = vsub.f32 %v3941, %v3942
        %v3944 = vand.u32 %v3943, 4294901760
        %3945 = vmatpush.msra.mxu0 %v3944
        %v3946 = vand.u32 %v2347, 4294901760
        %3947 = vmatmul.f32.gmra.mxu0 %v3946
        %v3948 = vpop.f32.mrf.mxu0
        %v3949 = vadd.f32 %v3918, %v3948
        %3950 = vdwg.mxu0
        %3951 = vmatpush.msra.mxu0 0.0
        %3952 = vmatpush.msra.mxu0 0.0
        %3953 = vmatpush.msra.mxu0 0.0
        %3954 = vmatpush.msra.mxu0 0.0
        %3955 = vmatpush.msra.mxu0 0.0
        %3956 = vmatpush.msra.mxu0 0.0
        %3957 = vmatpush.msra.mxu0 0.0
        %3958 = vmatpush.msra.mxu0 0.0
        %3959 = vmatpush.msra.mxu0 0.0
        %3960 = vmatpush.msra.mxu0 0.0
        %3961 = vmatpush.msra.mxu0 0.0
        %3962 = vmatpush.msra.mxu0 0.0
        %3963 = vmatpush.msra.mxu0 0.0
        %3964 = vmatpush.msra.mxu0 0.0
        %v3965 = vand.u32 %v344, 4294901760
        %v3966 = vsub.f32 %v344, %v3965
        %3967 = vmatpush.msra.mxu0 %v3966
        %v3968 = vand.u32 %v342, 4294901760
        %v3969 = vsub.f32 %v342, %v3968
        %3970 = vmatpush.msra.mxu0 %v3969
        %v3971 = vand.u32 %v2347, 4294901760
        %v3972 = vsub.f32 %v2347, %v3971
        %3973 = vmatmul.f32.gmra.mxu0 %v3972
        %v3974 = vpop.f32.mrf.mxu0
        %v3975 = vadd.f32 %v3949, %v3974
        %3976 = vdwg.mxu0
        %3977 = vmatpush.msra.mxu0 0.0
        %3978 = vmatpush.msra.mxu0 0.0
        %3979 = vmatpush.msra.mxu0 0.0
        %3980 = vmatpush.msra.mxu0 0.0
        %3981 = vmatpush.msra.mxu0 0.0
        %3982 = vmatpush.msra.mxu0 0.0
        %3983 = vmatpush.msra.mxu0 0.0
        %3984 = vmatpush.msra.mxu0 0.0
        %3985 = vmatpush.msra.mxu0 0.0
        %3986 = vmatpush.msra.mxu0 0.0
        %3987 = vmatpush.msra.mxu0 0.0
        %3988 = vmatpush.msra.mxu0 0.0
        %3989 = vmatpush.msra.mxu0 0.0
        %3990 = vmatpush.msra.mxu0 0.0
        %v3991 = vand.u32 %v344, 4294901760
        %3992 = vmatpush.msra.mxu0 %v3991
        %v3993 = vand.u32 %v342, 4294901760
        %3994 = vmatpush.msra.mxu0 %v3993
        %v3995 = vand.u32 %v2347, 4294901760
        %v3996 = vsub.f32 %v2347, %v3995
        %v3997 = vand.u32 %v3996, 4294901760
        %3998 = vmatmul.f32.gmra.mxu0 %v3997
        %v3999 = vpop.f32.mrf.mxu0
        %v4000 = vadd.f32 %v3975, %v3999
        %4001 = vdwg.mxu0
        %4002 = vmatpush.msra.mxu0 0.0
        %4003 = vmatpush.msra.mxu0 0.0
        %4004 = vmatpush.msra.mxu0 0.0
        %4005 = vmatpush.msra.mxu0 0.0
        %4006 = vmatpush.msra.mxu0 0.0
        %4007 = vmatpush.msra.mxu0 0.0
        %4008 = vmatpush.msra.mxu0 0.0
        %4009 = vmatpush.msra.mxu0 0.0
        %4010 = vmatpush.msra.mxu0 0.0
        %4011 = vmatpush.msra.mxu0 0.0
        %4012 = vmatpush.msra.mxu0 0.0
        %4013 = vmatpush.msra.mxu0 0.0
        %4014 = vmatpush.msra.mxu0 0.0
        %4015 = vmatpush.msra.mxu0 0.0
        %v4016 = vand.u32 %v344, 4294901760
        %v4017 = vsub.f32 %v344, %v4016
        %v4018 = vand.u32 %v4017, 4294901760
        %4019 = vmatpush.msra.mxu0 %v4018
        %v4020 = vand.u32 %v342, 4294901760
        %v4021 = vsub.f32 %v342, %v4020
        %v4022 = vand.u32 %v4021, 4294901760
        %4023 = vmatpush.msra.mxu0 %v4022
        %v4024 = vand.u32 %v2347, 4294901760
        %4025 = vmatmul.f32.gmra.mxu0 %v4024
        %v4026 = vpop.f32.mrf.mxu0
        %v4027 = vadd.f32 %v4000, %v4026
        %4028 = vdwg.mxu0
        %4029 = vmatpush.msra.mxu0 0.0
        %4030 = vmatpush.msra.mxu0 0.0
        %4031 = vmatpush.msra.mxu0 0.0
        %4032 = vmatpush.msra.mxu0 0.0
        %4033 = vmatpush.msra.mxu0 0.0
        %4034 = vmatpush.msra.mxu0 0.0
        %4035 = vmatpush.msra.mxu0 0.0
        %4036 = vmatpush.msra.mxu0 0.0
        %4037 = vmatpush.msra.mxu0 0.0
        %4038 = vmatpush.msra.mxu0 0.0
        %4039 = vmatpush.msra.mxu0 0.0
        %4040 = vmatpush.msra.mxu0 0.0
        %4041 = vmatpush.msra.mxu0 0.0
        %4042 = vmatpush.msra.mxu0 0.0
        %v4043 = vand.u32 %v344, 4294901760
        %4044 = vmatpush.msra.mxu0 %v4043
        %v4045 = vand.u32 %v342, 4294901760
        %4046 = vmatpush.msra.mxu0 %v4045
        %v4047 = vand.u32 %v2347, 4294901760
        %4048 = vmatmul.f32.gmra.mxu0 %v4047
        %v4049 = vpop.f32.mrf.mxu0
        %v4050 = vadd.f32 %v4027, %v4049
        %4051 = vdwg.mxu0
        %4052 = vmatpush.msra.mxu0 0.0
        %4053 = vmatpush.msra.mxu0 0.0
        %4054 = vmatpush.msra.mxu0 0.0
        %4055 = vmatpush.msra.mxu0 0.0
        %4056 = vmatpush.msra.mxu0 0.0
        %4057 = vmatpush.msra.mxu0 0.0
        %4058 = vmatpush.msra.mxu0 0.0
        %4059 = vmatpush.msra.mxu0 0.0
        %4060 = vmatpush.msra.mxu0 0.0
        %4061 = vmatpush.msra.mxu0 0.0
        %4062 = vmatpush.msra.mxu0 0.0
        %4063 = vmatpush.msra.mxu0 0.0
        %4064 = vmatpush.msra.mxu0 0.0
        %4065 = vmatpush.msra.mxu0 0.0
        %v4066 = vand.u32 %v402, 4294901760
        %4067 = vmatpush.msra.mxu0 %v4066
        %v4068 = vand.u32 %v400, 4294901760
        %4069 = vmatpush.msra.mxu0 %v4068
        %v4070 = vand.u32 %v2700, 4294901760
        %v4071 = vsub.f32 %v2700, %v4070
        %v4072 = vand.u32 %v4071, 4294901760
        %v4073 = vsub.f32 %v4071, %v4072
        %v4074 = vand.u32 %v4073, 4294901760
        %4075 = vmatmul.f32.gmra.mxu0 %v4074
        %v4076 = vpop.f32.mrf.mxu0
        %v4077 = vadd.f32 0.0, %v4076
        %4078 = vdwg.mxu0
        %4079 = vmatpush.msra.mxu0 0.0
        %4080 = vmatpush.msra.mxu0 0.0
        %4081 = vmatpush.msra.mxu0 0.0
        %4082 = vmatpush.msra.mxu0 0.0
        %4083 = vmatpush.msra.mxu0 0.0
        %4084 = vmatpush.msra.mxu0 0.0
        %4085 = vmatpush.msra.mxu0 0.0
        %4086 = vmatpush.msra.mxu0 0.0
        %4087 = vmatpush.msra.mxu0 0.0
        %4088 = vmatpush.msra.mxu0 0.0
        %4089 = vmatpush.msra.mxu0 0.0
        %4090 = vmatpush.msra.mxu0 0.0
        %4091 = vmatpush.msra.mxu0 0.0
        %4092 = vmatpush.msra.mxu0 0.0
        %v4093 = vand.u32 %v402, 4294901760
        %v4094 = vsub.f32 %v402, %v4093
        %v4095 = vand.u32 %v4094, 4294901760
        %v4096 = vsub.f32 %v4094, %v4095
        %v4097 = vand.u32 %v4096, 4294901760
        %4098 = vmatpush.msra.mxu0 %v4097
        %v4099 = vand.u32 %v400, 4294901760
        %v4100 = vsub.f32 %v400, %v4099
        %v4101 = vand.u32 %v4100, 4294901760
        %v4102 = vsub.f32 %v4100, %v4101
        %v4103 = vand.u32 %v4102, 4294901760
        %4104 = vmatpush.msra.mxu0 %v4103
        %v4105 = vand.u32 %v2700, 4294901760
        %4106 = vmatmul.f32.gmra.mxu0 %v4105
        %v4107 = vpop.f32.mrf.mxu0
        %v4108 = vadd.f32 %v4077, %v4107
        %4109 = vdwg.mxu0
        %4110 = vmatpush.msra.mxu0 0.0
        %4111 = vmatpush.msra.mxu0 0.0
        %4112 = vmatpush.msra.mxu0 0.0
        %4113 = vmatpush.msra.mxu0 0.0
        %4114 = vmatpush.msra.mxu0 0.0
        %4115 = vmatpush.msra.mxu0 0.0
        %4116 = vmatpush.msra.mxu0 0.0
        %4117 = vmatpush.msra.mxu0 0.0
        %4118 = vmatpush.msra.mxu0 0.0
        %4119 = vmatpush.msra.mxu0 0.0
        %4120 = vmatpush.msra.mxu0 0.0
        %4121 = vmatpush.msra.mxu0 0.0
        %4122 = vmatpush.msra.mxu0 0.0
        %4123 = vmatpush.msra.mxu0 0.0
        %v4124 = vand.u32 %v402, 4294901760
        %v4125 = vsub.f32 %v402, %v4124
        %4126 = vmatpush.msra.mxu0 %v4125
        %v4127 = vand.u32 %v400, 4294901760
        %v4128 = vsub.f32 %v400, %v4127
        %4129 = vmatpush.msra.mxu0 %v4128
        %v4130 = vand.u32 %v2700, 4294901760
        %v4131 = vsub.f32 %v2700, %v4130
        %4132 = vmatmul.f32.gmra.mxu0 %v4131
        %v4133 = vpop.f32.mrf.mxu0
        %v4134 = vadd.f32 %v4108, %v4133
        %4135 = vdwg.mxu0
        %4136 = vmatpush.msra.mxu0 0.0
        %4137 = vmatpush.msra.mxu0 0.0
        %4138 = vmatpush.msra.mxu0 0.0
        %4139 = vmatpush.msra.mxu0 0.0
        %4140 = vmatpush.msra.mxu0 0.0
        %4141 = vmatpush.msra.mxu0 0.0
        %4142 = vmatpush.msra.mxu0 0.0
        %4143 = vmatpush.msra.mxu0 0.0
        %4144 = vmatpush.msra.mxu0 0.0
        %4145 = vmatpush.msra.mxu0 0.0
        %4146 = vmatpush.msra.mxu0 0.0
        %4147 = vmatpush.msra.mxu0 0.0
        %4148 = vmatpush.msra.mxu0 0.0
        %4149 = vmatpush.msra.mxu0 0.0
        %v4150 = vand.u32 %v402, 4294901760
        %4151 = vmatpush.msra.mxu0 %v4150
        %v4152 = vand.u32 %v400, 4294901760
        %4153 = vmatpush.msra.mxu0 %v4152
        %v4154 = vand.u32 %v2700, 4294901760
        %v4155 = vsub.f32 %v2700, %v4154
        %v4156 = vand.u32 %v4155, 4294901760
        %4157 = vmatmul.f32.gmra.mxu0 %v4156
        %v4158 = vpop.f32.mrf.mxu0
        %v4159 = vadd.f32 %v4134, %v4158
        %4160 = vdwg.mxu0
        %4161 = vmatpush.msra.mxu0 0.0
        %4162 = vmatpush.msra.mxu0 0.0
        %4163 = vmatpush.msra.mxu0 0.0
        %4164 = vmatpush.msra.mxu0 0.0
        %4165 = vmatpush.msra.mxu0 0.0
        %4166 = vmatpush.msra.mxu0 0.0
        %4167 = vmatpush.msra.mxu0 0.0
        %4168 = vmatpush.msra.mxu0 0.0
        %4169 = vmatpush.msra.mxu0 0.0
        %4170 = vmatpush.msra.mxu0 0.0
        %4171 = vmatpush.msra.mxu0 0.0
        %4172 = vmatpush.msra.mxu0 0.0
        %4173 = vmatpush.msra.mxu0 0.0
        %4174 = vmatpush.msra.mxu0 0.0
        %v4175 = vand.u32 %v402, 4294901760
        %v4176 = vsub.f32 %v402, %v4175
        %v4177 = vand.u32 %v4176, 4294901760
        %4178 = vmatpush.msra.mxu0 %v4177
        %v4179 = vand.u32 %v400, 4294901760
        %v4180 = vsub.f32 %v400, %v4179
        %v4181 = vand.u32 %v4180, 4294901760
        %4182 = vmatpush.msra.mxu0 %v4181
        %v4183 = vand.u32 %v2700, 4294901760
        %4184 = vmatmul.f32.gmra.mxu0 %v4183
        %v4185 = vpop.f32.mrf.mxu0
        %v4186 = vadd.f32 %v4159, %v4185
        %4187 = vdwg.mxu0
        %4188 = vmatpush.msra.mxu0 0.0
        %4189 = vmatpush.msra.mxu0 0.0
        %4190 = vmatpush.msra.mxu0 0.0
        %4191 = vmatpush.msra.mxu0 0.0
        %4192 = vmatpush.msra.mxu0 0.0
        %4193 = vmatpush.msra.mxu0 0.0
        %4194 = vmatpush.msra.mxu0 0.0
        %4195 = vmatpush.msra.mxu0 0.0
        %4196 = vmatpush.msra.mxu0 0.0
        %4197 = vmatpush.msra.mxu0 0.0
        %4198 = vmatpush.msra.mxu0 0.0
        %4199 = vmatpush.msra.mxu0 0.0
        %4200 = vmatpush.msra.mxu0 0.0
        %4201 = vmatpush.msra.mxu0 0.0
        %v4202 = vand.u32 %v402, 4294901760
        %4203 = vmatpush.msra.mxu0 %v4202
        %v4204 = vand.u32 %v400, 4294901760
        %4205 = vmatpush.msra.mxu0 %v4204
        %v4206 = vand.u32 %v2700, 4294901760
        %4207 = vmatmul.f32.gmra.mxu0 %v4206
        %v4208 = vpop.f32.mrf.mxu0
        %v4209 = vadd.f32 %v4186, %v4208
        %4210 = vdwg.mxu0
        %4211 = vmatpush.msra.mxu0 0.0
        %4212 = vmatpush.msra.mxu0 0.0
        %4213 = vmatpush.msra.mxu0 0.0
        %4214 = vmatpush.msra.mxu0 0.0
        %4215 = vmatpush.msra.mxu0 0.0
        %4216 = vmatpush.msra.mxu0 0.0
        %4217 = vmatpush.msra.mxu0 0.0
        %4218 = vmatpush.msra.mxu0 0.0
        %4219 = vmatpush.msra.mxu0 0.0
        %4220 = vmatpush.msra.mxu0 0.0
        %4221 = vmatpush.msra.mxu0 0.0
        %4222 = vmatpush.msra.mxu0 0.0
        %4223 = vmatpush.msra.mxu0 0.0
        %4224 = vmatpush.msra.mxu0 0.0
        %v4225 = vand.u32 %v440, 4294901760
        %4226 = vmatpush.msra.mxu0 %v4225
        %v4227 = vand.u32 %v438, 4294901760
        %4228 = vmatpush.msra.mxu0 %v4227
        %v4229 = vand.u32 %v2700, 4294901760
        %v4230 = vsub.f32 %v2700, %v4229
        %v4231 = vand.u32 %v4230, 4294901760
        %v4232 = vsub.f32 %v4230, %v4231
        %v4233 = vand.u32 %v4232, 4294901760
        %4234 = vmatmul.f32.gmra.mxu0 %v4233
        %v4235 = vpop.f32.mrf.mxu0
        %v4236 = vadd.f32 0.0, %v4235
        %4237 = vdwg.mxu0
        %4238 = vmatpush.msra.mxu0 0.0
        %4239 = vmatpush.msra.mxu0 0.0
        %4240 = vmatpush.msra.mxu0 0.0
        %4241 = vmatpush.msra.mxu0 0.0
        %4242 = vmatpush.msra.mxu0 0.0
        %4243 = vmatpush.msra.mxu0 0.0
        %4244 = vmatpush.msra.mxu0 0.0
        %4245 = vmatpush.msra.mxu0 0.0
        %4246 = vmatpush.msra.mxu0 0.0
        %4247 = vmatpush.msra.mxu0 0.0
        %4248 = vmatpush.msra.mxu0 0.0
        %4249 = vmatpush.msra.mxu0 0.0
        %4250 = vmatpush.msra.mxu0 0.0
        %4251 = vmatpush.msra.mxu0 0.0
        %v4252 = vand.u32 %v440, 4294901760
        %v4253 = vsub.f32 %v440, %v4252
        %v4254 = vand.u32 %v4253, 4294901760
        %v4255 = vsub.f32 %v4253, %v4254
        %v4256 = vand.u32 %v4255, 4294901760
        %4257 = vmatpush.msra.mxu0 %v4256
        %v4258 = vand.u32 %v438, 4294901760
        %v4259 = vsub.f32 %v438, %v4258
        %v4260 = vand.u32 %v4259, 4294901760
        %v4261 = vsub.f32 %v4259, %v4260
        %v4262 = vand.u32 %v4261, 4294901760
        %4263 = vmatpush.msra.mxu0 %v4262
        %v4264 = vand.u32 %v2700, 4294901760
        %4265 = vmatmul.f32.gmra.mxu0 %v4264
        %v4266 = vpop.f32.mrf.mxu0
        %v4267 = vadd.f32 %v4236, %v4266
        %4268 = vdwg.mxu0
        %4269 = vmatpush.msra.mxu0 0.0
        %4270 = vmatpush.msra.mxu0 0.0
        %4271 = vmatpush.msra.mxu0 0.0
        %4272 = vmatpush.msra.mxu0 0.0
        %4273 = vmatpush.msra.mxu0 0.0
        %4274 = vmatpush.msra.mxu0 0.0
        %4275 = vmatpush.msra.mxu0 0.0
        %4276 = vmatpush.msra.mxu0 0.0
        %4277 = vmatpush.msra.mxu0 0.0
        %4278 = vmatpush.msra.mxu0 0.0
        %4279 = vmatpush.msra.mxu0 0.0
        %4280 = vmatpush.msra.mxu0 0.0
        %4281 = vmatpush.msra.mxu0 0.0
        %4282 = vmatpush.msra.mxu0 0.0
        %v4283 = vand.u32 %v440, 4294901760
        %v4284 = vsub.f32 %v440, %v4283
        %4285 = vmatpush.msra.mxu0 %v4284
        %v4286 = vand.u32 %v438, 4294901760
        %v4287 = vsub.f32 %v438, %v4286
        %4288 = vmatpush.msra.mxu0 %v4287
        %v4289 = vand.u32 %v2700, 4294901760
        %v4290 = vsub.f32 %v2700, %v4289
        %4291 = vmatmul.f32.gmra.mxu0 %v4290
        %v4292 = vpop.f32.mrf.mxu0
        %v4293 = vadd.f32 %v4267, %v4292
        %4294 = vdwg.mxu0
        %4295 = vmatpush.msra.mxu0 0.0
        %4296 = vmatpush.msra.mxu0 0.0
        %4297 = vmatpush.msra.mxu0 0.0
        %4298 = vmatpush.msra.mxu0 0.0
        %4299 = vmatpush.msra.mxu0 0.0
        %4300 = vmatpush.msra.mxu0 0.0
        %4301 = vmatpush.msra.mxu0 0.0
        %4302 = vmatpush.msra.mxu0 0.0
        %4303 = vmatpush.msra.mxu0 0.0
        %4304 = vmatpush.msra.mxu0 0.0
        %4305 = vmatpush.msra.mxu0 0.0
        %4306 = vmatpush.msra.mxu0 0.0
        %4307 = vmatpush.msra.mxu0 0.0
        %4308 = vmatpush.msra.mxu0 0.0
        %v4309 = vand.u32 %v440, 4294901760
        %4310 = vmatpush.msra.mxu0 %v4309
        %v4311 = vand.u32 %v438, 4294901760
        %4312 = vmatpush.msra.mxu0 %v4311
        %v4313 = vand.u32 %v2700, 4294901760
        %v4314 = vsub.f32 %v2700, %v4313
        %v4315 = vand.u32 %v4314, 4294901760
        %4316 = vmatmul.f32.gmra.mxu0 %v4315
        %v4317 = vpop.f32.mrf.mxu0
        %v4318 = vadd.f32 %v4293, %v4317
        %4319 = vdwg.mxu0
        %4320 = vmatpush.msra.mxu0 0.0
        %4321 = vmatpush.msra.mxu0 0.0
        %4322 = vmatpush.msra.mxu0 0.0
        %4323 = vmatpush.msra.mxu0 0.0
        %4324 = vmatpush.msra.mxu0 0.0
        %4325 = vmatpush.msra.mxu0 0.0
        %4326 = vmatpush.msra.mxu0 0.0
        %4327 = vmatpush.msra.mxu0 0.0
        %4328 = vmatpush.msra.mxu0 0.0
        %4329 = vmatpush.msra.mxu0 0.0
        %4330 = vmatpush.msra.mxu0 0.0
        %4331 = vmatpush.msra.mxu0 0.0
        %4332 = vmatpush.msra.mxu0 0.0
        %4333 = vmatpush.msra.mxu0 0.0
        %v4334 = vand.u32 %v440, 4294901760
        %v4335 = vsub.f32 %v440, %v4334
        %v4336 = vand.u32 %v4335, 4294901760
        %4337 = vmatpush.msra.mxu0 %v4336
        %v4338 = vand.u32 %v438, 4294901760
        %v4339 = vsub.f32 %v438, %v4338
        %v4340 = vand.u32 %v4339, 4294901760
        %4341 = vmatpush.msra.mxu0 %v4340
        %v4342 = vand.u32 %v2700, 4294901760
        %4343 = vmatmul.f32.gmra.mxu0 %v4342
        %v4344 = vpop.f32.mrf.mxu0
        %v4345 = vadd.f32 %v4318, %v4344
        %4346 = vdwg.mxu0
        %4347 = vmatpush.msra.mxu0 0.0
        %4348 = vmatpush.msra.mxu0 0.0
        %4349 = vmatpush.msra.mxu0 0.0
        %4350 = vmatpush.msra.mxu0 0.0
        %4351 = vmatpush.msra.mxu0 0.0
        %4352 = vmatpush.msra.mxu0 0.0
        %4353 = vmatpush.msra.mxu0 0.0
        %4354 = vmatpush.msra.mxu0 0.0
        %4355 = vmatpush.msra.mxu0 0.0
        %4356 = vmatpush.msra.mxu0 0.0
        %4357 = vmatpush.msra.mxu0 0.0
        %4358 = vmatpush.msra.mxu0 0.0
        %4359 = vmatpush.msra.mxu0 0.0
        %4360 = vmatpush.msra.mxu0 0.0
        %v4361 = vand.u32 %v440, 4294901760
        %4362 = vmatpush.msra.mxu0 %v4361
        %v4363 = vand.u32 %v438, 4294901760
        %4364 = vmatpush.msra.mxu0 %v4363
        %v4365 = vand.u32 %v2700, 4294901760
        %4366 = vmatmul.f32.gmra.mxu0 %v4365
        %v4367 = vpop.f32.mrf.mxu0
        %v4368 = vadd.f32 %v4345, %v4367
        %4369 = vdwg.mxu0
        %4370 = vmatpush.msra.mxu0 0.0
        %4371 = vmatpush.msra.mxu0 0.0
        %4372 = vmatpush.msra.mxu0 0.0
        %4373 = vmatpush.msra.mxu0 0.0
        %4374 = vmatpush.msra.mxu0 0.0
        %4375 = vmatpush.msra.mxu0 0.0
        %4376 = vmatpush.msra.mxu0 0.0
        %4377 = vmatpush.msra.mxu0 0.0
        %4378 = vmatpush.msra.mxu0 0.0
        %4379 = vmatpush.msra.mxu0 0.0
        %4380 = vmatpush.msra.mxu0 0.0
        %4381 = vmatpush.msra.mxu0 0.0
        %4382 = vmatpush.msra.mxu0 0.0
        %4383 = vmatpush.msra.mxu0 0.0
        %v4384 = vand.u32 %v498, 4294901760
        %4385 = vmatpush.msra.mxu0 %v4384
        %v4386 = vand.u32 %v496, 4294901760
        %4387 = vmatpush.msra.mxu0 %v4386
        %v4388 = vand.u32 %v3053, 4294901760
        %v4389 = vsub.f32 %v3053, %v4388
        %v4390 = vand.u32 %v4389, 4294901760
        %v4391 = vsub.f32 %v4389, %v4390
        %v4392 = vand.u32 %v4391, 4294901760
        %4393 = vmatmul.f32.gmra.mxu0 %v4392
        %v4394 = vpop.f32.mrf.mxu0
        %v4395 = vadd.f32 0.0, %v4394
        %4396 = vdwg.mxu0
        %4397 = vmatpush.msra.mxu0 0.0
        %4398 = vmatpush.msra.mxu0 0.0
        %4399 = vmatpush.msra.mxu0 0.0
        %4400 = vmatpush.msra.mxu0 0.0
        %4401 = vmatpush.msra.mxu0 0.0
        %4402 = vmatpush.msra.mxu0 0.0
        %4403 = vmatpush.msra.mxu0 0.0
        %4404 = vmatpush.msra.mxu0 0.0
        %4405 = vmatpush.msra.mxu0 0.0
        %4406 = vmatpush.msra.mxu0 0.0
        %4407 = vmatpush.msra.mxu0 0.0
        %4408 = vmatpush.msra.mxu0 0.0
        %4409 = vmatpush.msra.mxu0 0.0
        %4410 = vmatpush.msra.mxu0 0.0
        %v4411 = vand.u32 %v498, 4294901760
        %v4412 = vsub.f32 %v498, %v4411
        %v4413 = vand.u32 %v4412, 4294901760
        %v4414 = vsub.f32 %v4412, %v4413
        %v4415 = vand.u32 %v4414, 4294901760
        %4416 = vmatpush.msra.mxu0 %v4415
        %v4417 = vand.u32 %v496, 4294901760
        %v4418 = vsub.f32 %v496, %v4417
        %v4419 = vand.u32 %v4418, 4294901760
        %v4420 = vsub.f32 %v4418, %v4419
        %v4421 = vand.u32 %v4420, 4294901760
        %4422 = vmatpush.msra.mxu0 %v4421
        %v4423 = vand.u32 %v3053, 4294901760
        %4424 = vmatmul.f32.gmra.mxu0 %v4423
        %v4425 = vpop.f32.mrf.mxu0
        %v4426 = vadd.f32 %v4395, %v4425
        %4427 = vdwg.mxu0
        %4428 = vmatpush.msra.mxu0 0.0
        %4429 = vmatpush.msra.mxu0 0.0
        %4430 = vmatpush.msra.mxu0 0.0
        %4431 = vmatpush.msra.mxu0 0.0
        %4432 = vmatpush.msra.mxu0 0.0
        %4433 = vmatpush.msra.mxu0 0.0
        %4434 = vmatpush.msra.mxu0 0.0
        %4435 = vmatpush.msra.mxu0 0.0
        %4436 = vmatpush.msra.mxu0 0.0
        %4437 = vmatpush.msra.mxu0 0.0
        %4438 = vmatpush.msra.mxu0 0.0
        %4439 = vmatpush.msra.mxu0 0.0
        %4440 = vmatpush.msra.mxu0 0.0
        %4441 = vmatpush.msra.mxu0 0.0
        %v4442 = vand.u32 %v498, 4294901760
        %v4443 = vsub.f32 %v498, %v4442
        %4444 = vmatpush.msra.mxu0 %v4443
        %v4445 = vand.u32 %v496, 4294901760
        %v4446 = vsub.f32 %v496, %v4445
        %4447 = vmatpush.msra.mxu0 %v4446
        %v4448 = vand.u32 %v3053, 4294901760
        %v4449 = vsub.f32 %v3053, %v4448
        %4450 = vmatmul.f32.gmra.mxu0 %v4449
        %v4451 = vpop.f32.mrf.mxu0
        %v4452 = vadd.f32 %v4426, %v4451
        %4453 = vdwg.mxu0
        %4454 = vmatpush.msra.mxu0 0.0
        %4455 = vmatpush.msra.mxu0 0.0
        %4456 = vmatpush.msra.mxu0 0.0
        %4457 = vmatpush.msra.mxu0 0.0
        %4458 = vmatpush.msra.mxu0 0.0
        %4459 = vmatpush.msra.mxu0 0.0
        %4460 = vmatpush.msra.mxu0 0.0
        %4461 = vmatpush.msra.mxu0 0.0
        %4462 = vmatpush.msra.mxu0 0.0
        %4463 = vmatpush.msra.mxu0 0.0
        %4464 = vmatpush.msra.mxu0 0.0
        %4465 = vmatpush.msra.mxu0 0.0
        %4466 = vmatpush.msra.mxu0 0.0
        %4467 = vmatpush.msra.mxu0 0.0
        %v4468 = vand.u32 %v498, 4294901760
        %4469 = vmatpush.msra.mxu0 %v4468
        %v4470 = vand.u32 %v496, 4294901760
        %4471 = vmatpush.msra.mxu0 %v4470
        %v4472 = vand.u32 %v3053, 4294901760
        %v4473 = vsub.f32 %v3053, %v4472
        %v4474 = vand.u32 %v4473, 4294901760
        %4475 = vmatmul.f32.gmra.mxu0 %v4474
        %v4476 = vpop.f32.mrf.mxu0
        %v4477 = vadd.f32 %v4452, %v4476
        %4478 = vdwg.mxu0
        %4479 = vmatpush.msra.mxu0 0.0
        %4480 = vmatpush.msra.mxu0 0.0
        %4481 = vmatpush.msra.mxu0 0.0
        %4482 = vmatpush.msra.mxu0 0.0
        %4483 = vmatpush.msra.mxu0 0.0
        %4484 = vmatpush.msra.mxu0 0.0
        %4485 = vmatpush.msra.mxu0 0.0
        %4486 = vmatpush.msra.mxu0 0.0
        %4487 = vmatpush.msra.mxu0 0.0
        %4488 = vmatpush.msra.mxu0 0.0
        %4489 = vmatpush.msra.mxu0 0.0
        %4490 = vmatpush.msra.mxu0 0.0
        %4491 = vmatpush.msra.mxu0 0.0
        %4492 = vmatpush.msra.mxu0 0.0
        %v4493 = vand.u32 %v498, 4294901760
        %v4494 = vsub.f32 %v498, %v4493
        %v4495 = vand.u32 %v4494, 4294901760
        %4496 = vmatpush.msra.mxu0 %v4495
        %v4497 = vand.u32 %v496, 4294901760
        %v4498 = vsub.f32 %v496, %v4497
        %v4499 = vand.u32 %v4498, 4294901760
        %4500 = vmatpush.msra.mxu0 %v4499
        %v4501 = vand.u32 %v3053, 4294901760
        %4502 = vmatmul.f32.gmra.mxu0 %v4501
        %v4503 = vpop.f32.mrf.mxu0
        %v4504 = vadd.f32 %v4477, %v4503
        %4505 = vdwg.mxu0
        %4506 = vmatpush.msra.mxu0 0.0
        %4507 = vmatpush.msra.mxu0 0.0
        %4508 = vmatpush.msra.mxu0 0.0
        %4509 = vmatpush.msra.mxu0 0.0
        %4510 = vmatpush.msra.mxu0 0.0
        %4511 = vmatpush.msra.mxu0 0.0
        %4512 = vmatpush.msra.mxu0 0.0
        %4513 = vmatpush.msra.mxu0 0.0
        %4514 = vmatpush.msra.mxu0 0.0
        %4515 = vmatpush.msra.mxu0 0.0
        %4516 = vmatpush.msra.mxu0 0.0
        %4517 = vmatpush.msra.mxu0 0.0
        %4518 = vmatpush.msra.mxu0 0.0
        %4519 = vmatpush.msra.mxu0 0.0
        %v4520 = vand.u32 %v498, 4294901760
        %4521 = vmatpush.msra.mxu0 %v4520
        %v4522 = vand.u32 %v496, 4294901760
        %4523 = vmatpush.msra.mxu0 %v4522
        %v4524 = vand.u32 %v3053, 4294901760
        %4525 = vmatmul.f32.gmra.mxu0 %v4524
        %v4526 = vpop.f32.mrf.mxu0
        %v4527 = vadd.f32 %v4504, %v4526
        %4528 = vdwg.mxu0
        %4529 = vmatpush.msra.mxu0 0.0
        %4530 = vmatpush.msra.mxu0 0.0
        %4531 = vmatpush.msra.mxu0 0.0
        %4532 = vmatpush.msra.mxu0 0.0
        %4533 = vmatpush.msra.mxu0 0.0
        %4534 = vmatpush.msra.mxu0 0.0
        %4535 = vmatpush.msra.mxu0 0.0
        %4536 = vmatpush.msra.mxu0 0.0
        %4537 = vmatpush.msra.mxu0 0.0
        %4538 = vmatpush.msra.mxu0 0.0
        %4539 = vmatpush.msra.mxu0 0.0
        %4540 = vmatpush.msra.mxu0 0.0
        %4541 = vmatpush.msra.mxu0 0.0
        %4542 = vmatpush.msra.mxu0 0.0
        %v4543 = vand.u32 %v536, 4294901760
        %4544 = vmatpush.msra.mxu0 %v4543
        %v4545 = vand.u32 %v534, 4294901760
        %4546 = vmatpush.msra.mxu0 %v4545
        %v4547 = vand.u32 %v3053, 4294901760
        %v4548 = vsub.f32 %v3053, %v4547
        %v4549 = vand.u32 %v4548, 4294901760
        %v4550 = vsub.f32 %v4548, %v4549
        %v4551 = vand.u32 %v4550, 4294901760
        %4552 = vmatmul.f32.gmra.mxu0 %v4551
        %v4553 = vpop.f32.mrf.mxu0
        %v4554 = vadd.f32 0.0, %v4553
        %4555 = vdwg.mxu0
        %4556 = vmatpush.msra.mxu0 0.0
        %4557 = vmatpush.msra.mxu0 0.0
        %4558 = vmatpush.msra.mxu0 0.0
        %4559 = vmatpush.msra.mxu0 0.0
        %4560 = vmatpush.msra.mxu0 0.0
        %4561 = vmatpush.msra.mxu0 0.0
        %4562 = vmatpush.msra.mxu0 0.0
        %4563 = vmatpush.msra.mxu0 0.0
        %4564 = vmatpush.msra.mxu0 0.0
        %4565 = vmatpush.msra.mxu0 0.0
        %4566 = vmatpush.msra.mxu0 0.0
        %4567 = vmatpush.msra.mxu0 0.0
        %4568 = vmatpush.msra.mxu0 0.0
        %4569 = vmatpush.msra.mxu0 0.0
        %v4570 = vand.u32 %v536, 4294901760
        %v4571 = vsub.f32 %v536, %v4570
        %v4572 = vand.u32 %v4571, 4294901760
        %v4573 = vsub.f32 %v4571, %v4572
        %v4574 = vand.u32 %v4573, 4294901760
        %4575 = vmatpush.msra.mxu0 %v4574
        %v4576 = vand.u32 %v534, 4294901760
        %v4577 = vsub.f32 %v534, %v4576
        %v4578 = vand.u32 %v4577, 4294901760
        %v4579 = vsub.f32 %v4577, %v4578
        %v4580 = vand.u32 %v4579, 4294901760
        %4581 = vmatpush.msra.mxu0 %v4580
        %v4582 = vand.u32 %v3053, 4294901760
        %4583 = vmatmul.f32.gmra.mxu0 %v4582
        %v4584 = vpop.f32.mrf.mxu0
        %v4585 = vadd.f32 %v4554, %v4584
        %4586 = vdwg.mxu0
        %4587 = vmatpush.msra.mxu0 0.0
        %4588 = vmatpush.msra.mxu0 0.0
        %4589 = vmatpush.msra.mxu0 0.0
        %4590 = vmatpush.msra.mxu0 0.0
        %4591 = vmatpush.msra.mxu0 0.0
        %4592 = vmatpush.msra.mxu0 0.0
        %4593 = vmatpush.msra.mxu0 0.0
        %4594 = vmatpush.msra.mxu0 0.0
        %4595 = vmatpush.msra.mxu0 0.0
        %4596 = vmatpush.msra.mxu0 0.0
        %4597 = vmatpush.msra.mxu0 0.0
        %4598 = vmatpush.msra.mxu0 0.0
        %4599 = vmatpush.msra.mxu0 0.0
        %4600 = vmatpush.msra.mxu0 0.0
        %v4601 = vand.u32 %v536, 4294901760
        %v4602 = vsub.f32 %v536, %v4601
        %4603 = vmatpush.msra.mxu0 %v4602
        %v4604 = vand.u32 %v534, 4294901760
        %v4605 = vsub.f32 %v534, %v4604
        %4606 = vmatpush.msra.mxu0 %v4605
        %v4607 = vand.u32 %v3053, 4294901760
        %v4608 = vsub.f32 %v3053, %v4607
        %4609 = vmatmul.f32.gmra.mxu0 %v4608
        %v4610 = vpop.f32.mrf.mxu0
        %v4611 = vadd.f32 %v4585, %v4610
        %4612 = vdwg.mxu0
        %4613 = vmatpush.msra.mxu0 0.0
        %4614 = vmatpush.msra.mxu0 0.0
        %4615 = vmatpush.msra.mxu0 0.0
        %4616 = vmatpush.msra.mxu0 0.0
        %4617 = vmatpush.msra.mxu0 0.0
        %4618 = vmatpush.msra.mxu0 0.0
        %4619 = vmatpush.msra.mxu0 0.0
        %4620 = vmatpush.msra.mxu0 0.0
        %4621 = vmatpush.msra.mxu0 0.0
        %4622 = vmatpush.msra.mxu0 0.0
        %4623 = vmatpush.msra.mxu0 0.0
        %4624 = vmatpush.msra.mxu0 0.0
        %4625 = vmatpush.msra.mxu0 0.0
        %4626 = vmatpush.msra.mxu0 0.0
        %v4627 = vand.u32 %v536, 4294901760
        %4628 = vmatpush.msra.mxu0 %v4627
        %v4629 = vand.u32 %v534, 4294901760
        %4630 = vmatpush.msra.mxu0 %v4629
        %v4631 = vand.u32 %v3053, 4294901760
        %v4632 = vsub.f32 %v3053, %v4631
        %v4633 = vand.u32 %v4632, 4294901760
        %4634 = vmatmul.f32.gmra.mxu0 %v4633
        %v4635 = vpop.f32.mrf.mxu0
        %v4636 = vadd.f32 %v4611, %v4635
        %4637 = vdwg.mxu0
        %4638 = vmatpush.msra.mxu0 0.0
        %4639 = vmatpush.msra.mxu0 0.0
        %4640 = vmatpush.msra.mxu0 0.0
        %4641 = vmatpush.msra.mxu0 0.0
        %4642 = vmatpush.msra.mxu0 0.0
        %4643 = vmatpush.msra.mxu0 0.0
        %4644 = vmatpush.msra.mxu0 0.0
        %4645 = vmatpush.msra.mxu0 0.0
        %4646 = vmatpush.msra.mxu0 0.0
        %4647 = vmatpush.msra.mxu0 0.0
        %4648 = vmatpush.msra.mxu0 0.0
        %4649 = vmatpush.msra.mxu0 0.0
        %4650 = vmatpush.msra.mxu0 0.0
        %4651 = vmatpush.msra.mxu0 0.0
        %v4652 = vand.u32 %v536, 4294901760
        %v4653 = vsub.f32 %v536, %v4652
        %v4654 = vand.u32 %v4653, 4294901760
        %4655 = vmatpush.msra.mxu0 %v4654
        %v4656 = vand.u32 %v534, 4294901760
        %v4657 = vsub.f32 %v534, %v4656
        %v4658 = vand.u32 %v4657, 4294901760
        %4659 = vmatpush.msra.mxu0 %v4658
        %v4660 = vand.u32 %v3053, 4294901760
        %4661 = vmatmul.f32.gmra.mxu0 %v4660
        %v4662 = vpop.f32.mrf.mxu0
        %v4663 = vadd.f32 %v4636, %v4662
        %4664 = vdwg.mxu0
        %4665 = vmatpush.msra.mxu0 0.0
        %4666 = vmatpush.msra.mxu0 0.0
        %4667 = vmatpush.msra.mxu0 0.0
        %4668 = vmatpush.msra.mxu0 0.0
        %4669 = vmatpush.msra.mxu0 0.0
        %4670 = vmatpush.msra.mxu0 0.0
        %4671 = vmatpush.msra.mxu0 0.0
        %4672 = vmatpush.msra.mxu0 0.0
        %4673 = vmatpush.msra.mxu0 0.0
        %4674 = vmatpush.msra.mxu0 0.0
        %4675 = vmatpush.msra.mxu0 0.0
        %4676 = vmatpush.msra.mxu0 0.0
        %4677 = vmatpush.msra.mxu0 0.0
        %4678 = vmatpush.msra.mxu0 0.0
        %v4679 = vand.u32 %v536, 4294901760
        %4680 = vmatpush.msra.mxu0 %v4679
        %v4681 = vand.u32 %v534, 4294901760
        %4682 = vmatpush.msra.mxu0 %v4681
        %v4683 = vand.u32 %v3053, 4294901760
        %4684 = vmatmul.f32.gmra.mxu0 %v4683
        %v4685 = vpop.f32.mrf.mxu0
        %v4686 = vadd.f32 %v4663, %v4685
        %4687 = vdwg.mxu0
        %4688 = vmatpush.msra.mxu0 0.0
        %4689 = vmatpush.msra.mxu0 0.0
        %4690 = vmatpush.msra.mxu0 0.0
        %4691 = vmatpush.msra.mxu0 0.0
        %4692 = vmatpush.msra.mxu0 0.0
        %4693 = vmatpush.msra.mxu0 0.0
        %4694 = vmatpush.msra.mxu0 0.0
        %4695 = vmatpush.msra.mxu0 0.0
        %4696 = vmatpush.msra.mxu0 0.0
        %4697 = vmatpush.msra.mxu0 0.0
        %4698 = vmatpush.msra.mxu0 0.0
        %4699 = vmatpush.msra.mxu0 0.0
        %4700 = vmatpush.msra.mxu0 0.0
        %4701 = vmatpush.msra.mxu0 0.0
        %v4702 = vand.u32 %v594, 4294901760
        %4703 = vmatpush.msra.mxu0 %v4702
        %v4704 = vand.u32 %v592, 4294901760
        %4705 = vmatpush.msra.mxu0 %v4704
        %v4706 = vand.u32 %v3406, 4294901760
        %v4707 = vsub.f32 %v3406, %v4706
        %v4708 = vand.u32 %v4707, 4294901760
        %v4709 = vsub.f32 %v4707, %v4708
        %v4710 = vand.u32 %v4709, 4294901760
        %4711 = vmatmul.f32.gmra.mxu0 %v4710
        %v4712 = vpop.f32.mrf.mxu0
        %v4713 = vadd.f32 0.0, %v4712
        %4714 = vdwg.mxu0
        %4715 = vmatpush.msra.mxu0 0.0
        %4716 = vmatpush.msra.mxu0 0.0
        %4717 = vmatpush.msra.mxu0 0.0
        %4718 = vmatpush.msra.mxu0 0.0
        %4719 = vmatpush.msra.mxu0 0.0
        %4720 = vmatpush.msra.mxu0 0.0
        %4721 = vmatpush.msra.mxu0 0.0
        %4722 = vmatpush.msra.mxu0 0.0
        %4723 = vmatpush.msra.mxu0 0.0
        %4724 = vmatpush.msra.mxu0 0.0
        %4725 = vmatpush.msra.mxu0 0.0
        %4726 = vmatpush.msra.mxu0 0.0
        %4727 = vmatpush.msra.mxu0 0.0
        %4728 = vmatpush.msra.mxu0 0.0
        %v4729 = vand.u32 %v594, 4294901760
        %v4730 = vsub.f32 %v594, %v4729
        %v4731 = vand.u32 %v4730, 4294901760
        %v4732 = vsub.f32 %v4730, %v4731
        %v4733 = vand.u32 %v4732, 4294901760
        %4734 = vmatpush.msra.mxu0 %v4733
        %v4735 = vand.u32 %v592, 4294901760
        %v4736 = vsub.f32 %v592, %v4735
        %v4737 = vand.u32 %v4736, 4294901760
        %v4738 = vsub.f32 %v4736, %v4737
        %v4739 = vand.u32 %v4738, 4294901760
        %4740 = vmatpush.msra.mxu0 %v4739
        %v4741 = vand.u32 %v3406, 4294901760
        %4742 = vmatmul.f32.gmra.mxu0 %v4741
        %v4743 = vpop.f32.mrf.mxu0
        %v4744 = vadd.f32 %v4713, %v4743
        %4745 = vdwg.mxu0
        %4746 = vmatpush.msra.mxu0 0.0
        %4747 = vmatpush.msra.mxu0 0.0
        %4748 = vmatpush.msra.mxu0 0.0
        %4749 = vmatpush.msra.mxu0 0.0
        %4750 = vmatpush.msra.mxu0 0.0
        %4751 = vmatpush.msra.mxu0 0.0
        %4752 = vmatpush.msra.mxu0 0.0
        %4753 = vmatpush.msra.mxu0 0.0
        %4754 = vmatpush.msra.mxu0 0.0
        %4755 = vmatpush.msra.mxu0 0.0
        %4756 = vmatpush.msra.mxu0 0.0
        %4757 = vmatpush.msra.mxu0 0.0
        %4758 = vmatpush.msra.mxu0 0.0
        %4759 = vmatpush.msra.mxu0 0.0
        %v4760 = vand.u32 %v594, 4294901760
        %v4761 = vsub.f32 %v594, %v4760
        %4762 = vmatpush.msra.mxu0 %v4761
        %v4763 = vand.u32 %v592, 4294901760
        %v4764 = vsub.f32 %v592, %v4763
        %4765 = vmatpush.msra.mxu0 %v4764
        %v4766 = vand.u32 %v3406, 4294901760
        %v4767 = vsub.f32 %v3406, %v4766
        %4768 = vmatmul.f32.gmra.mxu0 %v4767
        %v4769 = vpop.f32.mrf.mxu0
        %v4770 = vadd.f32 %v4744, %v4769
        %4771 = vdwg.mxu0
        %4772 = vmatpush.msra.mxu0 0.0
        %4773 = vmatpush.msra.mxu0 0.0
        %4774 = vmatpush.msra.mxu0 0.0
        %4775 = vmatpush.msra.mxu0 0.0
        %4776 = vmatpush.msra.mxu0 0.0
        %4777 = vmatpush.msra.mxu0 0.0
        %4778 = vmatpush.msra.mxu0 0.0
        %4779 = vmatpush.msra.mxu0 0.0
        %4780 = vmatpush.msra.mxu0 0.0
        %4781 = vmatpush.msra.mxu0 0.0
        %4782 = vmatpush.msra.mxu0 0.0
        %4783 = vmatpush.msra.mxu0 0.0
        %4784 = vmatpush.msra.mxu0 0.0
        %4785 = vmatpush.msra.mxu0 0.0
        %v4786 = vand.u32 %v594, 4294901760
        %4787 = vmatpush.msra.mxu0 %v4786
        %v4788 = vand.u32 %v592, 4294901760
        %4789 = vmatpush.msra.mxu0 %v4788
        %v4790 = vand.u32 %v3406, 4294901760
        %v4791 = vsub.f32 %v3406, %v4790
        %v4792 = vand.u32 %v4791, 4294901760
        %4793 = vmatmul.f32.gmra.mxu0 %v4792
        %v4794 = vpop.f32.mrf.mxu0
        %v4795 = vadd.f32 %v4770, %v4794
        %4796 = vdwg.mxu0
        %4797 = vmatpush.msra.mxu0 0.0
        %4798 = vmatpush.msra.mxu0 0.0
        %4799 = vmatpush.msra.mxu0 0.0
        %4800 = vmatpush.msra.mxu0 0.0
        %4801 = vmatpush.msra.mxu0 0.0
        %4802 = vmatpush.msra.mxu0 0.0
        %4803 = vmatpush.msra.mxu0 0.0
        %4804 = vmatpush.msra.mxu0 0.0
        %4805 = vmatpush.msra.mxu0 0.0
        %4806 = vmatpush.msra.mxu0 0.0
        %4807 = vmatpush.msra.mxu0 0.0
        %4808 = vmatpush.msra.mxu0 0.0
        %4809 = vmatpush.msra.mxu0 0.0
        %4810 = vmatpush.msra.mxu0 0.0
        %v4811 = vand.u32 %v594, 4294901760
        %v4812 = vsub.f32 %v594, %v4811
        %v4813 = vand.u32 %v4812, 4294901760
        %4814 = vmatpush.msra.mxu0 %v4813
        %v4815 = vand.u32 %v592, 4294901760
        %v4816 = vsub.f32 %v592, %v4815
        %v4817 = vand.u32 %v4816, 4294901760
        %4818 = vmatpush.msra.mxu0 %v4817
        %v4819 = vand.u32 %v3406, 4294901760
        %4820 = vmatmul.f32.gmra.mxu0 %v4819
        %v4821 = vpop.f32.mrf.mxu0
        %v4822 = vadd.f32 %v4795, %v4821
        %4823 = vdwg.mxu0
        %4824 = vmatpush.msra.mxu0 0.0
        %4825 = vmatpush.msra.mxu0 0.0
        %4826 = vmatpush.msra.mxu0 0.0
        %4827 = vmatpush.msra.mxu0 0.0
        %4828 = vmatpush.msra.mxu0 0.0
        %4829 = vmatpush.msra.mxu0 0.0
        %4830 = vmatpush.msra.mxu0 0.0
        %4831 = vmatpush.msra.mxu0 0.0
        %4832 = vmatpush.msra.mxu0 0.0
        %4833 = vmatpush.msra.mxu0 0.0
        %4834 = vmatpush.msra.mxu0 0.0
        %4835 = vmatpush.msra.mxu0 0.0
        %4836 = vmatpush.msra.mxu0 0.0
        %4837 = vmatpush.msra.mxu0 0.0
        %v4838 = vand.u32 %v594, 4294901760
        %4839 = vmatpush.msra.mxu0 %v4838
        %v4840 = vand.u32 %v592, 4294901760
        %4841 = vmatpush.msra.mxu0 %v4840
        %v4842 = vand.u32 %v3406, 4294901760
        %4843 = vmatmul.f32.gmra.mxu0 %v4842
        %v4844 = vpop.f32.mrf.mxu0
        %v4845 = vadd.f32 %v4822, %v4844
        %4846 = vdwg.mxu0
        %4847 = vmatpush.msra.mxu0 0.0
        %4848 = vmatpush.msra.mxu0 0.0
        %4849 = vmatpush.msra.mxu0 0.0
        %4850 = vmatpush.msra.mxu0 0.0
        %4851 = vmatpush.msra.mxu0 0.0
        %4852 = vmatpush.msra.mxu0 0.0
        %4853 = vmatpush.msra.mxu0 0.0
        %4854 = vmatpush.msra.mxu0 0.0
        %4855 = vmatpush.msra.mxu0 0.0
        %4856 = vmatpush.msra.mxu0 0.0
        %4857 = vmatpush.msra.mxu0 0.0
        %4858 = vmatpush.msra.mxu0 0.0
        %4859 = vmatpush.msra.mxu0 0.0
        %4860 = vmatpush.msra.mxu0 0.0
        %v4861 = vand.u32 %v632, 4294901760
        %4862 = vmatpush.msra.mxu0 %v4861
        %v4863 = vand.u32 %v630, 4294901760
        %4864 = vmatpush.msra.mxu0 %v4863
        %v4865 = vand.u32 %v3406, 4294901760
        %v4866 = vsub.f32 %v3406, %v4865
        %v4867 = vand.u32 %v4866, 4294901760
        %v4868 = vsub.f32 %v4866, %v4867
        %v4869 = vand.u32 %v4868, 4294901760
        %4870 = vmatmul.f32.gmra.mxu0 %v4869
        %v4871 = vpop.f32.mrf.mxu0
        %v4872 = vadd.f32 0.0, %v4871
        %4873 = vdwg.mxu0
        %4874 = vmatpush.msra.mxu0 0.0
        %4875 = vmatpush.msra.mxu0 0.0
        %4876 = vmatpush.msra.mxu0 0.0
        %4877 = vmatpush.msra.mxu0 0.0
        %4878 = vmatpush.msra.mxu0 0.0
        %4879 = vmatpush.msra.mxu0 0.0
        %4880 = vmatpush.msra.mxu0 0.0
        %4881 = vmatpush.msra.mxu0 0.0
        %4882 = vmatpush.msra.mxu0 0.0
        %4883 = vmatpush.msra.mxu0 0.0
        %4884 = vmatpush.msra.mxu0 0.0
        %4885 = vmatpush.msra.mxu0 0.0
        %4886 = vmatpush.msra.mxu0 0.0
        %4887 = vmatpush.msra.mxu0 0.0
        %v4888 = vand.u32 %v632, 4294901760
        %v4889 = vsub.f32 %v632, %v4888
        %v4890 = vand.u32 %v4889, 4294901760
        %v4891 = vsub.f32 %v4889, %v4890
        %v4892 = vand.u32 %v4891, 4294901760
        %4893 = vmatpush.msra.mxu0 %v4892
        %v4894 = vand.u32 %v630, 4294901760
        %v4895 = vsub.f32 %v630, %v4894
        %v4896 = vand.u32 %v4895, 4294901760
        %v4897 = vsub.f32 %v4895, %v4896
        %v4898 = vand.u32 %v4897, 4294901760
        %4899 = vmatpush.msra.mxu0 %v4898
        %v4900 = vand.u32 %v3406, 4294901760
        %4901 = vmatmul.f32.gmra.mxu0 %v4900
        %v4902 = vpop.f32.mrf.mxu0
        %v4903 = vadd.f32 %v4872, %v4902
        %4904 = vdwg.mxu0
        %4905 = vmatpush.msra.mxu0 0.0
        %4906 = vmatpush.msra.mxu0 0.0
        %4907 = vmatpush.msra.mxu0 0.0
        %4908 = vmatpush.msra.mxu0 0.0
        %4909 = vmatpush.msra.mxu0 0.0
        %4910 = vmatpush.msra.mxu0 0.0
        %4911 = vmatpush.msra.mxu0 0.0
        %4912 = vmatpush.msra.mxu0 0.0
        %4913 = vmatpush.msra.mxu0 0.0
        %4914 = vmatpush.msra.mxu0 0.0
        %4915 = vmatpush.msra.mxu0 0.0
        %4916 = vmatpush.msra.mxu0 0.0
        %4917 = vmatpush.msra.mxu0 0.0
        %4918 = vmatpush.msra.mxu0 0.0
        %v4919 = vand.u32 %v632, 4294901760
        %v4920 = vsub.f32 %v632, %v4919
        %4921 = vmatpush.msra.mxu0 %v4920
        %v4922 = vand.u32 %v630, 4294901760
        %v4923 = vsub.f32 %v630, %v4922
        %4924 = vmatpush.msra.mxu0 %v4923
        %v4925 = vand.u32 %v3406, 4294901760
        %v4926 = vsub.f32 %v3406, %v4925
        %4927 = vmatmul.f32.gmra.mxu0 %v4926
        %v4928 = vpop.f32.mrf.mxu0
        %v4929 = vadd.f32 %v4903, %v4928
        %4930 = vdwg.mxu0
        %4931 = vmatpush.msra.mxu0 0.0
        %4932 = vmatpush.msra.mxu0 0.0
        %4933 = vmatpush.msra.mxu0 0.0
        %4934 = vmatpush.msra.mxu0 0.0
        %4935 = vmatpush.msra.mxu0 0.0
        %4936 = vmatpush.msra.mxu0 0.0
        %4937 = vmatpush.msra.mxu0 0.0
        %4938 = vmatpush.msra.mxu0 0.0
        %4939 = vmatpush.msra.mxu0 0.0
        %4940 = vmatpush.msra.mxu0 0.0
        %4941 = vmatpush.msra.mxu0 0.0
        %4942 = vmatpush.msra.mxu0 0.0
        %4943 = vmatpush.msra.mxu0 0.0
        %4944 = vmatpush.msra.mxu0 0.0
        %v4945 = vand.u32 %v632, 4294901760
        %4946 = vmatpush.msra.mxu0 %v4945
        %v4947 = vand.u32 %v630, 4294901760
        %4948 = vmatpush.msra.mxu0 %v4947
        %v4949 = vand.u32 %v3406, 4294901760
        %v4950 = vsub.f32 %v3406, %v4949
        %v4951 = vand.u32 %v4950, 4294901760
        %4952 = vmatmul.f32.gmra.mxu0 %v4951
        %v4953 = vpop.f32.mrf.mxu0
        %v4954 = vadd.f32 %v4929, %v4953
        %4955 = vdwg.mxu0
        %4956 = vmatpush.msra.mxu0 0.0
        %4957 = vmatpush.msra.mxu0 0.0
        %4958 = vmatpush.msra.mxu0 0.0
        %4959 = vmatpush.msra.mxu0 0.0
        %4960 = vmatpush.msra.mxu0 0.0
        %4961 = vmatpush.msra.mxu0 0.0
        %4962 = vmatpush.msra.mxu0 0.0
        %4963 = vmatpush.msra.mxu0 0.0
        %4964 = vmatpush.msra.mxu0 0.0
        %4965 = vmatpush.msra.mxu0 0.0
        %4966 = vmatpush.msra.mxu0 0.0
        %4967 = vmatpush.msra.mxu0 0.0
        %4968 = vmatpush.msra.mxu0 0.0
        %4969 = vmatpush.msra.mxu0 0.0
        %v4970 = vand.u32 %v632, 4294901760
        %v4971 = vsub.f32 %v632, %v4970
        %v4972 = vand.u32 %v4971, 4294901760
        %4973 = vmatpush.msra.mxu0 %v4972
        %v4974 = vand.u32 %v630, 4294901760
        %v4975 = vsub.f32 %v630, %v4974
        %v4976 = vand.u32 %v4975, 4294901760
        %4977 = vmatpush.msra.mxu0 %v4976
        %v4978 = vand.u32 %v3406, 4294901760
        %4979 = vmatmul.f32.gmra.mxu0 %v4978
        %v4980 = vpop.f32.mrf.mxu0
        %v4981 = vadd.f32 %v4954, %v4980
        %4982 = vdwg.mxu0
        %4983 = vmatpush.msra.mxu0 0.0
        %4984 = vmatpush.msra.mxu0 0.0
        %4985 = vmatpush.msra.mxu0 0.0
        %4986 = vmatpush.msra.mxu0 0.0
        %4987 = vmatpush.msra.mxu0 0.0
        %4988 = vmatpush.msra.mxu0 0.0
        %4989 = vmatpush.msra.mxu0 0.0
        %4990 = vmatpush.msra.mxu0 0.0
        %4991 = vmatpush.msra.mxu0 0.0
        %4992 = vmatpush.msra.mxu0 0.0
        %4993 = vmatpush.msra.mxu0 0.0
        %4994 = vmatpush.msra.mxu0 0.0
        %4995 = vmatpush.msra.mxu0 0.0
        %4996 = vmatpush.msra.mxu0 0.0
        %v4997 = vand.u32 %v632, 4294901760
        %4998 = vmatpush.msra.mxu0 %v4997
        %v4999 = vand.u32 %v630, 4294901760
        %5000 = vmatpush.msra.mxu0 %v4999
        %v5001 = vand.u32 %v3406, 4294901760
        %5002 = vmatmul.f32.gmra.mxu0 %v5001
        %v5003 = vpop.f32.mrf.mxu0
        %v5004 = vadd.f32 %v4981, %v5003
        %5005 = vdwg.mxu0
        %s5006 = scalar_lea.vmem %s191, 16 [#allocation5]
        %5007 = vst [vmem:[%s5006] sm:$0xff] %v3891
        %5008 = vst [vmem:[%s5006 + $0x8] sm:$0xff] %v4050
        %5009 = vst [vmem:[%s5006 + $0x40] sm:$0xff] %v4209
        %5010 = vst [vmem:[%s5006 + $0x48] sm:$0xff] %v4368
        %5011 = vst [vmem:[%s5006 + $0x80] sm:$0xff] %v4527
        %5012 = vst [vmem:[%s5006 + $0x88] sm:$0xff] %v4686
        %5013 = vst [vmem:[%s5006 + $0xc0] sm:$0xff] %v4845
        %5014 = vst [vmem:[%s5006 + $0xc8] sm:$0xff] %v5004
        %5015 = vmatpush.msra.mxu0 0.0
        %5016 = vmatpush.msra.mxu0 0.0
        %5017 = vmatpush.msra.mxu0 0.0
        %5018 = vmatpush.msra.mxu0 0.0
        %5019 = vmatpush.msra.mxu0 0.0
        %5020 = vmatpush.msra.mxu0 0.0
        %5021 = vmatpush.msra.mxu0 0.0
        %5022 = vmatpush.msra.mxu0 0.0
        %5023 = vmatpush.msra.mxu0 0.0
        %5024 = vmatpush.msra.mxu0 0.0
        %5025 = vmatpush.msra.mxu0 0.0
        %5026 = vmatpush.msra.mxu0 0.0
        %5027 = vmatpush.msra.mxu0 0.0
        %5028 = vmatpush.msra.mxu0 0.0
        %v5029 = vand.u32 %v311, 4294901760
        %5030 = vmatpush.msra.mxu0 %v5029
        %v5031 = vand.u32 %v309, 4294901760
        %5032 = vmatpush.msra.mxu0 %v5031
        %v5033 = vand.u32 %v2347, 4294901760
        %v5034 = vsub.f32 %v2347, %v5033
        %v5035 = vand.u32 %v5034, 4294901760
        %v5036 = vsub.f32 %v5034, %v5035
        %v5037 = vand.u32 %v5036, 4294901760
        %5038 = vmatmul.f32.gmra.mxu0 %v5037
        %v5039 = vpop.f32.mrf.mxu0
        %v5040 = vadd.f32 0.0, %v5039
        %5041 = vdwg.mxu0
        %5042 = vmatpush.msra.mxu0 0.0
        %5043 = vmatpush.msra.mxu0 0.0
        %5044 = vmatpush.msra.mxu0 0.0
        %5045 = vmatpush.msra.mxu0 0.0
        %5046 = vmatpush.msra.mxu0 0.0
        %5047 = vmatpush.msra.mxu0 0.0
        %5048 = vmatpush.msra.mxu0 0.0
        %5049 = vmatpush.msra.mxu0 0.0
        %5050 = vmatpush.msra.mxu0 0.0
        %5051 = vmatpush.msra.mxu0 0.0
        %5052 = vmatpush.msra.mxu0 0.0
        %5053 = vmatpush.msra.mxu0 0.0
        %5054 = vmatpush.msra.mxu0 0.0
        %5055 = vmatpush.msra.mxu0 0.0
        %v5056 = vand.u32 %v311, 4294901760
        %v5057 = vsub.f32 %v311, %v5056
        %v5058 = vand.u32 %v5057, 4294901760
        %v5059 = vsub.f32 %v5057, %v5058
        %v5060 = vand.u32 %v5059, 4294901760
        %5061 = vmatpush.msra.mxu0 %v5060
        %v5062 = vand.u32 %v309, 4294901760
        %v5063 = vsub.f32 %v309, %v5062
        %v5064 = vand.u32 %v5063, 4294901760
        %v5065 = vsub.f32 %v5063, %v5064
        %v5066 = vand.u32 %v5065, 4294901760
        %5067 = vmatpush.msra.mxu0 %v5066
        %v5068 = vand.u32 %v2347, 4294901760
        %5069 = vmatmul.f32.gmra.mxu0 %v5068
        %v5070 = vpop.f32.mrf.mxu0
        %v5071 = vadd.f32 %v5040, %v5070
        %5072 = vdwg.mxu0
        %5073 = vmatpush.msra.mxu0 0.0
        %5074 = vmatpush.msra.mxu0 0.0
        %5075 = vmatpush.msra.mxu0 0.0
        %5076 = vmatpush.msra.mxu0 0.0
        %5077 = vmatpush.msra.mxu0 0.0
        %5078 = vmatpush.msra.mxu0 0.0
        %5079 = vmatpush.msra.mxu0 0.0
        %5080 = vmatpush.msra.mxu0 0.0
        %5081 = vmatpush.msra.mxu0 0.0
        %5082 = vmatpush.msra.mxu0 0.0
        %5083 = vmatpush.msra.mxu0 0.0
        %5084 = vmatpush.msra.mxu0 0.0
        %5085 = vmatpush.msra.mxu0 0.0
        %5086 = vmatpush.msra.mxu0 0.0
        %v5087 = vand.u32 %v311, 4294901760
        %v5088 = vsub.f32 %v311, %v5087
        %5089 = vmatpush.msra.mxu0 %v5088
        %v5090 = vand.u32 %v309, 4294901760
        %v5091 = vsub.f32 %v309, %v5090
        %5092 = vmatpush.msra.mxu0 %v5091
        %v5093 = vand.u32 %v2347, 4294901760
        %v5094 = vsub.f32 %v2347, %v5093
        %5095 = vmatmul.f32.gmra.mxu0 %v5094
        %v5096 = vpop.f32.mrf.mxu0
        %v5097 = vadd.f32 %v5071, %v5096
        %5098 = vdwg.mxu0
        %5099 = vmatpush.msra.mxu0 0.0
        %5100 = vmatpush.msra.mxu0 0.0
        %5101 = vmatpush.msra.mxu0 0.0
        %5102 = vmatpush.msra.mxu0 0.0
        %5103 = vmatpush.msra.mxu0 0.0
        %5104 = vmatpush.msra.mxu0 0.0
        %5105 = vmatpush.msra.mxu0 0.0
        %5106 = vmatpush.msra.mxu0 0.0
        %5107 = vmatpush.msra.mxu0 0.0
        %5108 = vmatpush.msra.mxu0 0.0
        %5109 = vmatpush.msra.mxu0 0.0
        %5110 = vmatpush.msra.mxu0 0.0
        %5111 = vmatpush.msra.mxu0 0.0
        %5112 = vmatpush.msra.mxu0 0.0
        %v5113 = vand.u32 %v311, 4294901760
        %5114 = vmatpush.msra.mxu0 %v5113
        %v5115 = vand.u32 %v309, 4294901760
        %5116 = vmatpush.msra.mxu0 %v5115
        %v5117 = vand.u32 %v2347, 4294901760
        %v5118 = vsub.f32 %v2347, %v5117
        %v5119 = vand.u32 %v5118, 4294901760
        %5120 = vmatmul.f32.gmra.mxu0 %v5119
        %v5121 = vpop.f32.mrf.mxu0
        %v5122 = vadd.f32 %v5097, %v5121
        %5123 = vdwg.mxu0
        %5124 = vmatpush.msra.mxu0 0.0
        %5125 = vmatpush.msra.mxu0 0.0
        %5126 = vmatpush.msra.mxu0 0.0
        %5127 = vmatpush.msra.mxu0 0.0
        %5128 = vmatpush.msra.mxu0 0.0
        %5129 = vmatpush.msra.mxu0 0.0
        %5130 = vmatpush.msra.mxu0 0.0
        %5131 = vmatpush.msra.mxu0 0.0
        %5132 = vmatpush.msra.mxu0 0.0
        %5133 = vmatpush.msra.mxu0 0.0
        %5134 = vmatpush.msra.mxu0 0.0
        %5135 = vmatpush.msra.mxu0 0.0
        %5136 = vmatpush.msra.mxu0 0.0
        %5137 = vmatpush.msra.mxu0 0.0
        %v5138 = vand.u32 %v311, 4294901760
        %v5139 = vsub.f32 %v311, %v5138
        %v5140 = vand.u32 %v5139, 4294901760
        %5141 = vmatpush.msra.mxu0 %v5140
        %v5142 = vand.u32 %v309, 4294901760
        %v5143 = vsub.f32 %v309, %v5142
        %v5144 = vand.u32 %v5143, 4294901760
        %5145 = vmatpush.msra.mxu0 %v5144
        %v5146 = vand.u32 %v2347, 4294901760
        %5147 = vmatmul.f32.gmra.mxu0 %v5146
        %v5148 = vpop.f32.mrf.mxu0
        %v5149 = vadd.f32 %v5122, %v5148
        %5150 = vdwg.mxu0
        %5151 = vmatpush.msra.mxu0 0.0
        %5152 = vmatpush.msra.mxu0 0.0
        %5153 = vmatpush.msra.mxu0 0.0
        %5154 = vmatpush.msra.mxu0 0.0
        %5155 = vmatpush.msra.mxu0 0.0
        %5156 = vmatpush.msra.mxu0 0.0
        %5157 = vmatpush.msra.mxu0 0.0
        %5158 = vmatpush.msra.mxu0 0.0
        %5159 = vmatpush.msra.mxu0 0.0
        %5160 = vmatpush.msra.mxu0 0.0
        %5161 = vmatpush.msra.mxu0 0.0
        %5162 = vmatpush.msra.mxu0 0.0
        %5163 = vmatpush.msra.mxu0 0.0
        %5164 = vmatpush.msra.mxu0 0.0
        %v5165 = vand.u32 %v311, 4294901760
        %5166 = vmatpush.msra.mxu0 %v5165
        %v5167 = vand.u32 %v309, 4294901760
        %5168 = vmatpush.msra.mxu0 %v5167
        %v5169 = vand.u32 %v2347, 4294901760
        %5170 = vmatmul.f32.gmra.mxu0 %v5169
        %v5171 = vpop.f32.mrf.mxu0
        %v5172 = vadd.f32 %v5149, %v5171
        %5173 = vdwg.mxu0
        %5174 = vmatpush.msra.mxu0 0.0
        %5175 = vmatpush.msra.mxu0 0.0
        %5176 = vmatpush.msra.mxu0 0.0
        %5177 = vmatpush.msra.mxu0 0.0
        %5178 = vmatpush.msra.mxu0 0.0
        %5179 = vmatpush.msra.mxu0 0.0
        %5180 = vmatpush.msra.mxu0 0.0
        %5181 = vmatpush.msra.mxu0 0.0
        %5182 = vmatpush.msra.mxu0 0.0
        %5183 = vmatpush.msra.mxu0 0.0
        %5184 = vmatpush.msra.mxu0 0.0
        %5185 = vmatpush.msra.mxu0 0.0
        %5186 = vmatpush.msra.mxu0 0.0
        %5187 = vmatpush.msra.mxu0 0.0
        %v5188 = vand.u32 %v349, 4294901760
        %5189 = vmatpush.msra.mxu0 %v5188
        %v5190 = vand.u32 %v347, 4294901760
        %5191 = vmatpush.msra.mxu0 %v5190
        %v5192 = vand.u32 %v2347, 4294901760
        %v5193 = vsub.f32 %v2347, %v5192
        %v5194 = vand.u32 %v5193, 4294901760
        %v5195 = vsub.f32 %v5193, %v5194
        %v5196 = vand.u32 %v5195, 4294901760
        %5197 = vmatmul.f32.gmra.mxu0 %v5196
        %v5198 = vpop.f32.mrf.mxu0
        %v5199 = vadd.f32 0.0, %v5198
        %5200 = vdwg.mxu0
        %5201 = vmatpush.msra.mxu0 0.0
        %5202 = vmatpush.msra.mxu0 0.0
        %5203 = vmatpush.msra.mxu0 0.0
        %5204 = vmatpush.msra.mxu0 0.0
        %5205 = vmatpush.msra.mxu0 0.0
        %5206 = vmatpush.msra.mxu0 0.0
        %5207 = vmatpush.msra.mxu0 0.0
        %5208 = vmatpush.msra.mxu0 0.0
        %5209 = vmatpush.msra.mxu0 0.0
        %5210 = vmatpush.msra.mxu0 0.0
        %5211 = vmatpush.msra.mxu0 0.0
        %5212 = vmatpush.msra.mxu0 0.0
        %5213 = vmatpush.msra.mxu0 0.0
        %5214 = vmatpush.msra.mxu0 0.0
        %v5215 = vand.u32 %v349, 4294901760
        %v5216 = vsub.f32 %v349, %v5215
        %v5217 = vand.u32 %v5216, 4294901760
        %v5218 = vsub.f32 %v5216, %v5217
        %v5219 = vand.u32 %v5218, 4294901760
        %5220 = vmatpush.msra.mxu0 %v5219
        %v5221 = vand.u32 %v347, 4294901760
        %v5222 = vsub.f32 %v347, %v5221
        %v5223 = vand.u32 %v5222, 4294901760
        %v5224 = vsub.f32 %v5222, %v5223
        %v5225 = vand.u32 %v5224, 4294901760
        %5226 = vmatpush.msra.mxu0 %v5225
        %v5227 = vand.u32 %v2347, 4294901760
        %5228 = vmatmul.f32.gmra.mxu0 %v5227
        %v5229 = vpop.f32.mrf.mxu0
        %v5230 = vadd.f32 %v5199, %v5229
        %5231 = vdwg.mxu0
        %5232 = vmatpush.msra.mxu0 0.0
        %5233 = vmatpush.msra.mxu0 0.0
        %5234 = vmatpush.msra.mxu0 0.0
        %5235 = vmatpush.msra.mxu0 0.0
        %5236 = vmatpush.msra.mxu0 0.0
        %5237 = vmatpush.msra.mxu0 0.0
        %5238 = vmatpush.msra.mxu0 0.0
        %5239 = vmatpush.msra.mxu0 0.0
        %5240 = vmatpush.msra.mxu0 0.0
        %5241 = vmatpush.msra.mxu0 0.0
        %5242 = vmatpush.msra.mxu0 0.0
        %5243 = vmatpush.msra.mxu0 0.0
        %5244 = vmatpush.msra.mxu0 0.0
        %5245 = vmatpush.msra.mxu0 0.0
        %v5246 = vand.u32 %v349, 4294901760
        %v5247 = vsub.f32 %v349, %v5246
        %5248 = vmatpush.msra.mxu0 %v5247
        %v5249 = vand.u32 %v347, 4294901760
        %v5250 = vsub.f32 %v347, %v5249
        %5251 = vmatpush.msra.mxu0 %v5250
        %v5252 = vand.u32 %v2347, 4294901760
        %v5253 = vsub.f32 %v2347, %v5252
        %5254 = vmatmul.f32.gmra.mxu0 %v5253
        %v5255 = vpop.f32.mrf.mxu0
        %v5256 = vadd.f32 %v5230, %v5255
        %5257 = vdwg.mxu0
        %5258 = vmatpush.msra.mxu0 0.0
        %5259 = vmatpush.msra.mxu0 0.0
        %5260 = vmatpush.msra.mxu0 0.0
        %5261 = vmatpush.msra.mxu0 0.0
        %5262 = vmatpush.msra.mxu0 0.0
        %5263 = vmatpush.msra.mxu0 0.0
        %5264 = vmatpush.msra.mxu0 0.0
        %5265 = vmatpush.msra.mxu0 0.0
        %5266 = vmatpush.msra.mxu0 0.0
        %5267 = vmatpush.msra.mxu0 0.0
        %5268 = vmatpush.msra.mxu0 0.0
        %5269 = vmatpush.msra.mxu0 0.0
        %5270 = vmatpush.msra.mxu0 0.0
        %5271 = vmatpush.msra.mxu0 0.0
        %v5272 = vand.u32 %v349, 4294901760
        %5273 = vmatpush.msra.mxu0 %v5272
        %v5274 = vand.u32 %v347, 4294901760
        %5275 = vmatpush.msra.mxu0 %v5274
        %v5276 = vand.u32 %v2347, 4294901760
        %v5277 = vsub.f32 %v2347, %v5276
        %v5278 = vand.u32 %v5277, 4294901760
        %5279 = vmatmul.f32.gmra.mxu0 %v5278
        %v5280 = vpop.f32.mrf.mxu0
        %v5281 = vadd.f32 %v5256, %v5280
        %5282 = vdwg.mxu0
        %5283 = vmatpush.msra.mxu0 0.0
        %5284 = vmatpush.msra.mxu0 0.0
        %5285 = vmatpush.msra.mxu0 0.0
        %5286 = vmatpush.msra.mxu0 0.0
        %5287 = vmatpush.msra.mxu0 0.0
        %5288 = vmatpush.msra.mxu0 0.0
        %5289 = vmatpush.msra.mxu0 0.0
        %5290 = vmatpush.msra.mxu0 0.0
        %5291 = vmatpush.msra.mxu0 0.0
        %5292 = vmatpush.msra.mxu0 0.0
        %5293 = vmatpush.msra.mxu0 0.0
        %5294 = vmatpush.msra.mxu0 0.0
        %5295 = vmatpush.msra.mxu0 0.0
        %5296 = vmatpush.msra.mxu0 0.0
        %v5297 = vand.u32 %v349, 4294901760
        %v5298 = vsub.f32 %v349, %v5297
        %v5299 = vand.u32 %v5298, 4294901760
        %5300 = vmatpush.msra.mxu0 %v5299
        %v5301 = vand.u32 %v347, 4294901760
        %v5302 = vsub.f32 %v347, %v5301
        %v5303 = vand.u32 %v5302, 4294901760
        %5304 = vmatpush.msra.mxu0 %v5303
        %v5305 = vand.u32 %v2347, 4294901760
        %5306 = vmatmul.f32.gmra.mxu0 %v5305
        %v5307 = vpop.f32.mrf.mxu0
        %v5308 = vadd.f32 %v5281, %v5307
        %5309 = vdwg.mxu0
        %5310 = vmatpush.msra.mxu0 0.0
        %5311 = vmatpush.msra.mxu0 0.0
        %5312 = vmatpush.msra.mxu0 0.0
        %5313 = vmatpush.msra.mxu0 0.0
        %5314 = vmatpush.msra.mxu0 0.0
        %5315 = vmatpush.msra.mxu0 0.0
        %5316 = vmatpush.msra.mxu0 0.0
        %5317 = vmatpush.msra.mxu0 0.0
        %5318 = vmatpush.msra.mxu0 0.0
        %5319 = vmatpush.msra.mxu0 0.0
        %5320 = vmatpush.msra.mxu0 0.0
        %5321 = vmatpush.msra.mxu0 0.0
        %5322 = vmatpush.msra.mxu0 0.0
        %5323 = vmatpush.msra.mxu0 0.0
        %v5324 = vand.u32 %v349, 4294901760
        %5325 = vmatpush.msra.mxu0 %v5324
        %v5326 = vand.u32 %v347, 4294901760
        %5327 = vmatpush.msra.mxu0 %v5326
        %v5328 = vand.u32 %v2347, 4294901760
        %5329 = vmatmul.f32.gmra.mxu0 %v5328
        %v5330 = vpop.f32.mrf.mxu0
        %v5331 = vadd.f32 %v5308, %v5330
        %5332 = vdwg.mxu0
        %5333 = vmatpush.msra.mxu0 0.0
        %5334 = vmatpush.msra.mxu0 0.0
        %5335 = vmatpush.msra.mxu0 0.0
        %5336 = vmatpush.msra.mxu0 0.0
        %5337 = vmatpush.msra.mxu0 0.0
        %5338 = vmatpush.msra.mxu0 0.0
        %5339 = vmatpush.msra.mxu0 0.0
        %5340 = vmatpush.msra.mxu0 0.0
        %5341 = vmatpush.msra.mxu0 0.0
        %5342 = vmatpush.msra.mxu0 0.0
        %5343 = vmatpush.msra.mxu0 0.0
        %5344 = vmatpush.msra.mxu0 0.0
        %5345 = vmatpush.msra.mxu0 0.0
        %5346 = vmatpush.msra.mxu0 0.0
        %v5347 = vand.u32 %v407, 4294901760
        %5348 = vmatpush.msra.mxu0 %v5347
        %v5349 = vand.u32 %v405, 4294901760
        %5350 = vmatpush.msra.mxu0 %v5349
        %v5351 = vand.u32 %v2700, 4294901760
        %v5352 = vsub.f32 %v2700, %v5351
        %v5353 = vand.u32 %v5352, 4294901760
        %v5354 = vsub.f32 %v5352, %v5353
        %v5355 = vand.u32 %v5354, 4294901760
        %5356 = vmatmul.f32.gmra.mxu0 %v5355
        %v5357 = vpop.f32.mrf.mxu0
        %v5358 = vadd.f32 0.0, %v5357
        %5359 = vdwg.mxu0
        %5360 = vmatpush.msra.mxu0 0.0
        %5361 = vmatpush.msra.mxu0 0.0
        %5362 = vmatpush.msra.mxu0 0.0
        %5363 = vmatpush.msra.mxu0 0.0
        %5364 = vmatpush.msra.mxu0 0.0
        %5365 = vmatpush.msra.mxu0 0.0
        %5366 = vmatpush.msra.mxu0 0.0
        %5367 = vmatpush.msra.mxu0 0.0
        %5368 = vmatpush.msra.mxu0 0.0
        %5369 = vmatpush.msra.mxu0 0.0
        %5370 = vmatpush.msra.mxu0 0.0
        %5371 = vmatpush.msra.mxu0 0.0
        %5372 = vmatpush.msra.mxu0 0.0
        %5373 = vmatpush.msra.mxu0 0.0
        %v5374 = vand.u32 %v407, 4294901760
        %v5375 = vsub.f32 %v407, %v5374
        %v5376 = vand.u32 %v5375, 4294901760
        %v5377 = vsub.f32 %v5375, %v5376
        %v5378 = vand.u32 %v5377, 4294901760
        %5379 = vmatpush.msra.mxu0 %v5378
        %v5380 = vand.u32 %v405, 4294901760
        %v5381 = vsub.f32 %v405, %v5380
        %v5382 = vand.u32 %v5381, 4294901760
        %v5383 = vsub.f32 %v5381, %v5382
        %v5384 = vand.u32 %v5383, 4294901760
        %5385 = vmatpush.msra.mxu0 %v5384
        %v5386 = vand.u32 %v2700, 4294901760
        %5387 = vmatmul.f32.gmra.mxu0 %v5386
        %v5388 = vpop.f32.mrf.mxu0
        %v5389 = vadd.f32 %v5358, %v5388
        %5390 = vdwg.mxu0
        %5391 = vmatpush.msra.mxu0 0.0
        %5392 = vmatpush.msra.mxu0 0.0
        %5393 = vmatpush.msra.mxu0 0.0
        %5394 = vmatpush.msra.mxu0 0.0
        %5395 = vmatpush.msra.mxu0 0.0
        %5396 = vmatpush.msra.mxu0 0.0
        %5397 = vmatpush.msra.mxu0 0.0
        %5398 = vmatpush.msra.mxu0 0.0
        %5399 = vmatpush.msra.mxu0 0.0
        %5400 = vmatpush.msra.mxu0 0.0
        %5401 = vmatpush.msra.mxu0 0.0
        %5402 = vmatpush.msra.mxu0 0.0
        %5403 = vmatpush.msra.mxu0 0.0
        %5404 = vmatpush.msra.mxu0 0.0
        %v5405 = vand.u32 %v407, 4294901760
        %v5406 = vsub.f32 %v407, %v5405
        %5407 = vmatpush.msra.mxu0 %v5406
        %v5408 = vand.u32 %v405, 4294901760
        %v5409 = vsub.f32 %v405, %v5408
        %5410 = vmatpush.msra.mxu0 %v5409
        %v5411 = vand.u32 %v2700, 4294901760
        %v5412 = vsub.f32 %v2700, %v5411
        %5413 = vmatmul.f32.gmra.mxu0 %v5412
        %v5414 = vpop.f32.mrf.mxu0
        %v5415 = vadd.f32 %v5389, %v5414
        %5416 = vdwg.mxu0
        %5417 = vmatpush.msra.mxu0 0.0
        %5418 = vmatpush.msra.mxu0 0.0
        %5419 = vmatpush.msra.mxu0 0.0
        %5420 = vmatpush.msra.mxu0 0.0
        %5421 = vmatpush.msra.mxu0 0.0
        %5422 = vmatpush.msra.mxu0 0.0
        %5423 = vmatpush.msra.mxu0 0.0
        %5424 = vmatpush.msra.mxu0 0.0
        %5425 = vmatpush.msra.mxu0 0.0
        %5426 = vmatpush.msra.mxu0 0.0
        %5427 = vmatpush.msra.mxu0 0.0
        %5428 = vmatpush.msra.mxu0 0.0
        %5429 = vmatpush.msra.mxu0 0.0
        %5430 = vmatpush.msra.mxu0 0.0
        %v5431 = vand.u32 %v407, 4294901760
        %5432 = vmatpush.msra.mxu0 %v5431
        %v5433 = vand.u32 %v405, 4294901760
        %5434 = vmatpush.msra.mxu0 %v5433
        %v5435 = vand.u32 %v2700, 4294901760
        %v5436 = vsub.f32 %v2700, %v5435
        %v5437 = vand.u32 %v5436, 4294901760
        %5438 = vmatmul.f32.gmra.mxu0 %v5437
        %v5439 = vpop.f32.mrf.mxu0
        %v5440 = vadd.f32 %v5415, %v5439
        %5441 = vdwg.mxu0
        %5442 = vmatpush.msra.mxu0 0.0
        %5443 = vmatpush.msra.mxu0 0.0
        %5444 = vmatpush.msra.mxu0 0.0
        %5445 = vmatpush.msra.mxu0 0.0
        %5446 = vmatpush.msra.mxu0 0.0
        %5447 = vmatpush.msra.mxu0 0.0
        %5448 = vmatpush.msra.mxu0 0.0
        %5449 = vmatpush.msra.mxu0 0.0
        %5450 = vmatpush.msra.mxu0 0.0
        %5451 = vmatpush.msra.mxu0 0.0
        %5452 = vmatpush.msra.mxu0 0.0
        %5453 = vmatpush.msra.mxu0 0.0
        %5454 = vmatpush.msra.mxu0 0.0
        %5455 = vmatpush.msra.mxu0 0.0
        %v5456 = vand.u32 %v407, 4294901760
        %v5457 = vsub.f32 %v407, %v5456
        %v5458 = vand.u32 %v5457, 4294901760
        %5459 = vmatpush.msra.mxu0 %v5458
        %v5460 = vand.u32 %v405, 4294901760
        %v5461 = vsub.f32 %v405, %v5460
        %v5462 = vand.u32 %v5461, 4294901760
        %5463 = vmatpush.msra.mxu0 %v5462
        %v5464 = vand.u32 %v2700, 4294901760
        %5465 = vmatmul.f32.gmra.mxu0 %v5464
        %v5466 = vpop.f32.mrf.mxu0
        %v5467 = vadd.f32 %v5440, %v5466
        %5468 = vdwg.mxu0
        %5469 = vmatpush.msra.mxu0 0.0
        %5470 = vmatpush.msra.mxu0 0.0
        %5471 = vmatpush.msra.mxu0 0.0
        %5472 = vmatpush.msra.mxu0 0.0
        %5473 = vmatpush.msra.mxu0 0.0
        %5474 = vmatpush.msra.mxu0 0.0
        %5475 = vmatpush.msra.mxu0 0.0
        %5476 = vmatpush.msra.mxu0 0.0
        %5477 = vmatpush.msra.mxu0 0.0
        %5478 = vmatpush.msra.mxu0 0.0
        %5479 = vmatpush.msra.mxu0 0.0
        %5480 = vmatpush.msra.mxu0 0.0
        %5481 = vmatpush.msra.mxu0 0.0
        %5482 = vmatpush.msra.mxu0 0.0
        %v5483 = vand.u32 %v407, 4294901760
        %5484 = vmatpush.msra.mxu0 %v5483
        %v5485 = vand.u32 %v405, 4294901760
        %5486 = vmatpush.msra.mxu0 %v5485
        %v5487 = vand.u32 %v2700, 4294901760
        %5488 = vmatmul.f32.gmra.mxu0 %v5487
        %v5489 = vpop.f32.mrf.mxu0
        %v5490 = vadd.f32 %v5467, %v5489
        %5491 = vdwg.mxu0
        %5492 = vmatpush.msra.mxu0 0.0
        %5493 = vmatpush.msra.mxu0 0.0
        %5494 = vmatpush.msra.mxu0 0.0
        %5495 = vmatpush.msra.mxu0 0.0
        %5496 = vmatpush.msra.mxu0 0.0
        %5497 = vmatpush.msra.mxu0 0.0
        %5498 = vmatpush.msra.mxu0 0.0
        %5499 = vmatpush.msra.mxu0 0.0
        %5500 = vmatpush.msra.mxu0 0.0
        %5501 = vmatpush.msra.mxu0 0.0
        %5502 = vmatpush.msra.mxu0 0.0
        %5503 = vmatpush.msra.mxu0 0.0
        %5504 = vmatpush.msra.mxu0 0.0
        %5505 = vmatpush.msra.mxu0 0.0
        %v5506 = vand.u32 %v445, 4294901760
        %5507 = vmatpush.msra.mxu0 %v5506
        %v5508 = vand.u32 %v443, 4294901760
        %5509 = vmatpush.msra.mxu0 %v5508
        %v5510 = vand.u32 %v2700, 4294901760
        %v5511 = vsub.f32 %v2700, %v5510
        %v5512 = vand.u32 %v5511, 4294901760
        %v5513 = vsub.f32 %v5511, %v5512
        %v5514 = vand.u32 %v5513, 4294901760
        %5515 = vmatmul.f32.gmra.mxu0 %v5514
        %v5516 = vpop.f32.mrf.mxu0
        %v5517 = vadd.f32 0.0, %v5516
        %5518 = vdwg.mxu0
        %5519 = vmatpush.msra.mxu0 0.0
        %5520 = vmatpush.msra.mxu0 0.0
        %5521 = vmatpush.msra.mxu0 0.0
        %5522 = vmatpush.msra.mxu0 0.0
        %5523 = vmatpush.msra.mxu0 0.0
        %5524 = vmatpush.msra.mxu0 0.0
        %5525 = vmatpush.msra.mxu0 0.0
        %5526 = vmatpush.msra.mxu0 0.0
        %5527 = vmatpush.msra.mxu0 0.0
        %5528 = vmatpush.msra.mxu0 0.0
        %5529 = vmatpush.msra.mxu0 0.0
        %5530 = vmatpush.msra.mxu0 0.0
        %5531 = vmatpush.msra.mxu0 0.0
        %5532 = vmatpush.msra.mxu0 0.0
        %v5533 = vand.u32 %v445, 4294901760
        %v5534 = vsub.f32 %v445, %v5533
        %v5535 = vand.u32 %v5534, 4294901760
        %v5536 = vsub.f32 %v5534, %v5535
        %v5537 = vand.u32 %v5536, 4294901760
        %5538 = vmatpush.msra.mxu0 %v5537
        %v5539 = vand.u32 %v443, 4294901760
        %v5540 = vsub.f32 %v443, %v5539
        %v5541 = vand.u32 %v5540, 4294901760
        %v5542 = vsub.f32 %v5540, %v5541
        %v5543 = vand.u32 %v5542, 4294901760
        %5544 = vmatpush.msra.mxu0 %v5543
        %v5545 = vand.u32 %v2700, 4294901760
        %5546 = vmatmul.f32.gmra.mxu0 %v5545
        %v5547 = vpop.f32.mrf.mxu0
        %v5548 = vadd.f32 %v5517, %v5547
        %5549 = vdwg.mxu0
        %5550 = vmatpush.msra.mxu0 0.0
        %5551 = vmatpush.msra.mxu0 0.0
        %5552 = vmatpush.msra.mxu0 0.0
        %5553 = vmatpush.msra.mxu0 0.0
        %5554 = vmatpush.msra.mxu0 0.0
        %5555 = vmatpush.msra.mxu0 0.0
        %5556 = vmatpush.msra.mxu0 0.0
        %5557 = vmatpush.msra.mxu0 0.0
        %5558 = vmatpush.msra.mxu0 0.0
        %5559 = vmatpush.msra.mxu0 0.0
        %5560 = vmatpush.msra.mxu0 0.0
        %5561 = vmatpush.msra.mxu0 0.0
        %5562 = vmatpush.msra.mxu0 0.0
        %5563 = vmatpush.msra.mxu0 0.0
        %v5564 = vand.u32 %v445, 4294901760
        %v5565 = vsub.f32 %v445, %v5564
        %5566 = vmatpush.msra.mxu0 %v5565
        %v5567 = vand.u32 %v443, 4294901760
        %v5568 = vsub.f32 %v443, %v5567
        %5569 = vmatpush.msra.mxu0 %v5568
        %v5570 = vand.u32 %v2700, 4294901760
        %v5571 = vsub.f32 %v2700, %v5570
        %5572 = vmatmul.f32.gmra.mxu0 %v5571
        %v5573 = vpop.f32.mrf.mxu0
        %v5574 = vadd.f32 %v5548, %v5573
        %5575 = vdwg.mxu0
        %5576 = vmatpush.msra.mxu0 0.0
        %5577 = vmatpush.msra.mxu0 0.0
        %5578 = vmatpush.msra.mxu0 0.0
        %5579 = vmatpush.msra.mxu0 0.0
        %5580 = vmatpush.msra.mxu0 0.0
        %5581 = vmatpush.msra.mxu0 0.0
        %5582 = vmatpush.msra.mxu0 0.0
        %5583 = vmatpush.msra.mxu0 0.0
        %5584 = vmatpush.msra.mxu0 0.0
        %5585 = vmatpush.msra.mxu0 0.0
        %5586 = vmatpush.msra.mxu0 0.0
        %5587 = vmatpush.msra.mxu0 0.0
        %5588 = vmatpush.msra.mxu0 0.0
        %5589 = vmatpush.msra.mxu0 0.0
        %v5590 = vand.u32 %v445, 4294901760
        %5591 = vmatpush.msra.mxu0 %v5590
        %v5592 = vand.u32 %v443, 4294901760
        %5593 = vmatpush.msra.mxu0 %v5592
        %v5594 = vand.u32 %v2700, 4294901760
        %v5595 = vsub.f32 %v2700, %v5594
        %v5596 = vand.u32 %v5595, 4294901760
        %5597 = vmatmul.f32.gmra.mxu0 %v5596
        %v5598 = vpop.f32.mrf.mxu0
        %v5599 = vadd.f32 %v5574, %v5598
        %5600 = vdwg.mxu0
        %5601 = vmatpush.msra.mxu0 0.0
        %5602 = vmatpush.msra.mxu0 0.0
        %5603 = vmatpush.msra.mxu0 0.0
        %5604 = vmatpush.msra.mxu0 0.0
        %5605 = vmatpush.msra.mxu0 0.0
        %5606 = vmatpush.msra.mxu0 0.0
        %5607 = vmatpush.msra.mxu0 0.0
        %5608 = vmatpush.msra.mxu0 0.0
        %5609 = vmatpush.msra.mxu0 0.0
        %5610 = vmatpush.msra.mxu0 0.0
        %5611 = vmatpush.msra.mxu0 0.0
        %5612 = vmatpush.msra.mxu0 0.0
        %5613 = vmatpush.msra.mxu0 0.0
        %5614 = vmatpush.msra.mxu0 0.0
        %v5615 = vand.u32 %v445, 4294901760
        %v5616 = vsub.f32 %v445, %v5615
        %v5617 = vand.u32 %v5616, 4294901760
        %5618 = vmatpush.msra.mxu0 %v5617
        %v5619 = vand.u32 %v443, 4294901760
        %v5620 = vsub.f32 %v443, %v5619
        %v5621 = vand.u32 %v5620, 4294901760
        %5622 = vmatpush.msra.mxu0 %v5621
        %v5623 = vand.u32 %v2700, 4294901760
        %5624 = vmatmul.f32.gmra.mxu0 %v5623
        %v5625 = vpop.f32.mrf.mxu0
        %v5626 = vadd.f32 %v5599, %v5625
        %5627 = vdwg.mxu0
        %5628 = vmatpush.msra.mxu0 0.0
        %5629 = vmatpush.msra.mxu0 0.0
        %5630 = vmatpush.msra.mxu0 0.0
        %5631 = vmatpush.msra.mxu0 0.0
        %5632 = vmatpush.msra.mxu0 0.0
        %5633 = vmatpush.msra.mxu0 0.0
        %5634 = vmatpush.msra.mxu0 0.0
        %5635 = vmatpush.msra.mxu0 0.0
        %5636 = vmatpush.msra.mxu0 0.0
        %5637 = vmatpush.msra.mxu0 0.0
        %5638 = vmatpush.msra.mxu0 0.0
        %5639 = vmatpush.msra.mxu0 0.0
        %5640 = vmatpush.msra.mxu0 0.0
        %5641 = vmatpush.msra.mxu0 0.0
        %v5642 = vand.u32 %v445, 4294901760
        %5643 = vmatpush.msra.mxu0 %v5642
        %v5644 = vand.u32 %v443, 4294901760
        %5645 = vmatpush.msra.mxu0 %v5644
        %v5646 = vand.u32 %v2700, 4294901760
        %5647 = vmatmul.f32.gmra.mxu0 %v5646
        %v5648 = vpop.f32.mrf.mxu0
        %v5649 = vadd.f32 %v5626, %v5648
        %5650 = vdwg.mxu0
        %5651 = vmatpush.msra.mxu0 0.0
        %5652 = vmatpush.msra.mxu0 0.0
        %5653 = vmatpush.msra.mxu0 0.0
        %5654 = vmatpush.msra.mxu0 0.0
        %5655 = vmatpush.msra.mxu0 0.0
        %5656 = vmatpush.msra.mxu0 0.0
        %5657 = vmatpush.msra.mxu0 0.0
        %5658 = vmatpush.msra.mxu0 0.0
        %5659 = vmatpush.msra.mxu0 0.0
        %5660 = vmatpush.msra.mxu0 0.0
        %5661 = vmatpush.msra.mxu0 0.0
        %5662 = vmatpush.msra.mxu0 0.0
        %5663 = vmatpush.msra.mxu0 0.0
        %5664 = vmatpush.msra.mxu0 0.0
        %v5665 = vand.u32 %v503, 4294901760
        %5666 = vmatpush.msra.mxu0 %v5665
        %v5667 = vand.u32 %v501, 4294901760
        %5668 = vmatpush.msra.mxu0 %v5667
        %v5669 = vand.u32 %v3053, 4294901760
        %v5670 = vsub.f32 %v3053, %v5669
        %v5671 = vand.u32 %v5670, 4294901760
        %v5672 = vsub.f32 %v5670, %v5671
        %v5673 = vand.u32 %v5672, 4294901760
        %5674 = vmatmul.f32.gmra.mxu0 %v5673
        %v5675 = vpop.f32.mrf.mxu0
        %v5676 = vadd.f32 0.0, %v5675
        %5677 = vdwg.mxu0
        %5678 = vmatpush.msra.mxu0 0.0
        %5679 = vmatpush.msra.mxu0 0.0
        %5680 = vmatpush.msra.mxu0 0.0
        %5681 = vmatpush.msra.mxu0 0.0
        %5682 = vmatpush.msra.mxu0 0.0
        %5683 = vmatpush.msra.mxu0 0.0
        %5684 = vmatpush.msra.mxu0 0.0
        %5685 = vmatpush.msra.mxu0 0.0
        %5686 = vmatpush.msra.mxu0 0.0
        %5687 = vmatpush.msra.mxu0 0.0
        %5688 = vmatpush.msra.mxu0 0.0
        %5689 = vmatpush.msra.mxu0 0.0
        %5690 = vmatpush.msra.mxu0 0.0
        %5691 = vmatpush.msra.mxu0 0.0
        %v5692 = vand.u32 %v503, 4294901760
        %v5693 = vsub.f32 %v503, %v5692
        %v5694 = vand.u32 %v5693, 4294901760
        %v5695 = vsub.f32 %v5693, %v5694
        %v5696 = vand.u32 %v5695, 4294901760
        %5697 = vmatpush.msra.mxu0 %v5696
        %v5698 = vand.u32 %v501, 4294901760
        %v5699 = vsub.f32 %v501, %v5698
        %v5700 = vand.u32 %v5699, 4294901760
        %v5701 = vsub.f32 %v5699, %v5700
        %v5702 = vand.u32 %v5701, 4294901760
        %5703 = vmatpush.msra.mxu0 %v5702
        %v5704 = vand.u32 %v3053, 4294901760
        %5705 = vmatmul.f32.gmra.mxu0 %v5704
        %v5706 = vpop.f32.mrf.mxu0
        %v5707 = vadd.f32 %v5676, %v5706
        %5708 = vdwg.mxu0
        %5709 = vmatpush.msra.mxu0 0.0
        %5710 = vmatpush.msra.mxu0 0.0
        %5711 = vmatpush.msra.mxu0 0.0
        %5712 = vmatpush.msra.mxu0 0.0
        %5713 = vmatpush.msra.mxu0 0.0
        %5714 = vmatpush.msra.mxu0 0.0
        %5715 = vmatpush.msra.mxu0 0.0
        %5716 = vmatpush.msra.mxu0 0.0
        %5717 = vmatpush.msra.mxu0 0.0
        %5718 = vmatpush.msra.mxu0 0.0
        %5719 = vmatpush.msra.mxu0 0.0
        %5720 = vmatpush.msra.mxu0 0.0
        %5721 = vmatpush.msra.mxu0 0.0
        %5722 = vmatpush.msra.mxu0 0.0
        %v5723 = vand.u32 %v503, 4294901760
        %v5724 = vsub.f32 %v503, %v5723
        %5725 = vmatpush.msra.mxu0 %v5724
        %v5726 = vand.u32 %v501, 4294901760
        %v5727 = vsub.f32 %v501, %v5726
        %5728 = vmatpush.msra.mxu0 %v5727
        %v5729 = vand.u32 %v3053, 4294901760
        %v5730 = vsub.f32 %v3053, %v5729
        %5731 = vmatmul.f32.gmra.mxu0 %v5730
        %v5732 = vpop.f32.mrf.mxu0
        %v5733 = vadd.f32 %v5707, %v5732
        %5734 = vdwg.mxu0
        %5735 = vmatpush.msra.mxu0 0.0
        %5736 = vmatpush.msra.mxu0 0.0
        %5737 = vmatpush.msra.mxu0 0.0
        %5738 = vmatpush.msra.mxu0 0.0
        %5739 = vmatpush.msra.mxu0 0.0
        %5740 = vmatpush.msra.mxu0 0.0
        %5741 = vmatpush.msra.mxu0 0.0
        %5742 = vmatpush.msra.mxu0 0.0
        %5743 = vmatpush.msra.mxu0 0.0
        %5744 = vmatpush.msra.mxu0 0.0
        %5745 = vmatpush.msra.mxu0 0.0
        %5746 = vmatpush.msra.mxu0 0.0
        %5747 = vmatpush.msra.mxu0 0.0
        %5748 = vmatpush.msra.mxu0 0.0
        %v5749 = vand.u32 %v503, 4294901760
        %5750 = vmatpush.msra.mxu0 %v5749
        %v5751 = vand.u32 %v501, 4294901760
        %5752 = vmatpush.msra.mxu0 %v5751
        %v5753 = vand.u32 %v3053, 4294901760
        %v5754 = vsub.f32 %v3053, %v5753
        %v5755 = vand.u32 %v5754, 4294901760
        %5756 = vmatmul.f32.gmra.mxu0 %v5755
        %v5757 = vpop.f32.mrf.mxu0
        %v5758 = vadd.f32 %v5733, %v5757
        %5759 = vdwg.mxu0
        %5760 = vmatpush.msra.mxu0 0.0
        %5761 = vmatpush.msra.mxu0 0.0
        %5762 = vmatpush.msra.mxu0 0.0
        %5763 = vmatpush.msra.mxu0 0.0
        %5764 = vmatpush.msra.mxu0 0.0
        %5765 = vmatpush.msra.mxu0 0.0
        %5766 = vmatpush.msra.mxu0 0.0
        %5767 = vmatpush.msra.mxu0 0.0
        %5768 = vmatpush.msra.mxu0 0.0
        %5769 = vmatpush.msra.mxu0 0.0
        %5770 = vmatpush.msra.mxu0 0.0
        %5771 = vmatpush.msra.mxu0 0.0
        %5772 = vmatpush.msra.mxu0 0.0
        %5773 = vmatpush.msra.mxu0 0.0
        %v5774 = vand.u32 %v503, 4294901760
        %v5775 = vsub.f32 %v503, %v5774
        %v5776 = vand.u32 %v5775, 4294901760
        %5777 = vmatpush.msra.mxu0 %v5776
        %v5778 = vand.u32 %v501, 4294901760
        %v5779 = vsub.f32 %v501, %v5778
        %v5780 = vand.u32 %v5779, 4294901760
        %5781 = vmatpush.msra.mxu0 %v5780
        %v5782 = vand.u32 %v3053, 4294901760
        %5783 = vmatmul.f32.gmra.mxu0 %v5782
        %v5784 = vpop.f32.mrf.mxu0
        %v5785 = vadd.f32 %v5758, %v5784
        %5786 = vdwg.mxu0
        %5787 = vmatpush.msra.mxu0 0.0
        %5788 = vmatpush.msra.mxu0 0.0
        %5789 = vmatpush.msra.mxu0 0.0
        %5790 = vmatpush.msra.mxu0 0.0
        %5791 = vmatpush.msra.mxu0 0.0
        %5792 = vmatpush.msra.mxu0 0.0
        %5793 = vmatpush.msra.mxu0 0.0
        %5794 = vmatpush.msra.mxu0 0.0
        %5795 = vmatpush.msra.mxu0 0.0
        %5796 = vmatpush.msra.mxu0 0.0
        %5797 = vmatpush.msra.mxu0 0.0
        %5798 = vmatpush.msra.mxu0 0.0
        %5799 = vmatpush.msra.mxu0 0.0
        %5800 = vmatpush.msra.mxu0 0.0
        %v5801 = vand.u32 %v503, 4294901760
        %5802 = vmatpush.msra.mxu0 %v5801
        %v5803 = vand.u32 %v501, 4294901760
        %5804 = vmatpush.msra.mxu0 %v5803
        %v5805 = vand.u32 %v3053, 4294901760
        %5806 = vmatmul.f32.gmra.mxu0 %v5805
        %v5807 = vpop.f32.mrf.mxu0
        %v5808 = vadd.f32 %v5785, %v5807
        %5809 = vdwg.mxu0
        %5810 = vmatpush.msra.mxu0 0.0
        %5811 = vmatpush.msra.mxu0 0.0
        %5812 = vmatpush.msra.mxu0 0.0
        %5813 = vmatpush.msra.mxu0 0.0
        %5814 = vmatpush.msra.mxu0 0.0
        %5815 = vmatpush.msra.mxu0 0.0
        %5816 = vmatpush.msra.mxu0 0.0
        %5817 = vmatpush.msra.mxu0 0.0
        %5818 = vmatpush.msra.mxu0 0.0
        %5819 = vmatpush.msra.mxu0 0.0
        %5820 = vmatpush.msra.mxu0 0.0
        %5821 = vmatpush.msra.mxu0 0.0
        %5822 = vmatpush.msra.mxu0 0.0
        %5823 = vmatpush.msra.mxu0 0.0
        %v5824 = vand.u32 %v541, 4294901760
        %5825 = vmatpush.msra.mxu0 %v5824
        %v5826 = vand.u32 %v539, 4294901760
        %5827 = vmatpush.msra.mxu0 %v5826
        %v5828 = vand.u32 %v3053, 4294901760
        %v5829 = vsub.f32 %v3053, %v5828
        %v5830 = vand.u32 %v5829, 4294901760
        %v5831 = vsub.f32 %v5829, %v5830
        %v5832 = vand.u32 %v5831, 4294901760
        %5833 = vmatmul.f32.gmra.mxu0 %v5832
        %v5834 = vpop.f32.mrf.mxu0
        %v5835 = vadd.f32 0.0, %v5834
        %5836 = vdwg.mxu0
        %5837 = vmatpush.msra.mxu0 0.0
        %5838 = vmatpush.msra.mxu0 0.0
        %5839 = vmatpush.msra.mxu0 0.0
        %5840 = vmatpush.msra.mxu0 0.0
        %5841 = vmatpush.msra.mxu0 0.0
        %5842 = vmatpush.msra.mxu0 0.0
        %5843 = vmatpush.msra.mxu0 0.0
        %5844 = vmatpush.msra.mxu0 0.0
        %5845 = vmatpush.msra.mxu0 0.0
        %5846 = vmatpush.msra.mxu0 0.0
        %5847 = vmatpush.msra.mxu0 0.0
        %5848 = vmatpush.msra.mxu0 0.0
        %5849 = vmatpush.msra.mxu0 0.0
        %5850 = vmatpush.msra.mxu0 0.0
        %v5851 = vand.u32 %v541, 4294901760
        %v5852 = vsub.f32 %v541, %v5851
        %v5853 = vand.u32 %v5852, 4294901760
        %v5854 = vsub.f32 %v5852, %v5853
        %v5855 = vand.u32 %v5854, 4294901760
        %5856 = vmatpush.msra.mxu0 %v5855
        %v5857 = vand.u32 %v539, 4294901760
        %v5858 = vsub.f32 %v539, %v5857
        %v5859 = vand.u32 %v5858, 4294901760
        %v5860 = vsub.f32 %v5858, %v5859
        %v5861 = vand.u32 %v5860, 4294901760
        %5862 = vmatpush.msra.mxu0 %v5861
        %v5863 = vand.u32 %v3053, 4294901760
        %5864 = vmatmul.f32.gmra.mxu0 %v5863
        %v5865 = vpop.f32.mrf.mxu0
        %v5866 = vadd.f32 %v5835, %v5865
        %5867 = vdwg.mxu0
        %5868 = vmatpush.msra.mxu0 0.0
        %5869 = vmatpush.msra.mxu0 0.0
        %5870 = vmatpush.msra.mxu0 0.0
        %5871 = vmatpush.msra.mxu0 0.0
        %5872 = vmatpush.msra.mxu0 0.0
        %5873 = vmatpush.msra.mxu0 0.0
        %5874 = vmatpush.msra.mxu0 0.0
        %5875 = vmatpush.msra.mxu0 0.0
        %5876 = vmatpush.msra.mxu0 0.0
        %5877 = vmatpush.msra.mxu0 0.0
        %5878 = vmatpush.msra.mxu0 0.0
        %5879 = vmatpush.msra.mxu0 0.0
        %5880 = vmatpush.msra.mxu0 0.0
        %5881 = vmatpush.msra.mxu0 0.0
        %v5882 = vand.u32 %v541, 4294901760
        %v5883 = vsub.f32 %v541, %v5882
        %5884 = vmatpush.msra.mxu0 %v5883
        %v5885 = vand.u32 %v539, 4294901760
        %v5886 = vsub.f32 %v539, %v5885
        %5887 = vmatpush.msra.mxu0 %v5886
        %v5888 = vand.u32 %v3053, 4294901760
        %v5889 = vsub.f32 %v3053, %v5888
        %5890 = vmatmul.f32.gmra.mxu0 %v5889
        %v5891 = vpop.f32.mrf.mxu0
        %v5892 = vadd.f32 %v5866, %v5891
        %5893 = vdwg.mxu0
        %5894 = vmatpush.msra.mxu0 0.0
        %5895 = vmatpush.msra.mxu0 0.0
        %5896 = vmatpush.msra.mxu0 0.0
        %5897 = vmatpush.msra.mxu0 0.0
        %5898 = vmatpush.msra.mxu0 0.0
        %5899 = vmatpush.msra.mxu0 0.0
        %5900 = vmatpush.msra.mxu0 0.0
        %5901 = vmatpush.msra.mxu0 0.0
        %5902 = vmatpush.msra.mxu0 0.0
        %5903 = vmatpush.msra.mxu0 0.0
        %5904 = vmatpush.msra.mxu0 0.0
        %5905 = vmatpush.msra.mxu0 0.0
        %5906 = vmatpush.msra.mxu0 0.0
        %5907 = vmatpush.msra.mxu0 0.0
        %v5908 = vand.u32 %v541, 4294901760
        %5909 = vmatpush.msra.mxu0 %v5908
        %v5910 = vand.u32 %v539, 4294901760
        %5911 = vmatpush.msra.mxu0 %v5910
        %v5912 = vand.u32 %v3053, 4294901760
        %v5913 = vsub.f32 %v3053, %v5912
        %v5914 = vand.u32 %v5913, 4294901760
        %5915 = vmatmul.f32.gmra.mxu0 %v5914
        %v5916 = vpop.f32.mrf.mxu0
        %v5917 = vadd.f32 %v5892, %v5916
        %5918 = vdwg.mxu0
        %5919 = vmatpush.msra.mxu0 0.0
        %5920 = vmatpush.msra.mxu0 0.0
        %5921 = vmatpush.msra.mxu0 0.0
        %5922 = vmatpush.msra.mxu0 0.0
        %5923 = vmatpush.msra.mxu0 0.0
        %5924 = vmatpush.msra.mxu0 0.0
        %5925 = vmatpush.msra.mxu0 0.0
        %5926 = vmatpush.msra.mxu0 0.0
        %5927 = vmatpush.msra.mxu0 0.0
        %5928 = vmatpush.msra.mxu0 0.0
        %5929 = vmatpush.msra.mxu0 0.0
        %5930 = vmatpush.msra.mxu0 0.0
        %5931 = vmatpush.msra.mxu0 0.0
        %5932 = vmatpush.msra.mxu0 0.0
        %v5933 = vand.u32 %v541, 4294901760
        %v5934 = vsub.f32 %v541, %v5933
        %v5935 = vand.u32 %v5934, 4294901760
        %5936 = vmatpush.msra.mxu0 %v5935
        %v5937 = vand.u32 %v539, 4294901760
        %v5938 = vsub.f32 %v539, %v5937
        %v5939 = vand.u32 %v5938, 4294901760
        %5940 = vmatpush.msra.mxu0 %v5939
        %v5941 = vand.u32 %v3053, 4294901760
        %5942 = vmatmul.f32.gmra.mxu0 %v5941
        %v5943 = vpop.f32.mrf.mxu0
        %v5944 = vadd.f32 %v5917, %v5943
        %5945 = vdwg.mxu0
        %5946 = vmatpush.msra.mxu0 0.0
        %5947 = vmatpush.msra.mxu0 0.0
        %5948 = vmatpush.msra.mxu0 0.0
        %5949 = vmatpush.msra.mxu0 0.0
        %5950 = vmatpush.msra.mxu0 0.0
        %5951 = vmatpush.msra.mxu0 0.0
        %5952 = vmatpush.msra.mxu0 0.0
        %5953 = vmatpush.msra.mxu0 0.0
        %5954 = vmatpush.msra.mxu0 0.0
        %5955 = vmatpush.msra.mxu0 0.0
        %5956 = vmatpush.msra.mxu0 0.0
        %5957 = vmatpush.msra.mxu0 0.0
        %5958 = vmatpush.msra.mxu0 0.0
        %5959 = vmatpush.msra.mxu0 0.0
        %v5960 = vand.u32 %v541, 4294901760
        %5961 = vmatpush.msra.mxu0 %v5960
        %v5962 = vand.u32 %v539, 4294901760
        %5963 = vmatpush.msra.mxu0 %v5962
        %v5964 = vand.u32 %v3053, 4294901760
        %5965 = vmatmul.f32.gmra.mxu0 %v5964
        %v5966 = vpop.f32.mrf.mxu0
        %v5967 = vadd.f32 %v5944, %v5966
        %5968 = vdwg.mxu0
        %5969 = vmatpush.msra.mxu0 0.0
        %5970 = vmatpush.msra.mxu0 0.0
        %5971 = vmatpush.msra.mxu0 0.0
        %5972 = vmatpush.msra.mxu0 0.0
        %5973 = vmatpush.msra.mxu0 0.0
        %5974 = vmatpush.msra.mxu0 0.0
        %5975 = vmatpush.msra.mxu0 0.0
        %5976 = vmatpush.msra.mxu0 0.0
        %5977 = vmatpush.msra.mxu0 0.0
        %5978 = vmatpush.msra.mxu0 0.0
        %5979 = vmatpush.msra.mxu0 0.0
        %5980 = vmatpush.msra.mxu0 0.0
        %5981 = vmatpush.msra.mxu0 0.0
        %5982 = vmatpush.msra.mxu0 0.0
        %v5983 = vand.u32 %v599, 4294901760
        %5984 = vmatpush.msra.mxu0 %v5983
        %v5985 = vand.u32 %v597, 4294901760
        %5986 = vmatpush.msra.mxu0 %v5985
        %v5987 = vand.u32 %v3406, 4294901760
        %v5988 = vsub.f32 %v3406, %v5987
        %v5989 = vand.u32 %v5988, 4294901760
        %v5990 = vsub.f32 %v5988, %v5989
        %v5991 = vand.u32 %v5990, 4294901760
        %5992 = vmatmul.f32.gmra.mxu0 %v5991
        %v5993 = vpop.f32.mrf.mxu0
        %v5994 = vadd.f32 0.0, %v5993
        %5995 = vdwg.mxu0
        %5996 = vmatpush.msra.mxu0 0.0
        %5997 = vmatpush.msra.mxu0 0.0
        %5998 = vmatpush.msra.mxu0 0.0
        %5999 = vmatpush.msra.mxu0 0.0
        %6000 = vmatpush.msra.mxu0 0.0
        %6001 = vmatpush.msra.mxu0 0.0
        %6002 = vmatpush.msra.mxu0 0.0
        %6003 = vmatpush.msra.mxu0 0.0
        %6004 = vmatpush.msra.mxu0 0.0
        %6005 = vmatpush.msra.mxu0 0.0
        %6006 = vmatpush.msra.mxu0 0.0
        %6007 = vmatpush.msra.mxu0 0.0
        %6008 = vmatpush.msra.mxu0 0.0
        %6009 = vmatpush.msra.mxu0 0.0
        %v6010 = vand.u32 %v599, 4294901760
        %v6011 = vsub.f32 %v599, %v6010
        %v6012 = vand.u32 %v6011, 4294901760
        %v6013 = vsub.f32 %v6011, %v6012
        %v6014 = vand.u32 %v6013, 4294901760
        %6015 = vmatpush.msra.mxu0 %v6014
        %v6016 = vand.u32 %v597, 4294901760
        %v6017 = vsub.f32 %v597, %v6016
        %v6018 = vand.u32 %v6017, 4294901760
        %v6019 = vsub.f32 %v6017, %v6018
        %v6020 = vand.u32 %v6019, 4294901760
        %6021 = vmatpush.msra.mxu0 %v6020
        %v6022 = vand.u32 %v3406, 4294901760
        %6023 = vmatmul.f32.gmra.mxu0 %v6022
        %v6024 = vpop.f32.mrf.mxu0
        %v6025 = vadd.f32 %v5994, %v6024
        %6026 = vdwg.mxu0
        %6027 = vmatpush.msra.mxu0 0.0
        %6028 = vmatpush.msra.mxu0 0.0
        %6029 = vmatpush.msra.mxu0 0.0
        %6030 = vmatpush.msra.mxu0 0.0
        %6031 = vmatpush.msra.mxu0 0.0
        %6032 = vmatpush.msra.mxu0 0.0
        %6033 = vmatpush.msra.mxu0 0.0
        %6034 = vmatpush.msra.mxu0 0.0
        %6035 = vmatpush.msra.mxu0 0.0
        %6036 = vmatpush.msra.mxu0 0.0
        %6037 = vmatpush.msra.mxu0 0.0
        %6038 = vmatpush.msra.mxu0 0.0
        %6039 = vmatpush.msra.mxu0 0.0
        %6040 = vmatpush.msra.mxu0 0.0
        %v6041 = vand.u32 %v599, 4294901760
        %v6042 = vsub.f32 %v599, %v6041
        %6043 = vmatpush.msra.mxu0 %v6042
        %v6044 = vand.u32 %v597, 4294901760
        %v6045 = vsub.f32 %v597, %v6044
        %6046 = vmatpush.msra.mxu0 %v6045
        %v6047 = vand.u32 %v3406, 4294901760
        %v6048 = vsub.f32 %v3406, %v6047
        %6049 = vmatmul.f32.gmra.mxu0 %v6048
        %v6050 = vpop.f32.mrf.mxu0
        %v6051 = vadd.f32 %v6025, %v6050
        %6052 = vdwg.mxu0
        %6053 = vmatpush.msra.mxu0 0.0
        %6054 = vmatpush.msra.mxu0 0.0
        %6055 = vmatpush.msra.mxu0 0.0
        %6056 = vmatpush.msra.mxu0 0.0
        %6057 = vmatpush.msra.mxu0 0.0
        %6058 = vmatpush.msra.mxu0 0.0
        %6059 = vmatpush.msra.mxu0 0.0
        %6060 = vmatpush.msra.mxu0 0.0
        %6061 = vmatpush.msra.mxu0 0.0
        %6062 = vmatpush.msra.mxu0 0.0
        %6063 = vmatpush.msra.mxu0 0.0
        %6064 = vmatpush.msra.mxu0 0.0
        %6065 = vmatpush.msra.mxu0 0.0
        %6066 = vmatpush.msra.mxu0 0.0
        %v6067 = vand.u32 %v599, 4294901760
        %6068 = vmatpush.msra.mxu0 %v6067
        %v6069 = vand.u32 %v597, 4294901760
        %6070 = vmatpush.msra.mxu0 %v6069
        %v6071 = vand.u32 %v3406, 4294901760
        %v6072 = vsub.f32 %v3406, %v6071
        %v6073 = vand.u32 %v6072, 4294901760
        %6074 = vmatmul.f32.gmra.mxu0 %v6073
        %v6075 = vpop.f32.mrf.mxu0
        %v6076 = vadd.f32 %v6051, %v6075
        %6077 = vdwg.mxu0
        %6078 = vmatpush.msra.mxu0 0.0
        %6079 = vmatpush.msra.mxu0 0.0
        %6080 = vmatpush.msra.mxu0 0.0
        %6081 = vmatpush.msra.mxu0 0.0
        %6082 = vmatpush.msra.mxu0 0.0
        %6083 = vmatpush.msra.mxu0 0.0
        %6084 = vmatpush.msra.mxu0 0.0
        %6085 = vmatpush.msra.mxu0 0.0
        %6086 = vmatpush.msra.mxu0 0.0
        %6087 = vmatpush.msra.mxu0 0.0
        %6088 = vmatpush.msra.mxu0 0.0
        %6089 = vmatpush.msra.mxu0 0.0
        %6090 = vmatpush.msra.mxu0 0.0
        %6091 = vmatpush.msra.mxu0 0.0
        %v6092 = vand.u32 %v599, 4294901760
        %v6093 = vsub.f32 %v599, %v6092
        %v6094 = vand.u32 %v6093, 4294901760
        %6095 = vmatpush.msra.mxu0 %v6094
        %v6096 = vand.u32 %v597, 4294901760
        %v6097 = vsub.f32 %v597, %v6096
        %v6098 = vand.u32 %v6097, 4294901760
        %6099 = vmatpush.msra.mxu0 %v6098
        %v6100 = vand.u32 %v3406, 4294901760
        %6101 = vmatmul.f32.gmra.mxu0 %v6100
        %v6102 = vpop.f32.mrf.mxu0
        %v6103 = vadd.f32 %v6076, %v6102
        %6104 = vdwg.mxu0
        %6105 = vmatpush.msra.mxu0 0.0
        %6106 = vmatpush.msra.mxu0 0.0
        %6107 = vmatpush.msra.mxu0 0.0
        %6108 = vmatpush.msra.mxu0 0.0
        %6109 = vmatpush.msra.mxu0 0.0
        %6110 = vmatpush.msra.mxu0 0.0
        %6111 = vmatpush.msra.mxu0 0.0
        %6112 = vmatpush.msra.mxu0 0.0
        %6113 = vmatpush.msra.mxu0 0.0
        %6114 = vmatpush.msra.mxu0 0.0
        %6115 = vmatpush.msra.mxu0 0.0
        %6116 = vmatpush.msra.mxu0 0.0
        %6117 = vmatpush.msra.mxu0 0.0
        %6118 = vmatpush.msra.mxu0 0.0
        %v6119 = vand.u32 %v599, 4294901760
        %6120 = vmatpush.msra.mxu0 %v6119
        %v6121 = vand.u32 %v597, 4294901760
        %6122 = vmatpush.msra.mxu0 %v6121
        %v6123 = vand.u32 %v3406, 4294901760
        %6124 = vmatmul.f32.gmra.mxu0 %v6123
        %v6125 = vpop.f32.mrf.mxu0
        %v6126 = vadd.f32 %v6103, %v6125
        %6127 = vdwg.mxu0
        %6128 = vmatpush.msra.mxu0 0.0
        %6129 = vmatpush.msra.mxu0 0.0
        %6130 = vmatpush.msra.mxu0 0.0
        %6131 = vmatpush.msra.mxu0 0.0
        %6132 = vmatpush.msra.mxu0 0.0
        %6133 = vmatpush.msra.mxu0 0.0
        %6134 = vmatpush.msra.mxu0 0.0
        %6135 = vmatpush.msra.mxu0 0.0
        %6136 = vmatpush.msra.mxu0 0.0
        %6137 = vmatpush.msra.mxu0 0.0
        %6138 = vmatpush.msra.mxu0 0.0
        %6139 = vmatpush.msra.mxu0 0.0
        %6140 = vmatpush.msra.mxu0 0.0
        %6141 = vmatpush.msra.mxu0 0.0
        %v6142 = vand.u32 %v637, 4294901760
        %6143 = vmatpush.msra.mxu0 %v6142
        %v6144 = vand.u32 %v635, 4294901760
        %6145 = vmatpush.msra.mxu0 %v6144
        %v6146 = vand.u32 %v3406, 4294901760
        %v6147 = vsub.f32 %v3406, %v6146
        %v6148 = vand.u32 %v6147, 4294901760
        %v6149 = vsub.f32 %v6147, %v6148
        %v6150 = vand.u32 %v6149, 4294901760
        %6151 = vmatmul.f32.gmra.mxu0 %v6150
        %v6152 = vpop.f32.mrf.mxu0
        %v6153 = vadd.f32 0.0, %v6152
        %6154 = vdwg.mxu0
        %6155 = vmatpush.msra.mxu0 0.0
        %6156 = vmatpush.msra.mxu0 0.0
        %6157 = vmatpush.msra.mxu0 0.0
        %6158 = vmatpush.msra.mxu0 0.0
        %6159 = vmatpush.msra.mxu0 0.0
        %6160 = vmatpush.msra.mxu0 0.0
        %6161 = vmatpush.msra.mxu0 0.0
        %6162 = vmatpush.msra.mxu0 0.0
        %6163 = vmatpush.msra.mxu0 0.0
        %6164 = vmatpush.msra.mxu0 0.0
        %6165 = vmatpush.msra.mxu0 0.0
        %6166 = vmatpush.msra.mxu0 0.0
        %6167 = vmatpush.msra.mxu0 0.0
        %6168 = vmatpush.msra.mxu0 0.0
        %v6169 = vand.u32 %v637, 4294901760
        %v6170 = vsub.f32 %v637, %v6169
        %v6171 = vand.u32 %v6170, 4294901760
        %v6172 = vsub.f32 %v6170, %v6171
        %v6173 = vand.u32 %v6172, 4294901760
        %6174 = vmatpush.msra.mxu0 %v6173
        %v6175 = vand.u32 %v635, 4294901760
        %v6176 = vsub.f32 %v635, %v6175
        %v6177 = vand.u32 %v6176, 4294901760
        %v6178 = vsub.f32 %v6176, %v6177
        %v6179 = vand.u32 %v6178, 4294901760
        %6180 = vmatpush.msra.mxu0 %v6179
        %v6181 = vand.u32 %v3406, 4294901760
        %6182 = vmatmul.f32.gmra.mxu0 %v6181
        %v6183 = vpop.f32.mrf.mxu0
        %v6184 = vadd.f32 %v6153, %v6183
        %6185 = vdwg.mxu0
        %6186 = vmatpush.msra.mxu0 0.0
        %6187 = vmatpush.msra.mxu0 0.0
        %6188 = vmatpush.msra.mxu0 0.0
        %6189 = vmatpush.msra.mxu0 0.0
        %6190 = vmatpush.msra.mxu0 0.0
        %6191 = vmatpush.msra.mxu0 0.0
        %6192 = vmatpush.msra.mxu0 0.0
        %6193 = vmatpush.msra.mxu0 0.0
        %6194 = vmatpush.msra.mxu0 0.0
        %6195 = vmatpush.msra.mxu0 0.0
        %6196 = vmatpush.msra.mxu0 0.0
        %6197 = vmatpush.msra.mxu0 0.0
        %6198 = vmatpush.msra.mxu0 0.0
        %6199 = vmatpush.msra.mxu0 0.0
        %v6200 = vand.u32 %v637, 4294901760
        %v6201 = vsub.f32 %v637, %v6200
        %6202 = vmatpush.msra.mxu0 %v6201
        %v6203 = vand.u32 %v635, 4294901760
        %v6204 = vsub.f32 %v635, %v6203
        %6205 = vmatpush.msra.mxu0 %v6204
        %v6206 = vand.u32 %v3406, 4294901760
        %v6207 = vsub.f32 %v3406, %v6206
        %6208 = vmatmul.f32.gmra.mxu0 %v6207
        %v6209 = vpop.f32.mrf.mxu0
        %v6210 = vadd.f32 %v6184, %v6209
        %6211 = vdwg.mxu0
        %6212 = vmatpush.msra.mxu0 0.0
        %6213 = vmatpush.msra.mxu0 0.0
        %6214 = vmatpush.msra.mxu0 0.0
        %6215 = vmatpush.msra.mxu0 0.0
        %6216 = vmatpush.msra.mxu0 0.0
        %6217 = vmatpush.msra.mxu0 0.0
        %6218 = vmatpush.msra.mxu0 0.0
        %6219 = vmatpush.msra.mxu0 0.0
        %6220 = vmatpush.msra.mxu0 0.0
        %6221 = vmatpush.msra.mxu0 0.0
        %6222 = vmatpush.msra.mxu0 0.0
        %6223 = vmatpush.msra.mxu0 0.0
        %6224 = vmatpush.msra.mxu0 0.0
        %6225 = vmatpush.msra.mxu0 0.0
        %v6226 = vand.u32 %v637, 4294901760
        %6227 = vmatpush.msra.mxu0 %v6226
        %v6228 = vand.u32 %v635, 4294901760
        %6229 = vmatpush.msra.mxu0 %v6228
        %v6230 = vand.u32 %v3406, 4294901760
        %v6231 = vsub.f32 %v3406, %v6230
        %v6232 = vand.u32 %v6231, 4294901760
        %6233 = vmatmul.f32.gmra.mxu0 %v6232
        %v6234 = vpop.f32.mrf.mxu0
        %v6235 = vadd.f32 %v6210, %v6234
        %6236 = vdwg.mxu0
        %6237 = vmatpush.msra.mxu0 0.0
        %6238 = vmatpush.msra.mxu0 0.0
        %6239 = vmatpush.msra.mxu0 0.0
        %6240 = vmatpush.msra.mxu0 0.0
        %6241 = vmatpush.msra.mxu0 0.0
        %6242 = vmatpush.msra.mxu0 0.0
        %6243 = vmatpush.msra.mxu0 0.0
        %6244 = vmatpush.msra.mxu0 0.0
        %6245 = vmatpush.msra.mxu0 0.0
        %6246 = vmatpush.msra.mxu0 0.0
        %6247 = vmatpush.msra.mxu0 0.0
        %6248 = vmatpush.msra.mxu0 0.0
        %6249 = vmatpush.msra.mxu0 0.0
        %6250 = vmatpush.msra.mxu0 0.0
        %v6251 = vand.u32 %v637, 4294901760
        %v6252 = vsub.f32 %v637, %v6251
        %v6253 = vand.u32 %v6252, 4294901760
        %6254 = vmatpush.msra.mxu0 %v6253
        %v6255 = vand.u32 %v635, 4294901760
        %v6256 = vsub.f32 %v635, %v6255
        %v6257 = vand.u32 %v6256, 4294901760
        %6258 = vmatpush.msra.mxu0 %v6257
        %v6259 = vand.u32 %v3406, 4294901760
        %6260 = vmatmul.f32.gmra.mxu0 %v6259
        %v6261 = vpop.f32.mrf.mxu0
        %v6262 = vadd.f32 %v6235, %v6261
        %6263 = vdwg.mxu0
        %6264 = vmatpush.msra.mxu0 0.0
        %6265 = vmatpush.msra.mxu0 0.0
        %6266 = vmatpush.msra.mxu0 0.0
        %6267 = vmatpush.msra.mxu0 0.0
        %6268 = vmatpush.msra.mxu0 0.0
        %6269 = vmatpush.msra.mxu0 0.0
        %6270 = vmatpush.msra.mxu0 0.0
        %6271 = vmatpush.msra.mxu0 0.0
        %6272 = vmatpush.msra.mxu0 0.0
        %6273 = vmatpush.msra.mxu0 0.0
        %6274 = vmatpush.msra.mxu0 0.0
        %6275 = vmatpush.msra.mxu0 0.0
        %6276 = vmatpush.msra.mxu0 0.0
        %6277 = vmatpush.msra.mxu0 0.0
        %v6278 = vand.u32 %v637, 4294901760
        %6279 = vmatpush.msra.mxu0 %v6278
        %v6280 = vand.u32 %v635, 4294901760
        %6281 = vmatpush.msra.mxu0 %v6280
        %v6282 = vand.u32 %v3406, 4294901760
        %6283 = vmatmul.f32.gmra.mxu0 %v6282
        %v6284 = vpop.f32.mrf.mxu0
        %v6285 = vadd.f32 %v6262, %v6284
        %6286 = vdwg.mxu0
        %s6287 = scalar_lea.vmem %s191, 32 [#allocation5]
        %6288 = vst [vmem:[%s6287] sm:$0xff] %v5172
        %6289 = vst [vmem:[%s6287 + $0x8] sm:$0xff] %v5331
        %6290 = vst [vmem:[%s6287 + $0x40] sm:$0xff] %v5490
        %6291 = vst [vmem:[%s6287 + $0x48] sm:$0xff] %v5649
        %6292 = vst [vmem:[%s6287 + $0x80] sm:$0xff] %v5808
        %6293 = vst [vmem:[%s6287 + $0x88] sm:$0xff] %v5967
        %6294 = vst [vmem:[%s6287 + $0xc0] sm:$0xff] %v6126
        %6295 = vst [vmem:[%s6287 + $0xc8] sm:$0xff] %v6285
        %6296 = vmatpush.msra.mxu0 0.0
        %6297 = vmatpush.msra.mxu0 0.0
        %6298 = vmatpush.msra.mxu0 0.0
        %6299 = vmatpush.msra.mxu0 0.0
        %6300 = vmatpush.msra.mxu0 0.0
        %6301 = vmatpush.msra.mxu0 0.0
        %6302 = vmatpush.msra.mxu0 0.0
        %6303 = vmatpush.msra.mxu0 0.0
        %6304 = vmatpush.msra.mxu0 0.0
        %6305 = vmatpush.msra.mxu0 0.0
        %6306 = vmatpush.msra.mxu0 0.0
        %6307 = vmatpush.msra.mxu0 0.0
        %6308 = vmatpush.msra.mxu0 0.0
        %6309 = vmatpush.msra.mxu0 0.0
        %v6310 = vand.u32 %v316, 4294901760
        %6311 = vmatpush.msra.mxu0 %v6310
        %v6312 = vand.u32 %v314, 4294901760
        %6313 = vmatpush.msra.mxu0 %v6312
        %v6314 = vand.u32 %v2347, 4294901760
        %v6315 = vsub.f32 %v2347, %v6314
        %v6316 = vand.u32 %v6315, 4294901760
        %v6317 = vsub.f32 %v6315, %v6316
        %v6318 = vand.u32 %v6317, 4294901760
        %6319 = vmatmul.f32.gmra.mxu0 %v6318
        %v6320 = vpop.f32.mrf.mxu0
        %v6321 = vadd.f32 0.0, %v6320
        %6322 = vdwg.mxu0
        %6323 = vmatpush.msra.mxu0 0.0
        %6324 = vmatpush.msra.mxu0 0.0
        %6325 = vmatpush.msra.mxu0 0.0
        %6326 = vmatpush.msra.mxu0 0.0
        %6327 = vmatpush.msra.mxu0 0.0
        %6328 = vmatpush.msra.mxu0 0.0
        %6329 = vmatpush.msra.mxu0 0.0
        %6330 = vmatpush.msra.mxu0 0.0
        %6331 = vmatpush.msra.mxu0 0.0
        %6332 = vmatpush.msra.mxu0 0.0
        %6333 = vmatpush.msra.mxu0 0.0
        %6334 = vmatpush.msra.mxu0 0.0
        %6335 = vmatpush.msra.mxu0 0.0
        %6336 = vmatpush.msra.mxu0 0.0
        %v6337 = vand.u32 %v316, 4294901760
        %v6338 = vsub.f32 %v316, %v6337
        %v6339 = vand.u32 %v6338, 4294901760
        %v6340 = vsub.f32 %v6338, %v6339
        %v6341 = vand.u32 %v6340, 4294901760
        %6342 = vmatpush.msra.mxu0 %v6341
        %v6343 = vand.u32 %v314, 4294901760
        %v6344 = vsub.f32 %v314, %v6343
        %v6345 = vand.u32 %v6344, 4294901760
        %v6346 = vsub.f32 %v6344, %v6345
        %v6347 = vand.u32 %v6346, 4294901760
        %6348 = vmatpush.msra.mxu0 %v6347
        %v6349 = vand.u32 %v2347, 4294901760
        %6350 = vmatmul.f32.gmra.mxu0 %v6349
        %v6351 = vpop.f32.mrf.mxu0
        %v6352 = vadd.f32 %v6321, %v6351
        %6353 = vdwg.mxu0
        %6354 = vmatpush.msra.mxu0 0.0
        %6355 = vmatpush.msra.mxu0 0.0
        %6356 = vmatpush.msra.mxu0 0.0
        %6357 = vmatpush.msra.mxu0 0.0
        %6358 = vmatpush.msra.mxu0 0.0
        %6359 = vmatpush.msra.mxu0 0.0
        %6360 = vmatpush.msra.mxu0 0.0
        %6361 = vmatpush.msra.mxu0 0.0
        %6362 = vmatpush.msra.mxu0 0.0
        %6363 = vmatpush.msra.mxu0 0.0
        %6364 = vmatpush.msra.mxu0 0.0
        %6365 = vmatpush.msra.mxu0 0.0
        %6366 = vmatpush.msra.mxu0 0.0
        %6367 = vmatpush.msra.mxu0 0.0
        %v6368 = vand.u32 %v316, 4294901760
        %v6369 = vsub.f32 %v316, %v6368
        %6370 = vmatpush.msra.mxu0 %v6369
        %v6371 = vand.u32 %v314, 4294901760
        %v6372 = vsub.f32 %v314, %v6371
        %6373 = vmatpush.msra.mxu0 %v6372
        %v6374 = vand.u32 %v2347, 4294901760
        %v6375 = vsub.f32 %v2347, %v6374
        %6376 = vmatmul.f32.gmra.mxu0 %v6375
        %v6377 = vpop.f32.mrf.mxu0
        %v6378 = vadd.f32 %v6352, %v6377
        %6379 = vdwg.mxu0
        %6380 = vmatpush.msra.mxu0 0.0
        %6381 = vmatpush.msra.mxu0 0.0
        %6382 = vmatpush.msra.mxu0 0.0
        %6383 = vmatpush.msra.mxu0 0.0
        %6384 = vmatpush.msra.mxu0 0.0
        %6385 = vmatpush.msra.mxu0 0.0
        %6386 = vmatpush.msra.mxu0 0.0
        %6387 = vmatpush.msra.mxu0 0.0
        %6388 = vmatpush.msra.mxu0 0.0
        %6389 = vmatpush.msra.mxu0 0.0
        %6390 = vmatpush.msra.mxu0 0.0
        %6391 = vmatpush.msra.mxu0 0.0
        %6392 = vmatpush.msra.mxu0 0.0
        %6393 = vmatpush.msra.mxu0 0.0
        %v6394 = vand.u32 %v316, 4294901760
        %6395 = vmatpush.msra.mxu0 %v6394
        %v6396 = vand.u32 %v314, 4294901760
        %6397 = vmatpush.msra.mxu0 %v6396
        %v6398 = vand.u32 %v2347, 4294901760
        %v6399 = vsub.f32 %v2347, %v6398
        %v6400 = vand.u32 %v6399, 4294901760
        %6401 = vmatmul.f32.gmra.mxu0 %v6400
        %v6402 = vpop.f32.mrf.mxu0
        %v6403 = vadd.f32 %v6378, %v6402
        %6404 = vdwg.mxu0
        %6405 = vmatpush.msra.mxu0 0.0
        %6406 = vmatpush.msra.mxu0 0.0
        %6407 = vmatpush.msra.mxu0 0.0
        %6408 = vmatpush.msra.mxu0 0.0
        %6409 = vmatpush.msra.mxu0 0.0
        %6410 = vmatpush.msra.mxu0 0.0
        %6411 = vmatpush.msra.mxu0 0.0
        %6412 = vmatpush.msra.mxu0 0.0
        %6413 = vmatpush.msra.mxu0 0.0
        %6414 = vmatpush.msra.mxu0 0.0
        %6415 = vmatpush.msra.mxu0 0.0
        %6416 = vmatpush.msra.mxu0 0.0
        %6417 = vmatpush.msra.mxu0 0.0
        %6418 = vmatpush.msra.mxu0 0.0
        %v6419 = vand.u32 %v316, 4294901760
        %v6420 = vsub.f32 %v316, %v6419
        %v6421 = vand.u32 %v6420, 4294901760
        %6422 = vmatpush.msra.mxu0 %v6421
        %v6423 = vand.u32 %v314, 4294901760
        %v6424 = vsub.f32 %v314, %v6423
        %v6425 = vand.u32 %v6424, 4294901760
        %6426 = vmatpush.msra.mxu0 %v6425
        %v6427 = vand.u32 %v2347, 4294901760
        %6428 = vmatmul.f32.gmra.mxu0 %v6427
        %v6429 = vpop.f32.mrf.mxu0
        %v6430 = vadd.f32 %v6403, %v6429
        %6431 = vdwg.mxu0
        %6432 = vmatpush.msra.mxu0 0.0
        %6433 = vmatpush.msra.mxu0 0.0
        %6434 = vmatpush.msra.mxu0 0.0
        %6435 = vmatpush.msra.mxu0 0.0
        %6436 = vmatpush.msra.mxu0 0.0
        %6437 = vmatpush.msra.mxu0 0.0
        %6438 = vmatpush.msra.mxu0 0.0
        %6439 = vmatpush.msra.mxu0 0.0
        %6440 = vmatpush.msra.mxu0 0.0
        %6441 = vmatpush.msra.mxu0 0.0
        %6442 = vmatpush.msra.mxu0 0.0
        %6443 = vmatpush.msra.mxu0 0.0
        %6444 = vmatpush.msra.mxu0 0.0
        %6445 = vmatpush.msra.mxu0 0.0
        %v6446 = vand.u32 %v316, 4294901760
        %6447 = vmatpush.msra.mxu0 %v6446
        %v6448 = vand.u32 %v314, 4294901760
        %6449 = vmatpush.msra.mxu0 %v6448
        %v6450 = vand.u32 %v2347, 4294901760
        %6451 = vmatmul.f32.gmra.mxu0 %v6450
        %v6452 = vpop.f32.mrf.mxu0
        %v6453 = vadd.f32 %v6430, %v6452
        %6454 = vdwg.mxu0
        %6455 = vmatpush.msra.mxu0 0.0
        %6456 = vmatpush.msra.mxu0 0.0
        %6457 = vmatpush.msra.mxu0 0.0
        %6458 = vmatpush.msra.mxu0 0.0
        %6459 = vmatpush.msra.mxu0 0.0
        %6460 = vmatpush.msra.mxu0 0.0
        %6461 = vmatpush.msra.mxu0 0.0
        %6462 = vmatpush.msra.mxu0 0.0
        %6463 = vmatpush.msra.mxu0 0.0
        %6464 = vmatpush.msra.mxu0 0.0
        %6465 = vmatpush.msra.mxu0 0.0
        %6466 = vmatpush.msra.mxu0 0.0
        %6467 = vmatpush.msra.mxu0 0.0
        %6468 = vmatpush.msra.mxu0 0.0
        %v6469 = vand.u32 %v354, 4294901760
        %6470 = vmatpush.msra.mxu0 %v6469
        %v6471 = vand.u32 %v352, 4294901760
        %6472 = vmatpush.msra.mxu0 %v6471
        %v6473 = vand.u32 %v2347, 4294901760
        %v6474 = vsub.f32 %v2347, %v6473
        %v6475 = vand.u32 %v6474, 4294901760
        %v6476 = vsub.f32 %v6474, %v6475
        %v6477 = vand.u32 %v6476, 4294901760
        %6478 = vmatmul.f32.gmra.mxu0 %v6477
        %v6479 = vpop.f32.mrf.mxu0
        %v6480 = vadd.f32 0.0, %v6479
        %6481 = vdwg.mxu0
        %6482 = vmatpush.msra.mxu0 0.0
        %6483 = vmatpush.msra.mxu0 0.0
        %6484 = vmatpush.msra.mxu0 0.0
        %6485 = vmatpush.msra.mxu0 0.0
        %6486 = vmatpush.msra.mxu0 0.0
        %6487 = vmatpush.msra.mxu0 0.0
        %6488 = vmatpush.msra.mxu0 0.0
        %6489 = vmatpush.msra.mxu0 0.0
        %6490 = vmatpush.msra.mxu0 0.0
        %6491 = vmatpush.msra.mxu0 0.0
        %6492 = vmatpush.msra.mxu0 0.0
        %6493 = vmatpush.msra.mxu0 0.0
        %6494 = vmatpush.msra.mxu0 0.0
        %6495 = vmatpush.msra.mxu0 0.0
        %v6496 = vand.u32 %v354, 4294901760
        %v6497 = vsub.f32 %v354, %v6496
        %v6498 = vand.u32 %v6497, 4294901760
        %v6499 = vsub.f32 %v6497, %v6498
        %v6500 = vand.u32 %v6499, 4294901760
        %6501 = vmatpush.msra.mxu0 %v6500
        %v6502 = vand.u32 %v352, 4294901760
        %v6503 = vsub.f32 %v352, %v6502
        %v6504 = vand.u32 %v6503, 4294901760
        %v6505 = vsub.f32 %v6503, %v6504
        %v6506 = vand.u32 %v6505, 4294901760
        %6507 = vmatpush.msra.mxu0 %v6506
        %v6508 = vand.u32 %v2347, 4294901760
        %6509 = vmatmul.f32.gmra.mxu0 %v6508
        %v6510 = vpop.f32.mrf.mxu0
        %v6511 = vadd.f32 %v6480, %v6510
        %6512 = vdwg.mxu0
        %6513 = vmatpush.msra.mxu0 0.0
        %6514 = vmatpush.msra.mxu0 0.0
        %6515 = vmatpush.msra.mxu0 0.0
        %6516 = vmatpush.msra.mxu0 0.0
        %6517 = vmatpush.msra.mxu0 0.0
        %6518 = vmatpush.msra.mxu0 0.0
        %6519 = vmatpush.msra.mxu0 0.0
        %6520 = vmatpush.msra.mxu0 0.0
        %6521 = vmatpush.msra.mxu0 0.0
        %6522 = vmatpush.msra.mxu0 0.0
        %6523 = vmatpush.msra.mxu0 0.0
        %6524 = vmatpush.msra.mxu0 0.0
        %6525 = vmatpush.msra.mxu0 0.0
        %6526 = vmatpush.msra.mxu0 0.0
        %v6527 = vand.u32 %v354, 4294901760
        %v6528 = vsub.f32 %v354, %v6527
        %6529 = vmatpush.msra.mxu0 %v6528
        %v6530 = vand.u32 %v352, 4294901760
        %v6531 = vsub.f32 %v352, %v6530
        %6532 = vmatpush.msra.mxu0 %v6531
        %v6533 = vand.u32 %v2347, 4294901760
        %v6534 = vsub.f32 %v2347, %v6533
        %6535 = vmatmul.f32.gmra.mxu0 %v6534
        %v6536 = vpop.f32.mrf.mxu0
        %v6537 = vadd.f32 %v6511, %v6536
        %6538 = vdwg.mxu0
        %6539 = vmatpush.msra.mxu0 0.0
        %6540 = vmatpush.msra.mxu0 0.0
        %6541 = vmatpush.msra.mxu0 0.0
        %6542 = vmatpush.msra.mxu0 0.0
        %6543 = vmatpush.msra.mxu0 0.0
        %6544 = vmatpush.msra.mxu0 0.0
        %6545 = vmatpush.msra.mxu0 0.0
        %6546 = vmatpush.msra.mxu0 0.0
        %6547 = vmatpush.msra.mxu0 0.0
        %6548 = vmatpush.msra.mxu0 0.0
        %6549 = vmatpush.msra.mxu0 0.0
        %6550 = vmatpush.msra.mxu0 0.0
        %6551 = vmatpush.msra.mxu0 0.0
        %6552 = vmatpush.msra.mxu0 0.0
        %v6553 = vand.u32 %v354, 4294901760
        %6554 = vmatpush.msra.mxu0 %v6553
        %v6555 = vand.u32 %v352, 4294901760
        %6556 = vmatpush.msra.mxu0 %v6555
        %v6557 = vand.u32 %v2347, 4294901760
        %v6558 = vsub.f32 %v2347, %v6557
        %v6559 = vand.u32 %v6558, 4294901760
        %6560 = vmatmul.f32.gmra.mxu0 %v6559
        %v6561 = vpop.f32.mrf.mxu0
        %v6562 = vadd.f32 %v6537, %v6561
        %6563 = vdwg.mxu0
        %6564 = vmatpush.msra.mxu0 0.0
        %6565 = vmatpush.msra.mxu0 0.0
        %6566 = vmatpush.msra.mxu0 0.0
        %6567 = vmatpush.msra.mxu0 0.0
        %6568 = vmatpush.msra.mxu0 0.0
        %6569 = vmatpush.msra.mxu0 0.0
        %6570 = vmatpush.msra.mxu0 0.0
        %6571 = vmatpush.msra.mxu0 0.0
        %6572 = vmatpush.msra.mxu0 0.0
        %6573 = vmatpush.msra.mxu0 0.0
        %6574 = vmatpush.msra.mxu0 0.0
        %6575 = vmatpush.msra.mxu0 0.0
        %6576 = vmatpush.msra.mxu0 0.0
        %6577 = vmatpush.msra.mxu0 0.0
        %v6578 = vand.u32 %v354, 4294901760
        %v6579 = vsub.f32 %v354, %v6578
        %v6580 = vand.u32 %v6579, 4294901760
        %6581 = vmatpush.msra.mxu0 %v6580
        %v6582 = vand.u32 %v352, 4294901760
        %v6583 = vsub.f32 %v352, %v6582
        %v6584 = vand.u32 %v6583, 4294901760
        %6585 = vmatpush.msra.mxu0 %v6584
        %v6586 = vand.u32 %v2347, 4294901760
        %6587 = vmatmul.f32.gmra.mxu0 %v6586
        %v6588 = vpop.f32.mrf.mxu0
        %v6589 = vadd.f32 %v6562, %v6588
        %6590 = vdwg.mxu0
        %6591 = vmatpush.msra.mxu0 0.0
        %6592 = vmatpush.msra.mxu0 0.0
        %6593 = vmatpush.msra.mxu0 0.0
        %6594 = vmatpush.msra.mxu0 0.0
        %6595 = vmatpush.msra.mxu0 0.0
        %6596 = vmatpush.msra.mxu0 0.0
        %6597 = vmatpush.msra.mxu0 0.0
        %6598 = vmatpush.msra.mxu0 0.0
        %6599 = vmatpush.msra.mxu0 0.0
        %6600 = vmatpush.msra.mxu0 0.0
        %6601 = vmatpush.msra.mxu0 0.0
        %6602 = vmatpush.msra.mxu0 0.0
        %6603 = vmatpush.msra.mxu0 0.0
        %6604 = vmatpush.msra.mxu0 0.0
        %v6605 = vand.u32 %v354, 4294901760
        %6606 = vmatpush.msra.mxu0 %v6605
        %v6607 = vand.u32 %v352, 4294901760
        %6608 = vmatpush.msra.mxu0 %v6607
        %v6609 = vand.u32 %v2347, 4294901760
        %6610 = vmatmul.f32.gmra.mxu0 %v6609
        %v6611 = vpop.f32.mrf.mxu0
        %v6612 = vadd.f32 %v6589, %v6611
        %6613 = vdwg.mxu0
        %6614 = vmatpush.msra.mxu0 0.0
        %6615 = vmatpush.msra.mxu0 0.0
        %6616 = vmatpush.msra.mxu0 0.0
        %6617 = vmatpush.msra.mxu0 0.0
        %6618 = vmatpush.msra.mxu0 0.0
        %6619 = vmatpush.msra.mxu0 0.0
        %6620 = vmatpush.msra.mxu0 0.0
        %6621 = vmatpush.msra.mxu0 0.0
        %6622 = vmatpush.msra.mxu0 0.0
        %6623 = vmatpush.msra.mxu0 0.0
        %6624 = vmatpush.msra.mxu0 0.0
        %6625 = vmatpush.msra.mxu0 0.0
        %6626 = vmatpush.msra.mxu0 0.0
        %6627 = vmatpush.msra.mxu0 0.0
        %v6628 = vand.u32 %v412, 4294901760
        %6629 = vmatpush.msra.mxu0 %v6628
        %v6630 = vand.u32 %v410, 4294901760
        %6631 = vmatpush.msra.mxu0 %v6630
        %v6632 = vand.u32 %v2700, 4294901760
        %v6633 = vsub.f32 %v2700, %v6632
        %v6634 = vand.u32 %v6633, 4294901760
        %v6635 = vsub.f32 %v6633, %v6634
        %v6636 = vand.u32 %v6635, 4294901760
        %6637 = vmatmul.f32.gmra.mxu0 %v6636
        %v6638 = vpop.f32.mrf.mxu0
        %v6639 = vadd.f32 0.0, %v6638
        %6640 = vdwg.mxu0
        %6641 = vmatpush.msra.mxu0 0.0
        %6642 = vmatpush.msra.mxu0 0.0
        %6643 = vmatpush.msra.mxu0 0.0
        %6644 = vmatpush.msra.mxu0 0.0
        %6645 = vmatpush.msra.mxu0 0.0
        %6646 = vmatpush.msra.mxu0 0.0
        %6647 = vmatpush.msra.mxu0 0.0
        %6648 = vmatpush.msra.mxu0 0.0
        %6649 = vmatpush.msra.mxu0 0.0
        %6650 = vmatpush.msra.mxu0 0.0
        %6651 = vmatpush.msra.mxu0 0.0
        %6652 = vmatpush.msra.mxu0 0.0
        %6653 = vmatpush.msra.mxu0 0.0
        %6654 = vmatpush.msra.mxu0 0.0
        %v6655 = vand.u32 %v412, 4294901760
        %v6656 = vsub.f32 %v412, %v6655
        %v6657 = vand.u32 %v6656, 4294901760
        %v6658 = vsub.f32 %v6656, %v6657
        %v6659 = vand.u32 %v6658, 4294901760
        %6660 = vmatpush.msra.mxu0 %v6659
        %v6661 = vand.u32 %v410, 4294901760
        %v6662 = vsub.f32 %v410, %v6661
        %v6663 = vand.u32 %v6662, 4294901760
        %v6664 = vsub.f32 %v6662, %v6663
        %v6665 = vand.u32 %v6664, 4294901760
        %6666 = vmatpush.msra.mxu0 %v6665
        %v6667 = vand.u32 %v2700, 4294901760
        %6668 = vmatmul.f32.gmra.mxu0 %v6667
        %v6669 = vpop.f32.mrf.mxu0
        %v6670 = vadd.f32 %v6639, %v6669
        %6671 = vdwg.mxu0
        %6672 = vmatpush.msra.mxu0 0.0
        %6673 = vmatpush.msra.mxu0 0.0
        %6674 = vmatpush.msra.mxu0 0.0
        %6675 = vmatpush.msra.mxu0 0.0
        %6676 = vmatpush.msra.mxu0 0.0
        %6677 = vmatpush.msra.mxu0 0.0
        %6678 = vmatpush.msra.mxu0 0.0
        %6679 = vmatpush.msra.mxu0 0.0
        %6680 = vmatpush.msra.mxu0 0.0
        %6681 = vmatpush.msra.mxu0 0.0
        %6682 = vmatpush.msra.mxu0 0.0
        %6683 = vmatpush.msra.mxu0 0.0
        %6684 = vmatpush.msra.mxu0 0.0
        %6685 = vmatpush.msra.mxu0 0.0
        %v6686 = vand.u32 %v412, 4294901760
        %v6687 = vsub.f32 %v412, %v6686
        %6688 = vmatpush.msra.mxu0 %v6687
        %v6689 = vand.u32 %v410, 4294901760
        %v6690 = vsub.f32 %v410, %v6689
        %6691 = vmatpush.msra.mxu0 %v6690
        %v6692 = vand.u32 %v2700, 4294901760
        %v6693 = vsub.f32 %v2700, %v6692
        %6694 = vmatmul.f32.gmra.mxu0 %v6693
        %v6695 = vpop.f32.mrf.mxu0
        %v6696 = vadd.f32 %v6670, %v6695
        %6697 = vdwg.mxu0
        %6698 = vmatpush.msra.mxu0 0.0
        %6699 = vmatpush.msra.mxu0 0.0
        %6700 = vmatpush.msra.mxu0 0.0
        %6701 = vmatpush.msra.mxu0 0.0
        %6702 = vmatpush.msra.mxu0 0.0
        %6703 = vmatpush.msra.mxu0 0.0
        %6704 = vmatpush.msra.mxu0 0.0
        %6705 = vmatpush.msra.mxu0 0.0
        %6706 = vmatpush.msra.mxu0 0.0
        %6707 = vmatpush.msra.mxu0 0.0
        %6708 = vmatpush.msra.mxu0 0.0
        %6709 = vmatpush.msra.mxu0 0.0
        %6710 = vmatpush.msra.mxu0 0.0
        %6711 = vmatpush.msra.mxu0 0.0
        %v6712 = vand.u32 %v412, 4294901760
        %6713 = vmatpush.msra.mxu0 %v6712
        %v6714 = vand.u32 %v410, 4294901760
        %6715 = vmatpush.msra.mxu0 %v6714
        %v6716 = vand.u32 %v2700, 4294901760
        %v6717 = vsub.f32 %v2700, %v6716
        %v6718 = vand.u32 %v6717, 4294901760
        %6719 = vmatmul.f32.gmra.mxu0 %v6718
        %v6720 = vpop.f32.mrf.mxu0
        %v6721 = vadd.f32 %v6696, %v6720
        %6722 = vdwg.mxu0
        %6723 = vmatpush.msra.mxu0 0.0
        %6724 = vmatpush.msra.mxu0 0.0
        %6725 = vmatpush.msra.mxu0 0.0
        %6726 = vmatpush.msra.mxu0 0.0
        %6727 = vmatpush.msra.mxu0 0.0
        %6728 = vmatpush.msra.mxu0 0.0
        %6729 = vmatpush.msra.mxu0 0.0
        %6730 = vmatpush.msra.mxu0 0.0
        %6731 = vmatpush.msra.mxu0 0.0
        %6732 = vmatpush.msra.mxu0 0.0
        %6733 = vmatpush.msra.mxu0 0.0
        %6734 = vmatpush.msra.mxu0 0.0
        %6735 = vmatpush.msra.mxu0 0.0
        %6736 = vmatpush.msra.mxu0 0.0
        %v6737 = vand.u32 %v412, 4294901760
        %v6738 = vsub.f32 %v412, %v6737
        %v6739 = vand.u32 %v6738, 4294901760
        %6740 = vmatpush.msra.mxu0 %v6739
        %v6741 = vand.u32 %v410, 4294901760
        %v6742 = vsub.f32 %v410, %v6741
        %v6743 = vand.u32 %v6742, 4294901760
        %6744 = vmatpush.msra.mxu0 %v6743
        %v6745 = vand.u32 %v2700, 4294901760
        %6746 = vmatmul.f32.gmra.mxu0 %v6745
        %v6747 = vpop.f32.mrf.mxu0
        %v6748 = vadd.f32 %v6721, %v6747
        %6749 = vdwg.mxu0
        %6750 = vmatpush.msra.mxu0 0.0
        %6751 = vmatpush.msra.mxu0 0.0
        %6752 = vmatpush.msra.mxu0 0.0
        %6753 = vmatpush.msra.mxu0 0.0
        %6754 = vmatpush.msra.mxu0 0.0
        %6755 = vmatpush.msra.mxu0 0.0
        %6756 = vmatpush.msra.mxu0 0.0
        %6757 = vmatpush.msra.mxu0 0.0
        %6758 = vmatpush.msra.mxu0 0.0
        %6759 = vmatpush.msra.mxu0 0.0
        %6760 = vmatpush.msra.mxu0 0.0
        %6761 = vmatpush.msra.mxu0 0.0
        %6762 = vmatpush.msra.mxu0 0.0
        %6763 = vmatpush.msra.mxu0 0.0
        %v6764 = vand.u32 %v412, 4294901760
        %6765 = vmatpush.msra.mxu0 %v6764
        %v6766 = vand.u32 %v410, 4294901760
        %6767 = vmatpush.msra.mxu0 %v6766
        %v6768 = vand.u32 %v2700, 4294901760
        %6769 = vmatmul.f32.gmra.mxu0 %v6768
        %v6770 = vpop.f32.mrf.mxu0
        %v6771 = vadd.f32 %v6748, %v6770
        %6772 = vdwg.mxu0
        %6773 = vmatpush.msra.mxu0 0.0
        %6774 = vmatpush.msra.mxu0 0.0
        %6775 = vmatpush.msra.mxu0 0.0
        %6776 = vmatpush.msra.mxu0 0.0
        %6777 = vmatpush.msra.mxu0 0.0
        %6778 = vmatpush.msra.mxu0 0.0
        %6779 = vmatpush.msra.mxu0 0.0
        %6780 = vmatpush.msra.mxu0 0.0
        %6781 = vmatpush.msra.mxu0 0.0
        %6782 = vmatpush.msra.mxu0 0.0
        %6783 = vmatpush.msra.mxu0 0.0
        %6784 = vmatpush.msra.mxu0 0.0
        %6785 = vmatpush.msra.mxu0 0.0
        %6786 = vmatpush.msra.mxu0 0.0
        %v6787 = vand.u32 %v450, 4294901760
        %6788 = vmatpush.msra.mxu0 %v6787
        %v6789 = vand.u32 %v448, 4294901760
        %6790 = vmatpush.msra.mxu0 %v6789
        %v6791 = vand.u32 %v2700, 4294901760
        %v6792 = vsub.f32 %v2700, %v6791
        %v6793 = vand.u32 %v6792, 4294901760
        %v6794 = vsub.f32 %v6792, %v6793
        %v6795 = vand.u32 %v6794, 4294901760
        %6796 = vmatmul.f32.gmra.mxu0 %v6795
        %v6797 = vpop.f32.mrf.mxu0
        %v6798 = vadd.f32 0.0, %v6797
        %6799 = vdwg.mxu0
        %6800 = vmatpush.msra.mxu0 0.0
        %6801 = vmatpush.msra.mxu0 0.0
        %6802 = vmatpush.msra.mxu0 0.0
        %6803 = vmatpush.msra.mxu0 0.0
        %6804 = vmatpush.msra.mxu0 0.0
        %6805 = vmatpush.msra.mxu0 0.0
        %6806 = vmatpush.msra.mxu0 0.0
        %6807 = vmatpush.msra.mxu0 0.0
        %6808 = vmatpush.msra.mxu0 0.0
        %6809 = vmatpush.msra.mxu0 0.0
        %6810 = vmatpush.msra.mxu0 0.0
        %6811 = vmatpush.msra.mxu0 0.0
        %6812 = vmatpush.msra.mxu0 0.0
        %6813 = vmatpush.msra.mxu0 0.0
        %v6814 = vand.u32 %v450, 4294901760
        %v6815 = vsub.f32 %v450, %v6814
        %v6816 = vand.u32 %v6815, 4294901760
        %v6817 = vsub.f32 %v6815, %v6816
        %v6818 = vand.u32 %v6817, 4294901760
        %6819 = vmatpush.msra.mxu0 %v6818
        %v6820 = vand.u32 %v448, 4294901760
        %v6821 = vsub.f32 %v448, %v6820
        %v6822 = vand.u32 %v6821, 4294901760
        %v6823 = vsub.f32 %v6821, %v6822
        %v6824 = vand.u32 %v6823, 4294901760
        %6825 = vmatpush.msra.mxu0 %v6824
        %v6826 = vand.u32 %v2700, 4294901760
        %6827 = vmatmul.f32.gmra.mxu0 %v6826
        %v6828 = vpop.f32.mrf.mxu0
        %v6829 = vadd.f32 %v6798, %v6828
        %6830 = vdwg.mxu0
        %6831 = vmatpush.msra.mxu0 0.0
        %6832 = vmatpush.msra.mxu0 0.0
        %6833 = vmatpush.msra.mxu0 0.0
        %6834 = vmatpush.msra.mxu0 0.0
        %6835 = vmatpush.msra.mxu0 0.0
        %6836 = vmatpush.msra.mxu0 0.0
        %6837 = vmatpush.msra.mxu0 0.0
        %6838 = vmatpush.msra.mxu0 0.0
        %6839 = vmatpush.msra.mxu0 0.0
        %6840 = vmatpush.msra.mxu0 0.0
        %6841 = vmatpush.msra.mxu0 0.0
        %6842 = vmatpush.msra.mxu0 0.0
        %6843 = vmatpush.msra.mxu0 0.0
        %6844 = vmatpush.msra.mxu0 0.0
        %v6845 = vand.u32 %v450, 4294901760
        %v6846 = vsub.f32 %v450, %v6845
        %6847 = vmatpush.msra.mxu0 %v6846
        %v6848 = vand.u32 %v448, 4294901760
        %v6849 = vsub.f32 %v448, %v6848
        %6850 = vmatpush.msra.mxu0 %v6849
        %v6851 = vand.u32 %v2700, 4294901760
        %v6852 = vsub.f32 %v2700, %v6851
        %6853 = vmatmul.f32.gmra.mxu0 %v6852
        %v6854 = vpop.f32.mrf.mxu0
        %v6855 = vadd.f32 %v6829, %v6854
        %6856 = vdwg.mxu0
        %6857 = vmatpush.msra.mxu0 0.0
        %6858 = vmatpush.msra.mxu0 0.0
        %6859 = vmatpush.msra.mxu0 0.0
        %6860 = vmatpush.msra.mxu0 0.0
        %6861 = vmatpush.msra.mxu0 0.0
        %6862 = vmatpush.msra.mxu0 0.0
        %6863 = vmatpush.msra.mxu0 0.0
        %6864 = vmatpush.msra.mxu0 0.0
        %6865 = vmatpush.msra.mxu0 0.0
        %6866 = vmatpush.msra.mxu0 0.0
        %6867 = vmatpush.msra.mxu0 0.0
        %6868 = vmatpush.msra.mxu0 0.0
        %6869 = vmatpush.msra.mxu0 0.0
        %6870 = vmatpush.msra.mxu0 0.0
        %v6871 = vand.u32 %v450, 4294901760
        %6872 = vmatpush.msra.mxu0 %v6871
        %v6873 = vand.u32 %v448, 4294901760
        %6874 = vmatpush.msra.mxu0 %v6873
        %v6875 = vand.u32 %v2700, 4294901760
        %v6876 = vsub.f32 %v2700, %v6875
        %v6877 = vand.u32 %v6876, 4294901760
        %6878 = vmatmul.f32.gmra.mxu0 %v6877
        %v6879 = vpop.f32.mrf.mxu0
        %v6880 = vadd.f32 %v6855, %v6879
        %6881 = vdwg.mxu0
        %6882 = vmatpush.msra.mxu0 0.0
        %6883 = vmatpush.msra.mxu0 0.0
        %6884 = vmatpush.msra.mxu0 0.0
        %6885 = vmatpush.msra.mxu0 0.0
        %6886 = vmatpush.msra.mxu0 0.0
        %6887 = vmatpush.msra.mxu0 0.0
        %6888 = vmatpush.msra.mxu0 0.0
        %6889 = vmatpush.msra.mxu0 0.0
        %6890 = vmatpush.msra.mxu0 0.0
        %6891 = vmatpush.msra.mxu0 0.0
        %6892 = vmatpush.msra.mxu0 0.0
        %6893 = vmatpush.msra.mxu0 0.0
        %6894 = vmatpush.msra.mxu0 0.0
        %6895 = vmatpush.msra.mxu0 0.0
        %v6896 = vand.u32 %v450, 4294901760
        %v6897 = vsub.f32 %v450, %v6896
        %v6898 = vand.u32 %v6897, 4294901760
        %6899 = vmatpush.msra.mxu0 %v6898
        %v6900 = vand.u32 %v448, 4294901760
        %v6901 = vsub.f32 %v448, %v6900
        %v6902 = vand.u32 %v6901, 4294901760
        %6903 = vmatpush.msra.mxu0 %v6902
        %v6904 = vand.u32 %v2700, 4294901760
        %6905 = vmatmul.f32.gmra.mxu0 %v6904
        %v6906 = vpop.f32.mrf.mxu0
        %v6907 = vadd.f32 %v6880, %v6906
        %6908 = vdwg.mxu0
        %6909 = vmatpush.msra.mxu0 0.0
        %6910 = vmatpush.msra.mxu0 0.0
        %6911 = vmatpush.msra.mxu0 0.0
        %6912 = vmatpush.msra.mxu0 0.0
        %6913 = vmatpush.msra.mxu0 0.0
        %6914 = vmatpush.msra.mxu0 0.0
        %6915 = vmatpush.msra.mxu0 0.0
        %6916 = vmatpush.msra.mxu0 0.0
        %6917 = vmatpush.msra.mxu0 0.0
        %6918 = vmatpush.msra.mxu0 0.0
        %6919 = vmatpush.msra.mxu0 0.0
        %6920 = vmatpush.msra.mxu0 0.0
        %6921 = vmatpush.msra.mxu0 0.0
        %6922 = vmatpush.msra.mxu0 0.0
        %v6923 = vand.u32 %v450, 4294901760
        %6924 = vmatpush.msra.mxu0 %v6923
        %v6925 = vand.u32 %v448, 4294901760
        %6926 = vmatpush.msra.mxu0 %v6925
        %v6927 = vand.u32 %v2700, 4294901760
        %6928 = vmatmul.f32.gmra.mxu0 %v6927
        %v6929 = vpop.f32.mrf.mxu0
        %v6930 = vadd.f32 %v6907, %v6929
        %6931 = vdwg.mxu0
        %6932 = vmatpush.msra.mxu0 0.0
        %6933 = vmatpush.msra.mxu0 0.0
        %6934 = vmatpush.msra.mxu0 0.0
        %6935 = vmatpush.msra.mxu0 0.0
        %6936 = vmatpush.msra.mxu0 0.0
        %6937 = vmatpush.msra.mxu0 0.0
        %6938 = vmatpush.msra.mxu0 0.0
        %6939 = vmatpush.msra.mxu0 0.0
        %6940 = vmatpush.msra.mxu0 0.0
        %6941 = vmatpush.msra.mxu0 0.0
        %6942 = vmatpush.msra.mxu0 0.0
        %6943 = vmatpush.msra.mxu0 0.0
        %6944 = vmatpush.msra.mxu0 0.0
        %6945 = vmatpush.msra.mxu0 0.0
        %v6946 = vand.u32 %v508, 4294901760
        %6947 = vmatpush.msra.mxu0 %v6946
        %v6948 = vand.u32 %v506, 4294901760
        %6949 = vmatpush.msra.mxu0 %v6948
        %v6950 = vand.u32 %v3053, 4294901760
        %v6951 = vsub.f32 %v3053, %v6950
        %v6952 = vand.u32 %v6951, 4294901760
        %v6953 = vsub.f32 %v6951, %v6952
        %v6954 = vand.u32 %v6953, 4294901760
        %6955 = vmatmul.f32.gmra.mxu0 %v6954
        %v6956 = vpop.f32.mrf.mxu0
        %v6957 = vadd.f32 0.0, %v6956
        %6958 = vdwg.mxu0
        %6959 = vmatpush.msra.mxu0 0.0
        %6960 = vmatpush.msra.mxu0 0.0
        %6961 = vmatpush.msra.mxu0 0.0
        %6962 = vmatpush.msra.mxu0 0.0
        %6963 = vmatpush.msra.mxu0 0.0
        %6964 = vmatpush.msra.mxu0 0.0
        %6965 = vmatpush.msra.mxu0 0.0
        %6966 = vmatpush.msra.mxu0 0.0
        %6967 = vmatpush.msra.mxu0 0.0
        %6968 = vmatpush.msra.mxu0 0.0
        %6969 = vmatpush.msra.mxu0 0.0
        %6970 = vmatpush.msra.mxu0 0.0
        %6971 = vmatpush.msra.mxu0 0.0
        %6972 = vmatpush.msra.mxu0 0.0
        %v6973 = vand.u32 %v508, 4294901760
        %v6974 = vsub.f32 %v508, %v6973
        %v6975 = vand.u32 %v6974, 4294901760
        %v6976 = vsub.f32 %v6974, %v6975
        %v6977 = vand.u32 %v6976, 4294901760
        %6978 = vmatpush.msra.mxu0 %v6977
        %v6979 = vand.u32 %v506, 4294901760
        %v6980 = vsub.f32 %v506, %v6979
        %v6981 = vand.u32 %v6980, 4294901760
        %v6982 = vsub.f32 %v6980, %v6981
        %v6983 = vand.u32 %v6982, 4294901760
        %6984 = vmatpush.msra.mxu0 %v6983
        %v6985 = vand.u32 %v3053, 4294901760
        %6986 = vmatmul.f32.gmra.mxu0 %v6985
        %v6987 = vpop.f32.mrf.mxu0
        %v6988 = vadd.f32 %v6957, %v6987
        %6989 = vdwg.mxu0
        %6990 = vmatpush.msra.mxu0 0.0
        %6991 = vmatpush.msra.mxu0 0.0
        %6992 = vmatpush.msra.mxu0 0.0
        %6993 = vmatpush.msra.mxu0 0.0
        %6994 = vmatpush.msra.mxu0 0.0
        %6995 = vmatpush.msra.mxu0 0.0
        %6996 = vmatpush.msra.mxu0 0.0
        %6997 = vmatpush.msra.mxu0 0.0
        %6998 = vmatpush.msra.mxu0 0.0
        %6999 = vmatpush.msra.mxu0 0.0
        %7000 = vmatpush.msra.mxu0 0.0
        %7001 = vmatpush.msra.mxu0 0.0
        %7002 = vmatpush.msra.mxu0 0.0
        %7003 = vmatpush.msra.mxu0 0.0
        %v7004 = vand.u32 %v508, 4294901760
        %v7005 = vsub.f32 %v508, %v7004
        %7006 = vmatpush.msra.mxu0 %v7005
        %v7007 = vand.u32 %v506, 4294901760
        %v7008 = vsub.f32 %v506, %v7007
        %7009 = vmatpush.msra.mxu0 %v7008
        %v7010 = vand.u32 %v3053, 4294901760
        %v7011 = vsub.f32 %v3053, %v7010
        %7012 = vmatmul.f32.gmra.mxu0 %v7011
        %v7013 = vpop.f32.mrf.mxu0
        %v7014 = vadd.f32 %v6988, %v7013
        %7015 = vdwg.mxu0
        %7016 = vmatpush.msra.mxu0 0.0
        %7017 = vmatpush.msra.mxu0 0.0
        %7018 = vmatpush.msra.mxu0 0.0
        %7019 = vmatpush.msra.mxu0 0.0
        %7020 = vmatpush.msra.mxu0 0.0
        %7021 = vmatpush.msra.mxu0 0.0
        %7022 = vmatpush.msra.mxu0 0.0
        %7023 = vmatpush.msra.mxu0 0.0
        %7024 = vmatpush.msra.mxu0 0.0
        %7025 = vmatpush.msra.mxu0 0.0
        %7026 = vmatpush.msra.mxu0 0.0
        %7027 = vmatpush.msra.mxu0 0.0
        %7028 = vmatpush.msra.mxu0 0.0
        %7029 = vmatpush.msra.mxu0 0.0
        %v7030 = vand.u32 %v508, 4294901760
        %7031 = vmatpush.msra.mxu0 %v7030
        %v7032 = vand.u32 %v506, 4294901760
        %7033 = vmatpush.msra.mxu0 %v7032
        %v7034 = vand.u32 %v3053, 4294901760
        %v7035 = vsub.f32 %v3053, %v7034
        %v7036 = vand.u32 %v7035, 4294901760
        %7037 = vmatmul.f32.gmra.mxu0 %v7036
        %v7038 = vpop.f32.mrf.mxu0
        %v7039 = vadd.f32 %v7014, %v7038
        %7040 = vdwg.mxu0
        %7041 = vmatpush.msra.mxu0 0.0
        %7042 = vmatpush.msra.mxu0 0.0
        %7043 = vmatpush.msra.mxu0 0.0
        %7044 = vmatpush.msra.mxu0 0.0
        %7045 = vmatpush.msra.mxu0 0.0
        %7046 = vmatpush.msra.mxu0 0.0
        %7047 = vmatpush.msra.mxu0 0.0
        %7048 = vmatpush.msra.mxu0 0.0
        %7049 = vmatpush.msra.mxu0 0.0
        %7050 = vmatpush.msra.mxu0 0.0
        %7051 = vmatpush.msra.mxu0 0.0
        %7052 = vmatpush.msra.mxu0 0.0
        %7053 = vmatpush.msra.mxu0 0.0
        %7054 = vmatpush.msra.mxu0 0.0
        %v7055 = vand.u32 %v508, 4294901760
        %v7056 = vsub.f32 %v508, %v7055
        %v7057 = vand.u32 %v7056, 4294901760
        %7058 = vmatpush.msra.mxu0 %v7057
        %v7059 = vand.u32 %v506, 4294901760
        %v7060 = vsub.f32 %v506, %v7059
        %v7061 = vand.u32 %v7060, 4294901760
        %7062 = vmatpush.msra.mxu0 %v7061
        %v7063 = vand.u32 %v3053, 4294901760
        %7064 = vmatmul.f32.gmra.mxu0 %v7063
        %v7065 = vpop.f32.mrf.mxu0
        %v7066 = vadd.f32 %v7039, %v7065
        %7067 = vdwg.mxu0
        %7068 = vmatpush.msra.mxu0 0.0
        %7069 = vmatpush.msra.mxu0 0.0
        %7070 = vmatpush.msra.mxu0 0.0
        %7071 = vmatpush.msra.mxu0 0.0
        %7072 = vmatpush.msra.mxu0 0.0
        %7073 = vmatpush.msra.mxu0 0.0
        %7074 = vmatpush.msra.mxu0 0.0
        %7075 = vmatpush.msra.mxu0 0.0
        %7076 = vmatpush.msra.mxu0 0.0
        %7077 = vmatpush.msra.mxu0 0.0
        %7078 = vmatpush.msra.mxu0 0.0
        %7079 = vmatpush.msra.mxu0 0.0
        %7080 = vmatpush.msra.mxu0 0.0
        %7081 = vmatpush.msra.mxu0 0.0
        %v7082 = vand.u32 %v508, 4294901760
        %7083 = vmatpush.msra.mxu0 %v7082
        %v7084 = vand.u32 %v506, 4294901760
        %7085 = vmatpush.msra.mxu0 %v7084
        %v7086 = vand.u32 %v3053, 4294901760
        %7087 = vmatmul.f32.gmra.mxu0 %v7086
        %v7088 = vpop.f32.mrf.mxu0
        %v7089 = vadd.f32 %v7066, %v7088
        %7090 = vdwg.mxu0
        %7091 = vmatpush.msra.mxu0 0.0
        %7092 = vmatpush.msra.mxu0 0.0
        %7093 = vmatpush.msra.mxu0 0.0
        %7094 = vmatpush.msra.mxu0 0.0
        %7095 = vmatpush.msra.mxu0 0.0
        %7096 = vmatpush.msra.mxu0 0.0
        %7097 = vmatpush.msra.mxu0 0.0
        %7098 = vmatpush.msra.mxu0 0.0
        %7099 = vmatpush.msra.mxu0 0.0
        %7100 = vmatpush.msra.mxu0 0.0
        %7101 = vmatpush.msra.mxu0 0.0
        %7102 = vmatpush.msra.mxu0 0.0
        %7103 = vmatpush.msra.mxu0 0.0
        %7104 = vmatpush.msra.mxu0 0.0
        %v7105 = vand.u32 %v546, 4294901760
        %7106 = vmatpush.msra.mxu0 %v7105
        %v7107 = vand.u32 %v544, 4294901760
        %7108 = vmatpush.msra.mxu0 %v7107
        %v7109 = vand.u32 %v3053, 4294901760
        %v7110 = vsub.f32 %v3053, %v7109
        %v7111 = vand.u32 %v7110, 4294901760
        %v7112 = vsub.f32 %v7110, %v7111
        %v7113 = vand.u32 %v7112, 4294901760
        %7114 = vmatmul.f32.gmra.mxu0 %v7113
        %v7115 = vpop.f32.mrf.mxu0
        %v7116 = vadd.f32 0.0, %v7115
        %7117 = vdwg.mxu0
        %7118 = vmatpush.msra.mxu0 0.0
        %7119 = vmatpush.msra.mxu0 0.0
        %7120 = vmatpush.msra.mxu0 0.0
        %7121 = vmatpush.msra.mxu0 0.0
        %7122 = vmatpush.msra.mxu0 0.0
        %7123 = vmatpush.msra.mxu0 0.0
        %7124 = vmatpush.msra.mxu0 0.0
        %7125 = vmatpush.msra.mxu0 0.0
        %7126 = vmatpush.msra.mxu0 0.0
        %7127 = vmatpush.msra.mxu0 0.0
        %7128 = vmatpush.msra.mxu0 0.0
        %7129 = vmatpush.msra.mxu0 0.0
        %7130 = vmatpush.msra.mxu0 0.0
        %7131 = vmatpush.msra.mxu0 0.0
        %v7132 = vand.u32 %v546, 4294901760
        %v7133 = vsub.f32 %v546, %v7132
        %v7134 = vand.u32 %v7133, 4294901760
        %v7135 = vsub.f32 %v7133, %v7134
        %v7136 = vand.u32 %v7135, 4294901760
        %7137 = vmatpush.msra.mxu0 %v7136
        %v7138 = vand.u32 %v544, 4294901760
        %v7139 = vsub.f32 %v544, %v7138
        %v7140 = vand.u32 %v7139, 4294901760
        %v7141 = vsub.f32 %v7139, %v7140
        %v7142 = vand.u32 %v7141, 4294901760
        %7143 = vmatpush.msra.mxu0 %v7142
        %v7144 = vand.u32 %v3053, 4294901760
        %7145 = vmatmul.f32.gmra.mxu0 %v7144
        %v7146 = vpop.f32.mrf.mxu0
        %v7147 = vadd.f32 %v7116, %v7146
        %7148 = vdwg.mxu0
        %7149 = vmatpush.msra.mxu0 0.0
        %7150 = vmatpush.msra.mxu0 0.0
        %7151 = vmatpush.msra.mxu0 0.0
        %7152 = vmatpush.msra.mxu0 0.0
        %7153 = vmatpush.msra.mxu0 0.0
        %7154 = vmatpush.msra.mxu0 0.0
        %7155 = vmatpush.msra.mxu0 0.0
        %7156 = vmatpush.msra.mxu0 0.0
        %7157 = vmatpush.msra.mxu0 0.0
        %7158 = vmatpush.msra.mxu0 0.0
        %7159 = vmatpush.msra.mxu0 0.0
        %7160 = vmatpush.msra.mxu0 0.0
        %7161 = vmatpush.msra.mxu0 0.0
        %7162 = vmatpush.msra.mxu0 0.0
        %v7163 = vand.u32 %v546, 4294901760
        %v7164 = vsub.f32 %v546, %v7163
        %7165 = vmatpush.msra.mxu0 %v7164
        %v7166 = vand.u32 %v544, 4294901760
        %v7167 = vsub.f32 %v544, %v7166
        %7168 = vmatpush.msra.mxu0 %v7167
        %v7169 = vand.u32 %v3053, 4294901760
        %v7170 = vsub.f32 %v3053, %v7169
        %7171 = vmatmul.f32.gmra.mxu0 %v7170
        %v7172 = vpop.f32.mrf.mxu0
        %v7173 = vadd.f32 %v7147, %v7172
        %7174 = vdwg.mxu0
        %7175 = vmatpush.msra.mxu0 0.0
        %7176 = vmatpush.msra.mxu0 0.0
        %7177 = vmatpush.msra.mxu0 0.0
        %7178 = vmatpush.msra.mxu0 0.0
        %7179 = vmatpush.msra.mxu0 0.0
        %7180 = vmatpush.msra.mxu0 0.0
        %7181 = vmatpush.msra.mxu0 0.0
        %7182 = vmatpush.msra.mxu0 0.0
        %7183 = vmatpush.msra.mxu0 0.0
        %7184 = vmatpush.msra.mxu0 0.0
        %7185 = vmatpush.msra.mxu0 0.0
        %7186 = vmatpush.msra.mxu0 0.0
        %7187 = vmatpush.msra.mxu0 0.0
        %7188 = vmatpush.msra.mxu0 0.0
        %v7189 = vand.u32 %v546, 4294901760
        %7190 = vmatpush.msra.mxu0 %v7189
        %v7191 = vand.u32 %v544, 4294901760
        %7192 = vmatpush.msra.mxu0 %v7191
        %v7193 = vand.u32 %v3053, 4294901760
        %v7194 = vsub.f32 %v3053, %v7193
        %v7195 = vand.u32 %v7194, 4294901760
        %7196 = vmatmul.f32.gmra.mxu0 %v7195
        %v7197 = vpop.f32.mrf.mxu0
        %v7198 = vadd.f32 %v7173, %v7197
        %7199 = vdwg.mxu0
        %7200 = vmatpush.msra.mxu0 0.0
        %7201 = vmatpush.msra.mxu0 0.0
        %7202 = vmatpush.msra.mxu0 0.0
        %7203 = vmatpush.msra.mxu0 0.0
        %7204 = vmatpush.msra.mxu0 0.0
        %7205 = vmatpush.msra.mxu0 0.0
        %7206 = vmatpush.msra.mxu0 0.0
        %7207 = vmatpush.msra.mxu0 0.0
        %7208 = vmatpush.msra.mxu0 0.0
        %7209 = vmatpush.msra.mxu0 0.0
        %7210 = vmatpush.msra.mxu0 0.0
        %7211 = vmatpush.msra.mxu0 0.0
        %7212 = vmatpush.msra.mxu0 0.0
        %7213 = vmatpush.msra.mxu0 0.0
        %v7214 = vand.u32 %v546, 4294901760
        %v7215 = vsub.f32 %v546, %v7214
        %v7216 = vand.u32 %v7215, 4294901760
        %7217 = vmatpush.msra.mxu0 %v7216
        %v7218 = vand.u32 %v544, 4294901760
        %v7219 = vsub.f32 %v544, %v7218
        %v7220 = vand.u32 %v7219, 4294901760
        %7221 = vmatpush.msra.mxu0 %v7220
        %v7222 = vand.u32 %v3053, 4294901760
        %7223 = vmatmul.f32.gmra.mxu0 %v7222
        %v7224 = vpop.f32.mrf.mxu0
        %v7225 = vadd.f32 %v7198, %v7224
        %7226 = vdwg.mxu0
        %7227 = vmatpush.msra.mxu0 0.0
        %7228 = vmatpush.msra.mxu0 0.0
        %7229 = vmatpush.msra.mxu0 0.0
        %7230 = vmatpush.msra.mxu0 0.0
        %7231 = vmatpush.msra.mxu0 0.0
        %7232 = vmatpush.msra.mxu0 0.0
        %7233 = vmatpush.msra.mxu0 0.0
        %7234 = vmatpush.msra.mxu0 0.0
        %7235 = vmatpush.msra.mxu0 0.0
        %7236 = vmatpush.msra.mxu0 0.0
        %7237 = vmatpush.msra.mxu0 0.0
        %7238 = vmatpush.msra.mxu0 0.0
        %7239 = vmatpush.msra.mxu0 0.0
        %7240 = vmatpush.msra.mxu0 0.0
        %v7241 = vand.u32 %v546, 4294901760
        %7242 = vmatpush.msra.mxu0 %v7241
        %v7243 = vand.u32 %v544, 4294901760
        %7244 = vmatpush.msra.mxu0 %v7243
        %v7245 = vand.u32 %v3053, 4294901760
        %7246 = vmatmul.f32.gmra.mxu0 %v7245
        %v7247 = vpop.f32.mrf.mxu0
        %v7248 = vadd.f32 %v7225, %v7247
        %7249 = vdwg.mxu0
        %7250 = vmatpush.msra.mxu0 0.0
        %7251 = vmatpush.msra.mxu0 0.0
        %7252 = vmatpush.msra.mxu0 0.0
        %7253 = vmatpush.msra.mxu0 0.0
        %7254 = vmatpush.msra.mxu0 0.0
        %7255 = vmatpush.msra.mxu0 0.0
        %7256 = vmatpush.msra.mxu0 0.0
        %7257 = vmatpush.msra.mxu0 0.0
        %7258 = vmatpush.msra.mxu0 0.0
        %7259 = vmatpush.msra.mxu0 0.0
        %7260 = vmatpush.msra.mxu0 0.0
        %7261 = vmatpush.msra.mxu0 0.0
        %7262 = vmatpush.msra.mxu0 0.0
        %7263 = vmatpush.msra.mxu0 0.0
        %v7264 = vand.u32 %v604, 4294901760
        %7265 = vmatpush.msra.mxu0 %v7264
        %v7266 = vand.u32 %v602, 4294901760
        %7267 = vmatpush.msra.mxu0 %v7266
        %v7268 = vand.u32 %v3406, 4294901760
        %v7269 = vsub.f32 %v3406, %v7268
        %v7270 = vand.u32 %v7269, 4294901760
        %v7271 = vsub.f32 %v7269, %v7270
        %v7272 = vand.u32 %v7271, 4294901760
        %7273 = vmatmul.f32.gmra.mxu0 %v7272
        %v7274 = vpop.f32.mrf.mxu0
        %v7275 = vadd.f32 0.0, %v7274
        %7276 = vdwg.mxu0
        %7277 = vmatpush.msra.mxu0 0.0
        %7278 = vmatpush.msra.mxu0 0.0
        %7279 = vmatpush.msra.mxu0 0.0
        %7280 = vmatpush.msra.mxu0 0.0
        %7281 = vmatpush.msra.mxu0 0.0
        %7282 = vmatpush.msra.mxu0 0.0
        %7283 = vmatpush.msra.mxu0 0.0
        %7284 = vmatpush.msra.mxu0 0.0
        %7285 = vmatpush.msra.mxu0 0.0
        %7286 = vmatpush.msra.mxu0 0.0
        %7287 = vmatpush.msra.mxu0 0.0
        %7288 = vmatpush.msra.mxu0 0.0
        %7289 = vmatpush.msra.mxu0 0.0
        %7290 = vmatpush.msra.mxu0 0.0
        %v7291 = vand.u32 %v604, 4294901760
        %v7292 = vsub.f32 %v604, %v7291
        %v7293 = vand.u32 %v7292, 4294901760
        %v7294 = vsub.f32 %v7292, %v7293
        %v7295 = vand.u32 %v7294, 4294901760
        %7296 = vmatpush.msra.mxu0 %v7295
        %v7297 = vand.u32 %v602, 4294901760
        %v7298 = vsub.f32 %v602, %v7297
        %v7299 = vand.u32 %v7298, 4294901760
        %v7300 = vsub.f32 %v7298, %v7299
        %v7301 = vand.u32 %v7300, 4294901760
        %7302 = vmatpush.msra.mxu0 %v7301
        %v7303 = vand.u32 %v3406, 4294901760
        %7304 = vmatmul.f32.gmra.mxu0 %v7303
        %v7305 = vpop.f32.mrf.mxu0
        %v7306 = vadd.f32 %v7275, %v7305
        %7307 = vdwg.mxu0
        %7308 = vmatpush.msra.mxu0 0.0
        %7309 = vmatpush.msra.mxu0 0.0
        %7310 = vmatpush.msra.mxu0 0.0
        %7311 = vmatpush.msra.mxu0 0.0
        %7312 = vmatpush.msra.mxu0 0.0
        %7313 = vmatpush.msra.mxu0 0.0
        %7314 = vmatpush.msra.mxu0 0.0
        %7315 = vmatpush.msra.mxu0 0.0
        %7316 = vmatpush.msra.mxu0 0.0
        %7317 = vmatpush.msra.mxu0 0.0
        %7318 = vmatpush.msra.mxu0 0.0
        %7319 = vmatpush.msra.mxu0 0.0
        %7320 = vmatpush.msra.mxu0 0.0
        %7321 = vmatpush.msra.mxu0 0.0
        %v7322 = vand.u32 %v604, 4294901760
        %v7323 = vsub.f32 %v604, %v7322
        %7324 = vmatpush.msra.mxu0 %v7323
        %v7325 = vand.u32 %v602, 4294901760
        %v7326 = vsub.f32 %v602, %v7325
        %7327 = vmatpush.msra.mxu0 %v7326
        %v7328 = vand.u32 %v3406, 4294901760
        %v7329 = vsub.f32 %v3406, %v7328
        %7330 = vmatmul.f32.gmra.mxu0 %v7329
        %v7331 = vpop.f32.mrf.mxu0
        %v7332 = vadd.f32 %v7306, %v7331
        %7333 = vdwg.mxu0
        %7334 = vmatpush.msra.mxu0 0.0
        %7335 = vmatpush.msra.mxu0 0.0
        %7336 = vmatpush.msra.mxu0 0.0
        %7337 = vmatpush.msra.mxu0 0.0
        %7338 = vmatpush.msra.mxu0 0.0
        %7339 = vmatpush.msra.mxu0 0.0
        %7340 = vmatpush.msra.mxu0 0.0
        %7341 = vmatpush.msra.mxu0 0.0
        %7342 = vmatpush.msra.mxu0 0.0
        %7343 = vmatpush.msra.mxu0 0.0
        %7344 = vmatpush.msra.mxu0 0.0
        %7345 = vmatpush.msra.mxu0 0.0
        %7346 = vmatpush.msra.mxu0 0.0
        %7347 = vmatpush.msra.mxu0 0.0
        %v7348 = vand.u32 %v604, 4294901760
        %7349 = vmatpush.msra.mxu0 %v7348
        %v7350 = vand.u32 %v602, 4294901760
        %7351 = vmatpush.msra.mxu0 %v7350
        %v7352 = vand.u32 %v3406, 4294901760
        %v7353 = vsub.f32 %v3406, %v7352
        %v7354 = vand.u32 %v7353, 4294901760
        %7355 = vmatmul.f32.gmra.mxu0 %v7354
        %v7356 = vpop.f32.mrf.mxu0
        %v7357 = vadd.f32 %v7332, %v7356
        %7358 = vdwg.mxu0
        %7359 = vmatpush.msra.mxu0 0.0
        %7360 = vmatpush.msra.mxu0 0.0
        %7361 = vmatpush.msra.mxu0 0.0
        %7362 = vmatpush.msra.mxu0 0.0
        %7363 = vmatpush.msra.mxu0 0.0
        %7364 = vmatpush.msra.mxu0 0.0
        %7365 = vmatpush.msra.mxu0 0.0
        %7366 = vmatpush.msra.mxu0 0.0
        %7367 = vmatpush.msra.mxu0 0.0
        %7368 = vmatpush.msra.mxu0 0.0
        %7369 = vmatpush.msra.mxu0 0.0
        %7370 = vmatpush.msra.mxu0 0.0
        %7371 = vmatpush.msra.mxu0 0.0
        %7372 = vmatpush.msra.mxu0 0.0
        %v7373 = vand.u32 %v604, 4294901760
        %v7374 = vsub.f32 %v604, %v7373
        %v7375 = vand.u32 %v7374, 4294901760
        %7376 = vmatpush.msra.mxu0 %v7375
        %v7377 = vand.u32 %v602, 4294901760
        %v7378 = vsub.f32 %v602, %v7377
        %v7379 = vand.u32 %v7378, 4294901760
        %7380 = vmatpush.msra.mxu0 %v7379
        %v7381 = vand.u32 %v3406, 4294901760
        %7382 = vmatmul.f32.gmra.mxu0 %v7381
        %v7383 = vpop.f32.mrf.mxu0
        %v7384 = vadd.f32 %v7357, %v7383
        %7385 = vdwg.mxu0
        %7386 = vmatpush.msra.mxu0 0.0
        %7387 = vmatpush.msra.mxu0 0.0
        %7388 = vmatpush.msra.mxu0 0.0
        %7389 = vmatpush.msra.mxu0 0.0
        %7390 = vmatpush.msra.mxu0 0.0
        %7391 = vmatpush.msra.mxu0 0.0
        %7392 = vmatpush.msra.mxu0 0.0
        %7393 = vmatpush.msra.mxu0 0.0
        %7394 = vmatpush.msra.mxu0 0.0
        %7395 = vmatpush.msra.mxu0 0.0
        %7396 = vmatpush.msra.mxu0 0.0
        %7397 = vmatpush.msra.mxu0 0.0
        %7398 = vmatpush.msra.mxu0 0.0
        %7399 = vmatpush.msra.mxu0 0.0
        %v7400 = vand.u32 %v604, 4294901760
        %7401 = vmatpush.msra.mxu0 %v7400
        %v7402 = vand.u32 %v602, 4294901760
        %7403 = vmatpush.msra.mxu0 %v7402
        %v7404 = vand.u32 %v3406, 4294901760
        %7405 = vmatmul.f32.gmra.mxu0 %v7404
        %v7406 = vpop.f32.mrf.mxu0
        %v7407 = vadd.f32 %v7384, %v7406
        %7408 = vdwg.mxu0
        %7409 = vmatpush.msra.mxu0 0.0
        %7410 = vmatpush.msra.mxu0 0.0
        %7411 = vmatpush.msra.mxu0 0.0
        %7412 = vmatpush.msra.mxu0 0.0
        %7413 = vmatpush.msra.mxu0 0.0
        %7414 = vmatpush.msra.mxu0 0.0
        %7415 = vmatpush.msra.mxu0 0.0
        %7416 = vmatpush.msra.mxu0 0.0
        %7417 = vmatpush.msra.mxu0 0.0
        %7418 = vmatpush.msra.mxu0 0.0
        %7419 = vmatpush.msra.mxu0 0.0
        %7420 = vmatpush.msra.mxu0 0.0
        %7421 = vmatpush.msra.mxu0 0.0
        %7422 = vmatpush.msra.mxu0 0.0
        %v7423 = vand.u32 %v642, 4294901760
        %7424 = vmatpush.msra.mxu0 %v7423
        %v7425 = vand.u32 %v640, 4294901760
        %7426 = vmatpush.msra.mxu0 %v7425
        %v7427 = vand.u32 %v3406, 4294901760
        %v7428 = vsub.f32 %v3406, %v7427
        %v7429 = vand.u32 %v7428, 4294901760
        %v7430 = vsub.f32 %v7428, %v7429
        %v7431 = vand.u32 %v7430, 4294901760
        %7432 = vmatmul.f32.gmra.mxu0 %v7431
        %v7433 = vpop.f32.mrf.mxu0
        %v7434 = vadd.f32 0.0, %v7433
        %7435 = vdwg.mxu0
        %7436 = vmatpush.msra.mxu0 0.0
        %7437 = vmatpush.msra.mxu0 0.0
        %7438 = vmatpush.msra.mxu0 0.0
        %7439 = vmatpush.msra.mxu0 0.0
        %7440 = vmatpush.msra.mxu0 0.0
        %7441 = vmatpush.msra.mxu0 0.0
        %7442 = vmatpush.msra.mxu0 0.0
        %7443 = vmatpush.msra.mxu0 0.0
        %7444 = vmatpush.msra.mxu0 0.0
        %7445 = vmatpush.msra.mxu0 0.0
        %7446 = vmatpush.msra.mxu0 0.0
        %7447 = vmatpush.msra.mxu0 0.0
        %7448 = vmatpush.msra.mxu0 0.0
        %7449 = vmatpush.msra.mxu0 0.0
        %v7450 = vand.u32 %v642, 4294901760
        %v7451 = vsub.f32 %v642, %v7450
        %v7452 = vand.u32 %v7451, 4294901760
        %v7453 = vsub.f32 %v7451, %v7452
        %v7454 = vand.u32 %v7453, 4294901760
        %7455 = vmatpush.msra.mxu0 %v7454
        %v7456 = vand.u32 %v640, 4294901760
        %v7457 = vsub.f32 %v640, %v7456
        %v7458 = vand.u32 %v7457, 4294901760
        %v7459 = vsub.f32 %v7457, %v7458
        %v7460 = vand.u32 %v7459, 4294901760
        %7461 = vmatpush.msra.mxu0 %v7460
        %v7462 = vand.u32 %v3406, 4294901760
        %7463 = vmatmul.f32.gmra.mxu0 %v7462
        %v7464 = vpop.f32.mrf.mxu0
        %v7465 = vadd.f32 %v7434, %v7464
        %7466 = vdwg.mxu0
        %7467 = vmatpush.msra.mxu0 0.0
        %7468 = vmatpush.msra.mxu0 0.0
        %7469 = vmatpush.msra.mxu0 0.0
        %7470 = vmatpush.msra.mxu0 0.0
        %7471 = vmatpush.msra.mxu0 0.0
        %7472 = vmatpush.msra.mxu0 0.0
        %7473 = vmatpush.msra.mxu0 0.0
        %7474 = vmatpush.msra.mxu0 0.0
        %7475 = vmatpush.msra.mxu0 0.0
        %7476 = vmatpush.msra.mxu0 0.0
        %7477 = vmatpush.msra.mxu0 0.0
        %7478 = vmatpush.msra.mxu0 0.0
        %7479 = vmatpush.msra.mxu0 0.0
        %7480 = vmatpush.msra.mxu0 0.0
        %v7481 = vand.u32 %v642, 4294901760
        %v7482 = vsub.f32 %v642, %v7481
        %7483 = vmatpush.msra.mxu0 %v7482
        %v7484 = vand.u32 %v640, 4294901760
        %v7485 = vsub.f32 %v640, %v7484
        %7486 = vmatpush.msra.mxu0 %v7485
        %v7487 = vand.u32 %v3406, 4294901760
        %v7488 = vsub.f32 %v3406, %v7487
        %7489 = vmatmul.f32.gmra.mxu0 %v7488
        %v7490 = vpop.f32.mrf.mxu0
        %v7491 = vadd.f32 %v7465, %v7490
        %7492 = vdwg.mxu0
        %7493 = vmatpush.msra.mxu0 0.0
        %7494 = vmatpush.msra.mxu0 0.0
        %7495 = vmatpush.msra.mxu0 0.0
        %7496 = vmatpush.msra.mxu0 0.0
        %7497 = vmatpush.msra.mxu0 0.0
        %7498 = vmatpush.msra.mxu0 0.0
        %7499 = vmatpush.msra.mxu0 0.0
        %7500 = vmatpush.msra.mxu0 0.0
        %7501 = vmatpush.msra.mxu0 0.0
        %7502 = vmatpush.msra.mxu0 0.0
        %7503 = vmatpush.msra.mxu0 0.0
        %7504 = vmatpush.msra.mxu0 0.0
        %7505 = vmatpush.msra.mxu0 0.0
        %7506 = vmatpush.msra.mxu0 0.0
        %v7507 = vand.u32 %v642, 4294901760
        %7508 = vmatpush.msra.mxu0 %v7507
        %v7509 = vand.u32 %v640, 4294901760
        %7510 = vmatpush.msra.mxu0 %v7509
        %v7511 = vand.u32 %v3406, 4294901760
        %v7512 = vsub.f32 %v3406, %v7511
        %v7513 = vand.u32 %v7512, 4294901760
        %7514 = vmatmul.f32.gmra.mxu0 %v7513
        %v7515 = vpop.f32.mrf.mxu0
        %v7516 = vadd.f32 %v7491, %v7515
        %7517 = vdwg.mxu0
        %7518 = vmatpush.msra.mxu0 0.0
        %7519 = vmatpush.msra.mxu0 0.0
        %7520 = vmatpush.msra.mxu0 0.0
        %7521 = vmatpush.msra.mxu0 0.0
        %7522 = vmatpush.msra.mxu0 0.0
        %7523 = vmatpush.msra.mxu0 0.0
        %7524 = vmatpush.msra.mxu0 0.0
        %7525 = vmatpush.msra.mxu0 0.0
        %7526 = vmatpush.msra.mxu0 0.0
        %7527 = vmatpush.msra.mxu0 0.0
        %7528 = vmatpush.msra.mxu0 0.0
        %7529 = vmatpush.msra.mxu0 0.0
        %7530 = vmatpush.msra.mxu0 0.0
        %7531 = vmatpush.msra.mxu0 0.0
        %v7532 = vand.u32 %v642, 4294901760
        %v7533 = vsub.f32 %v642, %v7532
        %v7534 = vand.u32 %v7533, 4294901760
        %7535 = vmatpush.msra.mxu0 %v7534
        %v7536 = vand.u32 %v640, 4294901760
        %v7537 = vsub.f32 %v640, %v7536
        %v7538 = vand.u32 %v7537, 4294901760
        %7539 = vmatpush.msra.mxu0 %v7538
        %v7540 = vand.u32 %v3406, 4294901760
        %7541 = vmatmul.f32.gmra.mxu0 %v7540
        %v7542 = vpop.f32.mrf.mxu0
        %v7543 = vadd.f32 %v7516, %v7542
        %7544 = vdwg.mxu0
        %7545 = vmatpush.msra.mxu0 0.0
        %7546 = vmatpush.msra.mxu0 0.0
        %7547 = vmatpush.msra.mxu0 0.0
        %7548 = vmatpush.msra.mxu0 0.0
        %7549 = vmatpush.msra.mxu0 0.0
        %7550 = vmatpush.msra.mxu0 0.0
        %7551 = vmatpush.msra.mxu0 0.0
        %7552 = vmatpush.msra.mxu0 0.0
        %7553 = vmatpush.msra.mxu0 0.0
        %7554 = vmatpush.msra.mxu0 0.0
        %7555 = vmatpush.msra.mxu0 0.0
        %7556 = vmatpush.msra.mxu0 0.0
        %7557 = vmatpush.msra.mxu0 0.0
        %7558 = vmatpush.msra.mxu0 0.0
        %v7559 = vand.u32 %v642, 4294901760
        %7560 = vmatpush.msra.mxu0 %v7559
        %v7561 = vand.u32 %v640, 4294901760
        %7562 = vmatpush.msra.mxu0 %v7561
        %v7563 = vand.u32 %v3406, 4294901760
        %7564 = vmatmul.f32.gmra.mxu0 %v7563
        %v7565 = vpop.f32.mrf.mxu0
        %v7566 = vadd.f32 %v7543, %v7565
        %7567 = vdwg.mxu0
        %s7568 = scalar_lea.vmem %s191, 48 [#allocation5]
        %7569 = vst [vmem:[%s7568] sm:$0xff] %v6453
        %7570 = vst [vmem:[%s7568 + $0x8] sm:$0xff] %v6612
        %7571 = vst [vmem:[%s7568 + $0x40] sm:$0xff] %v6771
        %7572 = vst [vmem:[%s7568 + $0x48] sm:$0xff] %v6930
        %7573 = vst [vmem:[%s7568 + $0x80] sm:$0xff] %v7089
        %7574 = vst [vmem:[%s7568 + $0x88] sm:$0xff] %v7248
        %7575 = vst [vmem:[%s7568 + $0xc0] sm:$0xff] %v7407
        %7576 = vst [vmem:[%s7568 + $0xc8] sm:$0xff] %v7566
        %s7577 = sand.u32 %s96, 1
        %s7578 = scalar_lea.sflag [#allocation4], %s7577
        %s7579 = sand.u32 %s96, 1
        %s7580 = smul.addr %s7579, 256
        %s7581 = scalar_lea.vmem [#allocation5], %s7580
        // Predicated region
        $region37: #{tpu_custom_call.1} parent=31 // pred_check
          %p7582 = pneg %p106
        $region38: #{tpu_custom_call.1} parent=31 // pred_check_branch
          %7584 = sbr.rel (%p7582) target = $region40
        $region39: #{tpu_custom_call.1} parent=31 // pred_region
          %s7585 = smul.u32 4, %s20
          %7587 = vsyncadd %s7578, 0
          %s7588 = smul.addr %s7585, 8
          %s7589 = smul.addr %s7588, 8
          %s7590 = scalar_lea.hbm %s3, %s7589
          %s7591 = sshll.u32 %s7581, 4
          %s7592 = int_to_ptr.vmem [resolvable:$true] %s7591
          %s7593 = sshll.u32 %s7590, 4
          %s7594 = int_to_ptr.hbm [resolvable:$true] %s7593
          %7599 = dma.vmem_to_hbm [thread:$0]  %s7592, 4096, %s7594, %s7578, 256, 256, 16
        $region40: #{tpu_custom_call.1} parent=31 // pred_fallthru
          _
      $region32: #{tpu_custom_call.1} parent=5 // pred_fallthru
        _
      %p7600 = scmp.le.s32.totalorder 2, %s15
      // Predicated region
      $region41: #{tpu_custom_call.1} parent=5 // pred_check
        %p7601 = pneg %p7600
      $region42: #{tpu_custom_call.1} parent=5 // pred_check_branch
        %7603 = sbr.rel (%p7601) target = $region44
      $region43: #{tpu_custom_call.1} parent=5 // pred_region
        %s7604 = ssub.s32 %s15, 2
        // Predicated region
        $region45: #{tpu_custom_call.1} parent=43 // pred_check
          %p7605 = pneg %p112
        $region46: #{tpu_custom_call.1} parent=43 // pred_check_branch
          %7607 = sbr.rel (%p7605) target = $region48
        $region47: #{tpu_custom_call.1} parent=43 // pred_region
          %s7608 = sand.u32 %s97, 1
          %s7609 = scalar_lea.sflag [#allocation4], %s7608
          %s7610 = sand.u32 %s97, 1
          %s7611 = smul.addr %s7610, 256
          %s7612 = scalar_lea.vmem [#allocation5], %s7611
          %7614 = dma.done %s7609, 4096
        $region48: #{tpu_custom_call.1} parent=43 // pred_fallthru
          _
      $region44: #{tpu_custom_call.1} parent=5 // pred_fallthru
        _
    $region6: #{tpu_custom_call.1} parent=1 // loop_footer
      %s19 = sadd.s32 1, %s15
    $region7: #{tpu_custom_call.1} parent=1 // loop_footer_branch
      %14 = sbr.rel target = $region3
    $region8: #{tpu_custom_call.1} parent=1 // loop_exit
      _
    %7615 = vsyncpa [#allocation3], 1
    %s7616 = scalar_lea.sflag [#allocation3], 1
    %7617 = vsyncpa %s7616, 1
    %7618 = vsyncpa [#allocation4], 1
    %s7619 = scalar_lea.sflag [#allocation4], 1
    %7620 = vsyncpa %s7619, 1

</llo_original>
